<compile_context>
chip_gen: v7x
topology: tpu7x:2x2x1
jax: 0.10.0
libtpu: 0.0.40
codegen_flags: <defaults>
</compile_context>

<pallas_src>
import functools
import math

import numpy as np
import jax
import jax.numpy as jnp
from jax import lax
from jax.experimental import pallas as pl
from jax.experimental.pallas import tpu as pltpu

INV_SQRT2 = 1.0 / math.sqrt(2.0)


def _gelu_exact(h):
    # exact GELU (erf form), matching torch.nn.GELU() default
    return 0.5 * h * (1.0 + lax.erf(h * INV_SQRT2))


# ---------------------------------------------------------------------------
# One-time capability/convention probe for pltpu.roll on the sublane axis.
# If roll lowers and matches jnp.roll semantics we use it (XLU shifts);
# otherwise we fall back to one shifted slice per dx (still 7x fewer
# materializations than the per-tap slicing of v1).
# ---------------------------------------------------------------------------
_USE_ROLL = None


def _roll_supported():
    global _USE_ROLL
    if _USE_ROLL is None:
        try:
            def k(x_ref, o_ref):
                o_ref[...] = pltpu.roll(x_ref[...], shift=3, axis=1)

            xp = jnp.arange(2 * 16 * 128, dtype=jnp.float32).reshape(2, 16, 128)
            yp = pl.pallas_call(
                k, out_shape=jax.ShapeDtypeStruct(xp.shape, xp.dtype))(xp)
            _USE_ROLL = bool(jnp.array_equal(yp, jnp.roll(xp, 3, axis=1)))
        except Exception:
            _USE_ROLL = False
    return _USE_ROLL


# ---------------------------------------------------------------------------
# In-kernel depthwise KxK 'same' conv on an (H, W, C) slab.
# ---------------------------------------------------------------------------
def _dwconv_same(x, w_ref, r, use_roll):
    H, W, C = x.shape
    K = 2 * r + 1
    PW = 8                                   # sublane-aligned guard cols (>= r)
    Wp = W + 2 * PW

    # Tile-aligned zero padding built in-register (no scratch, no per-step fill).
    zr = jnp.zeros((r, W, C), x.dtype)
    zc = jnp.zeros((H + 2 * r, PW, C), x.dtype)
    xp = jnp.concatenate([zc, jnp.concatenate([zr, x, zr], axis=0), zc], axis=1)

    acc = jnp.zeros((H, W, C), jnp.float32)
    for dx in range(-r, r + 1):
        if dx == 0 or not use_roll:
            # one slice per dx; dx == 0 is sublane-aligned (PW, W multiples of 8)
            col = xp[:, PW + dx:PW + dx + W, :]
        else:
            # shifted[:, w] = xp[:, w + dx]; roll wrap-in lands only in the
            # zero guard columns, which the aligned interior slice discards.
            col = pltpu.roll(xp, shift=(-dx) % Wp, axis=1)[:, PW:PW + W, :]
        for dy in range(-r, r + 1):
            t = (dy + r) * K + (dx + r)
            # vertical shift = leading-dim (untiled) slice: free
            acc = acc + col[r + dy:r + dy + H] * w_ref[t, :]
    return acc


# ---------------------------------------------------------------------------
# Kernel
# ---------------------------------------------------------------------------
def repmixer_block_kernel(
    x_ref,      # (1, H, W, C) f32
    w3_ref,     # (9,  C) f32  RepMixer taps (BN, layer_scale, affine branches, identity folded)
    c3_ref,     # (1,  C) f32  RepMixer folded bias
    w7_ref,     # (49, C) f32  ConvFFN dw7x7 taps (BN scale folded)
    b7_ref,     # (1,  C) f32  ConvFFN BN bias
    wfc1_ref,   # (C,  Ch) bf16
    bfc1_ref,   # (1,  Ch) f32
    wfc2_ref,   # (Ch, C)  bf16 (block layer_scale folded)
    bfc2_ref,   # (1,  C)  f32  (block layer_scale folded)
    out_ref,    # (1, H, W, C) f32
    *, use_roll,
):
    _, H, W, C = x_ref.shape
    x = x_ref[0]

    # ---- RepMixer: y = x + ls_rm * (mixer(x) - norm(x)), fully folded ------
    y = _dwconv_same(x, w3_ref, 1, use_roll) + c3_ref[0, :]

    # ---- ConvFFN: dw7x7(+BN) -> fc1 -> GELU -> fc2 (layer_scale folded) ----
    z = _dwconv_same(y, w7_ref, 3, use_roll) + b7_ref[0, :]

    zf = z.reshape(H * W, C).astype(jnp.bfloat16)      # W % 8 == 0 -> cheap reshape
    h1 = jnp.dot(zf, wfc1_ref[...],
                 preferred_element_type=jnp.float32) + bfc1_ref[0, :]
    h1 = _gelu_exact(h1).astype(jnp.bfloat16)
    h2 = jnp.dot(h1, wfc2_ref[...],
                 preferred_element_type=jnp.float32) + bfc2_ref[0, :]

    out_ref[0] = y + h2.reshape(H, W, C)


# ---------------------------------------------------------------------------
# Wrapper
# ---------------------------------------------------------------------------
def repmixer_block(x_nhwc, fp):
    B, H, W, C = x_nhwc.shape
    weights = [fp["w3"], fp["c3"], fp["w7"], fp["b7"],
               fp["wfc1"], fp["bfc1"], fp["wfc2"], fp["bfc2"]]

    def full_spec(shape):
        return pl.BlockSpec(shape, lambda b: tuple(0 for _ in shape))

    in_specs = [pl.BlockSpec((1, H, W, C), lambda b: (b, 0, 0, 0))]
    in_specs += [full_spec(w.shape) for w in weights]

    kern = functools.partial(repmixer_block_kernel, use_roll=_roll_supported())

    return pl.pallas_call(
        kern,
        out_shape=jax.ShapeDtypeStruct((B, H, W, C), jnp.float32),
        grid=(B,),
        in_specs=in_specs,
        out_specs=pl.BlockSpec((1, H, W, C), lambda b: (b, 0, 0, 0)),
        compiler_params=pltpu.CompilerParams(dimension_semantics=("parallel",)),
    )(x_nhwc, *weights)


# ---------------------------------------------------------------------------
# Parameter construction (module-like, unfolded) + wrapper-side folding
# ---------------------------------------------------------------------------
def make_params(key, C, Ch):
    eps = 1e-5
    ks = list(jax.random.split(key, 10))

    def bn(k):
        k1, k2, k3, k4 = jax.random.split(k, 4)
        gamma = 1.0 + 0.1 * jax.random.normal(k1, (C,), jnp.float32)
        beta = 0.1 * jax.random.normal(k2, (C,), jnp.float32)
        mean = 0.1 * jax.random.normal(k3, (C,), jnp.float32)
        var = jnp.abs(1.0 + 0.1 * jax.random.normal(k4, (C,), jnp.float32))
        s = gamma / jnp.sqrt(var + eps)
        return s, beta - mean * s

    # mixer dw3x3 (bias=False) + BN
    w3_raw = 0.02 * jax.random.normal(ks[0], (3, 3, C), jnp.float32)
    s3, b3 = bn(ks[1])
    w3_3d = w3_raw * s3
    # mixer 1x1 scale branch (bias=False) + BN
    w1_raw = 0.02 * jax.random.normal(ks[2], (C,), jnp.float32)
    s1, t1 = bn(ks[3])
    sm1, bm1 = w1_raw * s1, t1
    # mixer skip-BN; norm skip-BN
    sms, bms = bn(ks[4])
    sn, bnb = bn(ks[5])
    # ConvFFN dw7x7 (bias=False) + BN
    w7_3d = 0.02 * jax.random.normal(ks[6], (7, 7, C), jnp.float32)
    s7, b7 = bn(ks[7])
    # fc1 / fc2 (1x1 convs): trunc_normal(std=0.02)-like weights, zero bias
    wfc1 = 0.02 * jax.random.normal(ks[8], (C, Ch), jnp.float32)
    bfc1 = jnp.zeros((Ch,), jnp.float32)
    wfc2 = 0.02 * jax.random.normal(ks[9], (Ch, C), jnp.float32)
    bfc2 = jnp.zeros((C,), jnp.float32)
    # layer scales (init 1e-5, per the module)
    ls_rm = 1e-5 * jnp.ones((C,), jnp.float32)
    ls_blk = 1e-5 * jnp.ones((C,), jnp.float32)

    return dict(w3_3d=w3_3d, b3=b3, sm1=sm1, bm1=bm1, sms=sms, bms=bms,
                sn=sn, bnb=bnb, ls_rm=ls_rm, w7_3d=w7_3d, s7=s7, b7=b7,
                wfc1=wfc1, bfc1=bfc1, wfc2=wfc2, bfc2=bfc2,
                ls_blk=ls_blk)


def fold_params(p):
    """One-time per-channel constant folding (plain JAX, outside the kernel)."""
    C = p["b3"].shape[0]
    row = lambda v: v.reshape(1, -1)

    # RepMixer: y = x + ls_rm*(dw3_bn(x)+b3 + x*sm1+bm1 + x*sms+bms - x*sn-bnb)
    #             = dw3_fold(x) + c3   (identity + affine folded into center tap)
    a_rm = p["sm1"] + p["sms"] - p["sn"]
    b_rm = p["b3"] + p["bm1"] + p["bms"] - p["bnb"]
    w3 = (p["w3_3d"] * p["ls_rm"]).reshape(9, C)
    w3 = w3.at[4].add(1.0 + p["ls_rm"] * a_rm)            # center tap (dy=dx=0)
    c3 = row(p["ls_rm"] * b_rm)

    # ConvFFN: fold BN scale into the 7x7 taps; fold ls_blk into fc2
    w7 = (p["w7_3d"] * p["s7"]).reshape(49, C)
    b7 = row(p["b7"])
    wfc1 = p["wfc1"].astype(jnp.bfloat16)
    bfc1 = row(p["bfc1"])
    wfc2 = (p["wfc2"] * p["ls_blk"][None, :]).astype(jnp.bfloat16)
    bfc2 = row(p["bfc2"] * p["ls_blk"])
    return dict(w3=w3, c3=c3, w7=w7, b7=b7,
                wfc1=wfc1, bfc1=bfc1, wfc2=wfc2, bfc2=bfc2)


# ---------------------------------------------------------------------------
# Pure-JAX reference (unfolded, f32, erf GELU) mirroring the PyTorch module
# ---------------------------------------------------------------------------
def reference(x, p):
    B, H, W, C = x.shape

    def dwconv(inp, w):  # w: (kh, kw, C) depthwise, 'same' zero padding
        kh, kw, _ = w.shape
        return lax.conv_general_dilated(
            inp, w.reshape(kh, kw, 1, C), window_strides=(1, 1),
            padding=((kh // 2, kh // 2), (kw // 2, kw // 2)),
            dimension_numbers=("NHWC", "HWIO", "NHWC"),
            feature_group_count=C)

    mixer = dwconv(x, p["w3_3d"]) + p["b3"] \
        + x * p["sm1"] + p["bm1"] + x * p["sms"] + p["bms"]
    normb = x * p["sn"] + p["bnb"]
    y = x + p["ls_rm"] * (mixer - normb)

    z = dwconv(y, p["w7_3d"]) * p["s7"] + p["b7"]
    h = z.reshape(-1, C) @ p["wfc1"] + p["bfc1"]
    h = _gelu_exact(h)
    o = h @ p["wfc2"] + p["bfc2"]
    return y + p["ls_blk"] * o.reshape(B, H, W, C)


if __name__ == "__main__":
    B, C, H, W = 2, 64, 16, 16
    mlp_ratio = 4.0
    Ch = int(C * mlp_ratio)

    key = jax.random.PRNGKey(0)
    kx, kp = jax.random.split(key)
    x_nchw = jax.random.normal(kx, (B, C, H, W), jnp.float32)   # module layout
    params = make_params(kp, C, Ch)
    folded = fold_params(params)

    x_nhwc = jnp.transpose(x_nchw, (0, 2, 3, 1))                # kernel layout
    out_nhwc = jax.block_until_ready(repmixer_block(x_nhwc, folded))
    out_nchw = jnp.transpose(out_nhwc, (0, 3, 1, 2))

    ref_nhwc = reference(x_nhwc, params)
    np.testing.assert_allclose(np.asarray(out_nhwc), np.asarray(ref_nhwc),
                               rtol=1e-4, atol=1e-5)
    assert out_nchw.shape == (B, C, H, W)
    print("KERNEL_OK")
</pallas_src>

<mosaic_0001>
module attributes {stable_mosaic.version = 11 : i64} {
  func.func @k(%arg0: memref<2x16x128xf32, #tpu.memory_space<vmem>>, %arg1: memref<2x16x128xf32, #tpu.memory_space<vmem>>) attributes {dimension_semantics = [], scalar_prefetch = 0 : i64, scratch_operands = 0 : i64, tpu.core_type = #tpu.core_type<tc>} {
    %c0 = arith.constant 0 : index
    %c0_0 = arith.constant 0 : index
    %c0_1 = arith.constant 0 : index
    %0 = vector.load %arg0[%c0, %c0_0, %c0_1] : memref<2x16x128xf32, #tpu.memory_space<vmem>>, vector<2x16x128xf32>
    %c3_i32 = arith.constant 3 : i32
    %1 = tpu.dynamic_rotate %0 by %c3_i32 dim 1 : vector<2x16x128xf32>, i32 -> vector<2x16x128xf32>
    %c0_2 = arith.constant 0 : index
    %c0_3 = arith.constant 0 : index
    %c0_4 = arith.constant 0 : index
    %2 = vector.load %arg1[%c0_2, %c0_3, %c0_4] : memref<2x16x128xf32, #tpu.memory_space<vmem>>, vector<2x16x128xf32>
    tpu.vector_store %arg1[%c0_2, %c0_3, %c0_4], %1 {strides = array<i32>} : memref<2x16x128xf32, #tpu.memory_space<vmem>>, vector<2x16x128xf32>,
    return
  }
}

module attributes {stable_mosaic.version = 11 : i64} {
  func.func @repmixer_block_kernel(%arg0: i32, %arg1: memref<1x16x16x64xf32, #tpu.memory_space<vmem>>, %arg2: memref<9x64xf32, #tpu.memory_space<vmem>>, %arg3: memref<1x64xf32, #tpu.memory_space<vmem>>, %arg4: memref<49x64xf32, #tpu.memory_space<vmem>>, %arg5: memref<1x64xf32, #tpu.memory_space<vmem>>, %arg6: memref<64x256xbf16, #tpu.memory_space<vmem>>, %arg7: memref<1x256xf32, #tpu.memory_space<vmem>>, %arg8: memref<256x64xbf16, #tpu.memory_space<vmem>>, %arg9: memref<1x64xf32, #tpu.memory_space<vmem>>, %arg10: memref<1x16x16x64xf32, #tpu.memory_space<vmem>>) attributes {dimension_semantics = [#tpu.dimension_semantics<parallel>], iteration_bounds = array<i64: 2>, scalar_prefetch = 0 : i64, scratch_operands = 0 : i64, tpu.core_type = #tpu.core_type<tc>, window_params = [{transform_indices = @transform_0, window_bounds = array<i64: 1, 16, 16, 64>}, {pipeline_mode = #tpu.pipeline_mode<synchronous>, transform_indices = @transform_1, window_bounds = array<i64: 9, 64>}, {pipeline_mode = #tpu.pipeline_mode<synchronous>, transform_indices = @transform_2, window_bounds = array<i64: 1, 64>}, {pipeline_mode = #tpu.pipeline_mode<synchronous>, transform_indices = @transform_3, window_bounds = array<i64: 49, 64>}, {pipeline_mode = #tpu.pipeline_mode<synchronous>, transform_indices = @transform_4, window_bounds = array<i64: 1, 64>}, {pipeline_mode = #tpu.pipeline_mode<synchronous>, transform_indices = @transform_5, window_bounds = array<i64: 64, 256>}, {pipeline_mode = #tpu.pipeline_mode<synchronous>, transform_indices = @transform_6, window_bounds = array<i64: 1, 256>}, {pipeline_mode = #tpu.pipeline_mode<synchronous>, transform_indices = @transform_7, window_bounds = array<i64: 256, 64>}, {pipeline_mode = #tpu.pipeline_mode<synchronous>, transform_indices = @transform_8, window_bounds = array<i64: 1, 64>}, {transform_indices = @transform_9, window_bounds = array<i64: 1, 16, 16, 64>}]} {
    %c0 = arith.constant 0 : index
    %c0_0 = arith.constant 0 : index
    %c0_1 = arith.constant 0 : index
    %c0_2 = arith.constant 0 : index
    %0 = vector.load %arg1[%c0, %c0_0, %c0_1, %c0_2] : memref<1x16x16x64xf32, #tpu.memory_space<vmem>>, vector<1x16x16x64xf32>
    %1 = vector.shape_cast %0 : vector<1x16x16x64xf32> to vector<16x16x64xf32>
    %cst = arith.constant 0.000000e+00 : f32
    %2 = vector.broadcast %cst : f32 to vector<1x16x64xf32>
    %cst_3 = arith.constant 0.000000e+00 : f32
    %3 = vector.broadcast %cst_3 : f32 to vector<18x8x64xf32>
    %4 = tpu.concatenate %2, %1, %2 in 0 : vector<1x16x64xf32>, vector<16x16x64xf32>, vector<1x16x64xf32> -> vector<18x16x64xf32>
    %5 = tpu.concatenate %3, %4, %3 in 1 : vector<18x8x64xf32>, vector<18x16x64xf32>, vector<18x8x64xf32> -> vector<18x32x64xf32>
    %cst_4 = arith.constant 0.000000e+00 : f32
    %6 = vector.broadcast %cst_4 : f32 to vector<16x16x64xf32>
    %7 = vector.extract_strided_slice %5 {offsets = [0, 7, 0], sizes = [18, 16, 64], strides = [1, 1, 1]} : vector<18x32x64xf32> to vector<18x16x64xf32>
    %8 = vector.extract_strided_slice %7 {offsets = [0, 0, 0], sizes = [16, 16, 64], strides = [1, 1, 1]} : vector<18x16x64xf32> to vector<16x16x64xf32>
    %c0_5 = arith.constant 0 : index
    %c0_6 = arith.constant 0 : index
    %9 = vector.load %arg2[%c0_5, %c0_6] : memref<9x64xf32, #tpu.memory_space<vmem>>, vector<1x64xf32>
    %10 = vector.shape_cast %9 : vector<1x64xf32> to vector<64xf32>
    %11 = vector.shape_cast %10 : vector<64xf32> to vector<1x1x64xf32>
    %12 = vector.broadcast %11 : vector<1x1x64xf32> to vector<16x16x64xf32>
    %13 = arith.mulf %8, %12 : vector<16x16x64xf32>
    %14 = arith.addf %6, %13 : vector<16x16x64xf32>
    %15 = vector.extract_strided_slice %7 {offsets = [1, 0, 0], sizes = [16, 16, 64], strides = [1, 1, 1]} : vector<18x16x64xf32> to vector<16x16x64xf32>
    %c3 = arith.constant 3 : index
    %c0_7 = arith.constant 0 : index
    %16 = vector.load %arg2[%c3, %c0_7] : memref<9x64xf32, #tpu.memory_space<vmem>>, vector<1x64xf32>
    %17 = vector.shape_cast %16 : vector<1x64xf32> to vector<64xf32>
    %18 = vector.shape_cast %17 : vector<64xf32> to vector<1x1x64xf32>
    %19 = vector.broadcast %18 : vector<1x1x64xf32> to vector<16x16x64xf32>
    %20 = arith.mulf %15, %19 : vector<16x16x64xf32>
    %21 = arith.addf %14, %20 : vector<16x16x64xf32>
    %22 = vector.extract_strided_slice %7 {offsets = [2, 0, 0], sizes = [16, 16, 64], strides = [1, 1, 1]} : vector<18x16x64xf32> to vector<16x16x64xf32>
    %c6 = arith.constant 6 : index
    %c0_8 = arith.constant 0 : index
    %23 = vector.load %arg2[%c6, %c0_8] : memref<9x64xf32, #tpu.memory_space<vmem>>, vector<1x64xf32>
    %24 = vector.shape_cast %23 : vector<1x64xf32> to vector<64xf32>
    %25 = vector.shape_cast %24 : vector<64xf32> to vector<1x1x64xf32>
    %26 = vector.broadcast %25 : vector<1x1x64xf32> to vector<16x16x64xf32>
    %27 = arith.mulf %22, %26 : vector<16x16x64xf32>
    %28 = arith.addf %21, %27 : vector<16x16x64xf32>
    %29 = vector.extract_strided_slice %5 {offsets = [0, 8, 0], sizes = [18, 16, 64], strides = [1, 1, 1]} : vector<18x32x64xf32> to vector<18x16x64xf32>
    %30 = vector.extract_strided_slice %29 {offsets = [0, 0, 0], sizes = [16, 16, 64], strides = [1, 1, 1]} : vector<18x16x64xf32> to vector<16x16x64xf32>
    %c1 = arith.constant 1 : index
    %c0_9 = arith.constant 0 : index
    %31 = vector.load %arg2[%c1, %c0_9] : memref<9x64xf32, #tpu.memory_space<vmem>>, vector<1x64xf32>
    %32 = vector.shape_cast %31 : vector<1x64xf32> to vector<64xf32>
    %33 = vector.shape_cast %32 : vector<64xf32> to vector<1x1x64xf32>
    %34 = vector.broadcast %33 : vector<1x1x64xf32> to vector<16x16x64xf32>
    %35 = arith.mulf %30, %34 : vector<16x16x64xf32>
    %36 = arith.addf %28, %35 : vector<16x16x64xf32>
    %37 = vector.extract_strided_slice %29 {offsets = [1, 0, 0], sizes = [16, 16, 64], strides = [1, 1, 1]} : vector<18x16x64xf32> to vector<16x16x64xf32>
    %c4 = arith.constant 4 : index
    %c0_10 = arith.constant 0 : index
    %38 = vector.load %arg2[%c4, %c0_10] : memref<9x64xf32, #tpu.memory_space<vmem>>, vector<1x64xf32>
    %39 = vector.shape_cast %38 : vector<1x64xf32> to vector<64xf32>
    %40 = vector.shape_cast %39 : vector<64xf32> to vector<1x1x64xf32>
    %41 = vector.broadcast %40 : vector<1x1x64xf32> to vector<16x16x64xf32>
    %42 = arith.mulf %37, %41 : vector<16x16x64xf32>
    %43 = arith.addf %36, %42 : vector<16x16x64xf32>
    %44 = vector.extract_strided_slice %29 {offsets = [2, 0, 0], sizes = [16, 16, 64], strides = [1, 1, 1]} : vector<18x16x64xf32> to vector<16x16x64xf32>
    %c7 = arith.constant 7 : index
    %c0_11 = arith.constant 0 : index
    %45 = vector.load %arg2[%c7, %c0_11] : memref<9x64xf32, #tpu.memory_space<vmem>>, vector<1x64xf32>
    %46 = vector.shape_cast %45 : vector<1x64xf32> to vector<64xf32>
    %47 = vector.shape_cast %46 : vector<64xf32> to vector<1x1x64xf32>
    %48 = vector.broadcast %47 : vector<1x1x64xf32> to vector<16x16x64xf32>
    %49 = arith.mulf %44, %48 : vector<16x16x64xf32>
    %50 = arith.addf %43, %49 : vector<16x16x64xf32>
    %51 = vector.extract_strided_slice %5 {offsets = [0, 9, 0], sizes = [18, 16, 64], strides = [1, 1, 1]} : vector<18x32x64xf32> to vector<18x16x64xf32>
    %52 = vector.extract_strided_slice %51 {offsets = [0, 0, 0], sizes = [16, 16, 64], strides = [1, 1, 1]} : vector<18x16x64xf32> to vector<16x16x64xf32>
    %c2 = arith.constant 2 : index
    %c0_12 = arith.constant 0 : index
    %53 = vector.load %arg2[%c2, %c0_12] : memref<9x64xf32, #tpu.memory_space<vmem>>, vector<1x64xf32>
    %54 = vector.shape_cast %53 : vector<1x64xf32> to vector<64xf32>
    %55 = vector.shape_cast %54 : vector<64xf32> to vector<1x1x64xf32>
    %56 = vector.broadcast %55 : vector<1x1x64xf32> to vector<16x16x64xf32>
    %57 = arith.mulf %52, %56 : vector<16x16x64xf32>
    %58 = arith.addf %50, %57 : vector<16x16x64xf32>
    %59 = vector.extract_strided_slice %51 {offsets = [1, 0, 0], sizes = [16, 16, 64], strides = [1, 1, 1]} : vector<18x16x64xf32> to vector<16x16x64xf32>
    %c5 = arith.constant 5 : index
    %c0_13 = arith.constant 0 : index
    %60 = vector.load %arg2[%c5, %c0_13] : memref<9x64xf32, #tpu.memory_space<vmem>>, vector<1x64xf32>
    %61 = vector.shape_cast %60 : vector<1x64xf32> to vector<64xf32>
    %62 = vector.shape_cast %61 : vector<64xf32> to vector<1x1x64xf32>
    %63 = vector.broadcast %62 : vector<1x1x64xf32> to vector<16x16x64xf32>
    %64 = arith.mulf %59, %63 : vector<16x16x64xf32>
    %65 = arith.addf %58, %64 : vector<16x16x64xf32>
    %66 = vector.extract_strided_slice %51 {offsets = [2, 0, 0], sizes = [16, 16, 64], strides = [1, 1, 1]} : vector<18x16x64xf32> to vector<16x16x64xf32>
    %c8 = arith.constant 8 : index
    %c0_14 = arith.constant 0 : index
    %67 = vector.load %arg2[%c8, %c0_14] : memref<9x64xf32, #tpu.memory_space<vmem>>, vector<1x64xf32>
    %68 = vector.shape_cast %67 : vector<1x64xf32> to vector<64xf32>
    %69 = vector.shape_cast %68 : vector<64xf32> to vector<1x1x64xf32>
    %70 = vector.broadcast %69 : vector<1x1x64xf32> to vector<16x16x64xf32>
    %71 = arith.mulf %66, %70 : vector<16x16x64xf32>
    %72 = arith.addf %65, %71 : vector<16x16x64xf32>
    %c0_15 = arith.constant 0 : index
    %c0_16 = arith.constant 0 : index
    %73 = vector.load %arg3[%c0_15, %c0_16] : memref<1x64xf32, #tpu.memory_space<vmem>>, vector<1x64xf32>
    %74 = vector.shape_cast %73 : vector<1x64xf32> to vector<64xf32>
    %75 = vector.shape_cast %74 : vector<64xf32> to vector<1x1x64xf32>
    %76 = vector.broadcast %75 : vector<1x1x64xf32> to vector<16x16x64xf32>
    %77 = arith.addf %72, %76 : vector<16x16x64xf32>
    %cst_17 = arith.constant 0.000000e+00 : f32
    %78 = vector.broadcast %cst_17 : f32 to vector<3x16x64xf32>
    %cst_18 = arith.constant 0.000000e+00 : f32
    %79 = vector.broadcast %cst_18 : f32 to vector<22x8x64xf32>
    %80 = tpu.concatenate %78, %77, %78 in 0 : vector<3x16x64xf32>, vector<16x16x64xf32>, vector<3x16x64xf32> -> vector<22x16x64xf32>
    %81 = tpu.concatenate %79, %80, %79 in 1 : vector<22x8x64xf32>, vector<22x16x64xf32>, vector<22x8x64xf32> -> vector<22x32x64xf32>
    %cst_19 = arith.constant 0.000000e+00 : f32
    %82 = vector.broadcast %cst_19 : f32 to vector<16x16x64xf32>
    %83 = vector.extract_strided_slice %81 {offsets = [0, 5, 0], sizes = [22, 16, 64], strides = [1, 1, 1]} : vector<22x32x64xf32> to vector<22x16x64xf32>
    %84 = vector.extract_strided_slice %83 {offsets = [0, 0, 0], sizes = [16, 16, 64], strides = [1, 1, 1]} : vector<22x16x64xf32> to vector<16x16x64xf32>
    %c0_20 = arith.constant 0 : index
    %c0_21 = arith.constant 0 : index
    %85 = vector.load %arg4[%c0_20, %c0_21] : memref<49x64xf32, #tpu.memory_space<vmem>>, vector<1x64xf32>
    %86 = vector.shape_cast %85 : vector<1x64xf32> to vector<64xf32>
    %87 = vector.shape_cast %86 : vector<64xf32> to vector<1x1x64xf32>
    %88 = vector.broadcast %87 : vector<1x1x64xf32> to vector<16x16x64xf32>
    %89 = arith.mulf %84, %88 : vector<16x16x64xf32>
    %90 = arith.addf %82, %89 : vector<16x16x64xf32>
    %91 = vector.extract_strided_slice %83 {offsets = [1, 0, 0], sizes = [16, 16, 64], strides = [1, 1, 1]} : vector<22x16x64xf32> to vector<16x16x64xf32>
    %c7_22 = arith.constant 7 : index
    %c0_23 = arith.constant 0 : index
    %92 = vector.load %arg4[%c7_22, %c0_23] : memref<49x64xf32, #tpu.memory_space<vmem>>, vector<1x64xf32>
    %93 = vector.shape_cast %92 : vector<1x64xf32> to vector<64xf32>
    %94 = vector.shape_cast %93 : vector<64xf32> to vector<1x1x64xf32>
    %95 = vector.broadcast %94 : vector<1x1x64xf32> to vector<16x16x64xf32>
    %96 = arith.mulf %91, %95 : vector<16x16x64xf32>
    %97 = arith.addf %90, %96 : vector<16x16x64xf32>
    %98 = vector.extract_strided_slice %83 {offsets = [2, 0, 0], sizes = [16, 16, 64], strides = [1, 1, 1]} : vector<22x16x64xf32> to vector<16x16x64xf32>
    %c14 = arith.constant 14 : index
    %c0_24 = arith.constant 0 : index
    %99 = vector.load %arg4[%c14, %c0_24] : memref<49x64xf32, #tpu.memory_space<vmem>>, vector<1x64xf32>
    %100 = vector.shape_cast %99 : vector<1x64xf32> to vector<64xf32>
    %101 = vector.shape_cast %100 : vector<64xf32> to vector<1x1x64xf32>
    %102 = vector.broadcast %101 : vector<1x1x64xf32> to vector<16x16x64xf32>
    %103 = arith.mulf %98, %102 : vector<16x16x64xf32>
    %104 = arith.addf %97, %103 : vector<16x16x64xf32>
    %105 = vector.extract_strided_slice %83 {offsets = [3, 0, 0], sizes = [16, 16, 64], strides = [1, 1, 1]} : vector<22x16x64xf32> to vector<16x16x64xf32>
    %c21 = arith.constant 21 : index
    %c0_25 = arith.constant 0 : index
    %106 = vector.load %arg4[%c21, %c0_25] : memref<49x64xf32, #tpu.memory_space<vmem>>, vector<1x64xf32>
    %107 = vector.shape_cast %106 : vector<1x64xf32> to vector<64xf32>
    %108 = vector.shape_cast %107 : vector<64xf32> to vector<1x1x64xf32>
    %109 = vector.broadcast %108 : vector<1x1x64xf32> to vector<16x16x64xf32>
    %110 = arith.mulf %105, %109 : vector<16x16x64xf32>
    %111 = arith.addf %104, %110 : vector<16x16x64xf32>
    %112 = vector.extract_strided_slice %83 {offsets = [4, 0, 0], sizes = [16, 16, 64], strides = [1, 1, 1]} : vector<22x16x64xf32> to vector<16x16x64xf32>
    %c28 = arith.constant 28 : index
    %c0_26 = arith.constant 0 : index
    %113 = vector.load %arg4[%c28, %c0_26] : memref<49x64xf32, #tpu.memory_space<vmem>>, vector<1x64xf32>
    %114 = vector.shape_cast %113 : vector<1x64xf32> to vector<64xf32>
    %115 = vector.shape_cast %114 : vector<64xf32> to vector<1x1x64xf32>
    %116 = vector.broadcast %115 : vector<1x1x64xf32> to vector<16x16x64xf32>
    %117 = arith.mulf %112, %116 : vector<16x16x64xf32>
    %118 = arith.addf %111, %117 : vector<16x16x64xf32>
    %119 = vector.extract_strided_slice %83 {offsets = [5, 0, 0], sizes = [16, 16, 64], strides = [1, 1, 1]} : vector<22x16x64xf32> to vector<16x16x64xf32>
    %c35 = arith.constant 35 : index
    %c0_27 = arith.constant 0 : index
    %120 = vector.load %arg4[%c35, %c0_27] : memref<49x64xf32, #tpu.memory_space<vmem>>, vector<1x64xf32>
    %121 = vector.shape_cast %120 : vector<1x64xf32> to vector<64xf32>
    %122 = vector.shape_cast %121 : vector<64xf32> to vector<1x1x64xf32>
    %123 = vector.broadcast %122 : vector<1x1x64xf32> to vector<16x16x64xf32>
    %124 = arith.mulf %119, %123 : vector<16x16x64xf32>
    %125 = arith.addf %118, %124 : vector<16x16x64xf32>
    %126 = vector.extract_strided_slice %83 {offsets = [6, 0, 0], sizes = [16, 16, 64], strides = [1, 1, 1]} : vector<22x16x64xf32> to vector<16x16x64xf32>
    %c42 = arith.constant 42 : index
    %c0_28 = arith.constant 0 : index
    %127 = vector.load %arg4[%c42, %c0_28] : memref<49x64xf32, #tpu.memory_space<vmem>>, vector<1x64xf32>
    %128 = vector.shape_cast %127 : vector<1x64xf32> to vector<64xf32>
    %129 = vector.shape_cast %128 : vector<64xf32> to vector<1x1x64xf32>
    %130 = vector.broadcast %129 : vector<1x1x64xf32> to vector<16x16x64xf32>
    %131 = arith.mulf %126, %130 : vector<16x16x64xf32>
    %132 = arith.addf %125, %131 : vector<16x16x64xf32>
    %133 = vector.extract_strided_slice %81 {offsets = [0, 6, 0], sizes = [22, 16, 64], strides = [1, 1, 1]} : vector<22x32x64xf32> to vector<22x16x64xf32>
    %134 = vector.extract_strided_slice %133 {offsets = [0, 0, 0], sizes = [16, 16, 64], strides = [1, 1, 1]} : vector<22x16x64xf32> to vector<16x16x64xf32>
    %c1_29 = arith.constant 1 : index
    %c0_30 = arith.constant 0 : index
    %135 = vector.load %arg4[%c1_29, %c0_30] : memref<49x64xf32, #tpu.memory_space<vmem>>, vector<1x64xf32>
    %136 = vector.shape_cast %135 : vector<1x64xf32> to vector<64xf32>
    %137 = vector.shape_cast %136 : vector<64xf32> to vector<1x1x64xf32>
    %138 = vector.broadcast %137 : vector<1x1x64xf32> to vector<16x16x64xf32>
    %139 = arith.mulf %134, %138 : vector<16x16x64xf32>
    %140 = arith.addf %132, %139 : vector<16x16x64xf32>
    %141 = vector.extract_strided_slice %133 {offsets = [1, 0, 0], sizes = [16, 16, 64], strides = [1, 1, 1]} : vector<22x16x64xf32> to vector<16x16x64xf32>
    %c8_31 = arith.constant 8 : index
    %c0_32 = arith.constant 0 : index
    %142 = vector.load %arg4[%c8_31, %c0_32] : memref<49x64xf32, #tpu.memory_space<vmem>>, vector<1x64xf32>
    %143 = vector.shape_cast %142 : vector<1x64xf32> to vector<64xf32>
    %144 = vector.shape_cast %143 : vector<64xf32> to vector<1x1x64xf32>
    %145 = vector.broadcast %144 : vector<1x1x64xf32> to vector<16x16x64xf32>
    %146 = arith.mulf %141, %145 : vector<16x16x64xf32>
    %147 = arith.addf %140, %146 : vector<16x16x64xf32>
    %148 = vector.extract_strided_slice %133 {offsets = [2, 0, 0], sizes = [16, 16, 64], strides = [1, 1, 1]} : vector<22x16x64xf32> to vector<16x16x64xf32>
    %c15 = arith.constant 15 : index
    %c0_33 = arith.constant 0 : index
    %149 = vector.load %arg4[%c15, %c0_33] : memref<49x64xf32, #tpu.memory_space<vmem>>, vector<1x64xf32>
    %150 = vector.shape_cast %149 : vector<1x64xf32> to vector<64xf32>
    %151 = vector.shape_cast %150 : vector<64xf32> to vector<1x1x64xf32>
    %152 = vector.broadcast %151 : vector<1x1x64xf32> to vector<16x16x64xf32>
    %153 = arith.mulf %148, %152 : vector<16x16x64xf32>
    %154 = arith.addf %147, %153 : vector<16x16x64xf32>
    %155 = vector.extract_strided_slice %133 {offsets = [3, 0, 0], sizes = [16, 16, 64], strides = [1, 1, 1]} : vector<22x16x64xf32> to vector<16x16x64xf32>
    %c22 = arith.constant 22 : index
    %c0_34 = arith.constant 0 : index
    %156 = vector.load %arg4[%c22, %c0_34] : memref<49x64xf32, #tpu.memory_space<vmem>>, vector<1x64xf32>
    %157 = vector.shape_cast %156 : vector<1x64xf32> to vector<64xf32>
    %158 = vector.shape_cast %157 : vector<64xf32> to vector<1x1x64xf32>
    %159 = vector.broadcast %158 : vector<1x1x64xf32> to vector<16x16x64xf32>
    %160 = arith.mulf %155, %159 : vector<16x16x64xf32>
    %161 = arith.addf %154, %160 : vector<16x16x64xf32>
    %162 = vector.extract_strided_slice %133 {offsets = [4, 0, 0], sizes = [16, 16, 64], strides = [1, 1, 1]} : vector<22x16x64xf32> to vector<16x16x64xf32>
    %c29 = arith.constant 29 : index
    %c0_35 = arith.constant 0 : index
    %163 = vector.load %arg4[%c29, %c0_35] : memref<49x64xf32, #tpu.memory_space<vmem>>, vector<1x64xf32>
    %164 = vector.shape_cast %163 : vector<1x64xf32> to vector<64xf32>
    %165 = vector.shape_cast %164 : vector<64xf32> to vector<1x1x64xf32>
    %166 = vector.broadcast %165 : vector<1x1x64xf32> to vector<16x16x64xf32>
    %167 = arith.mulf %162, %166 : vector<16x16x64xf32>
    %168 = arith.addf %161, %167 : vector<16x16x64xf32>
    %169 = vector.extract_strided_slice %133 {offsets = [5, 0, 0], sizes = [16, 16, 64], strides = [1, 1, 1]} : vector<22x16x64xf32> to vector<16x16x64xf32>
    %c36 = arith.constant 36 : index
    %c0_36 = arith.constant 0 : index
    %170 = vector.load %arg4[%c36, %c0_36] : memref<49x64xf32, #tpu.memory_space<vmem>>, vector<1x64xf32>
    %171 = vector.shape_cast %170 : vector<1x64xf32> to vector<64xf32>
    %172 = vector.shape_cast %171 : vector<64xf32> to vector<1x1x64xf32>
    %173 = vector.broadcast %172 : vector<1x1x64xf32> to vector<16x16x64xf32>
    %174 = arith.mulf %169, %173 : vector<16x16x64xf32>
    %175 = arith.addf %168, %174 : vector<16x16x64xf32>
    %176 = vector.extract_strided_slice %133 {offsets = [6, 0, 0], sizes = [16, 16, 64], strides = [1, 1, 1]} : vector<22x16x64xf32> to vector<16x16x64xf32>
    %c43 = arith.constant 43 : index
    %c0_37 = arith.constant 0 : index
    %177 = vector.load %arg4[%c43, %c0_37] : memref<49x64xf32, #tpu.memory_space<vmem>>, vector<1x64xf32>
    %178 = vector.shape_cast %177 : vector<1x64xf32> to vector<64xf32>
    %179 = vector.shape_cast %178 : vector<64xf32> to vector<1x1x64xf32>
    %180 = vector.broadcast %179 : vector<1x1x64xf32> to vector<16x16x64xf32>
    %181 = arith.mulf %176, %180 : vector<16x16x64xf32>
    %182 = arith.addf %175, %181 : vector<16x16x64xf32>
    %183 = vector.extract_strided_slice %81 {offsets = [0, 7, 0], sizes = [22, 16, 64], strides = [1, 1, 1]} : vector<22x32x64xf32> to vector<22x16x64xf32>
    %184 = vector.extract_strided_slice %183 {offsets = [0, 0, 0], sizes = [16, 16, 64], strides = [1, 1, 1]} : vector<22x16x64xf32> to vector<16x16x64xf32>
    %c2_38 = arith.constant 2 : index
    %c0_39 = arith.constant 0 : index
    %185 = vector.load %arg4[%c2_38, %c0_39] : memref<49x64xf32, #tpu.memory_space<vmem>>, vector<1x64xf32>
    %186 = vector.shape_cast %185 : vector<1x64xf32> to vector<64xf32>
    %187 = vector.shape_cast %186 : vector<64xf32> to vector<1x1x64xf32>
    %188 = vector.broadcast %187 : vector<1x1x64xf32> to vector<16x16x64xf32>
    %189 = arith.mulf %184, %188 : vector<16x16x64xf32>
    %190 = arith.addf %182, %189 : vector<16x16x64xf32>
    %191 = vector.extract_strided_slice %183 {offsets = [1, 0, 0], sizes = [16, 16, 64], strides = [1, 1, 1]} : vector<22x16x64xf32> to vector<16x16x64xf32>
    %c9 = arith.constant 9 : index
    %c0_40 = arith.constant 0 : index
    %192 = vector.load %arg4[%c9, %c0_40] : memref<49x64xf32, #tpu.memory_space<vmem>>, vector<1x64xf32>
    %193 = vector.shape_cast %192 : vector<1x64xf32> to vector<64xf32>
    %194 = vector.shape_cast %193 : vector<64xf32> to vector<1x1x64xf32>
    %195 = vector.broadcast %194 : vector<1x1x64xf32> to vector<16x16x64xf32>
    %196 = arith.mulf %191, %195 : vector<16x16x64xf32>
    %197 = arith.addf %190, %196 : vector<16x16x64xf32>
    %198 = vector.extract_strided_slice %183 {offsets = [2, 0, 0], sizes = [16, 16, 64], strides = [1, 1, 1]} : vector<22x16x64xf32> to vector<16x16x64xf32>
    %c16 = arith.constant 16 : index
    %c0_41 = arith.constant 0 : index
    %199 = vector.load %arg4[%c16, %c0_41] : memref<49x64xf32, #tpu.memory_space<vmem>>, vector<1x64xf32>
    %200 = vector.shape_cast %199 : vector<1x64xf32> to vector<64xf32>
    %201 = vector.shape_cast %200 : vector<64xf32> to vector<1x1x64xf32>
    %202 = vector.broadcast %201 : vector<1x1x64xf32> to vector<16x16x64xf32>
    %203 = arith.mulf %198, %202 : vector<16x16x64xf32>
    %204 = arith.addf %197, %203 : vector<16x16x64xf32>
    %205 = vector.extract_strided_slice %183 {offsets = [3, 0, 0], sizes = [16, 16, 64], strides = [1, 1, 1]} : vector<22x16x64xf32> to vector<16x16x64xf32>
    %c23 = arith.constant 23 : index
    %c0_42 = arith.constant 0 : index
    %206 = vector.load %arg4[%c23, %c0_42] : memref<49x64xf32, #tpu.memory_space<vmem>>, vector<1x64xf32>
    %207 = vector.shape_cast %206 : vector<1x64xf32> to vector<64xf32>
    %208 = vector.shape_cast %207 : vector<64xf32> to vector<1x1x64xf32>
    %209 = vector.broadcast %208 : vector<1x1x64xf32> to vector<16x16x64xf32>
    %210 = arith.mulf %205, %209 : vector<16x16x64xf32>
    %211 = arith.addf %204, %210 : vector<16x16x64xf32>
    %212 = vector.extract_strided_slice %183 {offsets = [4, 0, 0], sizes = [16, 16, 64], strides = [1, 1, 1]} : vector<22x16x64xf32> to vector<16x16x64xf32>
    %c30 = arith.constant 30 : index
    %c0_43 = arith.constant 0 : index
    %213 = vector.load %arg4[%c30, %c0_43] : memref<49x64xf32, #tpu.memory_space<vmem>>, vector<1x64xf32>
    %214 = vector.shape_cast %213 : vector<1x64xf32> to vector<64xf32>
    %215 = vector.shape_cast %214 : vector<64xf32> to vector<1x1x64xf32>
    %216 = vector.broadcast %215 : vector<1x1x64xf32> to vector<16x16x64xf32>
    %217 = arith.mulf %212, %216 : vector<16x16x64xf32>
    %218 = arith.addf %211, %217 : vector<16x16x64xf32>
    %219 = vector.extract_strided_slice %183 {offsets = [5, 0, 0], sizes = [16, 16, 64], strides = [1, 1, 1]} : vector<22x16x64xf32> to vector<16x16x64xf32>
    %c37 = arith.constant 37 : index
    %c0_44 = arith.constant 0 : index
    %220 = vector.load %arg4[%c37, %c0_44] : memref<49x64xf32, #tpu.memory_space<vmem>>, vector<1x64xf32>
    %221 = vector.shape_cast %220 : vector<1x64xf32> to vector<64xf32>
    %222 = vector.shape_cast %221 : vector<64xf32> to vector<1x1x64xf32>
    %223 = vector.broadcast %222 : vector<1x1x64xf32> to vector<16x16x64xf32>
    %224 = arith.mulf %219, %223 : vector<16x16x64xf32>
    %225 = arith.addf %218, %224 : vector<16x16x64xf32>
    %226 = vector.extract_strided_slice %183 {offsets = [6, 0, 0], sizes = [16, 16, 64], strides = [1, 1, 1]} : vector<22x16x64xf32> to vector<16x16x64xf32>
    %c44 = arith.constant 44 : index
    %c0_45 = arith.constant 0 : index
    %227 = vector.load %arg4[%c44, %c0_45] : memref<49x64xf32, #tpu.memory_space<vmem>>, vector<1x64xf32>
    %228 = vector.shape_cast %227 : vector<1x64xf32> to vector<64xf32>
    %229 = vector.shape_cast %228 : vector<64xf32> to vector<1x1x64xf32>
    %230 = vector.broadcast %229 : vector<1x1x64xf32> to vector<16x16x64xf32>
    %231 = arith.mulf %226, %230 : vector<16x16x64xf32>
    %232 = arith.addf %225, %231 : vector<16x16x64xf32>
    %233 = vector.extract_strided_slice %81 {offsets = [0, 8, 0], sizes = [22, 16, 64], strides = [1, 1, 1]} : vector<22x32x64xf32> to vector<22x16x64xf32>
    %234 = vector.extract_strided_slice %233 {offsets = [0, 0, 0], sizes = [16, 16, 64], strides = [1, 1, 1]} : vector<22x16x64xf32> to vector<16x16x64xf32>
    %c3_46 = arith.constant 3 : index
    %c0_47 = arith.constant 0 : index
    %235 = vector.load %arg4[%c3_46, %c0_47] : memref<49x64xf32, #tpu.memory_space<vmem>>, vector<1x64xf32>
    %236 = vector.shape_cast %235 : vector<1x64xf32> to vector<64xf32>
    %237 = vector.shape_cast %236 : vector<64xf32> to vector<1x1x64xf32>
    %238 = vector.broadcast %237 : vector<1x1x64xf32> to vector<16x16x64xf32>
    %239 = arith.mulf %234, %238 : vector<16x16x64xf32>
    %240 = arith.addf %232, %239 : vector<16x16x64xf32>
    %241 = vector.extract_strided_slice %233 {offsets = [1, 0, 0], sizes = [16, 16, 64], strides = [1, 1, 1]} : vector<22x16x64xf32> to vector<16x16x64xf32>
    %c10 = arith.constant 10 : index
    %c0_48 = arith.constant 0 : index
    %242 = vector.load %arg4[%c10, %c0_48] : memref<49x64xf32, #tpu.memory_space<vmem>>, vector<1x64xf32>
    %243 = vector.shape_cast %242 : vector<1x64xf32> to vector<64xf32>
    %244 = vector.shape_cast %243 : vector<64xf32> to vector<1x1x64xf32>
    %245 = vector.broadcast %244 : vector<1x1x64xf32> to vector<16x16x64xf32>
    %246 = arith.mulf %241, %245 : vector<16x16x64xf32>
    %247 = arith.addf %240, %246 : vector<16x16x64xf32>
    %248 = vector.extract_strided_slice %233 {offsets = [2, 0, 0], sizes = [16, 16, 64], strides = [1, 1, 1]} : vector<22x16x64xf32> to vector<16x16x64xf32>
    %c17 = arith.constant 17 : index
    %c0_49 = arith.constant 0 : index
    %249 = vector.load %arg4[%c17, %c0_49] : memref<49x64xf32, #tpu.memory_space<vmem>>, vector<1x64xf32>
    %250 = vector.shape_cast %249 : vector<1x64xf32> to vector<64xf32>
    %251 = vector.shape_cast %250 : vector<64xf32> to vector<1x1x64xf32>
    %252 = vector.broadcast %251 : vector<1x1x64xf32> to vector<16x16x64xf32>
    %253 = arith.mulf %248, %252 : vector<16x16x64xf32>
    %254 = arith.addf %247, %253 : vector<16x16x64xf32>
    %255 = vector.extract_strided_slice %233 {offsets = [3, 0, 0], sizes = [16, 16, 64], strides = [1, 1, 1]} : vector<22x16x64xf32> to vector<16x16x64xf32>
    %c24 = arith.constant 24 : index
    %c0_50 = arith.constant 0 : index
    %256 = vector.load %arg4[%c24, %c0_50] : memref<49x64xf32, #tpu.memory_space<vmem>>, vector<1x64xf32>
    %257 = vector.shape_cast %256 : vector<1x64xf32> to vector<64xf32>
    %258 = vector.shape_cast %257 : vector<64xf32> to vector<1x1x64xf32>
    %259 = vector.broadcast %258 : vector<1x1x64xf32> to vector<16x16x64xf32>
    %260 = arith.mulf %255, %259 : vector<16x16x64xf32>
    %261 = arith.addf %254, %260 : vector<16x16x64xf32>
    %262 = vector.extract_strided_slice %233 {offsets = [4, 0, 0], sizes = [16, 16, 64], strides = [1, 1, 1]} : vector<22x16x64xf32> to vector<16x16x64xf32>
    %c31 = arith.constant 31 : index
    %c0_51 = arith.constant 0 : index
    %263 = vector.load %arg4[%c31, %c0_51] : memref<49x64xf32, #tpu.memory_space<vmem>>, vector<1x64xf32>
    %264 = vector.shape_cast %263 : vector<1x64xf32> to vector<64xf32>
    %265 = vector.shape_cast %264 : vector<64xf32> to vector<1x1x64xf32>
    %266 = vector.broadcast %265 : vector<1x1x64xf32> to vector<16x16x64xf32>
    %267 = arith.mulf %262, %266 : vector<16x16x64xf32>
    %268 = arith.addf %261, %267 : vector<16x16x64xf32>
    %269 = vector.extract_strided_slice %233 {offsets = [5, 0, 0], sizes = [16, 16, 64], strides = [1, 1, 1]} : vector<22x16x64xf32> to vector<16x16x64xf32>
    %c38 = arith.constant 38 : index
    %c0_52 = arith.constant 0 : index
    %270 = vector.load %arg4[%c38, %c0_52] : memref<49x64xf32, #tpu.memory_space<vmem>>, vector<1x64xf32>
    %271 = vector.shape_cast %270 : vector<1x64xf32> to vector<64xf32>
    %272 = vector.shape_cast %271 : vector<64xf32> to vector<1x1x64xf32>
    %273 = vector.broadcast %272 : vector<1x1x64xf32> to vector<16x16x64xf32>
    %274 = arith.mulf %269, %273 : vector<16x16x64xf32>
    %275 = arith.addf %268, %274 : vector<16x16x64xf32>
    %276 = vector.extract_strided_slice %233 {offsets = [6, 0, 0], sizes = [16, 16, 64], strides = [1, 1, 1]} : vector<22x16x64xf32> to vector<16x16x64xf32>
    %c45 = arith.constant 45 : index
    %c0_53 = arith.constant 0 : index
    %277 = vector.load %arg4[%c45, %c0_53] : memref<49x64xf32, #tpu.memory_space<vmem>>, vector<1x64xf32>
    %278 = vector.shape_cast %277 : vector<1x64xf32> to vector<64xf32>
    %279 = vector.shape_cast %278 : vector<64xf32> to vector<1x1x64xf32>
    %280 = vector.broadcast %279 : vector<1x1x64xf32> to vector<16x16x64xf32>
    %281 = arith.mulf %276, %280 : vector<16x16x64xf32>
    %282 = arith.addf %275, %281 : vector<16x16x64xf32>
    %283 = vector.extract_strided_slice %81 {offsets = [0, 9, 0], sizes = [22, 16, 64], strides = [1, 1, 1]} : vector<22x32x64xf32> to vector<22x16x64xf32>
    %284 = vector.extract_strided_slice %283 {offsets = [0, 0, 0], sizes = [16, 16, 64], strides = [1, 1, 1]} : vector<22x16x64xf32> to vector<16x16x64xf32>
    %c4_54 = arith.constant 4 : index
    %c0_55 = arith.constant 0 : index
    %285 = vector.load %arg4[%c4_54, %c0_55] : memref<49x64xf32, #tpu.memory_space<vmem>>, vector<1x64xf32>
    %286 = vector.shape_cast %285 : vector<1x64xf32> to vector<64xf32>
    %287 = vector.shape_cast %286 : vector<64xf32> to vector<1x1x64xf32>
    %288 = vector.broadcast %287 : vector<1x1x64xf32> to vector<16x16x64xf32>
    %289 = arith.mulf %284, %288 : vector<16x16x64xf32>
    %290 = arith.addf %282, %289 : vector<16x16x64xf32>
    %291 = vector.extract_strided_slice %283 {offsets = [1, 0, 0], sizes = [16, 16, 64], strides = [1, 1, 1]} : vector<22x16x64xf32> to vector<16x16x64xf32>
    %c11 = arith.constant 11 : index
    %c0_56 = arith.constant 0 : index
    %292 = vector.load %arg4[%c11, %c0_56] : memref<49x64xf32, #tpu.memory_space<vmem>>, vector<1x64xf32>
    %293 = vector.shape_cast %292 : vector<1x64xf32> to vector<64xf32>
    %294 = vector.shape_cast %293 : vector<64xf32> to vector<1x1x64xf32>
    %295 = vector.broadcast %294 : vector<1x1x64xf32> to vector<16x16x64xf32>
    %296 = arith.mulf %291, %295 : vector<16x16x64xf32>
    %297 = arith.addf %290, %296 : vector<16x16x64xf32>
    %298 = vector.extract_strided_slice %283 {offsets = [2, 0, 0], sizes = [16, 16, 64], strides = [1, 1, 1]} : vector<22x16x64xf32> to vector<16x16x64xf32>
    %c18 = arith.constant 18 : index
    %c0_57 = arith.constant 0 : index
    %299 = vector.load %arg4[%c18, %c0_57] : memref<49x64xf32, #tpu.memory_space<vmem>>, vector<1x64xf32>
    %300 = vector.shape_cast %299 : vector<1x64xf32> to vector<64xf32>
    %301 = vector.shape_cast %300 : vector<64xf32> to vector<1x1x64xf32>
    %302 = vector.broadcast %301 : vector<1x1x64xf32> to vector<16x16x64xf32>
    %303 = arith.mulf %298, %302 : vector<16x16x64xf32>
    %304 = arith.addf %297, %303 : vector<16x16x64xf32>
    %305 = vector.extract_strided_slice %283 {offsets = [3, 0, 0], sizes = [16, 16, 64], strides = [1, 1, 1]} : vector<22x16x64xf32> to vector<16x16x64xf32>
    %c25 = arith.constant 25 : index
    %c0_58 = arith.constant 0 : index
    %306 = vector.load %arg4[%c25, %c0_58] : memref<49x64xf32, #tpu.memory_space<vmem>>, vector<1x64xf32>
    %307 = vector.shape_cast %306 : vector<1x64xf32> to vector<64xf32>
    %308 = vector.shape_cast %307 : vector<64xf32> to vector<1x1x64xf32>
    %309 = vector.broadcast %308 : vector<1x1x64xf32> to vector<16x16x64xf32>
    %310 = arith.mulf %305, %309 : vector<16x16x64xf32>
    %311 = arith.addf %304, %310 : vector<16x16x64xf32>
    %312 = vector.extract_strided_slice %283 {offsets = [4, 0, 0], sizes = [16, 16, 64], strides = [1, 1, 1]} : vector<22x16x64xf32> to vector<16x16x64xf32>
    %c32 = arith.constant 32 : index
    %c0_59 = arith.constant 0 : index
    %313 = vector.load %arg4[%c32, %c0_59] : memref<49x64xf32, #tpu.memory_space<vmem>>, vector<1x64xf32>
    %314 = vector.shape_cast %313 : vector<1x64xf32> to vector<64xf32>
    %315 = vector.shape_cast %314 : vector<64xf32> to vector<1x1x64xf32>
    %316 = vector.broadcast %315 : vector<1x1x64xf32> to vector<16x16x64xf32>
    %317 = arith.mulf %312, %316 : vector<16x16x64xf32>
    %318 = arith.addf %311, %317 : vector<16x16x64xf32>
    %319 = vector.extract_strided_slice %283 {offsets = [5, 0, 0], sizes = [16, 16, 64], strides = [1, 1, 1]} : vector<22x16x64xf32> to vector<16x16x64xf32>
    %c39 = arith.constant 39 : index
    %c0_60 = arith.constant 0 : index
    %320 = vector.load %arg4[%c39, %c0_60] : memref<49x64xf32, #tpu.memory_space<vmem>>, vector<1x64xf32>
    %321 = vector.shape_cast %320 : vector<1x64xf32> to vector<64xf32>
    %322 = vector.shape_cast %321 : vector<64xf32> to vector<1x1x64xf32>
    %323 = vector.broadcast %322 : vector<1x1x64xf32> to vector<16x16x64xf32>
    %324 = arith.mulf %319, %323 : vector<16x16x64xf32>
    %325 = arith.addf %318, %324 : vector<16x16x64xf32>
    %326 = vector.extract_strided_slice %283 {offsets = [6, 0, 0], sizes = [16, 16, 64], strides = [1, 1, 1]} : vector<22x16x64xf32> to vector<16x16x64xf32>
    %c46 = arith.constant 46 : index
    %c0_61 = arith.constant 0 : index
    %327 = vector.load %arg4[%c46, %c0_61] : memref<49x64xf32, #tpu.memory_space<vmem>>, vector<1x64xf32>
    %328 = vector.shape_cast %327 : vector<1x64xf32> to vector<64xf32>
    %329 = vector.shape_cast %328 : vector<64xf32> to vector<1x1x64xf32>
    %330 = vector.broadcast %329 : vector<1x1x64xf32> to vector<16x16x64xf32>
    %331 = arith.mulf %326, %330 : vector<16x16x64xf32>
    %332 = arith.addf %325, %331 : vector<16x16x64xf32>
    %333 = vector.extract_strided_slice %81 {offsets = [0, 10, 0], sizes = [22, 16, 64], strides = [1, 1, 1]} : vector<22x32x64xf32> to vector<22x16x64xf32>
    %334 = vector.extract_strided_slice %333 {offsets = [0, 0, 0], sizes = [16, 16, 64], strides = [1, 1, 1]} : vector<22x16x64xf32> to vector<16x16x64xf32>
    %c5_62 = arith.constant 5 : index
    %c0_63 = arith.constant 0 : index
    %335 = vector.load %arg4[%c5_62, %c0_63] : memref<49x64xf32, #tpu.memory_space<vmem>>, vector<1x64xf32>
    %336 = vector.shape_cast %335 : vector<1x64xf32> to vector<64xf32>
    %337 = vector.shape_cast %336 : vector<64xf32> to vector<1x1x64xf32>
    %338 = vector.broadcast %337 : vector<1x1x64xf32> to vector<16x16x64xf32>
    %339 = arith.mulf %334, %338 : vector<16x16x64xf32>
    %340 = arith.addf %332, %339 : vector<16x16x64xf32>
    %341 = vector.extract_strided_slice %333 {offsets = [1, 0, 0], sizes = [16, 16, 64], strides = [1, 1, 1]} : vector<22x16x64xf32> to vector<16x16x64xf32>
    %c12 = arith.constant 12 : index
    %c0_64 = arith.constant 0 : index
    %342 = vector.load %arg4[%c12, %c0_64] : memref<49x64xf32, #tpu.memory_space<vmem>>, vector<1x64xf32>
    %343 = vector.shape_cast %342 : vector<1x64xf32> to vector<64xf32>
    %344 = vector.shape_cast %343 : vector<64xf32> to vector<1x1x64xf32>
    %345 = vector.broadcast %344 : vector<1x1x64xf32> to vector<16x16x64xf32>
    %346 = arith.mulf %341, %345 : vector<16x16x64xf32>
    %347 = arith.addf %340, %346 : vector<16x16x64xf32>
    %348 = vector.extract_strided_slice %333 {offsets = [2, 0, 0], sizes = [16, 16, 64], strides = [1, 1, 1]} : vector<22x16x64xf32> to vector<16x16x64xf32>
    %c19 = arith.constant 19 : index
    %c0_65 = arith.constant 0 : index
    %349 = vector.load %arg4[%c19, %c0_65] : memref<49x64xf32, #tpu.memory_space<vmem>>, vector<1x64xf32>
    %350 = vector.shape_cast %349 : vector<1x64xf32> to vector<64xf32>
    %351 = vector.shape_cast %350 : vector<64xf32> to vector<1x1x64xf32>
    %352 = vector.broadcast %351 : vector<1x1x64xf32> to vector<16x16x64xf32>
    %353 = arith.mulf %348, %352 : vector<16x16x64xf32>
    %354 = arith.addf %347, %353 : vector<16x16x64xf32>
    %355 = vector.extract_strided_slice %333 {offsets = [3, 0, 0], sizes = [16, 16, 64], strides = [1, 1, 1]} : vector<22x16x64xf32> to vector<16x16x64xf32>
    %c26 = arith.constant 26 : index
    %c0_66 = arith.constant 0 : index
    %356 = vector.load %arg4[%c26, %c0_66] : memref<49x64xf32, #tpu.memory_space<vmem>>, vector<1x64xf32>
    %357 = vector.shape_cast %356 : vector<1x64xf32> to vector<64xf32>
    %358 = vector.shape_cast %357 : vector<64xf32> to vector<1x1x64xf32>
    %359 = vector.broadcast %358 : vector<1x1x64xf32> to vector<16x16x64xf32>
    %360 = arith.mulf %355, %359 : vector<16x16x64xf32>
    %361 = arith.addf %354, %360 : vector<16x16x64xf32>
    %362 = vector.extract_strided_slice %333 {offsets = [4, 0, 0], sizes = [16, 16, 64], strides = [1, 1, 1]} : vector<22x16x64xf32> to vector<16x16x64xf32>
    %c33 = arith.constant 33 : index
    %c0_67 = arith.constant 0 : index
    %363 = vector.load %arg4[%c33, %c0_67] : memref<49x64xf32, #tpu.memory_space<vmem>>, vector<1x64xf32>
    %364 = vector.shape_cast %363 : vector<1x64xf32> to vector<64xf32>
    %365 = vector.shape_cast %364 : vector<64xf32> to vector<1x1x64xf32>
    %366 = vector.broadcast %365 : vector<1x1x64xf32> to vector<16x16x64xf32>
    %367 = arith.mulf %362, %366 : vector<16x16x64xf32>
    %368 = arith.addf %361, %367 : vector<16x16x64xf32>
    %369 = vector.extract_strided_slice %333 {offsets = [5, 0, 0], sizes = [16, 16, 64], strides = [1, 1, 1]} : vector<22x16x64xf32> to vector<16x16x64xf32>
    %c40 = arith.constant 40 : index
    %c0_68 = arith.constant 0 : index
    %370 = vector.load %arg4[%c40, %c0_68] : memref<49x64xf32, #tpu.memory_space<vmem>>, vector<1x64xf32>
    %371 = vector.shape_cast %370 : vector<1x64xf32> to vector<64xf32>
    %372 = vector.shape_cast %371 : vector<64xf32> to vector<1x1x64xf32>
    %373 = vector.broadcast %372 : vector<1x1x64xf32> to vector<16x16x64xf32>
    %374 = arith.mulf %369, %373 : vector<16x16x64xf32>
    %375 = arith.addf %368, %374 : vector<16x16x64xf32>
    %376 = vector.extract_strided_slice %333 {offsets = [6, 0, 0], sizes = [16, 16, 64], strides = [1, 1, 1]} : vector<22x16x64xf32> to vector<16x16x64xf32>
    %c47 = arith.constant 47 : index
    %c0_69 = arith.constant 0 : index
    %377 = vector.load %arg4[%c47, %c0_69] : memref<49x64xf32, #tpu.memory_space<vmem>>, vector<1x64xf32>
    %378 = vector.shape_cast %377 : vector<1x64xf32> to vector<64xf32>
    %379 = vector.shape_cast %378 : vector<64xf32> to vector<1x1x64xf32>
    %380 = vector.broadcast %379 : vector<1x1x64xf32> to vector<16x16x64xf32>
    %381 = arith.mulf %376, %380 : vector<16x16x64xf32>
    %382 = arith.addf %375, %381 : vector<16x16x64xf32>
    %383 = vector.extract_strided_slice %81 {offsets = [0, 11, 0], sizes = [22, 16, 64], strides = [1, 1, 1]} : vector<22x32x64xf32> to vector<22x16x64xf32>
    %384 = vector.extract_strided_slice %383 {offsets = [0, 0, 0], sizes = [16, 16, 64], strides = [1, 1, 1]} : vector<22x16x64xf32> to vector<16x16x64xf32>
    %c6_70 = arith.constant 6 : index
    %c0_71 = arith.constant 0 : index
    %385 = vector.load %arg4[%c6_70, %c0_71] : memref<49x64xf32, #tpu.memory_space<vmem>>, vector<1x64xf32>
    %386 = vector.shape_cast %385 : vector<1x64xf32> to vector<64xf32>
    %387 = vector.shape_cast %386 : vector<64xf32> to vector<1x1x64xf32>
    %388 = vector.broadcast %387 : vector<1x1x64xf32> to vector<16x16x64xf32>
    %389 = arith.mulf %384, %388 : vector<16x16x64xf32>
    %390 = arith.addf %382, %389 : vector<16x16x64xf32>
    %391 = vector.extract_strided_slice %383 {offsets = [1, 0, 0], sizes = [16, 16, 64], strides = [1, 1, 1]} : vector<22x16x64xf32> to vector<16x16x64xf32>
    %c13 = arith.constant 13 : index
    %c0_72 = arith.constant 0 : index
    %392 = vector.load %arg4[%c13, %c0_72] : memref<49x64xf32, #tpu.memory_space<vmem>>, vector<1x64xf32>
    %393 = vector.shape_cast %392 : vector<1x64xf32> to vector<64xf32>
    %394 = vector.shape_cast %393 : vector<64xf32> to vector<1x1x64xf32>
    %395 = vector.broadcast %394 : vector<1x1x64xf32> to vector<16x16x64xf32>
    %396 = arith.mulf %391, %395 : vector<16x16x64xf32>
    %397 = arith.addf %390, %396 : vector<16x16x64xf32>
    %398 = vector.extract_strided_slice %383 {offsets = [2, 0, 0], sizes = [16, 16, 64], strides = [1, 1, 1]} : vector<22x16x64xf32> to vector<16x16x64xf32>
    %c20 = arith.constant 20 : index
    %c0_73 = arith.constant 0 : index
    %399 = vector.load %arg4[%c20, %c0_73] : memref<49x64xf32, #tpu.memory_space<vmem>>, vector<1x64xf32>
    %400 = vector.shape_cast %399 : vector<1x64xf32> to vector<64xf32>
    %401 = vector.shape_cast %400 : vector<64xf32> to vector<1x1x64xf32>
    %402 = vector.broadcast %401 : vector<1x1x64xf32> to vector<16x16x64xf32>
    %403 = arith.mulf %398, %402 : vector<16x16x64xf32>
    %404 = arith.addf %397, %403 : vector<16x16x64xf32>
    %405 = vector.extract_strided_slice %383 {offsets = [3, 0, 0], sizes = [16, 16, 64], strides = [1, 1, 1]} : vector<22x16x64xf32> to vector<16x16x64xf32>
    %c27 = arith.constant 27 : index
    %c0_74 = arith.constant 0 : index
    %406 = vector.load %arg4[%c27, %c0_74] : memref<49x64xf32, #tpu.memory_space<vmem>>, vector<1x64xf32>
    %407 = vector.shape_cast %406 : vector<1x64xf32> to vector<64xf32>
    %408 = vector.shape_cast %407 : vector<64xf32> to vector<1x1x64xf32>
    %409 = vector.broadcast %408 : vector<1x1x64xf32> to vector<16x16x64xf32>
    %410 = arith.mulf %405, %409 : vector<16x16x64xf32>
    %411 = arith.addf %404, %410 : vector<16x16x64xf32>
    %412 = vector.extract_strided_slice %383 {offsets = [4, 0, 0], sizes = [16, 16, 64], strides = [1, 1, 1]} : vector<22x16x64xf32> to vector<16x16x64xf32>
    %c34 = arith.constant 34 : index
    %c0_75 = arith.constant 0 : index
    %413 = vector.load %arg4[%c34, %c0_75] : memref<49x64xf32, #tpu.memory_space<vmem>>, vector<1x64xf32>
    %414 = vector.shape_cast %413 : vector<1x64xf32> to vector<64xf32>
    %415 = vector.shape_cast %414 : vector<64xf32> to vector<1x1x64xf32>
    %416 = vector.broadcast %415 : vector<1x1x64xf32> to vector<16x16x64xf32>
    %417 = arith.mulf %412, %416 : vector<16x16x64xf32>
    %418 = arith.addf %411, %417 : vector<16x16x64xf32>
    %419 = vector.extract_strided_slice %383 {offsets = [5, 0, 0], sizes = [16, 16, 64], strides = [1, 1, 1]} : vector<22x16x64xf32> to vector<16x16x64xf32>
    %c41 = arith.constant 41 : index
    %c0_76 = arith.constant 0 : index
    %420 = vector.load %arg4[%c41, %c0_76] : memref<49x64xf32, #tpu.memory_space<vmem>>, vector<1x64xf32>
    %421 = vector.shape_cast %420 : vector<1x64xf32> to vector<64xf32>
    %422 = vector.shape_cast %421 : vector<64xf32> to vector<1x1x64xf32>
    %423 = vector.broadcast %422 : vector<1x1x64xf32> to vector<16x16x64xf32>
    %424 = arith.mulf %419, %423 : vector<16x16x64xf32>
    %425 = arith.addf %418, %424 : vector<16x16x64xf32>
    %426 = vector.extract_strided_slice %383 {offsets = [6, 0, 0], sizes = [16, 16, 64], strides = [1, 1, 1]} : vector<22x16x64xf32> to vector<16x16x64xf32>
    %c48 = arith.constant 48 : index
    %c0_77 = arith.constant 0 : index
    %427 = vector.load %arg4[%c48, %c0_77] : memref<49x64xf32, #tpu.memory_space<vmem>>, vector<1x64xf32>
    %428 = vector.shape_cast %427 : vector<1x64xf32> to vector<64xf32>
    %429 = vector.shape_cast %428 : vector<64xf32> to vector<1x1x64xf32>
    %430 = vector.broadcast %429 : vector<1x1x64xf32> to vector<16x16x64xf32>
    %431 = arith.mulf %426, %430 : vector<16x16x64xf32>
    %432 = arith.addf %425, %431 : vector<16x16x64xf32>
    %c0_78 = arith.constant 0 : index
    %c0_79 = arith.constant 0 : index
    %433 = vector.load %arg5[%c0_78, %c0_79] : memref<1x64xf32, #tpu.memory_space<vmem>>, vector<1x64xf32>
    %434 = vector.shape_cast %433 : vector<1x64xf32> to vector<64xf32>
    %435 = vector.shape_cast %434 : vector<64xf32> to vector<1x1x64xf32>
    %436 = vector.broadcast %435 : vector<1x1x64xf32> to vector<16x16x64xf32>
    %437 = arith.addf %432, %436 : vector<16x16x64xf32>
    %438 = vector.shape_cast %437 : vector<16x16x64xf32> to vector<256x64xf32>
    %439 = arith.truncf %438 : vector<256x64xf32> to vector<256x64xbf16>
    %c0_80 = arith.constant 0 : index
    %c0_81 = arith.constant 0 : index
    %440 = vector.load %arg6[%c0_80, %c0_81] : memref<64x256xbf16, #tpu.memory_space<vmem>>, vector<64x256xbf16>
    %cst_82 = arith.constant dense<0.000000e+00> : vector<256x256xf32>
    %441 = tpu.matmul %439, %440, %cst_82 {dimension_numbers = #tpu.dot_dimension_numbers<[1], [0], [0], [1], [0, 0, 1, 1], [], []>} : vector<256x64xbf16>, vector<64x256xbf16>, vector<256x256xf32> -> vector<256x256xf32>
    %c0_83 = arith.constant 0 : index
    %c0_84 = arith.constant 0 : index
    %442 = vector.load %arg7[%c0_83, %c0_84] : memref<1x256xf32, #tpu.memory_space<vmem>>, vector<1x256xf32>
    %443 = vector.shape_cast %442 : vector<1x256xf32> to vector<256xf32>
    %444 = vector.shape_cast %443 : vector<256xf32> to vector<1x256xf32>
    %445 = vector.broadcast %444 : vector<1x256xf32> to vector<256x256xf32>
    %446 = arith.addf %441, %445 : vector<256x256xf32>
    %cst_85 = arith.constant 5.000000e-01 : f32
    %447 = vector.broadcast %cst_85 : f32 to vector<256x256xf32>
    %448 = arith.mulf %447, %446 : vector<256x256xf32>
    %cst_86 = arith.constant 0.707106769 : f32
    %449 = vector.broadcast %cst_86 : f32 to vector<256x256xf32>
    %450 = arith.mulf %446, %449 : vector<256x256xf32>
    %451 = math.erf %450 : vector<256x256xf32>
    %cst_87 = arith.constant 1.000000e+00 : f32
    %452 = vector.broadcast %cst_87 : f32 to vector<256x256xf32>
    %453 = arith.addf %452, %451 : vector<256x256xf32>
    %454 = arith.mulf %448, %453 : vector<256x256xf32>
    %455 = arith.truncf %454 : vector<256x256xf32> to vector<256x256xbf16>
    %c0_88 = arith.constant 0 : index
    %c0_89 = arith.constant 0 : index
    %456 = vector.load %arg8[%c0_88, %c0_89] : memref<256x64xbf16, #tpu.memory_space<vmem>>, vector<256x64xbf16>
    %cst_90 = arith.constant dense<0.000000e+00> : vector<256x64xf32>
    %457 = tpu.matmul %455, %456, %cst_90 {dimension_numbers = #tpu.dot_dimension_numbers<[1], [0], [0], [1], [0, 0, 1, 1], [], []>} : vector<256x256xbf16>, vector<256x64xbf16>, vector<256x64xf32> -> vector<256x64xf32>
    %c0_91 = arith.constant 0 : index
    %c0_92 = arith.constant 0 : index
    %458 = vector.load %arg9[%c0_91, %c0_92] : memref<1x64xf32, #tpu.memory_space<vmem>>, vector<1x64xf32>
    %459 = vector.shape_cast %458 : vector<1x64xf32> to vector<64xf32>
    %460 = vector.shape_cast %459 : vector<64xf32> to vector<1x64xf32>
    %461 = vector.broadcast %460 : vector<1x64xf32> to vector<256x64xf32>
    %462 = arith.addf %457, %461 : vector<256x64xf32>
    %463 = vector.shape_cast %462 : vector<256x64xf32> to vector<16x16x64xf32>
    %464 = arith.addf %77, %463 : vector<16x16x64xf32>
    %c0_93 = arith.constant 0 : index
    %c0_94 = arith.constant 0 : index
    %c0_95 = arith.constant 0 : index
    %c0_96 = arith.constant 0 : index
    %465 = vector.load %arg10[%c0_93, %c0_94, %c0_95, %c0_96] : memref<1x16x16x64xf32, #tpu.memory_space<vmem>>, vector<1x16x16x64xf32>
    %466 = vector.shape_cast %465 : vector<1x16x16x64xf32> to vector<16x16x64xf32>
    %467 = vector.shape_cast %464 : vector<16x16x64xf32> to vector<1x16x16x64xf32>
    tpu.vector_store %arg10[%c0_93, %c0_94, %c0_95, %c0_96], %467 {strides = array<i32>} : memref<1x16x16x64xf32, #tpu.memory_space<vmem>>, vector<1x16x16x64xf32>,
    return
  }
  func.func @transform_0(%arg0: i32) -> (i32, i32, i32, i32) {
    %c0_i32 = arith.constant 0 : i32
    %c0_i32_0 = arith.constant 0 : i32
    %c0_i32_1 = arith.constant 0 : i32
    %c0_i32_2 = arith.constant 0 : i32
    return %arg0, %c0_i32, %c0_i32_0, %c0_i32_1 : i32, i32, i32, i32
  }
  func.func @transform_1(%arg0: i32) -> (i32, i32) {
    %c0_i32 = arith.constant 0 : i32
    %c0_i32_0 = arith.constant 0 : i32
    %c0_i32_1 = arith.constant 0 : i32
    return %c0_i32, %c0_i32_0 : i32, i32
  }
  func.func @transform_2(%arg0: i32) -> (i32, i32) {
    %c0_i32 = arith.constant 0 : i32
    %c0_i32_0 = arith.constant 0 : i32
    %c0_i32_1 = arith.constant 0 : i32
    return %c0_i32, %c0_i32_0 : i32, i32
  }
  func.func @transform_3(%arg0: i32) -> (i32, i32) {
    %c0_i32 = arith.constant 0 : i32
    %c0_i32_0 = arith.constant 0 : i32
    %c0_i32_1 = arith.constant 0 : i32
    return %c0_i32, %c0_i32_0 : i32, i32
  }
  func.func @transform_4(%arg0: i32) -> (i32, i32) {
    %c0_i32 = arith.constant 0 : i32
    %c0_i32_0 = arith.constant 0 : i32
    %c0_i32_1 = arith.constant 0 : i32
    return %c0_i32, %c0_i32_0 : i32, i32
  }
  func.func @transform_5(%arg0: i32) -> (i32, i32) {
    %c0_i32 = arith.constant 0 : i32
    %c0_i32_0 = arith.constant 0 : i32
    %c0_i32_1 = arith.constant 0 : i32
    return %c0_i32, %c0_i32_0 : i32, i32
  }
  func.func @transform_6(%arg0: i32) -> (i32, i32) {
    %c0_i32 = arith.constant 0 : i32
    %c0_i32_0 = arith.constant 0 : i32
    %c0_i32_1 = arith.constant 0 : i32
    return %c0_i32, %c0_i32_0 : i32, i32
  }
  func.func @transform_7(%arg0: i32) -> (i32, i32) {
    %c0_i32 = arith.constant 0 : i32
    %c0_i32_0 = arith.constant 0 : i32
    %c0_i32_1 = arith.constant 0 : i32
    return %c0_i32, %c0_i32_0 : i32, i32
  }
  func.func @transform_8(%arg0: i32) -> (i32, i32) {
    %c0_i32 = arith.constant 0 : i32
    %c0_i32_0 = arith.constant 0 : i32
    %c0_i32_1 = arith.constant 0 : i32
    return %c0_i32, %c0_i32_0 : i32, i32
  }
  func.func @transform_9(%arg0: i32) -> (i32, i32, i32, i32) {
    %c0_i32 = arith.constant 0 : i32
    %c0_i32_0 = arith.constant 0 : i32
    %c0_i32_1 = arith.constant 0 : i32
    %c0_i32_2 = arith.constant 0 : i32
    return %arg0, %c0_i32, %c0_i32_0, %c0_i32_1 : i32, i32, i32, i32
  }
}

</mosaic_0001>

<llo_original>
// kernel: tpu_custom_call.1
$region0: #{tpu_custom_call.1}
  #allocation0 [shape = 'u32[]', space=smem, size = 0x4, offset = 0x4, fixed_abs, tag = 'smem constant byte address 0x4 - core index']
  #allocation1 [shape = 'u32[144,128]{1,0:T(1,128)}', space=vmem, size = 0x12000, scoped, tag = 'internal scratch']
  %s0 = inlined_call_operand.hbm [shape: f32[2,16,128], index: 0, kind: input, shape index: {}]
  %s1 = inlined_call_operand.hbm [shape: f32[2,16,128], index: 1, kind: output, shape index: {}]
  %s2 = sld [smem:[#allocation0]]
  $region18: #{tpu_custom_call.1} parent=0
    _
  %s4 = ssub.s32 1, %s2
  %s5 = scalar_select 0, %s4, %s2
  $region1: #{tpu_custom_call.1} parent=0
    #allocation2 [shape = 'u8[16384]{0}', space=vmem, size = 0x4000, scoped, tag = 'input window, operand 0, single buffered']
    #allocation3 [shape = 's32[1]{0}', space=sflag, size = 0x4, scoped, tag = 'scoped memory for tpu_custom_call.1']
    #allocation4 [shape = 's32[1]{0}', space=sflag, size = 0x4, scoped, tag = 'scoped memory for tpu_custom_call.1']
    #allocation5 [shape = 'u8[16384]{0}', space=vmem, size = 0x4000, scoped, tag = 'output window, operand 0, single buffered']
    %6 = vsyncpa [#allocation3], 0
    %7 = vsyncpa [#allocation4], 0
    // Predicated region
    $region2: #{tpu_custom_call.1} parent=1 // pred_check
      _
    $region3: #{tpu_custom_call.1} parent=1 // pred_check_branch
      %9 = sbr.rel (0) target = $region5
    $region4: #{tpu_custom_call.1} parent=1 // pred_region
      %s11 = ssub.s32 512, 512
      %12 = vsyncadd [#allocation3], %s11
      %s13 = sshll.u32 [#allocation2], 4
      %s14 = int_to_ptr.vmem [resolvable:$true] %s13
      %19 = dma.hbm_to_vmem [thread:$0]  %s0, 512, %s14, [#allocation3], 128, 128, 8
    $region5: #{tpu_custom_call.1} parent=1 // pred_fallthru
      _
    // Predicated region
    $region6: #{tpu_custom_call.1} parent=1 // pred_check
      _
    $region7: #{tpu_custom_call.1} parent=1 // pred_check_branch
      %21 = sbr.rel (0) target = $region9
    $region8: #{tpu_custom_call.1} parent=1 // pred_region
      %22 = dma.done [#allocation3], 512
    $region9: #{tpu_custom_call.1} parent=1 // pred_fallthru
      _
    %v23 = vld [vmem:[#allocation2] sm:$0xff]
    %v24 = vld [vmem:[#allocation2 + $0x8] sm:$0xff]
    %v25 = vld [vmem:[#allocation2 + $0x10] sm:$0xff]
    %v26 = vld [vmem:[#allocation2 + $0x18] sm:$0xff]
    %v27 = vrot.slane %v23, 5
    %v28 = vrot.slane %v25, 5
    %v29 = vrot.slane %v24, 5
    %v30 = vrot.slane %v26, 5
    %v31 = vlaneseq
    %v32 = vshrl.u32 %v31, 7
    %vm33 = vcmp.lt.s32.totalorder %v32, 3
    %v34 = vsel %vm33, %v27, %v29
    %v35 = vsel %vm33, %v28, %v30
    %v36 = vsel %vm33, %v29, %v27
    %v37 = vsel %vm33, %v30, %v28
    %38 = vst [vmem:[#allocation5] sm:$0xff] %v36
    %39 = vst [vmem:[#allocation5 + $0x8] sm:$0xff] %v34
    %40 = vst [vmem:[#allocation5 + $0x10] sm:$0xff] %v37
    %41 = vst [vmem:[#allocation5 + $0x18] sm:$0xff] %v35
    // Predicated region
    $region10: #{tpu_custom_call.1} parent=1 // pred_check
      _
    $region11: #{tpu_custom_call.1} parent=1 // pred_check_branch
      %43 = sbr.rel (0) target = $region13
    $region12: #{tpu_custom_call.1} parent=1 // pred_region
      %s45 = ssub.s32 512, 512
      %46 = vsyncadd [#allocation4], %s45
      %s47 = sshll.u32 [#allocation5], 4
      %s48 = int_to_ptr.vmem [resolvable:$true] %s47
      %53 = dma.vmem_to_hbm [thread:$0]  %s48, 512, %s1, [#allocation4], 128, 128, 8
    $region13: #{tpu_custom_call.1} parent=1 // pred_fallthru
      _
    // Predicated region
    $region14: #{tpu_custom_call.1} parent=1 // pred_check
      _
    $region15: #{tpu_custom_call.1} parent=1 // pred_check_branch
      %55 = sbr.rel (0) target = $region17
    $region16: #{tpu_custom_call.1} parent=1 // pred_region
      %56 = dma.done [#allocation4], 512
    $region17: #{tpu_custom_call.1} parent=1 // pred_fallthru
      _
    %57 = vsyncpa [#allocation3], 1
    %58 = vsyncpa [#allocation4], 1

// kernel: tpu_custom_call.1
$region0: #{tpu_custom_call.1}
  #allocation0 [shape = 'u32[]', space=smem, size = 0x4, offset = 0x4, fixed_abs, tag = 'smem constant byte address 0x4 - core index']
  #allocation1 [shape = 'u32[144,128]{1,0:T(1,128)}', space=vmem, size = 0x12000, scoped, tag = 'internal scratch']
  %s0 = inlined_call_operand.hbm [shape: f32[2,16,16,64], index: 0, kind: input, shape index: {}]
  %s1 = inlined_call_operand.vmem [shape: f32[9,64], index: 1, kind: input, shape index: {}]
  %s2 = inlined_call_operand.vmem [shape: f32[1,64], index: 2, kind: input, shape index: {}]
  %s3 = inlined_call_operand.vmem [shape: f32[49,64], index: 3, kind: input, shape index: {}]
  %s4 = inlined_call_operand.vmem [shape: f32[1,64], index: 4, kind: input, shape index: {}]
  %s5 = inlined_call_operand.vmem [shape: bf16[64,256], index: 5, kind: input, shape index: {}]
  %s6 = inlined_call_operand.vmem [shape: f32[1,256], index: 6, kind: input, shape index: {}]
  %s7 = inlined_call_operand.vmem [shape: bf16[256,64], index: 7, kind: input, shape index: {}]
  %s8 = inlined_call_operand.vmem [shape: f32[1,64], index: 8, kind: input, shape index: {}]
  %s9 = inlined_call_operand.hbm [shape: f32[2,16,16,64], index: 9, kind: output, shape index: {}]
  %s10 = sld [smem:[#allocation0]]
  $region73: #{tpu_custom_call.1} parent=0
    _
  %s12 = ssub.s32 1, %s10
  %s13 = scalar_select 0, %s12, %s10
  $region1: #{tpu_custom_call.1} parent=0
    #allocation2 [shape = 'u8[262144]{0}', space=vmem, size = 0x40000, scoped, tag = 'input window, operand 0']
    #allocation3 [shape = 's32[2]{0}', space=sflag, size = 0x8, scoped, tag = 'scoped memory for tpu_custom_call.1']
    #allocation4 [shape = 's32[2]{0}', space=sflag, size = 0x8, scoped, tag = 'scoped memory for tpu_custom_call.1']
    #allocation5 [shape = 'u8[262144]{0}', space=vmem, size = 0x40000, scoped, tag = 'output window, operand 0']
    %14 = vsyncpa [#allocation3], 0
    %s15 = scalar_lea.sflag [#allocation3], 1
    %16 = vsyncpa %s15, 0
    %17 = vsyncpa [#allocation4], 0
    %s18 = scalar_lea.sflag [#allocation4], 1
    %19 = vsyncpa %s18, 0
    loop: start=0, step=1, limit=4
    $region2: #{tpu_custom_call.1} parent=1 // loop_pre_header
      _
    $region3: #{tpu_custom_call.1} parent=1 // loop_header
      %s21 = sphi 0, %s25
      %p22 = scmp.ge.s32.totalorder %s21, 4
      %s31 = sphi 0, %s33
      %s34 = sphi 0, %s31
      %s35 = sphi 0, %s34
      %s51 = sphi 0, %s35
      %s55 = sphi 0, %s55
      %s57 = sphi 0, %s55
      %s58 = sphi 0, %s57
      %s72 = sphi 0, %s58
      %s76 = sphi 0, %s76
      %s78 = sphi 0, %s76
      %s79 = sphi 0, %s78
      %s93 = sphi 0, %s79
      %s97 = sphi 0, %s97
      %s99 = sphi 0, %s97
      %s100 = sphi 0, %s99
      %s114 = sphi 0, %s100
      %s118 = sphi 0, %s118
      %s120 = sphi 0, %s118
      %s121 = sphi 0, %s120
      %s135 = sphi 0, %s121
      %s139 = sphi 0, %s139
      %s141 = sphi 0, %s139
      %s142 = sphi 0, %s141
      %s156 = sphi 0, %s142
      %s160 = sphi 0, %s160
      %s162 = sphi 0, %s160
      %s163 = sphi 0, %s162
      %s177 = sphi 0, %s163
      %s181 = sphi 0, %s181
      %s183 = sphi 0, %s181
      %s184 = sphi 0, %s183
      %s198 = sphi 0, %s184
      %s202 = sphi 0, %s202
      %s204 = sphi 0, %s202
      %s205 = sphi 0, %s204
      %s219 = sphi 0, %s205
      %s225 = sphi 0, %s227
      %s228 = sphi 0, %s225
      %s229 = sphi 0, %s228
      %s245 = sphi 0, %s229
    $region4: #{tpu_custom_call.1} parent=1 // loop_header_branch
      %24 = sbr.rel (%p22) target = $region8
    $region5: #{tpu_custom_call.1} parent=1 // loop_body
      %s26 = ssub.s32 %s21, 1
      %s27 = ssub.s32 %s21, 2
      %s28 = sadd.s32 %s21, 1
      %s29 = ssub.s32 %s21, %s28
      %p30 = scmp.eq.s32.totalorder %s29, 0
      %s32 = sadd.s32 %s31, 1
      %s33 = scalar_select %p30, %s31, %s32
      %p36 = pneg %p30
      %p37 = scmp.eq.s32.totalorder %s21, 1
      %p38 = por %p36, %p37
      %p39 = scmp.ne.s32.totalorder %s31, %s34
      %p40 = scmp.eq.s32.totalorder %s21, 0
      %p41 = por %p39, %p40
      %p42 = scmp.ne.s32.totalorder %s31, %s34
      %p43 = scmp.eq.s32.totalorder %s26, 1
      %p44 = por %p42, %p43
      %p45 = scmp.ne.s32.totalorder %s34, %s35
      %p46 = scmp.eq.s32.totalorder %s26, 0
      %p47 = por %p45, %p46
      %p48 = scmp.ne.s32.totalorder %s34, %s35
      %p49 = scmp.eq.s32.totalorder %s27, 1
      %p50 = por %p48, %p49
      %p52 = scmp.ne.s32.totalorder %s35, %s51
      %p53 = scmp.eq.s32.totalorder %s27, 0
      %p54 = por %p52, %p53
      %s56 = sadd.s32 %s55, 1
      %p59 = scmp.eq.s32.totalorder %s21, 1
      %p60 = scmp.ne.s32.totalorder %s55, %s57
      %p61 = scmp.eq.s32.totalorder %s21, 0
      %p62 = por %p60, %p61
      %p63 = scmp.ne.s32.totalorder %s55, %s57
      %p64 = scmp.eq.s32.totalorder %s26, 1
      %p65 = por %p63, %p64
      %p66 = scmp.ne.s32.totalorder %s57, %s58
      %p67 = scmp.eq.s32.totalorder %s26, 0
      %p68 = por %p66, %p67
      %p69 = scmp.ne.s32.totalorder %s57, %s58
      %p70 = scmp.eq.s32.totalorder %s27, 1
      %p71 = por %p69, %p70
      %p73 = scmp.ne.s32.totalorder %s58, %s72
      %p74 = scmp.eq.s32.totalorder %s27, 0
      %p75 = por %p73, %p74
      %s77 = sadd.s32 %s76, 1
      %p80 = scmp.eq.s32.totalorder %s21, 1
      %p81 = scmp.ne.s32.totalorder %s76, %s78
      %p82 = scmp.eq.s32.totalorder %s21, 0
      %p83 = por %p81, %p82
      %p84 = scmp.ne.s32.totalorder %s76, %s78
      %p85 = scmp.eq.s32.totalorder %s26, 1
      %p86 = por %p84, %p85
      %p87 = scmp.ne.s32.totalorder %s78, %s79
      %p88 = scmp.eq.s32.totalorder %s26, 0
      %p89 = por %p87, %p88
      %p90 = scmp.ne.s32.totalorder %s78, %s79
      %p91 = scmp.eq.s32.totalorder %s27, 1
      %p92 = por %p90, %p91
      %p94 = scmp.ne.s32.totalorder %s79, %s93
      %p95 = scmp.eq.s32.totalorder %s27, 0
      %p96 = por %p94, %p95
      %s98 = sadd.s32 %s97, 1
      %p101 = scmp.eq.s32.totalorder %s21, 1
      %p102 = scmp.ne.s32.totalorder %s97, %s99
      %p103 = scmp.eq.s32.totalorder %s21, 0
      %p104 = por %p102, %p103
      %p105 = scmp.ne.s32.totalorder %s97, %s99
      %p106 = scmp.eq.s32.totalorder %s26, 1
      %p107 = por %p105, %p106
      %p108 = scmp.ne.s32.totalorder %s99, %s100
      %p109 = scmp.eq.s32.totalorder %s26, 0
      %p110 = por %p108, %p109
      %p111 = scmp.ne.s32.totalorder %s99, %s100
      %p112 = scmp.eq.s32.totalorder %s27, 1
      %p113 = por %p111, %p112
      %p115 = scmp.ne.s32.totalorder %s100, %s114
      %p116 = scmp.eq.s32.totalorder %s27, 0
      %p117 = por %p115, %p116
      %s119 = sadd.s32 %s118, 1
      %p122 = scmp.eq.s32.totalorder %s21, 1
      %p123 = scmp.ne.s32.totalorder %s118, %s120
      %p124 = scmp.eq.s32.totalorder %s21, 0
      %p125 = por %p123, %p124
      %p126 = scmp.ne.s32.totalorder %s118, %s120
      %p127 = scmp.eq.s32.totalorder %s26, 1
      %p128 = por %p126, %p127
      %p129 = scmp.ne.s32.totalorder %s120, %s121
      %p130 = scmp.eq.s32.totalorder %s26, 0
      %p131 = por %p129, %p130
      %p132 = scmp.ne.s32.totalorder %s120, %s121
      %p133 = scmp.eq.s32.totalorder %s27, 1
      %p134 = por %p132, %p133
      %p136 = scmp.ne.s32.totalorder %s121, %s135
      %p137 = scmp.eq.s32.totalorder %s27, 0
      %p138 = por %p136, %p137
      %s140 = sadd.s32 %s139, 1
      %p143 = scmp.eq.s32.totalorder %s21, 1
      %p144 = scmp.ne.s32.totalorder %s139, %s141
      %p145 = scmp.eq.s32.totalorder %s21, 0
      %p146 = por %p144, %p145
      %p147 = scmp.ne.s32.totalorder %s139, %s141
      %p148 = scmp.eq.s32.totalorder %s26, 1
      %p149 = por %p147, %p148
      %p150 = scmp.ne.s32.totalorder %s141, %s142
      %p151 = scmp.eq.s32.totalorder %s26, 0
      %p152 = por %p150, %p151
      %p153 = scmp.ne.s32.totalorder %s141, %s142
      %p154 = scmp.eq.s32.totalorder %s27, 1
      %p155 = por %p153, %p154
      %p157 = scmp.ne.s32.totalorder %s142, %s156
      %p158 = scmp.eq.s32.totalorder %s27, 0
      %p159 = por %p157, %p158
      %s161 = sadd.s32 %s160, 1
      %p164 = scmp.eq.s32.totalorder %s21, 1
      %p165 = scmp.ne.s32.totalorder %s160, %s162
      %p166 = scmp.eq.s32.totalorder %s21, 0
      %p167 = por %p165, %p166
      %p168 = scmp.ne.s32.totalorder %s160, %s162
      %p169 = scmp.eq.s32.totalorder %s26, 1
      %p170 = por %p168, %p169
      %p171 = scmp.ne.s32.totalorder %s162, %s163
      %p172 = scmp.eq.s32.totalorder %s26, 0
      %p173 = por %p171, %p172
      %p174 = scmp.ne.s32.totalorder %s162, %s163
      %p175 = scmp.eq.s32.totalorder %s27, 1
      %p176 = por %p174, %p175
      %p178 = scmp.ne.s32.totalorder %s163, %s177
      %p179 = scmp.eq.s32.totalorder %s27, 0
      %p180 = por %p178, %p179
      %s182 = sadd.s32 %s181, 1
      %p185 = scmp.eq.s32.totalorder %s21, 1
      %p186 = scmp.ne.s32.totalorder %s181, %s183
      %p187 = scmp.eq.s32.totalorder %s21, 0
      %p188 = por %p186, %p187
      %p189 = scmp.ne.s32.totalorder %s181, %s183
      %p190 = scmp.eq.s32.totalorder %s26, 1
      %p191 = por %p189, %p190
      %p192 = scmp.ne.s32.totalorder %s183, %s184
      %p193 = scmp.eq.s32.totalorder %s26, 0
      %p194 = por %p192, %p193
      %p195 = scmp.ne.s32.totalorder %s183, %s184
      %p196 = scmp.eq.s32.totalorder %s27, 1
      %p197 = por %p195, %p196
      %p199 = scmp.ne.s32.totalorder %s184, %s198
      %p200 = scmp.eq.s32.totalorder %s27, 0
      %p201 = por %p199, %p200
      %s203 = sadd.s32 %s202, 1
      %p206 = scmp.eq.s32.totalorder %s21, 1
      %p207 = scmp.ne.s32.totalorder %s202, %s204
      %p208 = scmp.eq.s32.totalorder %s21, 0
      %p209 = por %p207, %p208
      %p210 = scmp.ne.s32.totalorder %s202, %s204
      %p211 = scmp.eq.s32.totalorder %s26, 1
      %p212 = por %p210, %p211
      %p213 = scmp.ne.s32.totalorder %s204, %s205
      %p214 = scmp.eq.s32.totalorder %s26, 0
      %p215 = por %p213, %p214
      %p216 = scmp.ne.s32.totalorder %s204, %s205
      %p217 = scmp.eq.s32.totalorder %s27, 1
      %p218 = por %p216, %p217
      %p220 = scmp.ne.s32.totalorder %s205, %s219
      %p221 = scmp.eq.s32.totalorder %s27, 0
      %p222 = por %p220, %p221
      %s223 = ssub.s32 %s21, %s28
      %p224 = scmp.eq.s32.totalorder %s223, 0
      %s226 = sadd.s32 %s225, 1
      %s227 = scalar_select %p224, %s225, %s226
      %p230 = pneg %p224
      %p231 = scmp.eq.s32.totalorder %s21, 1
      %p232 = por %p230, %p231
      %p233 = scmp.ne.s32.totalorder %s225, %s228
      %p234 = scmp.eq.s32.totalorder %s21, 0
      %p235 = por %p233, %p234
      %p236 = scmp.ne.s32.totalorder %s225, %s228
      %p237 = scmp.eq.s32.totalorder %s26, 1
      %p238 = por %p236, %p237
      %p239 = scmp.ne.s32.totalorder %s228, %s229
      %p240 = scmp.eq.s32.totalorder %s26, 0
      %p241 = por %p239, %p240
      %p242 = scmp.ne.s32.totalorder %s228, %s229
      %p243 = scmp.eq.s32.totalorder %s27, 1
      %p244 = por %p242, %p243
      %p246 = scmp.ne.s32.totalorder %s229, %s245
      %p247 = scmp.eq.s32.totalorder %s27, 0
      %p248 = por %p246, %p247
      %p249 = scmp.le.s32.totalorder 1, %s21
      %p250 = scmp.lt.s32.totalorder %s21, 3
      %p251 = pnand %p249, %p250
      %p252 = pneg %p251
      // Predicated region
      $region9: #{tpu_custom_call.1} parent=5 // pred_check
        _
      $region10: #{tpu_custom_call.1} parent=5 // pred_check_branch
        %254 = sbr.rel (%p251) target = $region12
      $region11: #{tpu_custom_call.1} parent=5 // pred_region
        %s255 = ssub.s32 %s21, 1
        // Predicated region
        $region13: #{tpu_custom_call.1} parent=11 // pred_check
          %p256 = pneg %p68
        $region14: #{tpu_custom_call.1} parent=11 // pred_check_branch
          %258 = sbr.rel (%p256) target = $region16
        $region15: #{tpu_custom_call.1} parent=11 // pred_region
          _
        $region16: #{tpu_custom_call.1} parent=11 // pred_fallthru
          _
        // Predicated region
        $region17: #{tpu_custom_call.1} parent=11 // pred_check
          %p259 = pneg %p89
        $region18: #{tpu_custom_call.1} parent=11 // pred_check_branch
          %261 = sbr.rel (%p259) target = $region20
        $region19: #{tpu_custom_call.1} parent=11 // pred_region
          _
        $region20: #{tpu_custom_call.1} parent=11 // pred_fallthru
          _
        // Predicated region
        $region21: #{tpu_custom_call.1} parent=11 // pred_check
          %p262 = pneg %p110
        $region22: #{tpu_custom_call.1} parent=11 // pred_check_branch
          %264 = sbr.rel (%p262) target = $region24
        $region23: #{tpu_custom_call.1} parent=11 // pred_region
          _
        $region24: #{tpu_custom_call.1} parent=11 // pred_fallthru
          _
        // Predicated region
        $region25: #{tpu_custom_call.1} parent=11 // pred_check
          %p265 = pneg %p131
        $region26: #{tpu_custom_call.1} parent=11 // pred_check_branch
          %267 = sbr.rel (%p265) target = $region28
        $region27: #{tpu_custom_call.1} parent=11 // pred_region
          _
        $region28: #{tpu_custom_call.1} parent=11 // pred_fallthru
          _
        // Predicated region
        $region29: #{tpu_custom_call.1} parent=11 // pred_check
          %p268 = pneg %p152
        $region30: #{tpu_custom_call.1} parent=11 // pred_check_branch
          %270 = sbr.rel (%p268) target = $region32
        $region31: #{tpu_custom_call.1} parent=11 // pred_region
          _
        $region32: #{tpu_custom_call.1} parent=11 // pred_fallthru
          _
        // Predicated region
        $region33: #{tpu_custom_call.1} parent=11 // pred_check
          %p271 = pneg %p173
        $region34: #{tpu_custom_call.1} parent=11 // pred_check_branch
          %273 = sbr.rel (%p271) target = $region36
        $region35: #{tpu_custom_call.1} parent=11 // pred_region
          _
        $region36: #{tpu_custom_call.1} parent=11 // pred_fallthru
          _
        // Predicated region
        $region37: #{tpu_custom_call.1} parent=11 // pred_check
          %p274 = pneg %p194
        $region38: #{tpu_custom_call.1} parent=11 // pred_check_branch
          %276 = sbr.rel (%p274) target = $region40
        $region39: #{tpu_custom_call.1} parent=11 // pred_region
          _
        $region40: #{tpu_custom_call.1} parent=11 // pred_fallthru
          _
        // Predicated region
        $region41: #{tpu_custom_call.1} parent=11 // pred_check
          %p277 = pneg %p215
        $region42: #{tpu_custom_call.1} parent=11 // pred_check_branch
          %279 = sbr.rel (%p277) target = $region44
        $region43: #{tpu_custom_call.1} parent=11 // pred_region
          _
        $region44: #{tpu_custom_call.1} parent=11 // pred_fallthru
          _
      $region12: #{tpu_custom_call.1} parent=5 // pred_fallthru
        _
      %p280 = scmp.lt.s32.totalorder %s21, 2
      // Predicated region
      $region45: #{tpu_custom_call.1} parent=5 // pred_check
        %p281 = pneg %p280
      $region46: #{tpu_custom_call.1} parent=5 // pred_check_branch
        %283 = sbr.rel (%p281) target = $region48
      $region47: #{tpu_custom_call.1} parent=5 // pred_region
        // Predicated region
        $region49: #{tpu_custom_call.1} parent=47 // pred_check
          %p284 = pneg %p41
        $region50: #{tpu_custom_call.1} parent=47 // pred_check_branch
          %286 = sbr.rel (%p284) target = $region52
        $region51: #{tpu_custom_call.1} parent=47 // pred_region
          %s287 = sand.u32 %s31, 1
          %s288 = scalar_lea.sflag [#allocation3], %s287
          %s289 = sand.u32 %s31, 1
          %s290 = smul.addr %s289, 256
          %s291 = scalar_lea.vmem [#allocation2], %s290
          %s293 = ssub.s32 4096, 4096
          %294 = vsyncadd %s288, %s293
          %s295 = smul.addr %s21, 32
          %s296 = smul.addr %s295, 128
          %s297 = scalar_lea.hbm %s0, %s296
          %s298 = sshll.u32 %s291, 4
          %s299 = int_to_ptr.vmem [resolvable:$true] %s298
          %304 = dma.hbm_to_vmem [thread:$0]  %s297, 4096, %s299, %s288, 128, 128, 8
        $region52: #{tpu_custom_call.1} parent=47 // pred_fallthru
          _
      $region48: #{tpu_custom_call.1} parent=5 // pred_fallthru
        _
      %p305 = scmp.le.s32.totalorder 1, %s21
      %p306 = scmp.lt.s32.totalorder %s21, 3
      %p307 = pnand %p305, %p306
      %p308 = pneg %p307
      // Predicated region
      $region53: #{tpu_custom_call.1} parent=5 // pred_check
        _
      $region54: #{tpu_custom_call.1} parent=5 // pred_check_branch
        %310 = sbr.rel (%p307) target = $region56
      $region55: #{tpu_custom_call.1} parent=5 // pred_region
        %s311 = ssub.s32 %s21, 1
        %s312 = sand.u32 %s34, 1
        %s313 = scalar_lea.sflag [#allocation3], %s312
        %s314 = sand.u32 %s34, 1
        %s315 = smul.addr %s314, 256
        %s316 = scalar_lea.vmem [#allocation2], %s315
        // Predicated region
        $region57: #{tpu_custom_call.1} parent=55 // pred_check
          %p317 = pneg %p47
        $region58: #{tpu_custom_call.1} parent=55 // pred_check_branch
          %319 = sbr.rel (%p317) target = $region60
        $region59: #{tpu_custom_call.1} parent=55 // pred_region
          %320 = dma.done %s313, 4096
        $region60: #{tpu_custom_call.1} parent=55 // pred_fallthru
          _
        %s321 = sand.u32 %s34, 1
        %s322 = scalar_lea.sflag [#allocation3], %s321
        %s323 = sand.u32 %s34, 1
        %s324 = smul.addr %s323, 256
        %s325 = scalar_lea.vmem [#allocation2], %s324
        %p326 = pneg %p47
        %p327 = pneg %p44
        %p328 = pneg %p68
        %p329 = pneg %p65
        %p330 = pneg %p89
        %p331 = pneg %p86
        %p332 = pneg %p110
        %p333 = pneg %p107
        %p334 = pneg %p131
        %p335 = pneg %p128
        %p336 = pneg %p152
        %p337 = pneg %p149
        %p338 = pneg %p173
        %p339 = pneg %p170
        %p340 = pneg %p194
        %p341 = pneg %p191
        %p342 = pneg %p215
        %p343 = pneg %p212
        %p344 = pneg %p241
        %p345 = pneg %p238
        %s346 = sand.u32 %s228, 1
        %s347 = scalar_lea.sflag [#allocation4], %s346
        %s348 = sand.u32 %s228, 1
        %s349 = smul.addr %s348, 256
        %s350 = scalar_lea.vmem [#allocation5], %s349
        %v352 = vld [vmem:[%s316] sm:$0xff]
        %v353 = vld [vmem:[%s316 + $0x8] sm:$0xff]
        %v354 = vld [vmem:[%s316 + $0x10] sm:$0xff]
        %v355 = vld [vmem:[%s316 + $0x18] sm:$0xff]
        %v356 = vld [vmem:[%s316 + $0x20] sm:$0xff]
        %v357 = vld [vmem:[%s316 + $0x28] sm:$0xff]
        %v358 = vld [vmem:[%s316 + $0x30] sm:$0xff]
        %v359 = vld [vmem:[%s316 + $0x38] sm:$0xff]
        %v360 = vld [vmem:[%s316 + $0x40] sm:$0xff]
        %v361 = vld [vmem:[%s316 + $0x48] sm:$0xff]
        %v362 = vld [vmem:[%s316 + $0x50] sm:$0xff]
        %v363 = vld [vmem:[%s316 + $0x58] sm:$0xff]
        %v364 = vld [vmem:[%s316 + $0x60] sm:$0xff]
        %v365 = vld [vmem:[%s316 + $0x68] sm:$0xff]
        %v366 = vld [vmem:[%s316 + $0x70] sm:$0xff]
        %v367 = vld [vmem:[%s316 + $0x78] sm:$0xff]
        %v368 = vld [vmem:[%s316 + $0x80] sm:$0xff]
        %v369 = vld [vmem:[%s316 + $0x88] sm:$0xff]
        %v370 = vld [vmem:[%s316 + $0x90] sm:$0xff]
        %v371 = vld [vmem:[%s316 + $0x98] sm:$0xff]
        %v372 = vld [vmem:[%s316 + $0xa0] sm:$0xff]
        %v373 = vld [vmem:[%s316 + $0xa8] sm:$0xff]
        %v374 = vld [vmem:[%s316 + $0xb0] sm:$0xff]
        %v375 = vld [vmem:[%s316 + $0xb8] sm:$0xff]
        %v376 = vld [vmem:[%s316 + $0xc0] sm:$0xff]
        %v377 = vld [vmem:[%s316 + $0xc8] sm:$0xff]
        %v378 = vld [vmem:[%s316 + $0xd0] sm:$0xff]
        %v379 = vld [vmem:[%s316 + $0xd8] sm:$0xff]
        %v380 = vld [vmem:[%s316 + $0xe0] sm:$0xff]
        %v381 = vld [vmem:[%s316 + $0xe8] sm:$0xff]
        %v382 = vld [vmem:[%s316 + $0xf0] sm:$0xff]
        %v383 = vld [vmem:[%s316 + $0xf8] sm:$0xff]
        %v384 = vld [vmem:[%s1] sm:$0x1]
        %v385 = vlaneseq
        %v386 = vshrl.u32 %v385, 7
        %v387 = vsub.s32 0, %v386
        %v388 = vrot.slane %v384, %v387
        %v389 = vmul.f32 %v388, 0.0
        %v390 = vmul.f32 %v352, %v388
        %v391 = vmul.f32 %v353, %v388
        %v392 = vmul.f32 %v354, %v388
        %v393 = vmul.f32 %v355, %v388
        %v394 = vmul.f32 %v356, %v388
        %v395 = vmul.f32 %v357, %v388
        %v396 = vmul.f32 %v358, %v388
        %v397 = vmul.f32 %v359, %v388
        %v398 = vmul.f32 %v360, %v388
        %v399 = vmul.f32 %v361, %v388
        %v400 = vmul.f32 %v362, %v388
        %v401 = vmul.f32 %v363, %v388
        %v402 = vmul.f32 %v364, %v388
        %v403 = vmul.f32 %v365, %v388
        %v404 = vmul.f32 %v366, %v388
        %v405 = vmul.f32 %v367, %v388
        %v406 = vmul.f32 %v368, %v388
        %v407 = vmul.f32 %v369, %v388
        %v408 = vmul.f32 %v370, %v388
        %v409 = vmul.f32 %v371, %v388
        %v410 = vmul.f32 %v372, %v388
        %v411 = vmul.f32 %v373, %v388
        %v412 = vmul.f32 %v374, %v388
        %v413 = vmul.f32 %v375, %v388
        %v414 = vmul.f32 %v376, %v388
        %v415 = vmul.f32 %v377, %v388
        %v416 = vmul.f32 %v378, %v388
        %v417 = vmul.f32 %v379, %v388
        %v418 = vmul.f32 %v380, %v388
        %v419 = vmul.f32 %v381, %v388
        %v420 = vadd.f32 %v389, 0.0
        %v421 = vadd.f32 %v390, 0.0
        %v422 = vadd.f32 %v391, 0.0
        %v423 = vadd.f32 %v392, 0.0
        %v424 = vadd.f32 %v393, 0.0
        %v425 = vadd.f32 %v394, 0.0
        %v426 = vadd.f32 %v395, 0.0
        %v427 = vadd.f32 %v396, 0.0
        %v428 = vadd.f32 %v397, 0.0
        %v429 = vadd.f32 %v398, 0.0
        %v430 = vadd.f32 %v399, 0.0
        %v431 = vadd.f32 %v400, 0.0
        %v432 = vadd.f32 %v401, 0.0
        %v433 = vadd.f32 %v402, 0.0
        %v434 = vadd.f32 %v403, 0.0
        %v435 = vadd.f32 %v404, 0.0
        %v436 = vadd.f32 %v405, 0.0
        %v437 = vadd.f32 %v406, 0.0
        %v438 = vadd.f32 %v407, 0.0
        %v439 = vadd.f32 %v408, 0.0
        %v440 = vadd.f32 %v409, 0.0
        %v441 = vadd.f32 %v410, 0.0
        %v442 = vadd.f32 %v411, 0.0
        %v443 = vadd.f32 %v412, 0.0
        %v444 = vadd.f32 %v413, 0.0
        %v445 = vadd.f32 %v414, 0.0
        %v446 = vadd.f32 %v415, 0.0
        %v447 = vadd.f32 %v416, 0.0
        %v448 = vadd.f32 %v417, 0.0
        %v449 = vadd.f32 %v418, 0.0
        %v450 = vadd.f32 %v419, 0.0
        %v451 = vld [vmem:[%s1 + $0x3] sm:$0x1]
        %v452 = vlaneseq
        %v453 = vshrl.u32 %v452, 7
        %v454 = vsub.s32 0, %v453
        %v455 = vrot.slane %v451, %v454
        %v456 = vmul.f32 %v455, 0.0
        %v457 = vmul.f32 %v352, %v455
        %v458 = vmul.f32 %v353, %v455
        %v459 = vmul.f32 %v354, %v455
        %v460 = vmul.f32 %v355, %v455
        %v461 = vmul.f32 %v356, %v455
        %v462 = vmul.f32 %v357, %v455
        %v463 = vmul.f32 %v358, %v455
        %v464 = vmul.f32 %v359, %v455
        %v465 = vmul.f32 %v360, %v455
        %v466 = vmul.f32 %v361, %v455
        %v467 = vmul.f32 %v362, %v455
        %v468 = vmul.f32 %v363, %v455
        %v469 = vmul.f32 %v364, %v455
        %v470 = vmul.f32 %v365, %v455
        %v471 = vmul.f32 %v366, %v455
        %v472 = vmul.f32 %v367, %v455
        %v473 = vmul.f32 %v368, %v455
        %v474 = vmul.f32 %v369, %v455
        %v475 = vmul.f32 %v370, %v455
        %v476 = vmul.f32 %v371, %v455
        %v477 = vmul.f32 %v372, %v455
        %v478 = vmul.f32 %v373, %v455
        %v479 = vmul.f32 %v374, %v455
        %v480 = vmul.f32 %v375, %v455
        %v481 = vmul.f32 %v376, %v455
        %v482 = vmul.f32 %v377, %v455
        %v483 = vmul.f32 %v378, %v455
        %v484 = vmul.f32 %v379, %v455
        %v485 = vmul.f32 %v380, %v455
        %v486 = vmul.f32 %v381, %v455
        %v487 = vmul.f32 %v382, %v455
        %v488 = vmul.f32 %v383, %v455
        %v489 = vadd.f32 %v420, %v456
        %v490 = vadd.f32 %v420, %v457
        %v491 = vadd.f32 %v420, %v458
        %v492 = vadd.f32 %v421, %v459
        %v493 = vadd.f32 %v422, %v460
        %v494 = vadd.f32 %v423, %v461
        %v495 = vadd.f32 %v424, %v462
        %v496 = vadd.f32 %v425, %v463
        %v497 = vadd.f32 %v426, %v464
        %v498 = vadd.f32 %v427, %v465
        %v499 = vadd.f32 %v428, %v466
        %v500 = vadd.f32 %v429, %v467
        %v501 = vadd.f32 %v430, %v468
        %v502 = vadd.f32 %v431, %v469
        %v503 = vadd.f32 %v432, %v470
        %v504 = vadd.f32 %v433, %v471
        %v505 = vadd.f32 %v434, %v472
        %v506 = vadd.f32 %v435, %v473
        %v507 = vadd.f32 %v436, %v474
        %v508 = vadd.f32 %v437, %v475
        %v509 = vadd.f32 %v438, %v476
        %v510 = vadd.f32 %v439, %v477
        %v511 = vadd.f32 %v440, %v478
        %v512 = vadd.f32 %v441, %v479
        %v513 = vadd.f32 %v442, %v480
        %v514 = vadd.f32 %v443, %v481
        %v515 = vadd.f32 %v444, %v482
        %v516 = vadd.f32 %v445, %v483
        %v517 = vadd.f32 %v446, %v484
        %v518 = vadd.f32 %v447, %v485
        %v519 = vadd.f32 %v448, %v486
        %v520 = vadd.f32 %v449, %v487
        %v521 = vadd.f32 %v450, %v488
        %v522 = vld [vmem:[%s1 + $0x6] sm:$0x1]
        %v523 = vlaneseq
        %v524 = vshrl.u32 %v523, 7
        %v525 = vsub.s32 0, %v524
        %v526 = vrot.slane %v522, %v525
        %v527 = vmul.f32 %v526, 0.0
        %v528 = vmul.f32 %v354, %v526
        %v529 = vmul.f32 %v355, %v526
        %v530 = vmul.f32 %v356, %v526
        %v531 = vmul.f32 %v357, %v526
        %v532 = vmul.f32 %v358, %v526
        %v533 = vmul.f32 %v359, %v526
        %v534 = vmul.f32 %v360, %v526
        %v535 = vmul.f32 %v361, %v526
        %v536 = vmul.f32 %v362, %v526
        %v537 = vmul.f32 %v363, %v526
        %v538 = vmul.f32 %v364, %v526
        %v539 = vmul.f32 %v365, %v526
        %v540 = vmul.f32 %v366, %v526
        %v541 = vmul.f32 %v367, %v526
        %v542 = vmul.f32 %v368, %v526
        %v543 = vmul.f32 %v369, %v526
        %v544 = vmul.f32 %v370, %v526
        %v545 = vmul.f32 %v371, %v526
        %v546 = vmul.f32 %v372, %v526
        %v547 = vmul.f32 %v373, %v526
        %v548 = vmul.f32 %v374, %v526
        %v549 = vmul.f32 %v375, %v526
        %v550 = vmul.f32 %v376, %v526
        %v551 = vmul.f32 %v377, %v526
        %v552 = vmul.f32 %v378, %v526
        %v553 = vmul.f32 %v379, %v526
        %v554 = vmul.f32 %v380, %v526
        %v555 = vmul.f32 %v381, %v526
        %v556 = vmul.f32 %v382, %v526
        %v557 = vmul.f32 %v383, %v526
        %v558 = vadd.f32 %v489, %v527
        %v559 = vadd.f32 %v490, %v528
        %v560 = vadd.f32 %v491, %v529
        %v561 = vadd.f32 %v492, %v530
        %v562 = vadd.f32 %v493, %v531
        %v563 = vadd.f32 %v494, %v532
        %v564 = vadd.f32 %v495, %v533
        %v565 = vadd.f32 %v496, %v534
        %v566 = vadd.f32 %v497, %v535
        %v567 = vadd.f32 %v498, %v536
        %v568 = vadd.f32 %v499, %v537
        %v569 = vadd.f32 %v500, %v538
        %v570 = vadd.f32 %v501, %v539
        %v571 = vadd.f32 %v502, %v540
        %v572 = vadd.f32 %v503, %v541
        %v573 = vadd.f32 %v504, %v542
        %v574 = vadd.f32 %v505, %v543
        %v575 = vadd.f32 %v506, %v544
        %v576 = vadd.f32 %v507, %v545
        %v577 = vadd.f32 %v508, %v546
        %v578 = vadd.f32 %v509, %v547
        %v579 = vadd.f32 %v510, %v548
        %v580 = vadd.f32 %v511, %v549
        %v581 = vadd.f32 %v512, %v550
        %v582 = vadd.f32 %v513, %v551
        %v583 = vadd.f32 %v514, %v552
        %v584 = vadd.f32 %v515, %v553
        %v585 = vadd.f32 %v516, %v554
        %v586 = vadd.f32 %v517, %v555
        %v587 = vadd.f32 %v518, %v556
        %v588 = vadd.f32 %v519, %v557
        %v589 = vadd.f32 %v520, %v527
        %v590 = vadd.f32 %v521, %v527
        %v591 = vld [vmem:[%s1 + $0x1] sm:$0x1]
        %v592 = vlaneseq
        %v593 = vshrl.u32 %v592, 7
        %v594 = vsub.s32 0, %v593
        %v595 = vrot.slane %v591, %v594
        %v596 = vmul.f32 %v595, 0.0
        %v597 = vmul.f32 %v352, %v595
        %v598 = vmul.f32 %v353, %v595
        %v599 = vmul.f32 %v354, %v595
        %v600 = vmul.f32 %v355, %v595
        %v601 = vmul.f32 %v356, %v595
        %v602 = vmul.f32 %v357, %v595
        %v603 = vmul.f32 %v358, %v595
        %v604 = vmul.f32 %v359, %v595
        %v605 = vmul.f32 %v360, %v595
        %v606 = vmul.f32 %v361, %v595
        %v607 = vmul.f32 %v362, %v595
        %v608 = vmul.f32 %v363, %v595
        %v609 = vmul.f32 %v364, %v595
        %v610 = vmul.f32 %v365, %v595
        %v611 = vmul.f32 %v366, %v595
        %v612 = vmul.f32 %v367, %v595
        %v613 = vmul.f32 %v368, %v595
        %v614 = vmul.f32 %v369, %v595
        %v615 = vmul.f32 %v370, %v595
        %v616 = vmul.f32 %v371, %v595
        %v617 = vmul.f32 %v372, %v595
        %v618 = vmul.f32 %v373, %v595
        %v619 = vmul.f32 %v374, %v595
        %v620 = vmul.f32 %v375, %v595
        %v621 = vmul.f32 %v376, %v595
        %v622 = vmul.f32 %v377, %v595
        %v623 = vmul.f32 %v378, %v595
        %v624 = vmul.f32 %v379, %v595
        %v625 = vmul.f32 %v380, %v595
        %v626 = vmul.f32 %v381, %v595
        %vm658 = vcmask 1046528
        %v659 = vrot.slane %v596, 1
        %v660 = vsel %vm658, %v659, %v659
        %v661 = vrot.slane %v597, 1
        %v662 = vrot.slane %v598, 1
        %v663 = vsel %vm658, %v661, %v662
        %v664 = vrot.slane %v599, 1
        %v665 = vrot.slane %v600, 1
        %v666 = vsel %vm658, %v664, %v665
        %v667 = vrot.slane %v601, 1
        %v668 = vrot.slane %v602, 1
        %v669 = vsel %vm658, %v667, %v668
        %v670 = vrot.slane %v603, 1
        %v671 = vrot.slane %v604, 1
        %v672 = vsel %vm658, %v670, %v671
        %v673 = vrot.slane %v605, 1
        %v674 = vrot.slane %v606, 1
        %v675 = vsel %vm658, %v673, %v674
        %v676 = vrot.slane %v607, 1
        %v677 = vrot.slane %v608, 1
        %v678 = vsel %vm658, %v676, %v677
        %v679 = vrot.slane %v609, 1
        %v680 = vrot.slane %v610, 1
        %v681 = vsel %vm658, %v679, %v680
        %v682 = vrot.slane %v611, 1
        %v683 = vrot.slane %v612, 1
        %v684 = vsel %vm658, %v682, %v683
        %v685 = vrot.slane %v613, 1
        %v686 = vrot.slane %v614, 1
        %v687 = vsel %vm658, %v685, %v686
        %v688 = vrot.slane %v615, 1
        %v689 = vrot.slane %v616, 1
        %v690 = vsel %vm658, %v688, %v689
        %v691 = vrot.slane %v617, 1
        %v692 = vrot.slane %v618, 1
        %v693 = vsel %vm658, %v691, %v692
        %v694 = vrot.slane %v619, 1
        %v695 = vrot.slane %v620, 1
        %v696 = vsel %vm658, %v694, %v695
        %v697 = vrot.slane %v621, 1
        %v698 = vrot.slane %v622, 1
        %v699 = vsel %vm658, %v697, %v698
        %v700 = vrot.slane %v623, 1
        %v701 = vrot.slane %v624, 1
        %v702 = vsel %vm658, %v700, %v701
        %v703 = vrot.slane %v625, 1
        %v704 = vrot.slane %v626, 1
        %v705 = vsel %vm658, %v703, %v704
        %v753 = vadd.f32 %v558, %v659
        %v754 = vadd.f32 %v559, %v660
        %v755 = vadd.f32 %v560, %v659
        %v756 = vadd.f32 %v558, %v661
        %v757 = vadd.f32 %v561, %v663
        %v758 = vadd.f32 %v562, %v662
        %v759 = vadd.f32 %v558, %v664
        %v760 = vadd.f32 %v563, %v666
        %v761 = vadd.f32 %v564, %v665
        %v762 = vadd.f32 %v558, %v667
        %v763 = vadd.f32 %v565, %v669
        %v764 = vadd.f32 %v566, %v668
        %v765 = vadd.f32 %v558, %v670
        %v766 = vadd.f32 %v567, %v672
        %v767 = vadd.f32 %v568, %v671
        %v768 = vadd.f32 %v558, %v673
        %v769 = vadd.f32 %v569, %v675
        %v770 = vadd.f32 %v570, %v674
        %v771 = vadd.f32 %v558, %v676
        %v772 = vadd.f32 %v571, %v678
        %v773 = vadd.f32 %v572, %v677
        %v774 = vadd.f32 %v558, %v679
        %v775 = vadd.f32 %v573, %v681
        %v776 = vadd.f32 %v574, %v680
        %v777 = vadd.f32 %v558, %v682
        %v778 = vadd.f32 %v575, %v684
        %v779 = vadd.f32 %v576, %v683
        %v780 = vadd.f32 %v558, %v685
        %v781 = vadd.f32 %v577, %v687
        %v782 = vadd.f32 %v578, %v686
        %v783 = vadd.f32 %v558, %v688
        %v784 = vadd.f32 %v579, %v690
        %v785 = vadd.f32 %v580, %v689
        %v786 = vadd.f32 %v558, %v691
        %v787 = vadd.f32 %v581, %v693
        %v788 = vadd.f32 %v582, %v692
        %v789 = vadd.f32 %v558, %v694
        %v790 = vadd.f32 %v583, %v696
        %v791 = vadd.f32 %v584, %v695
        %v792 = vadd.f32 %v558, %v697
        %v793 = vadd.f32 %v585, %v699
        %v794 = vadd.f32 %v586, %v698
        %v795 = vadd.f32 %v558, %v700
        %v796 = vadd.f32 %v587, %v702
        %v797 = vadd.f32 %v588, %v701
        %v798 = vadd.f32 %v558, %v703
        %v799 = vadd.f32 %v589, %v705
        %v800 = vadd.f32 %v590, %v704
        %v801 = vld [vmem:[%s1 + $0x4] sm:$0x1]
        %v802 = vlaneseq
        %v803 = vshrl.u32 %v802, 7
        %v804 = vsub.s32 0, %v803
        %v805 = vrot.slane %v801, %v804
        %v806 = vmul.f32 %v352, %v805
        %v807 = vmul.f32 %v353, %v805
        %v808 = vmul.f32 %v354, %v805
        %v809 = vmul.f32 %v355, %v805
        %v810 = vmul.f32 %v356, %v805
        %v811 = vmul.f32 %v357, %v805
        %v812 = vmul.f32 %v358, %v805
        %v813 = vmul.f32 %v359, %v805
        %v814 = vmul.f32 %v360, %v805
        %v815 = vmul.f32 %v361, %v805
        %v816 = vmul.f32 %v362, %v805
        %v817 = vmul.f32 %v363, %v805
        %v818 = vmul.f32 %v364, %v805
        %v819 = vmul.f32 %v365, %v805
        %v820 = vmul.f32 %v366, %v805
        %v821 = vmul.f32 %v367, %v805
        %v822 = vmul.f32 %v368, %v805
        %v823 = vmul.f32 %v369, %v805
        %v824 = vmul.f32 %v370, %v805
        %v825 = vmul.f32 %v371, %v805
        %v826 = vmul.f32 %v372, %v805
        %v827 = vmul.f32 %v373, %v805
        %v828 = vmul.f32 %v374, %v805
        %v829 = vmul.f32 %v375, %v805
        %v830 = vmul.f32 %v376, %v805
        %v831 = vmul.f32 %v377, %v805
        %v832 = vmul.f32 %v378, %v805
        %v833 = vmul.f32 %v379, %v805
        %v834 = vmul.f32 %v380, %v805
        %v835 = vmul.f32 %v381, %v805
        %v836 = vmul.f32 %v382, %v805
        %v837 = vmul.f32 %v383, %v805
        %v870 = vrot.slane %v806, 1
        %v871 = vrot.slane %v807, 1
        %v872 = vsel %vm658, %v870, %v871
        %v873 = vrot.slane %v808, 1
        %v874 = vrot.slane %v809, 1
        %v875 = vsel %vm658, %v873, %v874
        %v876 = vrot.slane %v810, 1
        %v877 = vrot.slane %v811, 1
        %v878 = vsel %vm658, %v876, %v877
        %v879 = vrot.slane %v812, 1
        %v880 = vrot.slane %v813, 1
        %v881 = vsel %vm658, %v879, %v880
        %v882 = vrot.slane %v814, 1
        %v883 = vrot.slane %v815, 1
        %v884 = vsel %vm658, %v882, %v883
        %v885 = vrot.slane %v816, 1
        %v886 = vrot.slane %v817, 1
        %v887 = vsel %vm658, %v885, %v886
        %v888 = vrot.slane %v818, 1
        %v889 = vrot.slane %v819, 1
        %v890 = vsel %vm658, %v888, %v889
        %v891 = vrot.slane %v820, 1
        %v892 = vrot.slane %v821, 1
        %v893 = vsel %vm658, %v891, %v892
        %v894 = vrot.slane %v822, 1
        %v895 = vrot.slane %v823, 1
        %v896 = vsel %vm658, %v894, %v895
        %v897 = vrot.slane %v824, 1
        %v898 = vrot.slane %v825, 1
        %v899 = vsel %vm658, %v897, %v898
        %v900 = vrot.slane %v826, 1
        %v901 = vrot.slane %v827, 1
        %v902 = vsel %vm658, %v900, %v901
        %v903 = vrot.slane %v828, 1
        %v904 = vrot.slane %v829, 1
        %v905 = vsel %vm658, %v903, %v904
        %v906 = vrot.slane %v830, 1
        %v907 = vrot.slane %v831, 1
        %v908 = vsel %vm658, %v906, %v907
        %v909 = vrot.slane %v832, 1
        %v910 = vrot.slane %v833, 1
        %v911 = vsel %vm658, %v909, %v910
        %v912 = vrot.slane %v834, 1
        %v913 = vrot.slane %v835, 1
        %v914 = vsel %vm658, %v912, %v913
        %v915 = vrot.slane %v836, 1
        %v916 = vrot.slane %v837, 1
        %v917 = vsel %vm658, %v915, %v916
        %v966 = vadd.f32 %v753, %v870
        %v967 = vadd.f32 %v754, %v872
        %v968 = vadd.f32 %v755, %v871
        %v969 = vadd.f32 %v756, %v873
        %v970 = vadd.f32 %v757, %v875
        %v971 = vadd.f32 %v758, %v874
        %v972 = vadd.f32 %v759, %v876
        %v973 = vadd.f32 %v760, %v878
        %v974 = vadd.f32 %v761, %v877
        %v975 = vadd.f32 %v762, %v879
        %v976 = vadd.f32 %v763, %v881
        %v977 = vadd.f32 %v764, %v880
        %v978 = vadd.f32 %v765, %v882
        %v979 = vadd.f32 %v766, %v884
        %v980 = vadd.f32 %v767, %v883
        %v981 = vadd.f32 %v768, %v885
        %v982 = vadd.f32 %v769, %v887
        %v983 = vadd.f32 %v770, %v886
        %v984 = vadd.f32 %v771, %v888
        %v985 = vadd.f32 %v772, %v890
        %v986 = vadd.f32 %v773, %v889
        %v987 = vadd.f32 %v774, %v891
        %v988 = vadd.f32 %v775, %v893
        %v989 = vadd.f32 %v776, %v892
        %v990 = vadd.f32 %v777, %v894
        %v991 = vadd.f32 %v778, %v896
        %v992 = vadd.f32 %v779, %v895
        %v993 = vadd.f32 %v780, %v897
        %v994 = vadd.f32 %v781, %v899
        %v995 = vadd.f32 %v782, %v898
        %v996 = vadd.f32 %v783, %v900
        %v997 = vadd.f32 %v784, %v902
        %v998 = vadd.f32 %v785, %v901
        %v999 = vadd.f32 %v786, %v903
        %v1000 = vadd.f32 %v787, %v905
        %v1001 = vadd.f32 %v788, %v904
        %v1002 = vadd.f32 %v789, %v906
        %v1003 = vadd.f32 %v790, %v908
        %v1004 = vadd.f32 %v791, %v907
        %v1005 = vadd.f32 %v792, %v909
        %v1006 = vadd.f32 %v793, %v911
        %v1007 = vadd.f32 %v794, %v910
        %v1008 = vadd.f32 %v795, %v912
        %v1009 = vadd.f32 %v796, %v914
        %v1010 = vadd.f32 %v797, %v913
        %v1011 = vadd.f32 %v798, %v915
        %v1012 = vadd.f32 %v799, %v917
        %v1013 = vadd.f32 %v800, %v916
        %v1014 = vld [vmem:[%s1 + $0x7] sm:$0x1]
        %v1015 = vlaneseq
        %v1016 = vshrl.u32 %v1015, 7
        %v1017 = vsub.s32 0, %v1016
        %v1018 = vrot.slane %v1014, %v1017
        %v1019 = vmul.f32 %v354, %v1018
        %v1020 = vmul.f32 %v355, %v1018
        %v1021 = vmul.f32 %v356, %v1018
        %v1022 = vmul.f32 %v357, %v1018
        %v1023 = vmul.f32 %v358, %v1018
        %v1024 = vmul.f32 %v359, %v1018
        %v1025 = vmul.f32 %v360, %v1018
        %v1026 = vmul.f32 %v361, %v1018
        %v1027 = vmul.f32 %v362, %v1018
        %v1028 = vmul.f32 %v363, %v1018
        %v1029 = vmul.f32 %v364, %v1018
        %v1030 = vmul.f32 %v365, %v1018
        %v1031 = vmul.f32 %v366, %v1018
        %v1032 = vmul.f32 %v367, %v1018
        %v1033 = vmul.f32 %v368, %v1018
        %v1034 = vmul.f32 %v369, %v1018
        %v1035 = vmul.f32 %v370, %v1018
        %v1036 = vmul.f32 %v371, %v1018
        %v1037 = vmul.f32 %v372, %v1018
        %v1038 = vmul.f32 %v373, %v1018
        %v1039 = vmul.f32 %v374, %v1018
        %v1040 = vmul.f32 %v375, %v1018
        %v1041 = vmul.f32 %v376, %v1018
        %v1042 = vmul.f32 %v377, %v1018
        %v1043 = vmul.f32 %v378, %v1018
        %v1044 = vmul.f32 %v379, %v1018
        %v1045 = vmul.f32 %v380, %v1018
        %v1046 = vmul.f32 %v381, %v1018
        %v1047 = vmul.f32 %v382, %v1018
        %v1048 = vmul.f32 %v383, %v1018
        %v1049 = vmul.f32 %v1018, 0.0
        %v1081 = vrot.slane %v1019, 1
        %v1082 = vrot.slane %v1020, 1
        %v1083 = vsel %vm658, %v1081, %v1082
        %v1084 = vrot.slane %v1021, 1
        %v1085 = vrot.slane %v1022, 1
        %v1086 = vsel %vm658, %v1084, %v1085
        %v1087 = vrot.slane %v1023, 1
        %v1088 = vrot.slane %v1024, 1
        %v1089 = vsel %vm658, %v1087, %v1088
        %v1090 = vrot.slane %v1025, 1
        %v1091 = vrot.slane %v1026, 1
        %v1092 = vsel %vm658, %v1090, %v1091
        %v1093 = vrot.slane %v1027, 1
        %v1094 = vrot.slane %v1028, 1
        %v1095 = vsel %vm658, %v1093, %v1094
        %v1096 = vrot.slane %v1029, 1
        %v1097 = vrot.slane %v1030, 1
        %v1098 = vsel %vm658, %v1096, %v1097
        %v1099 = vrot.slane %v1031, 1
        %v1100 = vrot.slane %v1032, 1
        %v1101 = vsel %vm658, %v1099, %v1100
        %v1102 = vrot.slane %v1033, 1
        %v1103 = vrot.slane %v1034, 1
        %v1104 = vsel %vm658, %v1102, %v1103
        %v1105 = vrot.slane %v1035, 1
        %v1106 = vrot.slane %v1036, 1
        %v1107 = vsel %vm658, %v1105, %v1106
        %v1108 = vrot.slane %v1037, 1
        %v1109 = vrot.slane %v1038, 1
        %v1110 = vsel %vm658, %v1108, %v1109
        %v1111 = vrot.slane %v1039, 1
        %v1112 = vrot.slane %v1040, 1
        %v1113 = vsel %vm658, %v1111, %v1112
        %v1114 = vrot.slane %v1041, 1
        %v1115 = vrot.slane %v1042, 1
        %v1116 = vsel %vm658, %v1114, %v1115
        %v1117 = vrot.slane %v1043, 1
        %v1118 = vrot.slane %v1044, 1
        %v1119 = vsel %vm658, %v1117, %v1118
        %v1120 = vrot.slane %v1045, 1
        %v1121 = vrot.slane %v1046, 1
        %v1122 = vsel %vm658, %v1120, %v1121
        %v1123 = vrot.slane %v1047, 1
        %v1124 = vrot.slane %v1048, 1
        %v1125 = vsel %vm658, %v1123, %v1124
        %v1126 = vrot.slane %v1049, 1
        %v1127 = vsel %vm658, %v1126, %v1126
        %v1175 = vadd.f32 %v966, %v1081
        %v1176 = vadd.f32 %v967, %v1083
        %v1177 = vadd.f32 %v968, %v1082
        %v1178 = vadd.f32 %v969, %v1084
        %v1179 = vadd.f32 %v970, %v1086
        %v1180 = vadd.f32 %v971, %v1085
        %v1181 = vadd.f32 %v972, %v1087
        %v1182 = vadd.f32 %v973, %v1089
        %v1183 = vadd.f32 %v974, %v1088
        %v1184 = vadd.f32 %v975, %v1090
        %v1185 = vadd.f32 %v976, %v1092
        %v1186 = vadd.f32 %v977, %v1091
        %v1187 = vadd.f32 %v978, %v1093
        %v1188 = vadd.f32 %v979, %v1095
        %v1189 = vadd.f32 %v980, %v1094
        %v1190 = vadd.f32 %v981, %v1096
        %v1191 = vadd.f32 %v982, %v1098
        %v1192 = vadd.f32 %v983, %v1097
        %v1193 = vadd.f32 %v984, %v1099
        %v1194 = vadd.f32 %v985, %v1101
        %v1195 = vadd.f32 %v986, %v1100
        %v1196 = vadd.f32 %v987, %v1102
        %v1197 = vadd.f32 %v988, %v1104
        %v1198 = vadd.f32 %v989, %v1103
        %v1199 = vadd.f32 %v990, %v1105
        %v1200 = vadd.f32 %v991, %v1107
        %v1201 = vadd.f32 %v992, %v1106
        %v1202 = vadd.f32 %v993, %v1108
        %v1203 = vadd.f32 %v994, %v1110
        %v1204 = vadd.f32 %v995, %v1109
        %v1205 = vadd.f32 %v996, %v1111
        %v1206 = vadd.f32 %v997, %v1113
        %v1207 = vadd.f32 %v998, %v1112
        %v1208 = vadd.f32 %v999, %v1114
        %v1209 = vadd.f32 %v1000, %v1116
        %v1210 = vadd.f32 %v1001, %v1115
        %v1211 = vadd.f32 %v1002, %v1117
        %v1212 = vadd.f32 %v1003, %v1119
        %v1213 = vadd.f32 %v1004, %v1118
        %v1214 = vadd.f32 %v1005, %v1120
        %v1215 = vadd.f32 %v1006, %v1122
        %v1216 = vadd.f32 %v1007, %v1121
        %v1217 = vadd.f32 %v1008, %v1123
        %v1218 = vadd.f32 %v1009, %v1125
        %v1219 = vadd.f32 %v1010, %v1124
        %v1220 = vadd.f32 %v1011, %v1126
        %v1221 = vadd.f32 %v1012, %v1127
        %v1222 = vadd.f32 %v1013, %v1126
        %v1223 = vld [vmem:[%s1 + $0x2] sm:$0x1]
        %v1224 = vlaneseq
        %v1225 = vshrl.u32 %v1224, 7
        %v1226 = vsub.s32 0, %v1225
        %v1227 = vrot.slane %v1223, %v1226
        %v1228 = vmul.f32 %v1227, 0.0
        %v1229 = vmul.f32 %v352, %v1227
        %v1230 = vmul.f32 %v353, %v1227
        %v1231 = vmul.f32 %v354, %v1227
        %v1232 = vmul.f32 %v355, %v1227
        %v1233 = vmul.f32 %v356, %v1227
        %v1234 = vmul.f32 %v357, %v1227
        %v1235 = vmul.f32 %v358, %v1227
        %v1236 = vmul.f32 %v359, %v1227
        %v1237 = vmul.f32 %v360, %v1227
        %v1238 = vmul.f32 %v361, %v1227
        %v1239 = vmul.f32 %v362, %v1227
        %v1240 = vmul.f32 %v363, %v1227
        %v1241 = vmul.f32 %v364, %v1227
        %v1242 = vmul.f32 %v365, %v1227
        %v1243 = vmul.f32 %v366, %v1227
        %v1244 = vmul.f32 %v367, %v1227
        %v1245 = vmul.f32 %v368, %v1227
        %v1246 = vmul.f32 %v369, %v1227
        %v1247 = vmul.f32 %v370, %v1227
        %v1248 = vmul.f32 %v371, %v1227
        %v1249 = vmul.f32 %v372, %v1227
        %v1250 = vmul.f32 %v373, %v1227
        %v1251 = vmul.f32 %v374, %v1227
        %v1252 = vmul.f32 %v375, %v1227
        %v1253 = vmul.f32 %v376, %v1227
        %v1254 = vmul.f32 %v377, %v1227
        %v1255 = vmul.f32 %v378, %v1227
        %v1256 = vmul.f32 %v379, %v1227
        %v1257 = vmul.f32 %v380, %v1227
        %v1258 = vmul.f32 %v381, %v1227
        %vm1290 = vcmask 1045504
        %v1291 = vrot.slane %v1228, 2
        %v1292 = vsel %vm1290, %v1291, %v1291
        %v1293 = vrot.slane %v1229, 2
        %v1294 = vrot.slane %v1230, 2
        %v1295 = vsel %vm1290, %v1293, %v1294
        %v1296 = vsel %vm1290, %v1294, %v1291
        %v1297 = vrot.slane %v1231, 2
        %v1298 = vrot.slane %v1232, 2
        %v1299 = vsel %vm1290, %v1297, %v1298
        %v1300 = vsel %vm1290, %v1298, %v1291
        %v1301 = vrot.slane %v1233, 2
        %v1302 = vrot.slane %v1234, 2
        %v1303 = vsel %vm1290, %v1301, %v1302
        %v1304 = vsel %vm1290, %v1302, %v1291
        %v1305 = vrot.slane %v1235, 2
        %v1306 = vrot.slane %v1236, 2
        %v1307 = vsel %vm1290, %v1305, %v1306
        %v1308 = vsel %vm1290, %v1306, %v1291
        %v1309 = vrot.slane %v1237, 2
        %v1310 = vrot.slane %v1238, 2
        %v1311 = vsel %vm1290, %v1309, %v1310
        %v1312 = vsel %vm1290, %v1310, %v1291
        %v1313 = vrot.slane %v1239, 2
        %v1314 = vrot.slane %v1240, 2
        %v1315 = vsel %vm1290, %v1313, %v1314
        %v1316 = vsel %vm1290, %v1314, %v1291
        %v1317 = vrot.slane %v1241, 2
        %v1318 = vrot.slane %v1242, 2
        %v1319 = vsel %vm1290, %v1317, %v1318
        %v1320 = vsel %vm1290, %v1318, %v1291
        %v1321 = vrot.slane %v1243, 2
        %v1322 = vrot.slane %v1244, 2
        %v1323 = vsel %vm1290, %v1321, %v1322
        %v1324 = vsel %vm1290, %v1322, %v1291
        %v1325 = vrot.slane %v1245, 2
        %v1326 = vrot.slane %v1246, 2
        %v1327 = vsel %vm1290, %v1325, %v1326
        %v1328 = vsel %vm1290, %v1326, %v1291
        %v1329 = vrot.slane %v1247, 2
        %v1330 = vrot.slane %v1248, 2
        %v1331 = vsel %vm1290, %v1329, %v1330
        %v1332 = vsel %vm1290, %v1330, %v1291
        %v1333 = vrot.slane %v1249, 2
        %v1334 = vrot.slane %v1250, 2
        %v1335 = vsel %vm1290, %v1333, %v1334
        %v1336 = vsel %vm1290, %v1334, %v1291
        %v1337 = vrot.slane %v1251, 2
        %v1338 = vrot.slane %v1252, 2
        %v1339 = vsel %vm1290, %v1337, %v1338
        %v1340 = vsel %vm1290, %v1338, %v1291
        %v1341 = vrot.slane %v1253, 2
        %v1342 = vrot.slane %v1254, 2
        %v1343 = vsel %vm1290, %v1341, %v1342
        %v1344 = vsel %vm1290, %v1342, %v1291
        %v1345 = vrot.slane %v1255, 2
        %v1346 = vrot.slane %v1256, 2
        %v1347 = vsel %vm1290, %v1345, %v1346
        %v1348 = vsel %vm1290, %v1346, %v1291
        %v1349 = vrot.slane %v1257, 2
        %v1350 = vrot.slane %v1258, 2
        %v1351 = vsel %vm1290, %v1349, %v1350
        %v1352 = vsel %vm1290, %v1350, %v1291
        %v1400 = vadd.f32 %v1175, %v1291
        %v1401 = vadd.f32 %v1176, %v1292
        %v1402 = vadd.f32 %v1177, %v1292
        %v1403 = vadd.f32 %v1178, %v1293
        %v1404 = vadd.f32 %v1179, %v1295
        %v1405 = vadd.f32 %v1180, %v1296
        %v1406 = vadd.f32 %v1181, %v1297
        %v1407 = vadd.f32 %v1182, %v1299
        %v1408 = vadd.f32 %v1183, %v1300
        %v1409 = vadd.f32 %v1184, %v1301
        %v1410 = vadd.f32 %v1185, %v1303
        %v1411 = vadd.f32 %v1186, %v1304
        %v1412 = vadd.f32 %v1187, %v1305
        %v1413 = vadd.f32 %v1188, %v1307
        %v1414 = vadd.f32 %v1189, %v1308
        %v1415 = vadd.f32 %v1190, %v1309
        %v1416 = vadd.f32 %v1191, %v1311
        %v1417 = vadd.f32 %v1192, %v1312
        %v1418 = vadd.f32 %v1193, %v1313
        %v1419 = vadd.f32 %v1194, %v1315
        %v1420 = vadd.f32 %v1195, %v1316
        %v1421 = vadd.f32 %v1196, %v1317
        %v1422 = vadd.f32 %v1197, %v1319
        %v1423 = vadd.f32 %v1198, %v1320
        %v1424 = vadd.f32 %v1199, %v1321
        %v1425 = vadd.f32 %v1200, %v1323
        %v1426 = vadd.f32 %v1201, %v1324
        %v1427 = vadd.f32 %v1202, %v1325
        %v1428 = vadd.f32 %v1203, %v1327
        %v1429 = vadd.f32 %v1204, %v1328
        %v1430 = vadd.f32 %v1205, %v1329
        %v1431 = vadd.f32 %v1206, %v1331
        %v1432 = vadd.f32 %v1207, %v1332
        %v1433 = vadd.f32 %v1208, %v1333
        %v1434 = vadd.f32 %v1209, %v1335
        %v1435 = vadd.f32 %v1210, %v1336
        %v1436 = vadd.f32 %v1211, %v1337
        %v1437 = vadd.f32 %v1212, %v1339
        %v1438 = vadd.f32 %v1213, %v1340
        %v1439 = vadd.f32 %v1214, %v1341
        %v1440 = vadd.f32 %v1215, %v1343
        %v1441 = vadd.f32 %v1216, %v1344
        %v1442 = vadd.f32 %v1217, %v1345
        %v1443 = vadd.f32 %v1218, %v1347
        %v1444 = vadd.f32 %v1219, %v1348
        %v1445 = vadd.f32 %v1220, %v1349
        %v1446 = vadd.f32 %v1221, %v1351
        %v1447 = vadd.f32 %v1222, %v1352
        %v1448 = vld [vmem:[%s1 + $0x5] sm:$0x1]
        %v1449 = vlaneseq
        %v1450 = vshrl.u32 %v1449, 7
        %v1451 = vsub.s32 0, %v1450
        %v1452 = vrot.slane %v1448, %v1451
        %v1453 = vmul.f32 %v352, %v1452
        %v1454 = vmul.f32 %v353, %v1452
        %v1455 = vmul.f32 %v1452, 0.0
        %v1456 = vmul.f32 %v354, %v1452
        %v1457 = vmul.f32 %v355, %v1452
        %v1458 = vmul.f32 %v356, %v1452
        %v1459 = vmul.f32 %v357, %v1452
        %v1460 = vmul.f32 %v358, %v1452
        %v1461 = vmul.f32 %v359, %v1452
        %v1462 = vmul.f32 %v360, %v1452
        %v1463 = vmul.f32 %v361, %v1452
        %v1464 = vmul.f32 %v362, %v1452
        %v1465 = vmul.f32 %v363, %v1452
        %v1466 = vmul.f32 %v364, %v1452
        %v1467 = vmul.f32 %v365, %v1452
        %v1468 = vmul.f32 %v366, %v1452
        %v1469 = vmul.f32 %v367, %v1452
        %v1470 = vmul.f32 %v368, %v1452
        %v1471 = vmul.f32 %v369, %v1452
        %v1472 = vmul.f32 %v370, %v1452
        %v1473 = vmul.f32 %v371, %v1452
        %v1474 = vmul.f32 %v372, %v1452
        %v1475 = vmul.f32 %v373, %v1452
        %v1476 = vmul.f32 %v374, %v1452
        %v1477 = vmul.f32 %v375, %v1452
        %v1478 = vmul.f32 %v376, %v1452
        %v1479 = vmul.f32 %v377, %v1452
        %v1480 = vmul.f32 %v378, %v1452
        %v1481 = vmul.f32 %v379, %v1452
        %v1482 = vmul.f32 %v380, %v1452
        %v1483 = vmul.f32 %v381, %v1452
        %v1484 = vmul.f32 %v382, %v1452
        %v1485 = vmul.f32 %v383, %v1452
        %v1519 = vrot.slane %v1453, 2
        %v1520 = vrot.slane %v1454, 2
        %v1521 = vsel %vm1290, %v1519, %v1520
        %v1522 = vrot.slane %v1455, 2
        %v1523 = vsel %vm1290, %v1520, %v1522
        %v1524 = vrot.slane %v1456, 2
        %v1525 = vrot.slane %v1457, 2
        %v1526 = vsel %vm1290, %v1524, %v1525
        %v1527 = vsel %vm1290, %v1525, %v1522
        %v1528 = vrot.slane %v1458, 2
        %v1529 = vrot.slane %v1459, 2
        %v1530 = vsel %vm1290, %v1528, %v1529
        %v1531 = vsel %vm1290, %v1529, %v1522
        %v1532 = vrot.slane %v1460, 2
        %v1533 = vrot.slane %v1461, 2
        %v1534 = vsel %vm1290, %v1532, %v1533
        %v1535 = vsel %vm1290, %v1533, %v1522
        %v1536 = vrot.slane %v1462, 2
        %v1537 = vrot.slane %v1463, 2
        %v1538 = vsel %vm1290, %v1536, %v1537
        %v1539 = vsel %vm1290, %v1537, %v1522
        %v1540 = vrot.slane %v1464, 2
        %v1541 = vrot.slane %v1465, 2
        %v1542 = vsel %vm1290, %v1540, %v1541
        %v1543 = vsel %vm1290, %v1541, %v1522
        %v1544 = vrot.slane %v1466, 2
        %v1545 = vrot.slane %v1467, 2
        %v1546 = vsel %vm1290, %v1544, %v1545
        %v1547 = vsel %vm1290, %v1545, %v1522
        %v1548 = vrot.slane %v1468, 2
        %v1549 = vrot.slane %v1469, 2
        %v1550 = vsel %vm1290, %v1548, %v1549
        %v1551 = vsel %vm1290, %v1549, %v1522
        %v1552 = vrot.slane %v1470, 2
        %v1553 = vrot.slane %v1471, 2
        %v1554 = vsel %vm1290, %v1552, %v1553
        %v1555 = vsel %vm1290, %v1553, %v1522
        %v1556 = vrot.slane %v1472, 2
        %v1557 = vrot.slane %v1473, 2
        %v1558 = vsel %vm1290, %v1556, %v1557
        %v1559 = vsel %vm1290, %v1557, %v1522
        %v1560 = vrot.slane %v1474, 2
        %v1561 = vrot.slane %v1475, 2
        %v1562 = vsel %vm1290, %v1560, %v1561
        %v1563 = vsel %vm1290, %v1561, %v1522
        %v1564 = vrot.slane %v1476, 2
        %v1565 = vrot.slane %v1477, 2
        %v1566 = vsel %vm1290, %v1564, %v1565
        %v1567 = vsel %vm1290, %v1565, %v1522
        %v1568 = vrot.slane %v1478, 2
        %v1569 = vrot.slane %v1479, 2
        %v1570 = vsel %vm1290, %v1568, %v1569
        %v1571 = vsel %vm1290, %v1569, %v1522
        %v1572 = vrot.slane %v1480, 2
        %v1573 = vrot.slane %v1481, 2
        %v1574 = vsel %vm1290, %v1572, %v1573
        %v1575 = vsel %vm1290, %v1573, %v1522
        %v1576 = vrot.slane %v1482, 2
        %v1577 = vrot.slane %v1483, 2
        %v1578 = vsel %vm1290, %v1576, %v1577
        %v1579 = vsel %vm1290, %v1577, %v1522
        %v1580 = vrot.slane %v1484, 2
        %v1581 = vrot.slane %v1485, 2
        %v1582 = vsel %vm1290, %v1580, %v1581
        %v1583 = vsel %vm1290, %v1581, %v1522
        %v1632 = vadd.f32 %v1400, %v1519
        %v1633 = vadd.f32 %v1401, %v1521
        %v1634 = vadd.f32 %v1402, %v1523
        %v1635 = vadd.f32 %v1403, %v1524
        %v1636 = vadd.f32 %v1404, %v1526
        %v1637 = vadd.f32 %v1405, %v1527
        %v1638 = vadd.f32 %v1406, %v1528
        %v1639 = vadd.f32 %v1407, %v1530
        %v1640 = vadd.f32 %v1408, %v1531
        %v1641 = vadd.f32 %v1409, %v1532
        %v1642 = vadd.f32 %v1410, %v1534
        %v1643 = vadd.f32 %v1411, %v1535
        %v1644 = vadd.f32 %v1412, %v1536
        %v1645 = vadd.f32 %v1413, %v1538
        %v1646 = vadd.f32 %v1414, %v1539
        %v1647 = vadd.f32 %v1415, %v1540
        %v1648 = vadd.f32 %v1416, %v1542
        %v1649 = vadd.f32 %v1417, %v1543
        %v1650 = vadd.f32 %v1418, %v1544
        %v1651 = vadd.f32 %v1419, %v1546
        %v1652 = vadd.f32 %v1420, %v1547
        %v1653 = vadd.f32 %v1421, %v1548
        %v1654 = vadd.f32 %v1422, %v1550
        %v1655 = vadd.f32 %v1423, %v1551
        %v1656 = vadd.f32 %v1424, %v1552
        %v1657 = vadd.f32 %v1425, %v1554
        %v1658 = vadd.f32 %v1426, %v1555
        %v1659 = vadd.f32 %v1427, %v1556
        %v1660 = vadd.f32 %v1428, %v1558
        %v1661 = vadd.f32 %v1429, %v1559
        %v1662 = vadd.f32 %v1430, %v1560
        %v1663 = vadd.f32 %v1431, %v1562
        %v1664 = vadd.f32 %v1432, %v1563
        %v1665 = vadd.f32 %v1433, %v1564
        %v1666 = vadd.f32 %v1434, %v1566
        %v1667 = vadd.f32 %v1435, %v1567
        %v1668 = vadd.f32 %v1436, %v1568
        %v1669 = vadd.f32 %v1437, %v1570
        %v1670 = vadd.f32 %v1438, %v1571
        %v1671 = vadd.f32 %v1439, %v1572
        %v1672 = vadd.f32 %v1440, %v1574
        %v1673 = vadd.f32 %v1441, %v1575
        %v1674 = vadd.f32 %v1442, %v1576
        %v1675 = vadd.f32 %v1443, %v1578
        %v1676 = vadd.f32 %v1444, %v1579
        %v1677 = vadd.f32 %v1445, %v1580
        %v1678 = vadd.f32 %v1446, %v1582
        %v1679 = vadd.f32 %v1447, %v1583
        %v1680 = vld [vmem:[%s1 + $0x8] sm:$0x1]
        %v1681 = vlaneseq
        %v1682 = vshrl.u32 %v1681, 7
        %v1683 = vsub.s32 0, %v1682
        %v1684 = vrot.slane %v1680, %v1683
        %v1685 = vmul.f32 %v354, %v1684
        %v1686 = vmul.f32 %v355, %v1684
        %v1687 = vmul.f32 %v1684, 0.0
        %v1688 = vmul.f32 %v356, %v1684
        %v1689 = vmul.f32 %v357, %v1684
        %v1690 = vmul.f32 %v358, %v1684
        %v1691 = vmul.f32 %v359, %v1684
        %v1692 = vmul.f32 %v360, %v1684
        %v1693 = vmul.f32 %v361, %v1684
        %v1694 = vmul.f32 %v362, %v1684
        %v1695 = vmul.f32 %v363, %v1684
        %v1696 = vmul.f32 %v364, %v1684
        %v1697 = vmul.f32 %v365, %v1684
        %v1698 = vmul.f32 %v366, %v1684
        %v1699 = vmul.f32 %v367, %v1684
        %v1700 = vmul.f32 %v368, %v1684
        %v1701 = vmul.f32 %v369, %v1684
        %v1702 = vmul.f32 %v370, %v1684
        %v1703 = vmul.f32 %v371, %v1684
        %v1704 = vmul.f32 %v372, %v1684
        %v1705 = vmul.f32 %v373, %v1684
        %v1706 = vmul.f32 %v374, %v1684
        %v1707 = vmul.f32 %v375, %v1684
        %v1708 = vmul.f32 %v376, %v1684
        %v1709 = vmul.f32 %v377, %v1684
        %v1710 = vmul.f32 %v378, %v1684
        %v1711 = vmul.f32 %v379, %v1684
        %v1712 = vmul.f32 %v380, %v1684
        %v1713 = vmul.f32 %v381, %v1684
        %v1714 = vmul.f32 %v382, %v1684
        %v1715 = vmul.f32 %v383, %v1684
        %v1747 = vrot.slane %v1685, 2
        %v1748 = vrot.slane %v1686, 2
        %v1749 = vsel %vm1290, %v1747, %v1748
        %v1750 = vrot.slane %v1687, 2
        %v1751 = vsel %vm1290, %v1748, %v1750
        %v1752 = vrot.slane %v1688, 2
        %v1753 = vrot.slane %v1689, 2
        %v1754 = vsel %vm1290, %v1752, %v1753
        %v1755 = vsel %vm1290, %v1753, %v1750
        %v1756 = vrot.slane %v1690, 2
        %v1757 = vrot.slane %v1691, 2
        %v1758 = vsel %vm1290, %v1756, %v1757
        %v1759 = vsel %vm1290, %v1757, %v1750
        %v1760 = vrot.slane %v1692, 2
        %v1761 = vrot.slane %v1693, 2
        %v1762 = vsel %vm1290, %v1760, %v1761
        %v1763 = vsel %vm1290, %v1761, %v1750
        %v1764 = vrot.slane %v1694, 2
        %v1765 = vrot.slane %v1695, 2
        %v1766 = vsel %vm1290, %v1764, %v1765
        %v1767 = vsel %vm1290, %v1765, %v1750
        %v1768 = vrot.slane %v1696, 2
        %v1769 = vrot.slane %v1697, 2
        %v1770 = vsel %vm1290, %v1768, %v1769
        %v1771 = vsel %vm1290, %v1769, %v1750
        %v1772 = vrot.slane %v1698, 2
        %v1773 = vrot.slane %v1699, 2
        %v1774 = vsel %vm1290, %v1772, %v1773
        %v1775 = vsel %vm1290, %v1773, %v1750
        %v1776 = vrot.slane %v1700, 2
        %v1777 = vrot.slane %v1701, 2
        %v1778 = vsel %vm1290, %v1776, %v1777
        %v1779 = vsel %vm1290, %v1777, %v1750
        %v1780 = vrot.slane %v1702, 2
        %v1781 = vrot.slane %v1703, 2
        %v1782 = vsel %vm1290, %v1780, %v1781
        %v1783 = vsel %vm1290, %v1781, %v1750
        %v1784 = vrot.slane %v1704, 2
        %v1785 = vrot.slane %v1705, 2
        %v1786 = vsel %vm1290, %v1784, %v1785
        %v1787 = vsel %vm1290, %v1785, %v1750
        %v1788 = vrot.slane %v1706, 2
        %v1789 = vrot.slane %v1707, 2
        %v1790 = vsel %vm1290, %v1788, %v1789
        %v1791 = vsel %vm1290, %v1789, %v1750
        %v1792 = vrot.slane %v1708, 2
        %v1793 = vrot.slane %v1709, 2
        %v1794 = vsel %vm1290, %v1792, %v1793
        %v1795 = vsel %vm1290, %v1793, %v1750
        %v1796 = vrot.slane %v1710, 2
        %v1797 = vrot.slane %v1711, 2
        %v1798 = vsel %vm1290, %v1796, %v1797
        %v1799 = vsel %vm1290, %v1797, %v1750
        %v1800 = vrot.slane %v1712, 2
        %v1801 = vrot.slane %v1713, 2
        %v1802 = vsel %vm1290, %v1800, %v1801
        %v1803 = vsel %vm1290, %v1801, %v1750
        %v1804 = vrot.slane %v1714, 2
        %v1805 = vrot.slane %v1715, 2
        %v1806 = vsel %vm1290, %v1804, %v1805
        %v1807 = vsel %vm1290, %v1805, %v1750
        %v1808 = vsel %vm1290, %v1750, %v1750
        %v1856 = vadd.f32 %v1632, %v1747
        %v1857 = vadd.f32 %v1633, %v1749
        %v1858 = vadd.f32 %v1634, %v1751
        %v1859 = vadd.f32 %v1635, %v1752
        %v1860 = vadd.f32 %v1636, %v1754
        %v1861 = vadd.f32 %v1637, %v1755
        %v1862 = vadd.f32 %v1638, %v1756
        %v1863 = vadd.f32 %v1639, %v1758
        %v1864 = vadd.f32 %v1640, %v1759
        %v1865 = vadd.f32 %v1641, %v1760
        %v1866 = vadd.f32 %v1642, %v1762
        %v1867 = vadd.f32 %v1643, %v1763
        %v1868 = vadd.f32 %v1644, %v1764
        %v1869 = vadd.f32 %v1645, %v1766
        %v1870 = vadd.f32 %v1646, %v1767
        %v1871 = vadd.f32 %v1647, %v1768
        %v1872 = vadd.f32 %v1648, %v1770
        %v1873 = vadd.f32 %v1649, %v1771
        %v1874 = vadd.f32 %v1650, %v1772
        %v1875 = vadd.f32 %v1651, %v1774
        %v1876 = vadd.f32 %v1652, %v1775
        %v1877 = vadd.f32 %v1653, %v1776
        %v1878 = vadd.f32 %v1654, %v1778
        %v1879 = vadd.f32 %v1655, %v1779
        %v1880 = vadd.f32 %v1656, %v1780
        %v1881 = vadd.f32 %v1657, %v1782
        %v1882 = vadd.f32 %v1658, %v1783
        %v1883 = vadd.f32 %v1659, %v1784
        %v1884 = vadd.f32 %v1660, %v1786
        %v1885 = vadd.f32 %v1661, %v1787
        %v1886 = vadd.f32 %v1662, %v1788
        %v1887 = vadd.f32 %v1663, %v1790
        %v1888 = vadd.f32 %v1664, %v1791
        %v1889 = vadd.f32 %v1665, %v1792
        %v1890 = vadd.f32 %v1666, %v1794
        %v1891 = vadd.f32 %v1667, %v1795
        %v1892 = vadd.f32 %v1668, %v1796
        %v1893 = vadd.f32 %v1669, %v1798
        %v1894 = vadd.f32 %v1670, %v1799
        %v1895 = vadd.f32 %v1671, %v1800
        %v1896 = vadd.f32 %v1672, %v1802
        %v1897 = vadd.f32 %v1673, %v1803
        %v1898 = vadd.f32 %v1674, %v1804
        %v1899 = vadd.f32 %v1675, %v1806
        %v1900 = vadd.f32 %v1676, %v1807
        %v1901 = vadd.f32 %v1677, %v1750
        %v1902 = vadd.f32 %v1678, %v1808
        %v1903 = vadd.f32 %v1679, %v1808
        %v1904 = vld [vmem:[%s2] sm:$0x1]
        %v1906 = vlaneseq
        %v1907 = vshrl.u32 %v1906, 7
        %v1908 = vsub.s32 0, %v1907
        %v1909 = vrot.slane %v1904, %v1908
        %v1911 = vadd.f32 %v1856, %v1909
        %v1912 = vadd.f32 %v1857, %v1909
        %v1913 = vadd.f32 %v1858, %v1909
        %v1914 = vadd.f32 %v1859, %v1909
        %v1915 = vadd.f32 %v1860, %v1909
        %v1916 = vadd.f32 %v1861, %v1909
        %v1917 = vadd.f32 %v1862, %v1909
        %v1918 = vadd.f32 %v1863, %v1909
        %v1919 = vadd.f32 %v1864, %v1909
        %v1920 = vadd.f32 %v1865, %v1909
        %v1921 = vadd.f32 %v1866, %v1909
        %v1922 = vadd.f32 %v1867, %v1909
        %v1923 = vadd.f32 %v1868, %v1909
        %v1924 = vadd.f32 %v1869, %v1909
        %v1925 = vadd.f32 %v1870, %v1909
        %v1926 = vadd.f32 %v1871, %v1909
        %v1927 = vadd.f32 %v1872, %v1909
        %v1928 = vadd.f32 %v1873, %v1909
        %v1929 = vadd.f32 %v1874, %v1909
        %v1930 = vadd.f32 %v1875, %v1909
        %v1931 = vadd.f32 %v1876, %v1909
        %v1932 = vadd.f32 %v1877, %v1909
        %v1933 = vadd.f32 %v1878, %v1909
        %v1934 = vadd.f32 %v1879, %v1909
        %v1935 = vadd.f32 %v1880, %v1909
        %v1936 = vadd.f32 %v1881, %v1909
        %v1937 = vadd.f32 %v1882, %v1909
        %v1938 = vadd.f32 %v1883, %v1909
        %v1939 = vadd.f32 %v1884, %v1909
        %v1940 = vadd.f32 %v1885, %v1909
        %v1941 = vadd.f32 %v1886, %v1909
        %v1942 = vadd.f32 %v1887, %v1909
        %v1943 = vadd.f32 %v1888, %v1909
        %v1944 = vadd.f32 %v1889, %v1909
        %v1945 = vadd.f32 %v1890, %v1909
        %v1946 = vadd.f32 %v1891, %v1909
        %v1947 = vadd.f32 %v1892, %v1909
        %v1948 = vadd.f32 %v1893, %v1909
        %v1949 = vadd.f32 %v1894, %v1909
        %v1950 = vadd.f32 %v1895, %v1909
        %v1951 = vadd.f32 %v1896, %v1909
        %v1952 = vadd.f32 %v1897, %v1909
        %v1953 = vadd.f32 %v1898, %v1909
        %v1954 = vadd.f32 %v1899, %v1909
        %v1955 = vadd.f32 %v1900, %v1909
        %v1956 = vadd.f32 %v1901, %v1909
        %v1957 = vadd.f32 %v1902, %v1909
        %v1958 = vadd.f32 %v1903, %v1909
        %vm2007 = vcmask 1040384
        %v2008 = vrot.slane %v1911, 7
        %v2009 = vrot.slane %v1912, 7
        %v2010 = vsel %vm2007, %v2008, %v2009
        %v2011 = vrot.slane %v1913, 7
        %v2012 = vsel %vm2007, %v2009, %v2011
        %v2013 = vrot.slane %v1914, 7
        %v2014 = vrot.slane %v1915, 7
        %v2015 = vsel %vm2007, %v2013, %v2014
        %v2016 = vrot.slane %v1916, 7
        %v2017 = vsel %vm2007, %v2014, %v2016
        %v2018 = vrot.slane %v1917, 7
        %v2019 = vrot.slane %v1918, 7
        %v2020 = vsel %vm2007, %v2018, %v2019
        %v2021 = vrot.slane %v1919, 7
        %v2022 = vsel %vm2007, %v2019, %v2021
        %v2023 = vrot.slane %v1920, 7
        %v2024 = vrot.slane %v1921, 7
        %v2025 = vsel %vm2007, %v2023, %v2024
        %v2026 = vrot.slane %v1922, 7
        %v2027 = vsel %vm2007, %v2024, %v2026
        %v2028 = vrot.slane %v1923, 7
        %v2029 = vrot.slane %v1924, 7
        %v2030 = vsel %vm2007, %v2028, %v2029
        %v2031 = vrot.slane %v1925, 7
        %v2032 = vsel %vm2007, %v2029, %v2031
        %v2033 = vrot.slane %v1926, 7
        %v2034 = vrot.slane %v1927, 7
        %v2035 = vsel %vm2007, %v2033, %v2034
        %v2036 = vrot.slane %v1928, 7
        %v2037 = vsel %vm2007, %v2034, %v2036
        %v2038 = vrot.slane %v1929, 7
        %v2039 = vrot.slane %v1930, 7
        %v2040 = vsel %vm2007, %v2038, %v2039
        %v2041 = vrot.slane %v1931, 7
        %v2042 = vsel %vm2007, %v2039, %v2041
        %v2043 = vrot.slane %v1932, 7
        %v2044 = vrot.slane %v1933, 7
        %v2045 = vsel %vm2007, %v2043, %v2044
        %v2046 = vrot.slane %v1934, 7
        %v2047 = vsel %vm2007, %v2044, %v2046
        %v2048 = vrot.slane %v1935, 7
        %v2049 = vrot.slane %v1936, 7
        %v2050 = vsel %vm2007, %v2048, %v2049
        %v2051 = vrot.slane %v1937, 7
        %v2052 = vsel %vm2007, %v2049, %v2051
        %v2053 = vrot.slane %v1938, 7
        %v2054 = vrot.slane %v1939, 7
        %v2055 = vsel %vm2007, %v2053, %v2054
        %v2056 = vrot.slane %v1940, 7
        %v2057 = vsel %vm2007, %v2054, %v2056
        %v2058 = vrot.slane %v1941, 7
        %v2059 = vrot.slane %v1942, 7
        %v2060 = vsel %vm2007, %v2058, %v2059
        %v2061 = vrot.slane %v1943, 7
        %v2062 = vsel %vm2007, %v2059, %v2061
        %v2063 = vrot.slane %v1944, 7
        %v2064 = vrot.slane %v1945, 7
        %v2065 = vsel %vm2007, %v2063, %v2064
        %v2066 = vrot.slane %v1946, 7
        %v2067 = vsel %vm2007, %v2064, %v2066
        %v2068 = vrot.slane %v1947, 7
        %v2069 = vrot.slane %v1948, 7
        %v2070 = vsel %vm2007, %v2068, %v2069
        %v2071 = vrot.slane %v1949, 7
        %v2072 = vsel %vm2007, %v2069, %v2071
        %v2073 = vrot.slane %v1950, 7
        %v2074 = vrot.slane %v1951, 7
        %v2075 = vsel %vm2007, %v2073, %v2074
        %v2076 = vrot.slane %v1952, 7
        %v2077 = vsel %vm2007, %v2074, %v2076
        %v2078 = vrot.slane %v1953, 7
        %v2079 = vrot.slane %v1954, 7
        %v2080 = vsel %vm2007, %v2078, %v2079
        %v2081 = vrot.slane %v1955, 7
        %v2082 = vsel %vm2007, %v2079, %v2081
        %v2083 = vrot.slane %v1956, 7
        %v2084 = vrot.slane %v1957, 7
        %v2085 = vsel %vm2007, %v2083, %v2084
        %v2086 = vrot.slane %v1958, 7
        %v2087 = vsel %vm2007, %v2084, %v2086
        %v2120 = vld [vmem:[%s3] sm:$0x1]
        %v2121 = vlaneseq
        %v2122 = vshrl.u32 %v2121, 7
        %v2123 = vsub.s32 0, %v2122
        %v2124 = vrot.slane %v2120, %v2123
        %v2125 = vmul.f32 %v2124, 0.0
        %v2126 = vmul.f32 %v2010, %v2124
        %v2127 = vmul.f32 %v2012, %v2124
        %v2128 = vmul.f32 %v2015, %v2124
        %v2129 = vmul.f32 %v2017, %v2124
        %v2130 = vmul.f32 %v2020, %v2124
        %v2131 = vmul.f32 %v2022, %v2124
        %v2132 = vmul.f32 %v2025, %v2124
        %v2133 = vmul.f32 %v2027, %v2124
        %v2134 = vmul.f32 %v2030, %v2124
        %v2135 = vmul.f32 %v2032, %v2124
        %v2136 = vmul.f32 %v2035, %v2124
        %v2137 = vmul.f32 %v2037, %v2124
        %v2138 = vmul.f32 %v2040, %v2124
        %v2139 = vmul.f32 %v2042, %v2124
        %v2140 = vmul.f32 %v2045, %v2124
        %v2141 = vmul.f32 %v2047, %v2124
        %v2142 = vmul.f32 %v2050, %v2124
        %v2143 = vmul.f32 %v2052, %v2124
        %v2144 = vmul.f32 %v2055, %v2124
        %v2145 = vmul.f32 %v2057, %v2124
        %v2146 = vmul.f32 %v2060, %v2124
        %v2147 = vmul.f32 %v2062, %v2124
        %v2148 = vmul.f32 %v2065, %v2124
        %v2149 = vmul.f32 %v2067, %v2124
        %v2150 = vmul.f32 %v2070, %v2124
        %v2151 = vmul.f32 %v2072, %v2124
        %v2152 = vadd.f32 %v2125, 0.0
        %v2153 = vadd.f32 %v2126, 0.0
        %v2154 = vadd.f32 %v2127, 0.0
        %v2155 = vadd.f32 %v2128, 0.0
        %v2156 = vadd.f32 %v2129, 0.0
        %v2157 = vadd.f32 %v2130, 0.0
        %v2158 = vadd.f32 %v2131, 0.0
        %v2159 = vadd.f32 %v2132, 0.0
        %v2160 = vadd.f32 %v2133, 0.0
        %v2161 = vadd.f32 %v2134, 0.0
        %v2162 = vadd.f32 %v2135, 0.0
        %v2163 = vadd.f32 %v2136, 0.0
        %v2164 = vadd.f32 %v2137, 0.0
        %v2165 = vadd.f32 %v2138, 0.0
        %v2166 = vadd.f32 %v2139, 0.0
        %v2167 = vadd.f32 %v2140, 0.0
        %v2168 = vadd.f32 %v2141, 0.0
        %v2169 = vadd.f32 %v2142, 0.0
        %v2170 = vadd.f32 %v2143, 0.0
        %v2171 = vadd.f32 %v2144, 0.0
        %v2172 = vadd.f32 %v2145, 0.0
        %v2173 = vadd.f32 %v2146, 0.0
        %v2174 = vadd.f32 %v2147, 0.0
        %v2175 = vadd.f32 %v2148, 0.0
        %v2176 = vadd.f32 %v2149, 0.0
        %v2177 = vadd.f32 %v2150, 0.0
        %v2178 = vadd.f32 %v2151, 0.0
        %v2179 = vld [vmem:[%s3 + $0x7] sm:$0x1]
        %v2180 = vlaneseq
        %v2181 = vshrl.u32 %v2180, 7
        %v2182 = vsub.s32 0, %v2181
        %v2183 = vrot.slane %v2179, %v2182
        %v2184 = vmul.f32 %v2183, 0.0
        %v2185 = vmul.f32 %v2010, %v2183
        %v2186 = vmul.f32 %v2012, %v2183
        %v2187 = vmul.f32 %v2015, %v2183
        %v2188 = vmul.f32 %v2017, %v2183
        %v2189 = vmul.f32 %v2020, %v2183
        %v2190 = vmul.f32 %v2022, %v2183
        %v2191 = vmul.f32 %v2025, %v2183
        %v2192 = vmul.f32 %v2027, %v2183
        %v2193 = vmul.f32 %v2030, %v2183
        %v2194 = vmul.f32 %v2032, %v2183
        %v2195 = vmul.f32 %v2035, %v2183
        %v2196 = vmul.f32 %v2037, %v2183
        %v2197 = vmul.f32 %v2040, %v2183
        %v2198 = vmul.f32 %v2042, %v2183
        %v2199 = vmul.f32 %v2045, %v2183
        %v2200 = vmul.f32 %v2047, %v2183
        %v2201 = vmul.f32 %v2050, %v2183
        %v2202 = vmul.f32 %v2052, %v2183
        %v2203 = vmul.f32 %v2055, %v2183
        %v2204 = vmul.f32 %v2057, %v2183
        %v2205 = vmul.f32 %v2060, %v2183
        %v2206 = vmul.f32 %v2062, %v2183
        %v2207 = vmul.f32 %v2065, %v2183
        %v2208 = vmul.f32 %v2067, %v2183
        %v2209 = vmul.f32 %v2070, %v2183
        %v2210 = vmul.f32 %v2072, %v2183
        %v2211 = vmul.f32 %v2075, %v2183
        %v2212 = vmul.f32 %v2077, %v2183
        %v2213 = vadd.f32 %v2152, %v2184
        %v2214 = vadd.f32 %v2152, %v2185
        %v2215 = vadd.f32 %v2152, %v2186
        %v2216 = vadd.f32 %v2153, %v2187
        %v2217 = vadd.f32 %v2154, %v2188
        %v2218 = vadd.f32 %v2155, %v2189
        %v2219 = vadd.f32 %v2156, %v2190
        %v2220 = vadd.f32 %v2157, %v2191
        %v2221 = vadd.f32 %v2158, %v2192
        %v2222 = vadd.f32 %v2159, %v2193
        %v2223 = vadd.f32 %v2160, %v2194
        %v2224 = vadd.f32 %v2161, %v2195
        %v2225 = vadd.f32 %v2162, %v2196
        %v2226 = vadd.f32 %v2163, %v2197
        %v2227 = vadd.f32 %v2164, %v2198
        %v2228 = vadd.f32 %v2165, %v2199
        %v2229 = vadd.f32 %v2166, %v2200
        %v2230 = vadd.f32 %v2167, %v2201
        %v2231 = vadd.f32 %v2168, %v2202
        %v2232 = vadd.f32 %v2169, %v2203
        %v2233 = vadd.f32 %v2170, %v2204
        %v2234 = vadd.f32 %v2171, %v2205
        %v2235 = vadd.f32 %v2172, %v2206
        %v2236 = vadd.f32 %v2173, %v2207
        %v2237 = vadd.f32 %v2174, %v2208
        %v2238 = vadd.f32 %v2175, %v2209
        %v2239 = vadd.f32 %v2176, %v2210
        %v2240 = vadd.f32 %v2177, %v2211
        %v2241 = vadd.f32 %v2178, %v2212
        %v2242 = vld [vmem:[%s3 + $0xe] sm:$0x1]
        %v2243 = vlaneseq
        %v2244 = vshrl.u32 %v2243, 7
        %v2245 = vsub.s32 0, %v2244
        %v2246 = vrot.slane %v2242, %v2245
        %v2247 = vmul.f32 %v2246, 0.0
        %v2248 = vmul.f32 %v2010, %v2246
        %v2249 = vmul.f32 %v2012, %v2246
        %v2250 = vmul.f32 %v2015, %v2246
        %v2251 = vmul.f32 %v2017, %v2246
        %v2252 = vmul.f32 %v2020, %v2246
        %v2253 = vmul.f32 %v2022, %v2246
        %v2254 = vmul.f32 %v2025, %v2246
        %v2255 = vmul.f32 %v2027, %v2246
        %v2256 = vmul.f32 %v2030, %v2246
        %v2257 = vmul.f32 %v2032, %v2246
        %v2258 = vmul.f32 %v2035, %v2246
        %v2259 = vmul.f32 %v2037, %v2246
        %v2260 = vmul.f32 %v2040, %v2246
        %v2261 = vmul.f32 %v2042, %v2246
        %v2262 = vmul.f32 %v2045, %v2246
        %v2263 = vmul.f32 %v2047, %v2246
        %v2264 = vmul.f32 %v2050, %v2246
        %v2265 = vmul.f32 %v2052, %v2246
        %v2266 = vmul.f32 %v2055, %v2246
        %v2267 = vmul.f32 %v2057, %v2246
        %v2268 = vmul.f32 %v2060, %v2246
        %v2269 = vmul.f32 %v2062, %v2246
        %v2270 = vmul.f32 %v2065, %v2246
        %v2271 = vmul.f32 %v2067, %v2246
        %v2272 = vmul.f32 %v2070, %v2246
        %v2273 = vmul.f32 %v2072, %v2246
        %v2274 = vmul.f32 %v2075, %v2246
        %v2275 = vmul.f32 %v2077, %v2246
        %v2276 = vmul.f32 %v2080, %v2246
        %v2277 = vmul.f32 %v2082, %v2246
        %v2278 = vadd.f32 %v2213, %v2247
        %v2279 = vadd.f32 %v2213, %v2248
        %v2280 = vadd.f32 %v2213, %v2249
        %v2281 = vadd.f32 %v2214, %v2250
        %v2282 = vadd.f32 %v2215, %v2251
        %v2283 = vadd.f32 %v2216, %v2252
        %v2284 = vadd.f32 %v2217, %v2253
        %v2285 = vadd.f32 %v2218, %v2254
        %v2286 = vadd.f32 %v2219, %v2255
        %v2287 = vadd.f32 %v2220, %v2256
        %v2288 = vadd.f32 %v2221, %v2257
        %v2289 = vadd.f32 %v2222, %v2258
        %v2290 = vadd.f32 %v2223, %v2259
        %v2291 = vadd.f32 %v2224, %v2260
        %v2292 = vadd.f32 %v2225, %v2261
        %v2293 = vadd.f32 %v2226, %v2262
        %v2294 = vadd.f32 %v2227, %v2263
        %v2295 = vadd.f32 %v2228, %v2264
        %v2296 = vadd.f32 %v2229, %v2265
        %v2297 = vadd.f32 %v2230, %v2266
        %v2298 = vadd.f32 %v2231, %v2267
        %v2299 = vadd.f32 %v2232, %v2268
        %v2300 = vadd.f32 %v2233, %v2269
        %v2301 = vadd.f32 %v2234, %v2270
        %v2302 = vadd.f32 %v2235, %v2271
        %v2303 = vadd.f32 %v2236, %v2272
        %v2304 = vadd.f32 %v2237, %v2273
        %v2305 = vadd.f32 %v2238, %v2274
        %v2306 = vadd.f32 %v2239, %v2275
        %v2307 = vadd.f32 %v2240, %v2276
        %v2308 = vadd.f32 %v2241, %v2277
        %v2309 = vld [vmem:[%s3 + $0x15] sm:$0x1]
        %v2310 = vlaneseq
        %v2311 = vshrl.u32 %v2310, 7
        %v2312 = vsub.s32 0, %v2311
        %v2313 = vrot.slane %v2309, %v2312
        %v2314 = vmul.f32 %v2313, 0.0
        %v2315 = vmul.f32 %v2010, %v2313
        %v2316 = vmul.f32 %v2012, %v2313
        %v2317 = vmul.f32 %v2015, %v2313
        %v2318 = vmul.f32 %v2017, %v2313
        %v2319 = vmul.f32 %v2020, %v2313
        %v2320 = vmul.f32 %v2022, %v2313
        %v2321 = vmul.f32 %v2025, %v2313
        %v2322 = vmul.f32 %v2027, %v2313
        %v2323 = vmul.f32 %v2030, %v2313
        %v2324 = vmul.f32 %v2032, %v2313
        %v2325 = vmul.f32 %v2035, %v2313
        %v2326 = vmul.f32 %v2037, %v2313
        %v2327 = vmul.f32 %v2040, %v2313
        %v2328 = vmul.f32 %v2042, %v2313
        %v2329 = vmul.f32 %v2045, %v2313
        %v2330 = vmul.f32 %v2047, %v2313
        %v2331 = vmul.f32 %v2050, %v2313
        %v2332 = vmul.f32 %v2052, %v2313
        %v2333 = vmul.f32 %v2055, %v2313
        %v2334 = vmul.f32 %v2057, %v2313
        %v2335 = vmul.f32 %v2060, %v2313
        %v2336 = vmul.f32 %v2062, %v2313
        %v2337 = vmul.f32 %v2065, %v2313
        %v2338 = vmul.f32 %v2067, %v2313
        %v2339 = vmul.f32 %v2070, %v2313
        %v2340 = vmul.f32 %v2072, %v2313
        %v2341 = vmul.f32 %v2075, %v2313
        %v2342 = vmul.f32 %v2077, %v2313
        %v2343 = vmul.f32 %v2080, %v2313
        %v2344 = vmul.f32 %v2082, %v2313
        %v2345 = vmul.f32 %v2085, %v2313
        %v2346 = vmul.f32 %v2087, %v2313
        %v2347 = vadd.f32 %v2278, %v2314
        %v2348 = vadd.f32 %v2278, %v2315
        %v2349 = vadd.f32 %v2278, %v2316
        %v2350 = vadd.f32 %v2279, %v2317
        %v2351 = vadd.f32 %v2280, %v2318
        %v2352 = vadd.f32 %v2281, %v2319
        %v2353 = vadd.f32 %v2282, %v2320
        %v2354 = vadd.f32 %v2283, %v2321
        %v2355 = vadd.f32 %v2284, %v2322
        %v2356 = vadd.f32 %v2285, %v2323
        %v2357 = vadd.f32 %v2286, %v2324
        %v2358 = vadd.f32 %v2287, %v2325
        %v2359 = vadd.f32 %v2288, %v2326
        %v2360 = vadd.f32 %v2289, %v2327
        %v2361 = vadd.f32 %v2290, %v2328
        %v2362 = vadd.f32 %v2291, %v2329
        %v2363 = vadd.f32 %v2292, %v2330
        %v2364 = vadd.f32 %v2293, %v2331
        %v2365 = vadd.f32 %v2294, %v2332
        %v2366 = vadd.f32 %v2295, %v2333
        %v2367 = vadd.f32 %v2296, %v2334
        %v2368 = vadd.f32 %v2297, %v2335
        %v2369 = vadd.f32 %v2298, %v2336
        %v2370 = vadd.f32 %v2299, %v2337
        %v2371 = vadd.f32 %v2300, %v2338
        %v2372 = vadd.f32 %v2301, %v2339
        %v2373 = vadd.f32 %v2302, %v2340
        %v2374 = vadd.f32 %v2303, %v2341
        %v2375 = vadd.f32 %v2304, %v2342
        %v2376 = vadd.f32 %v2305, %v2343
        %v2377 = vadd.f32 %v2306, %v2344
        %v2378 = vadd.f32 %v2307, %v2345
        %v2379 = vadd.f32 %v2308, %v2346
        %v2380 = vld [vmem:[%s3 + $0x1c] sm:$0x1]
        %v2381 = vlaneseq
        %v2382 = vshrl.u32 %v2381, 7
        %v2383 = vsub.s32 0, %v2382
        %v2384 = vrot.slane %v2380, %v2383
        %v2385 = vmul.f32 %v2384, 0.0
        %v2386 = vmul.f32 %v2015, %v2384
        %v2387 = vmul.f32 %v2017, %v2384
        %v2388 = vmul.f32 %v2020, %v2384
        %v2389 = vmul.f32 %v2022, %v2384
        %v2390 = vmul.f32 %v2025, %v2384
        %v2391 = vmul.f32 %v2027, %v2384
        %v2392 = vmul.f32 %v2030, %v2384
        %v2393 = vmul.f32 %v2032, %v2384
        %v2394 = vmul.f32 %v2035, %v2384
        %v2395 = vmul.f32 %v2037, %v2384
        %v2396 = vmul.f32 %v2040, %v2384
        %v2397 = vmul.f32 %v2042, %v2384
        %v2398 = vmul.f32 %v2045, %v2384
        %v2399 = vmul.f32 %v2047, %v2384
        %v2400 = vmul.f32 %v2050, %v2384
        %v2401 = vmul.f32 %v2052, %v2384
        %v2402 = vmul.f32 %v2055, %v2384
        %v2403 = vmul.f32 %v2057, %v2384
        %v2404 = vmul.f32 %v2060, %v2384
        %v2405 = vmul.f32 %v2062, %v2384
        %v2406 = vmul.f32 %v2065, %v2384
        %v2407 = vmul.f32 %v2067, %v2384
        %v2408 = vmul.f32 %v2070, %v2384
        %v2409 = vmul.f32 %v2072, %v2384
        %v2410 = vmul.f32 %v2075, %v2384
        %v2411 = vmul.f32 %v2077, %v2384
        %v2412 = vmul.f32 %v2080, %v2384
        %v2413 = vmul.f32 %v2082, %v2384
        %v2414 = vmul.f32 %v2085, %v2384
        %v2415 = vmul.f32 %v2087, %v2384
        %v2416 = vadd.f32 %v2347, %v2385
        %v2417 = vadd.f32 %v2348, %v2386
        %v2418 = vadd.f32 %v2349, %v2387
        %v2419 = vadd.f32 %v2350, %v2388
        %v2420 = vadd.f32 %v2351, %v2389
        %v2421 = vadd.f32 %v2352, %v2390
        %v2422 = vadd.f32 %v2353, %v2391
        %v2423 = vadd.f32 %v2354, %v2392
        %v2424 = vadd.f32 %v2355, %v2393
        %v2425 = vadd.f32 %v2356, %v2394
        %v2426 = vadd.f32 %v2357, %v2395
        %v2427 = vadd.f32 %v2358, %v2396
        %v2428 = vadd.f32 %v2359, %v2397
        %v2429 = vadd.f32 %v2360, %v2398
        %v2430 = vadd.f32 %v2361, %v2399
        %v2431 = vadd.f32 %v2362, %v2400
        %v2432 = vadd.f32 %v2363, %v2401
        %v2433 = vadd.f32 %v2364, %v2402
        %v2434 = vadd.f32 %v2365, %v2403
        %v2435 = vadd.f32 %v2366, %v2404
        %v2436 = vadd.f32 %v2367, %v2405
        %v2437 = vadd.f32 %v2368, %v2406
        %v2438 = vadd.f32 %v2369, %v2407
        %v2439 = vadd.f32 %v2370, %v2408
        %v2440 = vadd.f32 %v2371, %v2409
        %v2441 = vadd.f32 %v2372, %v2410
        %v2442 = vadd.f32 %v2373, %v2411
        %v2443 = vadd.f32 %v2374, %v2412
        %v2444 = vadd.f32 %v2375, %v2413
        %v2445 = vadd.f32 %v2376, %v2414
        %v2446 = vadd.f32 %v2377, %v2415
        %v2447 = vadd.f32 %v2378, %v2385
        %v2448 = vadd.f32 %v2379, %v2385
        %v2449 = vld [vmem:[%s3 + $0x23] sm:$0x1]
        %v2450 = vlaneseq
        %v2451 = vshrl.u32 %v2450, 7
        %v2452 = vsub.s32 0, %v2451
        %v2453 = vrot.slane %v2449, %v2452
        %v2454 = vmul.f32 %v2453, 0.0
        %v2455 = vmul.f32 %v2020, %v2453
        %v2456 = vmul.f32 %v2022, %v2453
        %v2457 = vmul.f32 %v2025, %v2453
        %v2458 = vmul.f32 %v2027, %v2453
        %v2459 = vmul.f32 %v2030, %v2453
        %v2460 = vmul.f32 %v2032, %v2453
        %v2461 = vmul.f32 %v2035, %v2453
        %v2462 = vmul.f32 %v2037, %v2453
        %v2463 = vmul.f32 %v2040, %v2453
        %v2464 = vmul.f32 %v2042, %v2453
        %v2465 = vmul.f32 %v2045, %v2453
        %v2466 = vmul.f32 %v2047, %v2453
        %v2467 = vmul.f32 %v2050, %v2453
        %v2468 = vmul.f32 %v2052, %v2453
        %v2469 = vmul.f32 %v2055, %v2453
        %v2470 = vmul.f32 %v2057, %v2453
        %v2471 = vmul.f32 %v2060, %v2453
        %v2472 = vmul.f32 %v2062, %v2453
        %v2473 = vmul.f32 %v2065, %v2453
        %v2474 = vmul.f32 %v2067, %v2453
        %v2475 = vmul.f32 %v2070, %v2453
        %v2476 = vmul.f32 %v2072, %v2453
        %v2477 = vmul.f32 %v2075, %v2453
        %v2478 = vmul.f32 %v2077, %v2453
        %v2479 = vmul.f32 %v2080, %v2453
        %v2480 = vmul.f32 %v2082, %v2453
        %v2481 = vmul.f32 %v2085, %v2453
        %v2482 = vmul.f32 %v2087, %v2453
        %v2483 = vadd.f32 %v2416, %v2454
        %v2484 = vadd.f32 %v2417, %v2455
        %v2485 = vadd.f32 %v2418, %v2456
        %v2486 = vadd.f32 %v2419, %v2457
        %v2487 = vadd.f32 %v2420, %v2458
        %v2488 = vadd.f32 %v2421, %v2459
        %v2489 = vadd.f32 %v2422, %v2460
        %v2490 = vadd.f32 %v2423, %v2461
        %v2491 = vadd.f32 %v2424, %v2462
        %v2492 = vadd.f32 %v2425, %v2463
        %v2493 = vadd.f32 %v2426, %v2464
        %v2494 = vadd.f32 %v2427, %v2465
        %v2495 = vadd.f32 %v2428, %v2466
        %v2496 = vadd.f32 %v2429, %v2467
        %v2497 = vadd.f32 %v2430, %v2468
        %v2498 = vadd.f32 %v2431, %v2469
        %v2499 = vadd.f32 %v2432, %v2470
        %v2500 = vadd.f32 %v2433, %v2471
        %v2501 = vadd.f32 %v2434, %v2472
        %v2502 = vadd.f32 %v2435, %v2473
        %v2503 = vadd.f32 %v2436, %v2474
        %v2504 = vadd.f32 %v2437, %v2475
        %v2505 = vadd.f32 %v2438, %v2476
        %v2506 = vadd.f32 %v2439, %v2477
        %v2507 = vadd.f32 %v2440, %v2478
        %v2508 = vadd.f32 %v2441, %v2479
        %v2509 = vadd.f32 %v2442, %v2480
        %v2510 = vadd.f32 %v2443, %v2481
        %v2511 = vadd.f32 %v2444, %v2482
        %v2512 = vadd.f32 %v2445, %v2454
        %v2513 = vadd.f32 %v2446, %v2454
        %v2514 = vadd.f32 %v2447, %v2454
        %v2515 = vadd.f32 %v2448, %v2454
        %v2516 = vld [vmem:[%s3 + $0x2a] sm:$0x1]
        %v2517 = vlaneseq
        %v2518 = vshrl.u32 %v2517, 7
        %v2519 = vsub.s32 0, %v2518
        %v2520 = vrot.slane %v2516, %v2519
        %v2521 = vmul.f32 %v2520, 0.0
        %v2522 = vmul.f32 %v2025, %v2520
        %v2523 = vmul.f32 %v2027, %v2520
        %v2524 = vmul.f32 %v2030, %v2520
        %v2525 = vmul.f32 %v2032, %v2520
        %v2526 = vmul.f32 %v2035, %v2520
        %v2527 = vmul.f32 %v2037, %v2520
        %v2528 = vmul.f32 %v2040, %v2520
        %v2529 = vmul.f32 %v2042, %v2520
        %v2530 = vmul.f32 %v2045, %v2520
        %v2531 = vmul.f32 %v2047, %v2520
        %v2532 = vmul.f32 %v2050, %v2520
        %v2533 = vmul.f32 %v2052, %v2520
        %v2534 = vmul.f32 %v2055, %v2520
        %v2535 = vmul.f32 %v2057, %v2520
        %v2536 = vmul.f32 %v2060, %v2520
        %v2537 = vmul.f32 %v2062, %v2520
        %v2538 = vmul.f32 %v2065, %v2520
        %v2539 = vmul.f32 %v2067, %v2520
        %v2540 = vmul.f32 %v2070, %v2520
        %v2541 = vmul.f32 %v2072, %v2520
        %v2542 = vmul.f32 %v2075, %v2520
        %v2543 = vmul.f32 %v2077, %v2520
        %v2544 = vmul.f32 %v2080, %v2520
        %v2545 = vmul.f32 %v2082, %v2520
        %v2546 = vmul.f32 %v2085, %v2520
        %v2547 = vmul.f32 %v2087, %v2520
        %v2548 = vadd.f32 %v2483, %v2521
        %v2549 = vadd.f32 %v2484, %v2522
        %v2550 = vadd.f32 %v2485, %v2523
        %v2551 = vadd.f32 %v2486, %v2524
        %v2552 = vadd.f32 %v2487, %v2525
        %v2553 = vadd.f32 %v2488, %v2526
        %v2554 = vadd.f32 %v2489, %v2527
        %v2555 = vadd.f32 %v2490, %v2528
        %v2556 = vadd.f32 %v2491, %v2529
        %v2557 = vadd.f32 %v2492, %v2530
        %v2558 = vadd.f32 %v2493, %v2531
        %v2559 = vadd.f32 %v2494, %v2532
        %v2560 = vadd.f32 %v2495, %v2533
        %v2561 = vadd.f32 %v2496, %v2534
        %v2562 = vadd.f32 %v2497, %v2535
        %v2563 = vadd.f32 %v2498, %v2536
        %v2564 = vadd.f32 %v2499, %v2537
        %v2565 = vadd.f32 %v2500, %v2538
        %v2566 = vadd.f32 %v2501, %v2539
        %v2567 = vadd.f32 %v2502, %v2540
        %v2568 = vadd.f32 %v2503, %v2541
        %v2569 = vadd.f32 %v2504, %v2542
        %v2570 = vadd.f32 %v2505, %v2543
        %v2571 = vadd.f32 %v2506, %v2544
        %v2572 = vadd.f32 %v2507, %v2545
        %v2573 = vadd.f32 %v2508, %v2546
        %v2574 = vadd.f32 %v2509, %v2547
        %v2575 = vadd.f32 %v2510, %v2521
        %v2576 = vadd.f32 %v2511, %v2521
        %v2577 = vadd.f32 %v2512, %v2521
        %v2578 = vadd.f32 %v2513, %v2521
        %v2579 = vadd.f32 %v2514, %v2521
        %v2580 = vadd.f32 %v2515, %v2521
        %v2581 = vld [vmem:[%s3 + $0x1] sm:$0x1]
        %v2582 = vlaneseq
        %v2583 = vshrl.u32 %v2582, 7
        %v2584 = vsub.s32 0, %v2583
        %v2585 = vrot.slane %v2581, %v2584
        %v2586 = vmul.f32 %v2585, 0.0
        %v2587 = vmul.f32 %v2010, %v2585
        %v2588 = vmul.f32 %v2012, %v2585
        %v2589 = vmul.f32 %v2015, %v2585
        %v2590 = vmul.f32 %v2017, %v2585
        %v2591 = vmul.f32 %v2020, %v2585
        %v2592 = vmul.f32 %v2022, %v2585
        %v2593 = vmul.f32 %v2025, %v2585
        %v2594 = vmul.f32 %v2027, %v2585
        %v2595 = vmul.f32 %v2030, %v2585
        %v2596 = vmul.f32 %v2032, %v2585
        %v2597 = vmul.f32 %v2035, %v2585
        %v2598 = vmul.f32 %v2037, %v2585
        %v2599 = vmul.f32 %v2040, %v2585
        %v2600 = vmul.f32 %v2042, %v2585
        %v2601 = vmul.f32 %v2045, %v2585
        %v2602 = vmul.f32 %v2047, %v2585
        %v2603 = vmul.f32 %v2050, %v2585
        %v2604 = vmul.f32 %v2052, %v2585
        %v2605 = vmul.f32 %v2055, %v2585
        %v2606 = vmul.f32 %v2057, %v2585
        %v2607 = vmul.f32 %v2060, %v2585
        %v2608 = vmul.f32 %v2062, %v2585
        %v2609 = vmul.f32 %v2065, %v2585
        %v2610 = vmul.f32 %v2067, %v2585
        %v2611 = vmul.f32 %v2070, %v2585
        %v2612 = vmul.f32 %v2072, %v2585
        %v2640 = vrot.slane %v2586, 1
        %v2641 = vsel %vm658, %v2640, %v2640
        %v2642 = vrot.slane %v2587, 1
        %v2643 = vsel %vm658, %v2640, %v2642
        %v2644 = vrot.slane %v2588, 1
        %v2645 = vsel %vm658, %v2642, %v2644
        %v2646 = vrot.slane %v2589, 1
        %v2647 = vsel %vm658, %v2640, %v2646
        %v2648 = vrot.slane %v2590, 1
        %v2649 = vsel %vm658, %v2646, %v2648
        %v2650 = vrot.slane %v2591, 1
        %v2651 = vsel %vm658, %v2640, %v2650
        %v2652 = vrot.slane %v2592, 1
        %v2653 = vsel %vm658, %v2650, %v2652
        %v2654 = vrot.slane %v2593, 1
        %v2655 = vsel %vm658, %v2640, %v2654
        %v2656 = vrot.slane %v2594, 1
        %v2657 = vsel %vm658, %v2654, %v2656
        %v2658 = vrot.slane %v2595, 1
        %v2659 = vsel %vm658, %v2640, %v2658
        %v2660 = vrot.slane %v2596, 1
        %v2661 = vsel %vm658, %v2658, %v2660
        %v2662 = vrot.slane %v2597, 1
        %v2663 = vsel %vm658, %v2640, %v2662
        %v2664 = vrot.slane %v2598, 1
        %v2665 = vsel %vm658, %v2662, %v2664
        %v2666 = vrot.slane %v2599, 1
        %v2667 = vsel %vm658, %v2640, %v2666
        %v2668 = vrot.slane %v2600, 1
        %v2669 = vsel %vm658, %v2666, %v2668
        %v2670 = vrot.slane %v2601, 1
        %v2671 = vsel %vm658, %v2640, %v2670
        %v2672 = vrot.slane %v2602, 1
        %v2673 = vsel %vm658, %v2670, %v2672
        %v2674 = vrot.slane %v2603, 1
        %v2675 = vsel %vm658, %v2640, %v2674
        %v2676 = vrot.slane %v2604, 1
        %v2677 = vsel %vm658, %v2674, %v2676
        %v2678 = vrot.slane %v2605, 1
        %v2679 = vsel %vm658, %v2640, %v2678
        %v2680 = vrot.slane %v2606, 1
        %v2681 = vsel %vm658, %v2678, %v2680
        %v2682 = vrot.slane %v2607, 1
        %v2683 = vsel %vm658, %v2640, %v2682
        %v2684 = vrot.slane %v2608, 1
        %v2685 = vsel %vm658, %v2682, %v2684
        %v2686 = vrot.slane %v2609, 1
        %v2687 = vsel %vm658, %v2640, %v2686
        %v2688 = vrot.slane %v2610, 1
        %v2689 = vsel %vm658, %v2686, %v2688
        %v2690 = vrot.slane %v2611, 1
        %v2691 = vsel %vm658, %v2640, %v2690
        %v2692 = vrot.slane %v2612, 1
        %v2693 = vsel %vm658, %v2690, %v2692
        %v2735 = vadd.f32 %v2548, %v2641
        %v2736 = vadd.f32 %v2549, %v2641
        %v2737 = vadd.f32 %v2550, %v2640
        %v2738 = vadd.f32 %v2551, %v2641
        %v2739 = vadd.f32 %v2552, %v2640
        %v2740 = vadd.f32 %v2553, %v2641
        %v2741 = vadd.f32 %v2554, %v2640
        %v2742 = vadd.f32 %v2548, %v2643
        %v2743 = vadd.f32 %v2555, %v2645
        %v2744 = vadd.f32 %v2556, %v2644
        %v2745 = vadd.f32 %v2548, %v2647
        %v2746 = vadd.f32 %v2557, %v2649
        %v2747 = vadd.f32 %v2558, %v2648
        %v2748 = vadd.f32 %v2548, %v2651
        %v2749 = vadd.f32 %v2559, %v2653
        %v2750 = vadd.f32 %v2560, %v2652
        %v2751 = vadd.f32 %v2548, %v2655
        %v2752 = vadd.f32 %v2561, %v2657
        %v2753 = vadd.f32 %v2562, %v2656
        %v2754 = vadd.f32 %v2548, %v2659
        %v2755 = vadd.f32 %v2563, %v2661
        %v2756 = vadd.f32 %v2564, %v2660
        %v2757 = vadd.f32 %v2548, %v2663
        %v2758 = vadd.f32 %v2565, %v2665
        %v2759 = vadd.f32 %v2566, %v2664
        %v2760 = vadd.f32 %v2548, %v2667
        %v2761 = vadd.f32 %v2567, %v2669
        %v2762 = vadd.f32 %v2568, %v2668
        %v2763 = vadd.f32 %v2548, %v2671
        %v2764 = vadd.f32 %v2569, %v2673
        %v2765 = vadd.f32 %v2570, %v2672
        %v2766 = vadd.f32 %v2548, %v2675
        %v2767 = vadd.f32 %v2571, %v2677
        %v2768 = vadd.f32 %v2572, %v2676
        %v2769 = vadd.f32 %v2548, %v2679
        %v2770 = vadd.f32 %v2573, %v2681
        %v2771 = vadd.f32 %v2574, %v2680
        %v2772 = vadd.f32 %v2548, %v2683
        %v2773 = vadd.f32 %v2575, %v2685
        %v2774 = vadd.f32 %v2576, %v2684
        %v2775 = vadd.f32 %v2548, %v2687
        %v2776 = vadd.f32 %v2577, %v2689
        %v2777 = vadd.f32 %v2578, %v2688
        %v2778 = vadd.f32 %v2548, %v2691
        %v2779 = vadd.f32 %v2579, %v2693
        %v2780 = vadd.f32 %v2580, %v2692
        %v2781 = vld [vmem:[%s3 + $0x8] sm:$0x1]
        %v2782 = vlaneseq
        %v2783 = vshrl.u32 %v2782, 7
        %v2784 = vsub.s32 0, %v2783
        %v2785 = vrot.slane %v2781, %v2784
        %v2786 = vmul.f32 %v2785, 0.0
        %v2787 = vmul.f32 %v2010, %v2785
        %v2788 = vmul.f32 %v2012, %v2785
        %v2789 = vmul.f32 %v2015, %v2785
        %v2790 = vmul.f32 %v2017, %v2785
        %v2791 = vmul.f32 %v2020, %v2785
        %v2792 = vmul.f32 %v2022, %v2785
        %v2793 = vmul.f32 %v2025, %v2785
        %v2794 = vmul.f32 %v2027, %v2785
        %v2795 = vmul.f32 %v2030, %v2785
        %v2796 = vmul.f32 %v2032, %v2785
        %v2797 = vmul.f32 %v2035, %v2785
        %v2798 = vmul.f32 %v2037, %v2785
        %v2799 = vmul.f32 %v2040, %v2785
        %v2800 = vmul.f32 %v2042, %v2785
        %v2801 = vmul.f32 %v2045, %v2785
        %v2802 = vmul.f32 %v2047, %v2785
        %v2803 = vmul.f32 %v2050, %v2785
        %v2804 = vmul.f32 %v2052, %v2785
        %v2805 = vmul.f32 %v2055, %v2785
        %v2806 = vmul.f32 %v2057, %v2785
        %v2807 = vmul.f32 %v2060, %v2785
        %v2808 = vmul.f32 %v2062, %v2785
        %v2809 = vmul.f32 %v2065, %v2785
        %v2810 = vmul.f32 %v2067, %v2785
        %v2811 = vmul.f32 %v2070, %v2785
        %v2812 = vmul.f32 %v2072, %v2785
        %v2813 = vmul.f32 %v2075, %v2785
        %v2814 = vmul.f32 %v2077, %v2785
        %v2844 = vrot.slane %v2786, 1
        %v2845 = vsel %vm658, %v2844, %v2844
        %v2846 = vrot.slane %v2787, 1
        %v2847 = vsel %vm658, %v2844, %v2846
        %v2848 = vrot.slane %v2788, 1
        %v2849 = vsel %vm658, %v2846, %v2848
        %v2850 = vrot.slane %v2789, 1
        %v2851 = vsel %vm658, %v2844, %v2850
        %v2852 = vrot.slane %v2790, 1
        %v2853 = vsel %vm658, %v2850, %v2852
        %v2854 = vrot.slane %v2791, 1
        %v2855 = vsel %vm658, %v2844, %v2854
        %v2856 = vrot.slane %v2792, 1
        %v2857 = vsel %vm658, %v2854, %v2856
        %v2858 = vrot.slane %v2793, 1
        %v2859 = vsel %vm658, %v2844, %v2858
        %v2860 = vrot.slane %v2794, 1
        %v2861 = vsel %vm658, %v2858, %v2860
        %v2862 = vrot.slane %v2795, 1
        %v2863 = vsel %vm658, %v2844, %v2862
        %v2864 = vrot.slane %v2796, 1
        %v2865 = vsel %vm658, %v2862, %v2864
        %v2866 = vrot.slane %v2797, 1
        %v2867 = vsel %vm658, %v2844, %v2866
        %v2868 = vrot.slane %v2798, 1
        %v2869 = vsel %vm658, %v2866, %v2868
        %v2870 = vrot.slane %v2799, 1
        %v2871 = vsel %vm658, %v2844, %v2870
        %v2872 = vrot.slane %v2800, 1
        %v2873 = vsel %vm658, %v2870, %v2872
        %v2874 = vrot.slane %v2801, 1
        %v2875 = vsel %vm658, %v2844, %v2874
        %v2876 = vrot.slane %v2802, 1
        %v2877 = vsel %vm658, %v2874, %v2876
        %v2878 = vrot.slane %v2803, 1
        %v2879 = vsel %vm658, %v2844, %v2878
        %v2880 = vrot.slane %v2804, 1
        %v2881 = vsel %vm658, %v2878, %v2880
        %v2882 = vrot.slane %v2805, 1
        %v2883 = vsel %vm658, %v2844, %v2882
        %v2884 = vrot.slane %v2806, 1
        %v2885 = vsel %vm658, %v2882, %v2884
        %v2886 = vrot.slane %v2807, 1
        %v2887 = vsel %vm658, %v2844, %v2886
        %v2888 = vrot.slane %v2808, 1
        %v2889 = vsel %vm658, %v2886, %v2888
        %v2890 = vrot.slane %v2809, 1
        %v2891 = vsel %vm658, %v2844, %v2890
        %v2892 = vrot.slane %v2810, 1
        %v2893 = vsel %vm658, %v2890, %v2892
        %v2894 = vrot.slane %v2811, 1
        %v2895 = vsel %vm658, %v2844, %v2894
        %v2896 = vrot.slane %v2812, 1
        %v2897 = vsel %vm658, %v2894, %v2896
        %v2898 = vrot.slane %v2813, 1
        %v2899 = vsel %vm658, %v2844, %v2898
        %v2900 = vrot.slane %v2814, 1
        %v2901 = vsel %vm658, %v2898, %v2900
        %v2946 = vadd.f32 %v2735, %v2845
        %v2947 = vadd.f32 %v2736, %v2845
        %v2948 = vadd.f32 %v2737, %v2844
        %v2949 = vadd.f32 %v2738, %v2845
        %v2950 = vadd.f32 %v2739, %v2844
        %v2951 = vadd.f32 %v2735, %v2847
        %v2952 = vadd.f32 %v2740, %v2849
        %v2953 = vadd.f32 %v2741, %v2848
        %v2954 = vadd.f32 %v2742, %v2851
        %v2955 = vadd.f32 %v2743, %v2853
        %v2956 = vadd.f32 %v2744, %v2852
        %v2957 = vadd.f32 %v2745, %v2855
        %v2958 = vadd.f32 %v2746, %v2857
        %v2959 = vadd.f32 %v2747, %v2856
        %v2960 = vadd.f32 %v2748, %v2859
        %v2961 = vadd.f32 %v2749, %v2861
        %v2962 = vadd.f32 %v2750, %v2860
        %v2963 = vadd.f32 %v2751, %v2863
        %v2964 = vadd.f32 %v2752, %v2865
        %v2965 = vadd.f32 %v2753, %v2864
        %v2966 = vadd.f32 %v2754, %v2867
        %v2967 = vadd.f32 %v2755, %v2869
        %v2968 = vadd.f32 %v2756, %v2868
        %v2969 = vadd.f32 %v2757, %v2871
        %v2970 = vadd.f32 %v2758, %v2873
        %v2971 = vadd.f32 %v2759, %v2872
        %v2972 = vadd.f32 %v2760, %v2875
        %v2973 = vadd.f32 %v2761, %v2877
        %v2974 = vadd.f32 %v2762, %v2876
        %v2975 = vadd.f32 %v2763, %v2879
        %v2976 = vadd.f32 %v2764, %v2881
        %v2977 = vadd.f32 %v2765, %v2880
        %v2978 = vadd.f32 %v2766, %v2883
        %v2979 = vadd.f32 %v2767, %v2885
        %v2980 = vadd.f32 %v2768, %v2884
        %v2981 = vadd.f32 %v2769, %v2887
        %v2982 = vadd.f32 %v2770, %v2889
        %v2983 = vadd.f32 %v2771, %v2888
        %v2984 = vadd.f32 %v2772, %v2891
        %v2985 = vadd.f32 %v2773, %v2893
        %v2986 = vadd.f32 %v2774, %v2892
        %v2987 = vadd.f32 %v2775, %v2895
        %v2988 = vadd.f32 %v2776, %v2897
        %v2989 = vadd.f32 %v2777, %v2896
        %v2990 = vadd.f32 %v2778, %v2899
        %v2991 = vadd.f32 %v2779, %v2901
        %v2992 = vadd.f32 %v2780, %v2900
        %v2993 = vld [vmem:[%s3 + $0xf] sm:$0x1]
        %v2994 = vlaneseq
        %v2995 = vshrl.u32 %v2994, 7
        %v2996 = vsub.s32 0, %v2995
        %v2997 = vrot.slane %v2993, %v2996
        %v2998 = vmul.f32 %v2997, 0.0
        %v2999 = vmul.f32 %v2010, %v2997
        %v3000 = vmul.f32 %v2012, %v2997
        %v3001 = vmul.f32 %v2015, %v2997
        %v3002 = vmul.f32 %v2017, %v2997
        %v3003 = vmul.f32 %v2020, %v2997
        %v3004 = vmul.f32 %v2022, %v2997
        %v3005 = vmul.f32 %v2025, %v2997
        %v3006 = vmul.f32 %v2027, %v2997
        %v3007 = vmul.f32 %v2030, %v2997
        %v3008 = vmul.f32 %v2032, %v2997
        %v3009 = vmul.f32 %v2035, %v2997
        %v3010 = vmul.f32 %v2037, %v2997
        %v3011 = vmul.f32 %v2040, %v2997
        %v3012 = vmul.f32 %v2042, %v2997
        %v3013 = vmul.f32 %v2045, %v2997
        %v3014 = vmul.f32 %v2047, %v2997
        %v3015 = vmul.f32 %v2050, %v2997
        %v3016 = vmul.f32 %v2052, %v2997
        %v3017 = vmul.f32 %v2055, %v2997
        %v3018 = vmul.f32 %v2057, %v2997
        %v3019 = vmul.f32 %v2060, %v2997
        %v3020 = vmul.f32 %v2062, %v2997
        %v3021 = vmul.f32 %v2065, %v2997
        %v3022 = vmul.f32 %v2067, %v2997
        %v3023 = vmul.f32 %v2070, %v2997
        %v3024 = vmul.f32 %v2072, %v2997
        %v3025 = vmul.f32 %v2075, %v2997
        %v3026 = vmul.f32 %v2077, %v2997
        %v3027 = vmul.f32 %v2080, %v2997
        %v3028 = vmul.f32 %v2082, %v2997
        %v3060 = vrot.slane %v2998, 1
        %v3061 = vsel %vm658, %v3060, %v3060
        %v3062 = vrot.slane %v2999, 1
        %v3063 = vsel %vm658, %v3060, %v3062
        %v3064 = vrot.slane %v3000, 1
        %v3065 = vsel %vm658, %v3062, %v3064
        %v3066 = vrot.slane %v3001, 1
        %v3067 = vsel %vm658, %v3060, %v3066
        %v3068 = vrot.slane %v3002, 1
        %v3069 = vsel %vm658, %v3066, %v3068
        %v3070 = vrot.slane %v3003, 1
        %v3071 = vsel %vm658, %v3060, %v3070
        %v3072 = vrot.slane %v3004, 1
        %v3073 = vsel %vm658, %v3070, %v3072
        %v3074 = vrot.slane %v3005, 1
        %v3075 = vsel %vm658, %v3060, %v3074
        %v3076 = vrot.slane %v3006, 1
        %v3077 = vsel %vm658, %v3074, %v3076
        %v3078 = vrot.slane %v3007, 1
        %v3079 = vsel %vm658, %v3060, %v3078
        %v3080 = vrot.slane %v3008, 1
        %v3081 = vsel %vm658, %v3078, %v3080
        %v3082 = vrot.slane %v3009, 1
        %v3083 = vsel %vm658, %v3060, %v3082
        %v3084 = vrot.slane %v3010, 1
        %v3085 = vsel %vm658, %v3082, %v3084
        %v3086 = vrot.slane %v3011, 1
        %v3087 = vsel %vm658, %v3060, %v3086
        %v3088 = vrot.slane %v3012, 1
        %v3089 = vsel %vm658, %v3086, %v3088
        %v3090 = vrot.slane %v3013, 1
        %v3091 = vsel %vm658, %v3060, %v3090
        %v3092 = vrot.slane %v3014, 1
        %v3093 = vsel %vm658, %v3090, %v3092
        %v3094 = vrot.slane %v3015, 1
        %v3095 = vsel %vm658, %v3060, %v3094
        %v3096 = vrot.slane %v3016, 1
        %v3097 = vsel %vm658, %v3094, %v3096
        %v3098 = vrot.slane %v3017, 1
        %v3099 = vsel %vm658, %v3060, %v3098
        %v3100 = vrot.slane %v3018, 1
        %v3101 = vsel %vm658, %v3098, %v3100
        %v3102 = vrot.slane %v3019, 1
        %v3103 = vsel %vm658, %v3060, %v3102
        %v3104 = vrot.slane %v3020, 1
        %v3105 = vsel %vm658, %v3102, %v3104
        %v3106 = vrot.slane %v3021, 1
        %v3107 = vsel %vm658, %v3060, %v3106
        %v3108 = vrot.slane %v3022, 1
        %v3109 = vsel %vm658, %v3106, %v3108
        %v3110 = vrot.slane %v3023, 1
        %v3111 = vsel %vm658, %v3060, %v3110
        %v3112 = vrot.slane %v3024, 1
        %v3113 = vsel %vm658, %v3110, %v3112
        %v3114 = vrot.slane %v3025, 1
        %v3115 = vsel %vm658, %v3060, %v3114
        %v3116 = vrot.slane %v3026, 1
        %v3117 = vsel %vm658, %v3114, %v3116
        %v3118 = vrot.slane %v3027, 1
        %v3119 = vsel %vm658, %v3060, %v3118
        %v3120 = vrot.slane %v3028, 1
        %v3121 = vsel %vm658, %v3118, %v3120
        %v3169 = vadd.f32 %v2946, %v3061
        %v3170 = vadd.f32 %v2947, %v3061
        %v3171 = vadd.f32 %v2948, %v3060
        %v3172 = vadd.f32 %v2946, %v3063
        %v3173 = vadd.f32 %v2949, %v3065
        %v3174 = vadd.f32 %v2950, %v3064
        %v3175 = vadd.f32 %v2951, %v3067
        %v3176 = vadd.f32 %v2952, %v3069
        %v3177 = vadd.f32 %v2953, %v3068
        %v3178 = vadd.f32 %v2954, %v3071
        %v3179 = vadd.f32 %v2955, %v3073
        %v3180 = vadd.f32 %v2956, %v3072
        %v3181 = vadd.f32 %v2957, %v3075
        %v3182 = vadd.f32 %v2958, %v3077
        %v3183 = vadd.f32 %v2959, %v3076
        %v3184 = vadd.f32 %v2960, %v3079
        %v3185 = vadd.f32 %v2961, %v3081
        %v3186 = vadd.f32 %v2962, %v3080
        %v3187 = vadd.f32 %v2963, %v3083
        %v3188 = vadd.f32 %v2964, %v3085
        %v3189 = vadd.f32 %v2965, %v3084
        %v3190 = vadd.f32 %v2966, %v3087
        %v3191 = vadd.f32 %v2967, %v3089
        %v3192 = vadd.f32 %v2968, %v3088
        %v3193 = vadd.f32 %v2969, %v3091
        %v3194 = vadd.f32 %v2970, %v3093
        %v3195 = vadd.f32 %v2971, %v3092
        %v3196 = vadd.f32 %v2972, %v3095
        %v3197 = vadd.f32 %v2973, %v3097
        %v3198 = vadd.f32 %v2974, %v3096
        %v3199 = vadd.f32 %v2975, %v3099
        %v3200 = vadd.f32 %v2976, %v3101
        %v3201 = vadd.f32 %v2977, %v3100
        %v3202 = vadd.f32 %v2978, %v3103
        %v3203 = vadd.f32 %v2979, %v3105
        %v3204 = vadd.f32 %v2980, %v3104
        %v3205 = vadd.f32 %v2981, %v3107
        %v3206 = vadd.f32 %v2982, %v3109
        %v3207 = vadd.f32 %v2983, %v3108
        %v3208 = vadd.f32 %v2984, %v3111
        %v3209 = vadd.f32 %v2985, %v3113
        %v3210 = vadd.f32 %v2986, %v3112
        %v3211 = vadd.f32 %v2987, %v3115
        %v3212 = vadd.f32 %v2988, %v3117
        %v3213 = vadd.f32 %v2989, %v3116
        %v3214 = vadd.f32 %v2990, %v3119
        %v3215 = vadd.f32 %v2991, %v3121
        %v3216 = vadd.f32 %v2992, %v3120
        %v3217 = vld [vmem:[%s3 + $0x16] sm:$0x1]
        %v3218 = vlaneseq
        %v3219 = vshrl.u32 %v3218, 7
        %v3220 = vsub.s32 0, %v3219
        %v3221 = vrot.slane %v3217, %v3220
        %v3222 = vmul.f32 %v3221, 0.0
        %v3223 = vmul.f32 %v2010, %v3221
        %v3224 = vmul.f32 %v2012, %v3221
        %v3225 = vmul.f32 %v2015, %v3221
        %v3226 = vmul.f32 %v2017, %v3221
        %v3227 = vmul.f32 %v2020, %v3221
        %v3228 = vmul.f32 %v2022, %v3221
        %v3229 = vmul.f32 %v2025, %v3221
        %v3230 = vmul.f32 %v2027, %v3221
        %v3231 = vmul.f32 %v2030, %v3221
        %v3232 = vmul.f32 %v2032, %v3221
        %v3233 = vmul.f32 %v2035, %v3221
        %v3234 = vmul.f32 %v2037, %v3221
        %v3235 = vmul.f32 %v2040, %v3221
        %v3236 = vmul.f32 %v2042, %v3221
        %v3237 = vmul.f32 %v2045, %v3221
        %v3238 = vmul.f32 %v2047, %v3221
        %v3239 = vmul.f32 %v2050, %v3221
        %v3240 = vmul.f32 %v2052, %v3221
        %v3241 = vmul.f32 %v2055, %v3221
        %v3242 = vmul.f32 %v2057, %v3221
        %v3243 = vmul.f32 %v2060, %v3221
        %v3244 = vmul.f32 %v2062, %v3221
        %v3245 = vmul.f32 %v2065, %v3221
        %v3246 = vmul.f32 %v2067, %v3221
        %v3247 = vmul.f32 %v2070, %v3221
        %v3248 = vmul.f32 %v2072, %v3221
        %v3249 = vmul.f32 %v2075, %v3221
        %v3250 = vmul.f32 %v2077, %v3221
        %v3251 = vmul.f32 %v2080, %v3221
        %v3252 = vmul.f32 %v2082, %v3221
        %v3253 = vmul.f32 %v2085, %v3221
        %v3254 = vmul.f32 %v2087, %v3221
        %v3288 = vrot.slane %v3222, 1
        %v3289 = vrot.slane %v3223, 1
        %v3290 = vsel %vm658, %v3288, %v3289
        %v3291 = vrot.slane %v3224, 1
        %v3292 = vsel %vm658, %v3289, %v3291
        %v3293 = vrot.slane %v3225, 1
        %v3294 = vsel %vm658, %v3288, %v3293
        %v3295 = vrot.slane %v3226, 1
        %v3296 = vsel %vm658, %v3293, %v3295
        %v3297 = vrot.slane %v3227, 1
        %v3298 = vsel %vm658, %v3288, %v3297
        %v3299 = vrot.slane %v3228, 1
        %v3300 = vsel %vm658, %v3297, %v3299
        %v3301 = vrot.slane %v3229, 1
        %v3302 = vsel %vm658, %v3288, %v3301
        %v3303 = vrot.slane %v3230, 1
        %v3304 = vsel %vm658, %v3301, %v3303
        %v3305 = vrot.slane %v3231, 1
        %v3306 = vsel %vm658, %v3288, %v3305
        %v3307 = vrot.slane %v3232, 1
        %v3308 = vsel %vm658, %v3305, %v3307
        %v3309 = vrot.slane %v3233, 1
        %v3310 = vsel %vm658, %v3288, %v3309
        %v3311 = vrot.slane %v3234, 1
        %v3312 = vsel %vm658, %v3309, %v3311
        %v3313 = vrot.slane %v3235, 1
        %v3314 = vsel %vm658, %v3288, %v3313
        %v3315 = vrot.slane %v3236, 1
        %v3316 = vsel %vm658, %v3313, %v3315
        %v3317 = vrot.slane %v3237, 1
        %v3318 = vsel %vm658, %v3288, %v3317
        %v3319 = vrot.slane %v3238, 1
        %v3320 = vsel %vm658, %v3317, %v3319
        %v3321 = vrot.slane %v3239, 1
        %v3322 = vsel %vm658, %v3288, %v3321
        %v3323 = vrot.slane %v3240, 1
        %v3324 = vsel %vm658, %v3321, %v3323
        %v3325 = vrot.slane %v3241, 1
        %v3326 = vsel %vm658, %v3288, %v3325
        %v3327 = vrot.slane %v3242, 1
        %v3328 = vsel %vm658, %v3325, %v3327
        %v3329 = vrot.slane %v3243, 1
        %v3330 = vsel %vm658, %v3288, %v3329
        %v3331 = vrot.slane %v3244, 1
        %v3332 = vsel %vm658, %v3329, %v3331
        %v3333 = vrot.slane %v3245, 1
        %v3334 = vsel %vm658, %v3288, %v3333
        %v3335 = vrot.slane %v3246, 1
        %v3336 = vsel %vm658, %v3333, %v3335
        %v3337 = vrot.slane %v3247, 1
        %v3338 = vsel %vm658, %v3288, %v3337
        %v3339 = vrot.slane %v3248, 1
        %v3340 = vsel %vm658, %v3337, %v3339
        %v3341 = vrot.slane %v3249, 1
        %v3342 = vsel %vm658, %v3288, %v3341
        %v3343 = vrot.slane %v3250, 1
        %v3344 = vsel %vm658, %v3341, %v3343
        %v3345 = vrot.slane %v3251, 1
        %v3346 = vsel %vm658, %v3288, %v3345
        %v3347 = vrot.slane %v3252, 1
        %v3348 = vsel %vm658, %v3345, %v3347
        %v3349 = vrot.slane %v3253, 1
        %v3350 = vsel %vm658, %v3288, %v3349
        %v3351 = vrot.slane %v3254, 1
        %v3352 = vsel %vm658, %v3349, %v3351
        %v3401 = vadd.f32 %v3169, %v3290
        %v3402 = vadd.f32 %v3170, %v3292
        %v3403 = vadd.f32 %v3171, %v3291
        %v3404 = vadd.f32 %v3172, %v3294
        %v3405 = vadd.f32 %v3173, %v3296
        %v3406 = vadd.f32 %v3174, %v3295
        %v3407 = vadd.f32 %v3175, %v3298
        %v3408 = vadd.f32 %v3176, %v3300
        %v3409 = vadd.f32 %v3177, %v3299
        %v3410 = vadd.f32 %v3178, %v3302
        %v3411 = vadd.f32 %v3179, %v3304
        %v3412 = vadd.f32 %v3180, %v3303
        %v3413 = vadd.f32 %v3181, %v3306
        %v3414 = vadd.f32 %v3182, %v3308
        %v3415 = vadd.f32 %v3183, %v3307
        %v3416 = vadd.f32 %v3184, %v3310
        %v3417 = vadd.f32 %v3185, %v3312
        %v3418 = vadd.f32 %v3186, %v3311
        %v3419 = vadd.f32 %v3187, %v3314
        %v3420 = vadd.f32 %v3188, %v3316
        %v3421 = vadd.f32 %v3189, %v3315
        %v3422 = vadd.f32 %v3190, %v3318
        %v3423 = vadd.f32 %v3191, %v3320
        %v3424 = vadd.f32 %v3192, %v3319
        %v3425 = vadd.f32 %v3193, %v3322
        %v3426 = vadd.f32 %v3194, %v3324
        %v3427 = vadd.f32 %v3195, %v3323
        %v3428 = vadd.f32 %v3196, %v3326
        %v3429 = vadd.f32 %v3197, %v3328
        %v3430 = vadd.f32 %v3198, %v3327
        %v3431 = vadd.f32 %v3199, %v3330
        %v3432 = vadd.f32 %v3200, %v3332
        %v3433 = vadd.f32 %v3201, %v3331
        %v3434 = vadd.f32 %v3202, %v3334
        %v3435 = vadd.f32 %v3203, %v3336
        %v3436 = vadd.f32 %v3204, %v3335
        %v3437 = vadd.f32 %v3205, %v3338
        %v3438 = vadd.f32 %v3206, %v3340
        %v3439 = vadd.f32 %v3207, %v3339
        %v3440 = vadd.f32 %v3208, %v3342
        %v3441 = vadd.f32 %v3209, %v3344
        %v3442 = vadd.f32 %v3210, %v3343
        %v3443 = vadd.f32 %v3211, %v3346
        %v3444 = vadd.f32 %v3212, %v3348
        %v3445 = vadd.f32 %v3213, %v3347
        %v3446 = vadd.f32 %v3214, %v3350
        %v3447 = vadd.f32 %v3215, %v3352
        %v3448 = vadd.f32 %v3216, %v3351
        %v3449 = vld [vmem:[%s3 + $0x1d] sm:$0x1]
        %v3450 = vlaneseq
        %v3451 = vshrl.u32 %v3450, 7
        %v3452 = vsub.s32 0, %v3451
        %v3453 = vrot.slane %v3449, %v3452
        %v3454 = vmul.f32 %v3453, 0.0
        %v3455 = vmul.f32 %v2015, %v3453
        %v3456 = vmul.f32 %v2017, %v3453
        %v3457 = vmul.f32 %v2020, %v3453
        %v3458 = vmul.f32 %v2022, %v3453
        %v3459 = vmul.f32 %v2025, %v3453
        %v3460 = vmul.f32 %v2027, %v3453
        %v3461 = vmul.f32 %v2030, %v3453
        %v3462 = vmul.f32 %v2032, %v3453
        %v3463 = vmul.f32 %v2035, %v3453
        %v3464 = vmul.f32 %v2037, %v3453
        %v3465 = vmul.f32 %v2040, %v3453
        %v3466 = vmul.f32 %v2042, %v3453
        %v3467 = vmul.f32 %v2045, %v3453
        %v3468 = vmul.f32 %v2047, %v3453
        %v3469 = vmul.f32 %v2050, %v3453
        %v3470 = vmul.f32 %v2052, %v3453
        %v3471 = vmul.f32 %v2055, %v3453
        %v3472 = vmul.f32 %v2057, %v3453
        %v3473 = vmul.f32 %v2060, %v3453
        %v3474 = vmul.f32 %v2062, %v3453
        %v3475 = vmul.f32 %v2065, %v3453
        %v3476 = vmul.f32 %v2067, %v3453
        %v3477 = vmul.f32 %v2070, %v3453
        %v3478 = vmul.f32 %v2072, %v3453
        %v3479 = vmul.f32 %v2075, %v3453
        %v3480 = vmul.f32 %v2077, %v3453
        %v3481 = vmul.f32 %v2080, %v3453
        %v3482 = vmul.f32 %v2082, %v3453
        %v3483 = vmul.f32 %v2085, %v3453
        %v3484 = vmul.f32 %v2087, %v3453
        %v3516 = vrot.slane %v3454, 1
        %v3517 = vrot.slane %v3455, 1
        %v3518 = vsel %vm658, %v3516, %v3517
        %v3519 = vrot.slane %v3456, 1
        %v3520 = vsel %vm658, %v3517, %v3519
        %v3521 = vrot.slane %v3457, 1
        %v3522 = vsel %vm658, %v3516, %v3521
        %v3523 = vrot.slane %v3458, 1
        %v3524 = vsel %vm658, %v3521, %v3523
        %v3525 = vrot.slane %v3459, 1
        %v3526 = vsel %vm658, %v3516, %v3525
        %v3527 = vrot.slane %v3460, 1
        %v3528 = vsel %vm658, %v3525, %v3527
        %v3529 = vrot.slane %v3461, 1
        %v3530 = vsel %vm658, %v3516, %v3529
        %v3531 = vrot.slane %v3462, 1
        %v3532 = vsel %vm658, %v3529, %v3531
        %v3533 = vrot.slane %v3463, 1
        %v3534 = vsel %vm658, %v3516, %v3533
        %v3535 = vrot.slane %v3464, 1
        %v3536 = vsel %vm658, %v3533, %v3535
        %v3537 = vrot.slane %v3465, 1
        %v3538 = vsel %vm658, %v3516, %v3537
        %v3539 = vrot.slane %v3466, 1
        %v3540 = vsel %vm658, %v3537, %v3539
        %v3541 = vrot.slane %v3467, 1
        %v3542 = vsel %vm658, %v3516, %v3541
        %v3543 = vrot.slane %v3468, 1
        %v3544 = vsel %vm658, %v3541, %v3543
        %v3545 = vrot.slane %v3469, 1
        %v3546 = vsel %vm658, %v3516, %v3545
        %v3547 = vrot.slane %v3470, 1
        %v3548 = vsel %vm658, %v3545, %v3547
        %v3549 = vrot.slane %v3471, 1
        %v3550 = vsel %vm658, %v3516, %v3549
        %v3551 = vrot.slane %v3472, 1
        %v3552 = vsel %vm658, %v3549, %v3551
        %v3553 = vrot.slane %v3473, 1
        %v3554 = vsel %vm658, %v3516, %v3553
        %v3555 = vrot.slane %v3474, 1
        %v3556 = vsel %vm658, %v3553, %v3555
        %v3557 = vrot.slane %v3475, 1
        %v3558 = vsel %vm658, %v3516, %v3557
        %v3559 = vrot.slane %v3476, 1
        %v3560 = vsel %vm658, %v3557, %v3559
        %v3561 = vrot.slane %v3477, 1
        %v3562 = vsel %vm658, %v3516, %v3561
        %v3563 = vrot.slane %v3478, 1
        %v3564 = vsel %vm658, %v3561, %v3563
        %v3565 = vrot.slane %v3479, 1
        %v3566 = vsel %vm658, %v3516, %v3565
        %v3567 = vrot.slane %v3480, 1
        %v3568 = vsel %vm658, %v3565, %v3567
        %v3569 = vrot.slane %v3481, 1
        %v3570 = vsel %vm658, %v3516, %v3569
        %v3571 = vrot.slane %v3482, 1
        %v3572 = vsel %vm658, %v3569, %v3571
        %v3573 = vrot.slane %v3483, 1
        %v3574 = vsel %vm658, %v3516, %v3573
        %v3575 = vrot.slane %v3484, 1
        %v3576 = vsel %vm658, %v3573, %v3575
        %v3577 = vsel %vm658, %v3516, %v3516
        %v3625 = vadd.f32 %v3401, %v3518
        %v3626 = vadd.f32 %v3402, %v3520
        %v3627 = vadd.f32 %v3403, %v3519
        %v3628 = vadd.f32 %v3404, %v3522
        %v3629 = vadd.f32 %v3405, %v3524
        %v3630 = vadd.f32 %v3406, %v3523
        %v3631 = vadd.f32 %v3407, %v3526
        %v3632 = vadd.f32 %v3408, %v3528
        %v3633 = vadd.f32 %v3409, %v3527
        %v3634 = vadd.f32 %v3410, %v3530
        %v3635 = vadd.f32 %v3411, %v3532
        %v3636 = vadd.f32 %v3412, %v3531
        %v3637 = vadd.f32 %v3413, %v3534
        %v3638 = vadd.f32 %v3414, %v3536
        %v3639 = vadd.f32 %v3415, %v3535
        %v3640 = vadd.f32 %v3416, %v3538
        %v3641 = vadd.f32 %v3417, %v3540
        %v3642 = vadd.f32 %v3418, %v3539
        %v3643 = vadd.f32 %v3419, %v3542
        %v3644 = vadd.f32 %v3420, %v3544
        %v3645 = vadd.f32 %v3421, %v3543
        %v3646 = vadd.f32 %v3422, %v3546
        %v3647 = vadd.f32 %v3423, %v3548
        %v3648 = vadd.f32 %v3424, %v3547
        %v3649 = vadd.f32 %v3425, %v3550
        %v3650 = vadd.f32 %v3426, %v3552
        %v3651 = vadd.f32 %v3427, %v3551
        %v3652 = vadd.f32 %v3428, %v3554
        %v3653 = vadd.f32 %v3429, %v3556
        %v3654 = vadd.f32 %v3430, %v3555
        %v3655 = vadd.f32 %v3431, %v3558
        %v3656 = vadd.f32 %v3432, %v3560
        %v3657 = vadd.f32 %v3433, %v3559
        %v3658 = vadd.f32 %v3434, %v3562
        %v3659 = vadd.f32 %v3435, %v3564
        %v3660 = vadd.f32 %v3436, %v3563
        %v3661 = vadd.f32 %v3437, %v3566
        %v3662 = vadd.f32 %v3438, %v3568
        %v3663 = vadd.f32 %v3439, %v3567
        %v3664 = vadd.f32 %v3440, %v3570
        %v3665 = vadd.f32 %v3441, %v3572
        %v3666 = vadd.f32 %v3442, %v3571
        %v3667 = vadd.f32 %v3443, %v3574
        %v3668 = vadd.f32 %v3444, %v3576
        %v3669 = vadd.f32 %v3445, %v3575
        %v3670 = vadd.f32 %v3446, %v3577
        %v3671 = vadd.f32 %v3447, %v3577
        %v3672 = vadd.f32 %v3448, %v3516
        %v3673 = vld [vmem:[%s3 + $0x24] sm:$0x1]
        %v3674 = vlaneseq
        %v3675 = vshrl.u32 %v3674, 7
        %v3676 = vsub.s32 0, %v3675
        %v3677 = vrot.slane %v3673, %v3676
        %v3678 = vmul.f32 %v3677, 0.0
        %v3679 = vmul.f32 %v2020, %v3677
        %v3680 = vmul.f32 %v2022, %v3677
        %v3681 = vmul.f32 %v2025, %v3677
        %v3682 = vmul.f32 %v2027, %v3677
        %v3683 = vmul.f32 %v2030, %v3677
        %v3684 = vmul.f32 %v2032, %v3677
        %v3685 = vmul.f32 %v2035, %v3677
        %v3686 = vmul.f32 %v2037, %v3677
        %v3687 = vmul.f32 %v2040, %v3677
        %v3688 = vmul.f32 %v2042, %v3677
        %v3689 = vmul.f32 %v2045, %v3677
        %v3690 = vmul.f32 %v2047, %v3677
        %v3691 = vmul.f32 %v2050, %v3677
        %v3692 = vmul.f32 %v2052, %v3677
        %v3693 = vmul.f32 %v2055, %v3677
        %v3694 = vmul.f32 %v2057, %v3677
        %v3695 = vmul.f32 %v2060, %v3677
        %v3696 = vmul.f32 %v2062, %v3677
        %v3697 = vmul.f32 %v2065, %v3677
        %v3698 = vmul.f32 %v2067, %v3677
        %v3699 = vmul.f32 %v2070, %v3677
        %v3700 = vmul.f32 %v2072, %v3677
        %v3701 = vmul.f32 %v2075, %v3677
        %v3702 = vmul.f32 %v2077, %v3677
        %v3703 = vmul.f32 %v2080, %v3677
        %v3704 = vmul.f32 %v2082, %v3677
        %v3705 = vmul.f32 %v2085, %v3677
        %v3706 = vmul.f32 %v2087, %v3677
        %v3736 = vrot.slane %v3678, 1
        %v3737 = vrot.slane %v3679, 1
        %v3738 = vsel %vm658, %v3736, %v3737
        %v3739 = vrot.slane %v3680, 1
        %v3740 = vsel %vm658, %v3737, %v3739
        %v3741 = vrot.slane %v3681, 1
        %v3742 = vsel %vm658, %v3736, %v3741
        %v3743 = vrot.slane %v3682, 1
        %v3744 = vsel %vm658, %v3741, %v3743
        %v3745 = vrot.slane %v3683, 1
        %v3746 = vsel %vm658, %v3736, %v3745
        %v3747 = vrot.slane %v3684, 1
        %v3748 = vsel %vm658, %v3745, %v3747
        %v3749 = vrot.slane %v3685, 1
        %v3750 = vsel %vm658, %v3736, %v3749
        %v3751 = vrot.slane %v3686, 1
        %v3752 = vsel %vm658, %v3749, %v3751
        %v3753 = vrot.slane %v3687, 1
        %v3754 = vsel %vm658, %v3736, %v3753
        %v3755 = vrot.slane %v3688, 1
        %v3756 = vsel %vm658, %v3753, %v3755
        %v3757 = vrot.slane %v3689, 1
        %v3758 = vsel %vm658, %v3736, %v3757
        %v3759 = vrot.slane %v3690, 1
        %v3760 = vsel %vm658, %v3757, %v3759
        %v3761 = vrot.slane %v3691, 1
        %v3762 = vsel %vm658, %v3736, %v3761
        %v3763 = vrot.slane %v3692, 1
        %v3764 = vsel %vm658, %v3761, %v3763
        %v3765 = vrot.slane %v3693, 1
        %v3766 = vsel %vm658, %v3736, %v3765
        %v3767 = vrot.slane %v3694, 1
        %v3768 = vsel %vm658, %v3765, %v3767
        %v3769 = vrot.slane %v3695, 1
        %v3770 = vsel %vm658, %v3736, %v3769
        %v3771 = vrot.slane %v3696, 1
        %v3772 = vsel %vm658, %v3769, %v3771
        %v3773 = vrot.slane %v3697, 1
        %v3774 = vsel %vm658, %v3736, %v3773
        %v3775 = vrot.slane %v3698, 1
        %v3776 = vsel %vm658, %v3773, %v3775
        %v3777 = vrot.slane %v3699, 1
        %v3778 = vsel %vm658, %v3736, %v3777
        %v3779 = vrot.slane %v3700, 1
        %v3780 = vsel %vm658, %v3777, %v3779
        %v3781 = vrot.slane %v3701, 1
        %v3782 = vsel %vm658, %v3736, %v3781
        %v3783 = vrot.slane %v3702, 1
        %v3784 = vsel %vm658, %v3781, %v3783
        %v3785 = vrot.slane %v3703, 1
        %v3786 = vsel %vm658, %v3736, %v3785
        %v3787 = vrot.slane %v3704, 1
        %v3788 = vsel %vm658, %v3785, %v3787
        %v3789 = vrot.slane %v3705, 1
        %v3790 = vsel %vm658, %v3736, %v3789
        %v3791 = vrot.slane %v3706, 1
        %v3792 = vsel %vm658, %v3789, %v3791
        %v3793 = vsel %vm658, %v3736, %v3736
        %v3838 = vadd.f32 %v3625, %v3738
        %v3839 = vadd.f32 %v3626, %v3740
        %v3840 = vadd.f32 %v3627, %v3739
        %v3841 = vadd.f32 %v3628, %v3742
        %v3842 = vadd.f32 %v3629, %v3744
        %v3843 = vadd.f32 %v3630, %v3743
        %v3844 = vadd.f32 %v3631, %v3746
        %v3845 = vadd.f32 %v3632, %v3748
        %v3846 = vadd.f32 %v3633, %v3747
        %v3847 = vadd.f32 %v3634, %v3750
        %v3848 = vadd.f32 %v3635, %v3752
        %v3849 = vadd.f32 %v3636, %v3751
        %v3850 = vadd.f32 %v3637, %v3754
        %v3851 = vadd.f32 %v3638, %v3756
        %v3852 = vadd.f32 %v3639, %v3755
        %v3853 = vadd.f32 %v3640, %v3758
        %v3854 = vadd.f32 %v3641, %v3760
        %v3855 = vadd.f32 %v3642, %v3759
        %v3856 = vadd.f32 %v3643, %v3762
        %v3857 = vadd.f32 %v3644, %v3764
        %v3858 = vadd.f32 %v3645, %v3763
        %v3859 = vadd.f32 %v3646, %v3766
        %v3860 = vadd.f32 %v3647, %v3768
        %v3861 = vadd.f32 %v3648, %v3767
        %v3862 = vadd.f32 %v3649, %v3770
        %v3863 = vadd.f32 %v3650, %v3772
        %v3864 = vadd.f32 %v3651, %v3771
        %v3865 = vadd.f32 %v3652, %v3774
        %v3866 = vadd.f32 %v3653, %v3776
        %v3867 = vadd.f32 %v3654, %v3775
        %v3868 = vadd.f32 %v3655, %v3778
        %v3869 = vadd.f32 %v3656, %v3780
        %v3870 = vadd.f32 %v3657, %v3779
        %v3871 = vadd.f32 %v3658, %v3782
        %v3872 = vadd.f32 %v3659, %v3784
        %v3873 = vadd.f32 %v3660, %v3783
        %v3874 = vadd.f32 %v3661, %v3786
        %v3875 = vadd.f32 %v3662, %v3788
        %v3876 = vadd.f32 %v3663, %v3787
        %v3877 = vadd.f32 %v3664, %v3790
        %v3878 = vadd.f32 %v3665, %v3792
        %v3879 = vadd.f32 %v3666, %v3791
        %v3880 = vadd.f32 %v3667, %v3793
        %v3881 = vadd.f32 %v3668, %v3793
        %v3882 = vadd.f32 %v3669, %v3736
        %v3883 = vadd.f32 %v3670, %v3793
        %v3884 = vadd.f32 %v3671, %v3793
        %v3885 = vadd.f32 %v3672, %v3736
        %v3886 = vld [vmem:[%s3 + $0x2b] sm:$0x1]
        %v3887 = vlaneseq
        %v3888 = vshrl.u32 %v3887, 7
        %v3889 = vsub.s32 0, %v3888
        %v3890 = vrot.slane %v3886, %v3889
        %v3891 = vmul.f32 %v3890, 0.0
        %v3892 = vmul.f32 %v2025, %v3890
        %v3893 = vmul.f32 %v2027, %v3890
        %v3894 = vmul.f32 %v2030, %v3890
        %v3895 = vmul.f32 %v2032, %v3890
        %v3896 = vmul.f32 %v2035, %v3890
        %v3897 = vmul.f32 %v2037, %v3890
        %v3898 = vmul.f32 %v2040, %v3890
        %v3899 = vmul.f32 %v2042, %v3890
        %v3900 = vmul.f32 %v2045, %v3890
        %v3901 = vmul.f32 %v2047, %v3890
        %v3902 = vmul.f32 %v2050, %v3890
        %v3903 = vmul.f32 %v2052, %v3890
        %v3904 = vmul.f32 %v2055, %v3890
        %v3905 = vmul.f32 %v2057, %v3890
        %v3906 = vmul.f32 %v2060, %v3890
        %v3907 = vmul.f32 %v2062, %v3890
        %v3908 = vmul.f32 %v2065, %v3890
        %v3909 = vmul.f32 %v2067, %v3890
        %v3910 = vmul.f32 %v2070, %v3890
        %v3911 = vmul.f32 %v2072, %v3890
        %v3912 = vmul.f32 %v2075, %v3890
        %v3913 = vmul.f32 %v2077, %v3890
        %v3914 = vmul.f32 %v2080, %v3890
        %v3915 = vmul.f32 %v2082, %v3890
        %v3916 = vmul.f32 %v2085, %v3890
        %v3917 = vmul.f32 %v2087, %v3890
        %v3945 = vrot.slane %v3891, 1
        %v3946 = vrot.slane %v3892, 1
        %v3947 = vsel %vm658, %v3945, %v3946
        %v3948 = vrot.slane %v3893, 1
        %v3949 = vsel %vm658, %v3946, %v3948
        %v3950 = vrot.slane %v3894, 1
        %v3951 = vsel %vm658, %v3945, %v3950
        %v3952 = vrot.slane %v3895, 1
        %v3953 = vsel %vm658, %v3950, %v3952
        %v3954 = vrot.slane %v3896, 1
        %v3955 = vsel %vm658, %v3945, %v3954
        %v3956 = vrot.slane %v3897, 1
        %v3957 = vsel %vm658, %v3954, %v3956
        %v3958 = vrot.slane %v3898, 1
        %v3959 = vsel %vm658, %v3945, %v3958
        %v3960 = vrot.slane %v3899, 1
        %v3961 = vsel %vm658, %v3958, %v3960
        %v3962 = vrot.slane %v3900, 1
        %v3963 = vsel %vm658, %v3945, %v3962
        %v3964 = vrot.slane %v3901, 1
        %v3965 = vsel %vm658, %v3962, %v3964
        %v3966 = vrot.slane %v3902, 1
        %v3967 = vsel %vm658, %v3945, %v3966
        %v3968 = vrot.slane %v3903, 1
        %v3969 = vsel %vm658, %v3966, %v3968
        %v3970 = vrot.slane %v3904, 1
        %v3971 = vsel %vm658, %v3945, %v3970
        %v3972 = vrot.slane %v3905, 1
        %v3973 = vsel %vm658, %v3970, %v3972
        %v3974 = vrot.slane %v3906, 1
        %v3975 = vsel %vm658, %v3945, %v3974
        %v3976 = vrot.slane %v3907, 1
        %v3977 = vsel %vm658, %v3974, %v3976
        %v3978 = vrot.slane %v3908, 1
        %v3979 = vsel %vm658, %v3945, %v3978
        %v3980 = vrot.slane %v3909, 1
        %v3981 = vsel %vm658, %v3978, %v3980
        %v3982 = vrot.slane %v3910, 1
        %v3983 = vsel %vm658, %v3945, %v3982
        %v3984 = vrot.slane %v3911, 1
        %v3985 = vsel %vm658, %v3982, %v3984
        %v3986 = vrot.slane %v3912, 1
        %v3987 = vsel %vm658, %v3945, %v3986
        %v3988 = vrot.slane %v3913, 1
        %v3989 = vsel %vm658, %v3986, %v3988
        %v3990 = vrot.slane %v3914, 1
        %v3991 = vsel %vm658, %v3945, %v3990
        %v3992 = vrot.slane %v3915, 1
        %v3993 = vsel %vm658, %v3990, %v3992
        %v3994 = vrot.slane %v3916, 1
        %v3995 = vsel %vm658, %v3945, %v3994
        %v3996 = vrot.slane %v3917, 1
        %v3997 = vsel %vm658, %v3994, %v3996
        %v3998 = vsel %vm658, %v3945, %v3945
        %v4040 = vadd.f32 %v3838, %v3947
        %v4041 = vadd.f32 %v3839, %v3949
        %v4042 = vadd.f32 %v3840, %v3948
        %v4043 = vadd.f32 %v3841, %v3951
        %v4044 = vadd.f32 %v3842, %v3953
        %v4045 = vadd.f32 %v3843, %v3952
        %v4046 = vadd.f32 %v3844, %v3955
        %v4047 = vadd.f32 %v3845, %v3957
        %v4048 = vadd.f32 %v3846, %v3956
        %v4049 = vadd.f32 %v3847, %v3959
        %v4050 = vadd.f32 %v3848, %v3961
        %v4051 = vadd.f32 %v3849, %v3960
        %v4052 = vadd.f32 %v3850, %v3963
        %v4053 = vadd.f32 %v3851, %v3965
        %v4054 = vadd.f32 %v3852, %v3964
        %v4055 = vadd.f32 %v3853, %v3967
        %v4056 = vadd.f32 %v3854, %v3969
        %v4057 = vadd.f32 %v3855, %v3968
        %v4058 = vadd.f32 %v3856, %v3971
        %v4059 = vadd.f32 %v3857, %v3973
        %v4060 = vadd.f32 %v3858, %v3972
        %v4061 = vadd.f32 %v3859, %v3975
        %v4062 = vadd.f32 %v3860, %v3977
        %v4063 = vadd.f32 %v3861, %v3976
        %v4064 = vadd.f32 %v3862, %v3979
        %v4065 = vadd.f32 %v3863, %v3981
        %v4066 = vadd.f32 %v3864, %v3980
        %v4067 = vadd.f32 %v3865, %v3983
        %v4068 = vadd.f32 %v3866, %v3985
        %v4069 = vadd.f32 %v3867, %v3984
        %v4070 = vadd.f32 %v3868, %v3987
        %v4071 = vadd.f32 %v3869, %v3989
        %v4072 = vadd.f32 %v3870, %v3988
        %v4073 = vadd.f32 %v3871, %v3991
        %v4074 = vadd.f32 %v3872, %v3993
        %v4075 = vadd.f32 %v3873, %v3992
        %v4076 = vadd.f32 %v3874, %v3995
        %v4077 = vadd.f32 %v3875, %v3997
        %v4078 = vadd.f32 %v3876, %v3996
        %v4079 = vadd.f32 %v3877, %v3998
        %v4080 = vadd.f32 %v3878, %v3998
        %v4081 = vadd.f32 %v3879, %v3945
        %v4082 = vadd.f32 %v3880, %v3998
        %v4083 = vadd.f32 %v3881, %v3998
        %v4084 = vadd.f32 %v3882, %v3945
        %v4085 = vadd.f32 %v3883, %v3998
        %v4086 = vadd.f32 %v3884, %v3998
        %v4087 = vadd.f32 %v3885, %v3945
        %v4088 = vld [vmem:[%s3 + $0x2] sm:$0x1]
        %v4089 = vlaneseq
        %v4090 = vshrl.u32 %v4089, 7
        %v4091 = vsub.s32 0, %v4090
        %v4092 = vrot.slane %v4088, %v4091
        %v4093 = vmul.f32 %v4092, 0.0
        %v4094 = vmul.f32 %v2010, %v4092
        %v4095 = vmul.f32 %v2012, %v4092
        %v4096 = vmul.f32 %v2015, %v4092
        %v4097 = vmul.f32 %v2017, %v4092
        %v4098 = vmul.f32 %v2020, %v4092
        %v4099 = vmul.f32 %v2022, %v4092
        %v4100 = vmul.f32 %v2025, %v4092
        %v4101 = vmul.f32 %v2027, %v4092
        %v4102 = vmul.f32 %v2030, %v4092
        %v4103 = vmul.f32 %v2032, %v4092
        %v4104 = vmul.f32 %v2035, %v4092
        %v4105 = vmul.f32 %v2037, %v4092
        %v4106 = vmul.f32 %v2040, %v4092
        %v4107 = vmul.f32 %v2042, %v4092
        %v4108 = vmul.f32 %v2045, %v4092
        %v4109 = vmul.f32 %v2047, %v4092
        %v4110 = vmul.f32 %v2050, %v4092
        %v4111 = vmul.f32 %v2052, %v4092
        %v4112 = vmul.f32 %v2055, %v4092
        %v4113 = vmul.f32 %v2057, %v4092
        %v4114 = vmul.f32 %v2060, %v4092
        %v4115 = vmul.f32 %v2062, %v4092
        %v4116 = vmul.f32 %v2065, %v4092
        %v4117 = vmul.f32 %v2067, %v4092
        %v4118 = vmul.f32 %v2070, %v4092
        %v4119 = vmul.f32 %v2072, %v4092
        %v4147 = vrot.slane %v4093, 2
        %v4148 = vsel %vm1290, %v4147, %v4147
        %v4149 = vrot.slane %v4094, 2
        %v4150 = vsel %vm1290, %v4147, %v4149
        %v4151 = vrot.slane %v4095, 2
        %v4152 = vsel %vm1290, %v4149, %v4151
        %v4153 = vrot.slane %v4096, 2
        %v4154 = vsel %vm1290, %v4147, %v4153
        %v4155 = vrot.slane %v4097, 2
        %v4156 = vsel %vm1290, %v4153, %v4155
        %v4157 = vrot.slane %v4098, 2
        %v4158 = vsel %vm1290, %v4147, %v4157
        %v4159 = vrot.slane %v4099, 2
        %v4160 = vsel %vm1290, %v4157, %v4159
        %v4161 = vrot.slane %v4100, 2
        %v4162 = vsel %vm1290, %v4147, %v4161
        %v4163 = vrot.slane %v4101, 2
        %v4164 = vsel %vm1290, %v4161, %v4163
        %v4165 = vrot.slane %v4102, 2
        %v4166 = vsel %vm1290, %v4147, %v4165
        %v4167 = vrot.slane %v4103, 2
        %v4168 = vsel %vm1290, %v4165, %v4167
        %v4169 = vrot.slane %v4104, 2
        %v4170 = vsel %vm1290, %v4147, %v4169
        %v4171 = vrot.slane %v4105, 2
        %v4172 = vsel %vm1290, %v4169, %v4171
        %v4173 = vrot.slane %v4106, 2
        %v4174 = vsel %vm1290, %v4147, %v4173
        %v4175 = vrot.slane %v4107, 2
        %v4176 = vsel %vm1290, %v4173, %v4175
        %v4177 = vrot.slane %v4108, 2
        %v4178 = vsel %vm1290, %v4147, %v4177
        %v4179 = vrot.slane %v4109, 2
        %v4180 = vsel %vm1290, %v4177, %v4179
        %v4181 = vrot.slane %v4110, 2
        %v4182 = vsel %vm1290, %v4147, %v4181
        %v4183 = vrot.slane %v4111, 2
        %v4184 = vsel %vm1290, %v4181, %v4183
        %v4185 = vrot.slane %v4112, 2
        %v4186 = vsel %vm1290, %v4147, %v4185
        %v4187 = vrot.slane %v4113, 2
        %v4188 = vsel %vm1290, %v4185, %v4187
        %v4189 = vrot.slane %v4114, 2
        %v4190 = vsel %vm1290, %v4147, %v4189
        %v4191 = vrot.slane %v4115, 2
        %v4192 = vsel %vm1290, %v4189, %v4191
        %v4193 = vrot.slane %v4116, 2
        %v4194 = vsel %vm1290, %v4147, %v4193
        %v4195 = vrot.slane %v4117, 2
        %v4196 = vsel %vm1290, %v4193, %v4195
        %v4197 = vrot.slane %v4118, 2
        %v4198 = vsel %vm1290, %v4147, %v4197
        %v4199 = vrot.slane %v4119, 2
        %v4200 = vsel %vm1290, %v4197, %v4199
        %v4242 = vadd.f32 %v4040, %v4148
        %v4243 = vadd.f32 %v4041, %v4148
        %v4244 = vadd.f32 %v4042, %v4147
        %v4245 = vadd.f32 %v4043, %v4148
        %v4246 = vadd.f32 %v4044, %v4148
        %v4247 = vadd.f32 %v4045, %v4147
        %v4248 = vadd.f32 %v4046, %v4148
        %v4249 = vadd.f32 %v4047, %v4148
        %v4250 = vadd.f32 %v4048, %v4147
        %v4251 = vadd.f32 %v4049, %v4150
        %v4252 = vadd.f32 %v4050, %v4152
        %v4253 = vadd.f32 %v4051, %v4151
        %v4254 = vadd.f32 %v4052, %v4154
        %v4255 = vadd.f32 %v4053, %v4156
        %v4256 = vadd.f32 %v4054, %v4155
        %v4257 = vadd.f32 %v4055, %v4158
        %v4258 = vadd.f32 %v4056, %v4160
        %v4259 = vadd.f32 %v4057, %v4159
        %v4260 = vadd.f32 %v4058, %v4162
        %v4261 = vadd.f32 %v4059, %v4164
        %v4262 = vadd.f32 %v4060, %v4163
        %v4263 = vadd.f32 %v4061, %v4166
        %v4264 = vadd.f32 %v4062, %v4168
        %v4265 = vadd.f32 %v4063, %v4167
        %v4266 = vadd.f32 %v4064, %v4170
        %v4267 = vadd.f32 %v4065, %v4172
        %v4268 = vadd.f32 %v4066, %v4171
        %v4269 = vadd.f32 %v4067, %v4174
        %v4270 = vadd.f32 %v4068, %v4176
        %v4271 = vadd.f32 %v4069, %v4175
        %v4272 = vadd.f32 %v4070, %v4178
        %v4273 = vadd.f32 %v4071, %v4180
        %v4274 = vadd.f32 %v4072, %v4179
        %v4275 = vadd.f32 %v4073, %v4182
        %v4276 = vadd.f32 %v4074, %v4184
        %v4277 = vadd.f32 %v4075, %v4183
        %v4278 = vadd.f32 %v4076, %v4186
        %v4279 = vadd.f32 %v4077, %v4188
        %v4280 = vadd.f32 %v4078, %v4187
        %v4281 = vadd.f32 %v4079, %v4190
        %v4282 = vadd.f32 %v4080, %v4192
        %v4283 = vadd.f32 %v4081, %v4191
        %v4284 = vadd.f32 %v4082, %v4194
        %v4285 = vadd.f32 %v4083, %v4196
        %v4286 = vadd.f32 %v4084, %v4195
        %v4287 = vadd.f32 %v4085, %v4198
        %v4288 = vadd.f32 %v4086, %v4200
        %v4289 = vadd.f32 %v4087, %v4199
        %v4290 = vld [vmem:[%s3 + $0x9] sm:$0x1]
        %v4291 = vlaneseq
        %v4292 = vshrl.u32 %v4291, 7
        %v4293 = vsub.s32 0, %v4292
        %v4294 = vrot.slane %v4290, %v4293
        %v4295 = vmul.f32 %v4294, 0.0
        %v4296 = vmul.f32 %v2010, %v4294
        %v4297 = vmul.f32 %v2012, %v4294
        %v4298 = vmul.f32 %v2015, %v4294
        %v4299 = vmul.f32 %v2017, %v4294
        %v4300 = vmul.f32 %v2020, %v4294
        %v4301 = vmul.f32 %v2022, %v4294
        %v4302 = vmul.f32 %v2025, %v4294
        %v4303 = vmul.f32 %v2027, %v4294
        %v4304 = vmul.f32 %v2030, %v4294
        %v4305 = vmul.f32 %v2032, %v4294
        %v4306 = vmul.f32 %v2035, %v4294
        %v4307 = vmul.f32 %v2037, %v4294
        %v4308 = vmul.f32 %v2040, %v4294
        %v4309 = vmul.f32 %v2042, %v4294
        %v4310 = vmul.f32 %v2045, %v4294
        %v4311 = vmul.f32 %v2047, %v4294
        %v4312 = vmul.f32 %v2050, %v4294
        %v4313 = vmul.f32 %v2052, %v4294
        %v4314 = vmul.f32 %v2055, %v4294
        %v4315 = vmul.f32 %v2057, %v4294
        %v4316 = vmul.f32 %v2060, %v4294
        %v4317 = vmul.f32 %v2062, %v4294
        %v4318 = vmul.f32 %v2065, %v4294
        %v4319 = vmul.f32 %v2067, %v4294
        %v4320 = vmul.f32 %v2070, %v4294
        %v4321 = vmul.f32 %v2072, %v4294
        %v4322 = vmul.f32 %v2075, %v4294
        %v4323 = vmul.f32 %v2077, %v4294
        %v4353 = vrot.slane %v4295, 2
        %v4354 = vsel %vm1290, %v4353, %v4353
        %v4355 = vrot.slane %v4296, 2
        %v4356 = vsel %vm1290, %v4353, %v4355
        %v4357 = vrot.slane %v4297, 2
        %v4358 = vsel %vm1290, %v4355, %v4357
        %v4359 = vrot.slane %v4298, 2
        %v4360 = vsel %vm1290, %v4353, %v4359
        %v4361 = vrot.slane %v4299, 2
        %v4362 = vsel %vm1290, %v4359, %v4361
        %v4363 = vrot.slane %v4300, 2
        %v4364 = vsel %vm1290, %v4353, %v4363
        %v4365 = vrot.slane %v4301, 2
        %v4366 = vsel %vm1290, %v4363, %v4365
        %v4367 = vrot.slane %v4302, 2
        %v4368 = vsel %vm1290, %v4353, %v4367
        %v4369 = vrot.slane %v4303, 2
        %v4370 = vsel %vm1290, %v4367, %v4369
        %v4371 = vrot.slane %v4304, 2
        %v4372 = vsel %vm1290, %v4353, %v4371
        %v4373 = vrot.slane %v4305, 2
        %v4374 = vsel %vm1290, %v4371, %v4373
        %v4375 = vrot.slane %v4306, 2
        %v4376 = vsel %vm1290, %v4353, %v4375
        %v4377 = vrot.slane %v4307, 2
        %v4378 = vsel %vm1290, %v4375, %v4377
        %v4379 = vrot.slane %v4308, 2
        %v4380 = vsel %vm1290, %v4353, %v4379
        %v4381 = vrot.slane %v4309, 2
        %v4382 = vsel %vm1290, %v4379, %v4381
        %v4383 = vrot.slane %v4310, 2
        %v4384 = vsel %vm1290, %v4353, %v4383
        %v4385 = vrot.slane %v4311, 2
        %v4386 = vsel %vm1290, %v4383, %v4385
        %v4387 = vrot.slane %v4312, 2
        %v4388 = vsel %vm1290, %v4353, %v4387
        %v4389 = vrot.slane %v4313, 2
        %v4390 = vsel %vm1290, %v4387, %v4389
        %v4391 = vrot.slane %v4314, 2
        %v4392 = vsel %vm1290, %v4353, %v4391
        %v4393 = vrot.slane %v4315, 2
        %v4394 = vsel %vm1290, %v4391, %v4393
        %v4395 = vrot.slane %v4316, 2
        %v4396 = vsel %vm1290, %v4353, %v4395
        %v4397 = vrot.slane %v4317, 2
        %v4398 = vsel %vm1290, %v4395, %v4397
        %v4399 = vrot.slane %v4318, 2
        %v4400 = vsel %vm1290, %v4353, %v4399
        %v4401 = vrot.slane %v4319, 2
        %v4402 = vsel %vm1290, %v4399, %v4401
        %v4403 = vrot.slane %v4320, 2
        %v4404 = vsel %vm1290, %v4353, %v4403
        %v4405 = vrot.slane %v4321, 2
        %v4406 = vsel %vm1290, %v4403, %v4405
        %v4407 = vrot.slane %v4322, 2
        %v4408 = vsel %vm1290, %v4353, %v4407
        %v4409 = vrot.slane %v4323, 2
        %v4410 = vsel %vm1290, %v4407, %v4409
        %v4455 = vadd.f32 %v4242, %v4354
        %v4456 = vadd.f32 %v4243, %v4354
        %v4457 = vadd.f32 %v4244, %v4353
        %v4458 = vadd.f32 %v4245, %v4354
        %v4459 = vadd.f32 %v4246, %v4354
        %v4460 = vadd.f32 %v4247, %v4353
        %v4461 = vadd.f32 %v4248, %v4356
        %v4462 = vadd.f32 %v4249, %v4358
        %v4463 = vadd.f32 %v4250, %v4357
        %v4464 = vadd.f32 %v4251, %v4360
        %v4465 = vadd.f32 %v4252, %v4362
        %v4466 = vadd.f32 %v4253, %v4361
        %v4467 = vadd.f32 %v4254, %v4364
        %v4468 = vadd.f32 %v4255, %v4366
        %v4469 = vadd.f32 %v4256, %v4365
        %v4470 = vadd.f32 %v4257, %v4368
        %v4471 = vadd.f32 %v4258, %v4370
        %v4472 = vadd.f32 %v4259, %v4369
        %v4473 = vadd.f32 %v4260, %v4372
        %v4474 = vadd.f32 %v4261, %v4374
        %v4475 = vadd.f32 %v4262, %v4373
        %v4476 = vadd.f32 %v4263, %v4376
        %v4477 = vadd.f32 %v4264, %v4378
        %v4478 = vadd.f32 %v4265, %v4377
        %v4479 = vadd.f32 %v4266, %v4380
        %v4480 = vadd.f32 %v4267, %v4382
        %v4481 = vadd.f32 %v4268, %v4381
        %v4482 = vadd.f32 %v4269, %v4384
        %v4483 = vadd.f32 %v4270, %v4386
        %v4484 = vadd.f32 %v4271, %v4385
        %v4485 = vadd.f32 %v4272, %v4388
        %v4486 = vadd.f32 %v4273, %v4390
        %v4487 = vadd.f32 %v4274, %v4389
        %v4488 = vadd.f32 %v4275, %v4392
        %v4489 = vadd.f32 %v4276, %v4394
        %v4490 = vadd.f32 %v4277, %v4393
        %v4491 = vadd.f32 %v4278, %v4396
        %v4492 = vadd.f32 %v4279, %v4398
        %v4493 = vadd.f32 %v4280, %v4397
        %v4494 = vadd.f32 %v4281, %v4400
        %v4495 = vadd.f32 %v4282, %v4402
        %v4496 = vadd.f32 %v4283, %v4401
        %v4497 = vadd.f32 %v4284, %v4404
        %v4498 = vadd.f32 %v4285, %v4406
        %v4499 = vadd.f32 %v4286, %v4405
        %v4500 = vadd.f32 %v4287, %v4408
        %v4501 = vadd.f32 %v4288, %v4410
        %v4502 = vadd.f32 %v4289, %v4409
        %v4503 = vld [vmem:[%s3 + $0x10] sm:$0x1]
        %v4504 = vlaneseq
        %v4505 = vshrl.u32 %v4504, 7
        %v4506 = vsub.s32 0, %v4505
        %v4507 = vrot.slane %v4503, %v4506
        %v4508 = vmul.f32 %v4507, 0.0
        %v4509 = vmul.f32 %v2010, %v4507
        %v4510 = vmul.f32 %v2012, %v4507
        %v4511 = vmul.f32 %v2015, %v4507
        %v4512 = vmul.f32 %v2017, %v4507
        %v4513 = vmul.f32 %v2020, %v4507
        %v4514 = vmul.f32 %v2022, %v4507
        %v4515 = vmul.f32 %v2025, %v4507
        %v4516 = vmul.f32 %v2027, %v4507
        %v4517 = vmul.f32 %v2030, %v4507
        %v4518 = vmul.f32 %v2032, %v4507
        %v4519 = vmul.f32 %v2035, %v4507
        %v4520 = vmul.f32 %v2037, %v4507
        %v4521 = vmul.f32 %v2040, %v4507
        %v4522 = vmul.f32 %v2042, %v4507
        %v4523 = vmul.f32 %v2045, %v4507
        %v4524 = vmul.f32 %v2047, %v4507
        %v4525 = vmul.f32 %v2050, %v4507
        %v4526 = vmul.f32 %v2052, %v4507
        %v4527 = vmul.f32 %v2055, %v4507
        %v4528 = vmul.f32 %v2057, %v4507
        %v4529 = vmul.f32 %v2060, %v4507
        %v4530 = vmul.f32 %v2062, %v4507
        %v4531 = vmul.f32 %v2065, %v4507
        %v4532 = vmul.f32 %v2067, %v4507
        %v4533 = vmul.f32 %v2070, %v4507
        %v4534 = vmul.f32 %v2072, %v4507
        %v4535 = vmul.f32 %v2075, %v4507
        %v4536 = vmul.f32 %v2077, %v4507
        %v4537 = vmul.f32 %v2080, %v4507
        %v4538 = vmul.f32 %v2082, %v4507
        %v4570 = vrot.slane %v4508, 2
        %v4571 = vsel %vm1290, %v4570, %v4570
        %v4572 = vrot.slane %v4509, 2
        %v4573 = vsel %vm1290, %v4570, %v4572
        %v4574 = vrot.slane %v4510, 2
        %v4575 = vsel %vm1290, %v4572, %v4574
        %v4576 = vrot.slane %v4511, 2
        %v4577 = vsel %vm1290, %v4570, %v4576
        %v4578 = vrot.slane %v4512, 2
        %v4579 = vsel %vm1290, %v4576, %v4578
        %v4580 = vrot.slane %v4513, 2
        %v4581 = vsel %vm1290, %v4570, %v4580
        %v4582 = vrot.slane %v4514, 2
        %v4583 = vsel %vm1290, %v4580, %v4582
        %v4584 = vrot.slane %v4515, 2
        %v4585 = vsel %vm1290, %v4570, %v4584
        %v4586 = vrot.slane %v4516, 2
        %v4587 = vsel %vm1290, %v4584, %v4586
        %v4588 = vrot.slane %v4517, 2
        %v4589 = vsel %vm1290, %v4570, %v4588
        %v4590 = vrot.slane %v4518, 2
        %v4591 = vsel %vm1290, %v4588, %v4590
        %v4592 = vrot.slane %v4519, 2
        %v4593 = vsel %vm1290, %v4570, %v4592
        %v4594 = vrot.slane %v4520, 2
        %v4595 = vsel %vm1290, %v4592, %v4594
        %v4596 = vrot.slane %v4521, 2
        %v4597 = vsel %vm1290, %v4570, %v4596
        %v4598 = vrot.slane %v4522, 2
        %v4599 = vsel %vm1290, %v4596, %v4598
        %v4600 = vrot.slane %v4523, 2
        %v4601 = vsel %vm1290, %v4570, %v4600
        %v4602 = vrot.slane %v4524, 2
        %v4603 = vsel %vm1290, %v4600, %v4602
        %v4604 = vrot.slane %v4525, 2
        %v4605 = vsel %vm1290, %v4570, %v4604
        %v4606 = vrot.slane %v4526, 2
        %v4607 = vsel %vm1290, %v4604, %v4606
        %v4608 = vrot.slane %v4527, 2
        %v4609 = vsel %vm1290, %v4570, %v4608
        %v4610 = vrot.slane %v4528, 2
        %v4611 = vsel %vm1290, %v4608, %v4610
        %v4612 = vrot.slane %v4529, 2
        %v4613 = vsel %vm1290, %v4570, %v4612
        %v4614 = vrot.slane %v4530, 2
        %v4615 = vsel %vm1290, %v4612, %v4614
        %v4616 = vrot.slane %v4531, 2
        %v4617 = vsel %vm1290, %v4570, %v4616
        %v4618 = vrot.slane %v4532, 2
        %v4619 = vsel %vm1290, %v4616, %v4618
        %v4620 = vrot.slane %v4533, 2
        %v4621 = vsel %vm1290, %v4570, %v4620
        %v4622 = vrot.slane %v4534, 2
        %v4623 = vsel %vm1290, %v4620, %v4622
        %v4624 = vrot.slane %v4535, 2
        %v4625 = vsel %vm1290, %v4570, %v4624
        %v4626 = vrot.slane %v4536, 2
        %v4627 = vsel %vm1290, %v4624, %v4626
        %v4628 = vrot.slane %v4537, 2
        %v4629 = vsel %vm1290, %v4570, %v4628
        %v4630 = vrot.slane %v4538, 2
        %v4631 = vsel %vm1290, %v4628, %v4630
        %v4679 = vadd.f32 %v4455, %v4571
        %v4680 = vadd.f32 %v4456, %v4571
        %v4681 = vadd.f32 %v4457, %v4570
        %v4682 = vadd.f32 %v4458, %v4573
        %v4683 = vadd.f32 %v4459, %v4575
        %v4684 = vadd.f32 %v4460, %v4574
        %v4685 = vadd.f32 %v4461, %v4577
        %v4686 = vadd.f32 %v4462, %v4579
        %v4687 = vadd.f32 %v4463, %v4578
        %v4688 = vadd.f32 %v4464, %v4581
        %v4689 = vadd.f32 %v4465, %v4583
        %v4690 = vadd.f32 %v4466, %v4582
        %v4691 = vadd.f32 %v4467, %v4585
        %v4692 = vadd.f32 %v4468, %v4587
        %v4693 = vadd.f32 %v4469, %v4586
        %v4694 = vadd.f32 %v4470, %v4589
        %v4695 = vadd.f32 %v4471, %v4591
        %v4696 = vadd.f32 %v4472, %v4590
        %v4697 = vadd.f32 %v4473, %v4593
        %v4698 = vadd.f32 %v4474, %v4595
        %v4699 = vadd.f32 %v4475, %v4594
        %v4700 = vadd.f32 %v4476, %v4597
        %v4701 = vadd.f32 %v4477, %v4599
        %v4702 = vadd.f32 %v4478, %v4598
        %v4703 = vadd.f32 %v4479, %v4601
        %v4704 = vadd.f32 %v4480, %v4603
        %v4705 = vadd.f32 %v4481, %v4602
        %v4706 = vadd.f32 %v4482, %v4605
        %v4707 = vadd.f32 %v4483, %v4607
        %v4708 = vadd.f32 %v4484, %v4606
        %v4709 = vadd.f32 %v4485, %v4609
        %v4710 = vadd.f32 %v4486, %v4611
        %v4711 = vadd.f32 %v4487, %v4610
        %v4712 = vadd.f32 %v4488, %v4613
        %v4713 = vadd.f32 %v4489, %v4615
        %v4714 = vadd.f32 %v4490, %v4614
        %v4715 = vadd.f32 %v4491, %v4617
        %v4716 = vadd.f32 %v4492, %v4619
        %v4717 = vadd.f32 %v4493, %v4618
        %v4718 = vadd.f32 %v4494, %v4621
        %v4719 = vadd.f32 %v4495, %v4623
        %v4720 = vadd.f32 %v4496, %v4622
        %v4721 = vadd.f32 %v4497, %v4625
        %v4722 = vadd.f32 %v4498, %v4627
        %v4723 = vadd.f32 %v4499, %v4626
        %v4724 = vadd.f32 %v4500, %v4629
        %v4725 = vadd.f32 %v4501, %v4631
        %v4726 = vadd.f32 %v4502, %v4630
        %v4727 = vld [vmem:[%s3 + $0x17] sm:$0x1]
        %v4728 = vlaneseq
        %v4729 = vshrl.u32 %v4728, 7
        %v4730 = vsub.s32 0, %v4729
        %v4731 = vrot.slane %v4727, %v4730
        %v4732 = vmul.f32 %v4731, 0.0
        %v4733 = vmul.f32 %v2010, %v4731
        %v4734 = vmul.f32 %v2012, %v4731
        %v4735 = vmul.f32 %v2015, %v4731
        %v4736 = vmul.f32 %v2017, %v4731
        %v4737 = vmul.f32 %v2020, %v4731
        %v4738 = vmul.f32 %v2022, %v4731
        %v4739 = vmul.f32 %v2025, %v4731
        %v4740 = vmul.f32 %v2027, %v4731
        %v4741 = vmul.f32 %v2030, %v4731
        %v4742 = vmul.f32 %v2032, %v4731
        %v4743 = vmul.f32 %v2035, %v4731
        %v4744 = vmul.f32 %v2037, %v4731
        %v4745 = vmul.f32 %v2040, %v4731
        %v4746 = vmul.f32 %v2042, %v4731
        %v4747 = vmul.f32 %v2045, %v4731
        %v4748 = vmul.f32 %v2047, %v4731
        %v4749 = vmul.f32 %v2050, %v4731
        %v4750 = vmul.f32 %v2052, %v4731
        %v4751 = vmul.f32 %v2055, %v4731
        %v4752 = vmul.f32 %v2057, %v4731
        %v4753 = vmul.f32 %v2060, %v4731
        %v4754 = vmul.f32 %v2062, %v4731
        %v4755 = vmul.f32 %v2065, %v4731
        %v4756 = vmul.f32 %v2067, %v4731
        %v4757 = vmul.f32 %v2070, %v4731
        %v4758 = vmul.f32 %v2072, %v4731
        %v4759 = vmul.f32 %v2075, %v4731
        %v4760 = vmul.f32 %v2077, %v4731
        %v4761 = vmul.f32 %v2080, %v4731
        %v4762 = vmul.f32 %v2082, %v4731
        %v4763 = vmul.f32 %v2085, %v4731
        %v4764 = vmul.f32 %v2087, %v4731
        %v4798 = vrot.slane %v4732, 2
        %v4799 = vrot.slane %v4733, 2
        %v4800 = vsel %vm1290, %v4798, %v4799
        %v4801 = vrot.slane %v4734, 2
        %v4802 = vsel %vm1290, %v4799, %v4801
        %v4803 = vrot.slane %v4735, 2
        %v4804 = vsel %vm1290, %v4798, %v4803
        %v4805 = vrot.slane %v4736, 2
        %v4806 = vsel %vm1290, %v4803, %v4805
        %v4807 = vrot.slane %v4737, 2
        %v4808 = vsel %vm1290, %v4798, %v4807
        %v4809 = vrot.slane %v4738, 2
        %v4810 = vsel %vm1290, %v4807, %v4809
        %v4811 = vrot.slane %v4739, 2
        %v4812 = vsel %vm1290, %v4798, %v4811
        %v4813 = vrot.slane %v4740, 2
        %v4814 = vsel %vm1290, %v4811, %v4813
        %v4815 = vrot.slane %v4741, 2
        %v4816 = vsel %vm1290, %v4798, %v4815
        %v4817 = vrot.slane %v4742, 2
        %v4818 = vsel %vm1290, %v4815, %v4817
        %v4819 = vrot.slane %v4743, 2
        %v4820 = vsel %vm1290, %v4798, %v4819
        %v4821 = vrot.slane %v4744, 2
        %v4822 = vsel %vm1290, %v4819, %v4821
        %v4823 = vrot.slane %v4745, 2
        %v4824 = vsel %vm1290, %v4798, %v4823
        %v4825 = vrot.slane %v4746, 2
        %v4826 = vsel %vm1290, %v4823, %v4825
        %v4827 = vrot.slane %v4747, 2
        %v4828 = vsel %vm1290, %v4798, %v4827
        %v4829 = vrot.slane %v4748, 2
        %v4830 = vsel %vm1290, %v4827, %v4829
        %v4831 = vrot.slane %v4749, 2
        %v4832 = vsel %vm1290, %v4798, %v4831
        %v4833 = vrot.slane %v4750, 2
        %v4834 = vsel %vm1290, %v4831, %v4833
        %v4835 = vrot.slane %v4751, 2
        %v4836 = vsel %vm1290, %v4798, %v4835
        %v4837 = vrot.slane %v4752, 2
        %v4838 = vsel %vm1290, %v4835, %v4837
        %v4839 = vrot.slane %v4753, 2
        %v4840 = vsel %vm1290, %v4798, %v4839
        %v4841 = vrot.slane %v4754, 2
        %v4842 = vsel %vm1290, %v4839, %v4841
        %v4843 = vrot.slane %v4755, 2
        %v4844 = vsel %vm1290, %v4798, %v4843
        %v4845 = vrot.slane %v4756, 2
        %v4846 = vsel %vm1290, %v4843, %v4845
        %v4847 = vrot.slane %v4757, 2
        %v4848 = vsel %vm1290, %v4798, %v4847
        %v4849 = vrot.slane %v4758, 2
        %v4850 = vsel %vm1290, %v4847, %v4849
        %v4851 = vrot.slane %v4759, 2
        %v4852 = vsel %vm1290, %v4798, %v4851
        %v4853 = vrot.slane %v4760, 2
        %v4854 = vsel %vm1290, %v4851, %v4853
        %v4855 = vrot.slane %v4761, 2
        %v4856 = vsel %vm1290, %v4798, %v4855
        %v4857 = vrot.slane %v4762, 2
        %v4858 = vsel %vm1290, %v4855, %v4857
        %v4859 = vrot.slane %v4763, 2
        %v4860 = vsel %vm1290, %v4798, %v4859
        %v4861 = vrot.slane %v4764, 2
        %v4862 = vsel %vm1290, %v4859, %v4861
        %v4911 = vadd.f32 %v4679, %v4800
        %v4912 = vadd.f32 %v4680, %v4802
        %v4913 = vadd.f32 %v4681, %v4801
        %v4914 = vadd.f32 %v4682, %v4804
        %v4915 = vadd.f32 %v4683, %v4806
        %v4916 = vadd.f32 %v4684, %v4805
        %v4917 = vadd.f32 %v4685, %v4808
        %v4918 = vadd.f32 %v4686, %v4810
        %v4919 = vadd.f32 %v4687, %v4809
        %v4920 = vadd.f32 %v4688, %v4812
        %v4921 = vadd.f32 %v4689, %v4814
        %v4922 = vadd.f32 %v4690, %v4813
        %v4923 = vadd.f32 %v4691, %v4816
        %v4924 = vadd.f32 %v4692, %v4818
        %v4925 = vadd.f32 %v4693, %v4817
        %v4926 = vadd.f32 %v4694, %v4820
        %v4927 = vadd.f32 %v4695, %v4822
        %v4928 = vadd.f32 %v4696, %v4821
        %v4929 = vadd.f32 %v4697, %v4824
        %v4930 = vadd.f32 %v4698, %v4826
        %v4931 = vadd.f32 %v4699, %v4825
        %v4932 = vadd.f32 %v4700, %v4828
        %v4933 = vadd.f32 %v4701, %v4830
        %v4934 = vadd.f32 %v4702, %v4829
        %v4935 = vadd.f32 %v4703, %v4832
        %v4936 = vadd.f32 %v4704, %v4834
        %v4937 = vadd.f32 %v4705, %v4833
        %v4938 = vadd.f32 %v4706, %v4836
        %v4939 = vadd.f32 %v4707, %v4838
        %v4940 = vadd.f32 %v4708, %v4837
        %v4941 = vadd.f32 %v4709, %v4840
        %v4942 = vadd.f32 %v4710, %v4842
        %v4943 = vadd.f32 %v4711, %v4841
        %v4944 = vadd.f32 %v4712, %v4844
        %v4945 = vadd.f32 %v4713, %v4846
        %v4946 = vadd.f32 %v4714, %v4845
        %v4947 = vadd.f32 %v4715, %v4848
        %v4948 = vadd.f32 %v4716, %v4850
        %v4949 = vadd.f32 %v4717, %v4849
        %v4950 = vadd.f32 %v4718, %v4852
        %v4951 = vadd.f32 %v4719, %v4854
        %v4952 = vadd.f32 %v4720, %v4853
        %v4953 = vadd.f32 %v4721, %v4856
        %v4954 = vadd.f32 %v4722, %v4858
        %v4955 = vadd.f32 %v4723, %v4857
        %v4956 = vadd.f32 %v4724, %v4860
        %v4957 = vadd.f32 %v4725, %v4862
        %v4958 = vadd.f32 %v4726, %v4861
        %v4959 = vld [vmem:[%s3 + $0x1e] sm:$0x1]
        %v4960 = vlaneseq
        %v4961 = vshrl.u32 %v4960, 7
        %v4962 = vsub.s32 0, %v4961
        %v4963 = vrot.slane %v4959, %v4962
        %v4964 = vmul.f32 %v4963, 0.0
        %v4965 = vmul.f32 %v2015, %v4963
        %v4966 = vmul.f32 %v2017, %v4963
        %v4967 = vmul.f32 %v2020, %v4963
        %v4968 = vmul.f32 %v2022, %v4963
        %v4969 = vmul.f32 %v2025, %v4963
        %v4970 = vmul.f32 %v2027, %v4963
        %v4971 = vmul.f32 %v2030, %v4963
        %v4972 = vmul.f32 %v2032, %v4963
        %v4973 = vmul.f32 %v2035, %v4963
        %v4974 = vmul.f32 %v2037, %v4963
        %v4975 = vmul.f32 %v2040, %v4963
        %v4976 = vmul.f32 %v2042, %v4963
        %v4977 = vmul.f32 %v2045, %v4963
        %v4978 = vmul.f32 %v2047, %v4963
        %v4979 = vmul.f32 %v2050, %v4963
        %v4980 = vmul.f32 %v2052, %v4963
        %v4981 = vmul.f32 %v2055, %v4963
        %v4982 = vmul.f32 %v2057, %v4963
        %v4983 = vmul.f32 %v2060, %v4963
        %v4984 = vmul.f32 %v2062, %v4963
        %v4985 = vmul.f32 %v2065, %v4963
        %v4986 = vmul.f32 %v2067, %v4963
        %v4987 = vmul.f32 %v2070, %v4963
        %v4988 = vmul.f32 %v2072, %v4963
        %v4989 = vmul.f32 %v2075, %v4963
        %v4990 = vmul.f32 %v2077, %v4963
        %v4991 = vmul.f32 %v2080, %v4963
        %v4992 = vmul.f32 %v2082, %v4963
        %v4993 = vmul.f32 %v2085, %v4963
        %v4994 = vmul.f32 %v2087, %v4963
        %v5026 = vrot.slane %v4964, 2
        %v5027 = vrot.slane %v4965, 2
        %v5028 = vsel %vm1290, %v5026, %v5027
        %v5029 = vrot.slane %v4966, 2
        %v5030 = vsel %vm1290, %v5027, %v5029
        %v5031 = vrot.slane %v4967, 2
        %v5032 = vsel %vm1290, %v5026, %v5031
        %v5033 = vrot.slane %v4968, 2
        %v5034 = vsel %vm1290, %v5031, %v5033
        %v5035 = vrot.slane %v4969, 2
        %v5036 = vsel %vm1290, %v5026, %v5035
        %v5037 = vrot.slane %v4970, 2
        %v5038 = vsel %vm1290, %v5035, %v5037
        %v5039 = vrot.slane %v4971, 2
        %v5040 = vsel %vm1290, %v5026, %v5039
        %v5041 = vrot.slane %v4972, 2
        %v5042 = vsel %vm1290, %v5039, %v5041
        %v5043 = vrot.slane %v4973, 2
        %v5044 = vsel %vm1290, %v5026, %v5043
        %v5045 = vrot.slane %v4974, 2
        %v5046 = vsel %vm1290, %v5043, %v5045
        %v5047 = vrot.slane %v4975, 2
        %v5048 = vsel %vm1290, %v5026, %v5047
        %v5049 = vrot.slane %v4976, 2
        %v5050 = vsel %vm1290, %v5047, %v5049
        %v5051 = vrot.slane %v4977, 2
        %v5052 = vsel %vm1290, %v5026, %v5051
        %v5053 = vrot.slane %v4978, 2
        %v5054 = vsel %vm1290, %v5051, %v5053
        %v5055 = vrot.slane %v4979, 2
        %v5056 = vsel %vm1290, %v5026, %v5055
        %v5057 = vrot.slane %v4980, 2
        %v5058 = vsel %vm1290, %v5055, %v5057
        %v5059 = vrot.slane %v4981, 2
        %v5060 = vsel %vm1290, %v5026, %v5059
        %v5061 = vrot.slane %v4982, 2
        %v5062 = vsel %vm1290, %v5059, %v5061
        %v5063 = vrot.slane %v4983, 2
        %v5064 = vsel %vm1290, %v5026, %v5063
        %v5065 = vrot.slane %v4984, 2
        %v5066 = vsel %vm1290, %v5063, %v5065
        %v5067 = vrot.slane %v4985, 2
        %v5068 = vsel %vm1290, %v5026, %v5067
        %v5069 = vrot.slane %v4986, 2
        %v5070 = vsel %vm1290, %v5067, %v5069
        %v5071 = vrot.slane %v4987, 2
        %v5072 = vsel %vm1290, %v5026, %v5071
        %v5073 = vrot.slane %v4988, 2
        %v5074 = vsel %vm1290, %v5071, %v5073
        %v5075 = vrot.slane %v4989, 2
        %v5076 = vsel %vm1290, %v5026, %v5075
        %v5077 = vrot.slane %v4990, 2
        %v5078 = vsel %vm1290, %v5075, %v5077
        %v5079 = vrot.slane %v4991, 2
        %v5080 = vsel %vm1290, %v5026, %v5079
        %v5081 = vrot.slane %v4992, 2
        %v5082 = vsel %vm1290, %v5079, %v5081
        %v5083 = vrot.slane %v4993, 2
        %v5084 = vsel %vm1290, %v5026, %v5083
        %v5085 = vrot.slane %v4994, 2
        %v5086 = vsel %vm1290, %v5083, %v5085
        %v5087 = vsel %vm1290, %v5026, %v5026
        %v5135 = vadd.f32 %v4911, %v5028
        %v5136 = vadd.f32 %v4912, %v5030
        %v5137 = vadd.f32 %v4913, %v5029
        %v5138 = vadd.f32 %v4914, %v5032
        %v5139 = vadd.f32 %v4915, %v5034
        %v5140 = vadd.f32 %v4916, %v5033
        %v5141 = vadd.f32 %v4917, %v5036
        %v5142 = vadd.f32 %v4918, %v5038
        %v5143 = vadd.f32 %v4919, %v5037
        %v5144 = vadd.f32 %v4920, %v5040
        %v5145 = vadd.f32 %v4921, %v5042
        %v5146 = vadd.f32 %v4922, %v5041
        %v5147 = vadd.f32 %v4923, %v5044
        %v5148 = vadd.f32 %v4924, %v5046
        %v5149 = vadd.f32 %v4925, %v5045
        %v5150 = vadd.f32 %v4926, %v5048
        %v5151 = vadd.f32 %v4927, %v5050
        %v5152 = vadd.f32 %v4928, %v5049
        %v5153 = vadd.f32 %v4929, %v5052
        %v5154 = vadd.f32 %v4930, %v5054
        %v5155 = vadd.f32 %v4931, %v5053
        %v5156 = vadd.f32 %v4932, %v5056
        %v5157 = vadd.f32 %v4933, %v5058
        %v5158 = vadd.f32 %v4934, %v5057
        %v5159 = vadd.f32 %v4935, %v5060
        %v5160 = vadd.f32 %v4936, %v5062
        %v5161 = vadd.f32 %v4937, %v5061
        %v5162 = vadd.f32 %v4938, %v5064
        %v5163 = vadd.f32 %v4939, %v5066
        %v5164 = vadd.f32 %v4940, %v5065
        %v5165 = vadd.f32 %v4941, %v5068
        %v5166 = vadd.f32 %v4942, %v5070
        %v5167 = vadd.f32 %v4943, %v5069
        %v5168 = vadd.f32 %v4944, %v5072
        %v5169 = vadd.f32 %v4945, %v5074
        %v5170 = vadd.f32 %v4946, %v5073
        %v5171 = vadd.f32 %v4947, %v5076
        %v5172 = vadd.f32 %v4948, %v5078
        %v5173 = vadd.f32 %v4949, %v5077
        %v5174 = vadd.f32 %v4950, %v5080
        %v5175 = vadd.f32 %v4951, %v5082
        %v5176 = vadd.f32 %v4952, %v5081
        %v5177 = vadd.f32 %v4953, %v5084
        %v5178 = vadd.f32 %v4954, %v5086
        %v5179 = vadd.f32 %v4955, %v5085
        %v5180 = vadd.f32 %v4956, %v5087
        %v5181 = vadd.f32 %v4957, %v5087
        %v5182 = vadd.f32 %v4958, %v5026
        %v5183 = vld [vmem:[%s3 + $0x25] sm:$0x1]
        %v5184 = vlaneseq
        %v5185 = vshrl.u32 %v5184, 7
        %v5186 = vsub.s32 0, %v5185
        %v5187 = vrot.slane %v5183, %v5186
        %v5188 = vmul.f32 %v5187, 0.0
        %v5189 = vmul.f32 %v2020, %v5187
        %v5190 = vmul.f32 %v2022, %v5187
        %v5191 = vmul.f32 %v2025, %v5187
        %v5192 = vmul.f32 %v2027, %v5187
        %v5193 = vmul.f32 %v2030, %v5187
        %v5194 = vmul.f32 %v2032, %v5187
        %v5195 = vmul.f32 %v2035, %v5187
        %v5196 = vmul.f32 %v2037, %v5187
        %v5197 = vmul.f32 %v2040, %v5187
        %v5198 = vmul.f32 %v2042, %v5187
        %v5199 = vmul.f32 %v2045, %v5187
        %v5200 = vmul.f32 %v2047, %v5187
        %v5201 = vmul.f32 %v2050, %v5187
        %v5202 = vmul.f32 %v2052, %v5187
        %v5203 = vmul.f32 %v2055, %v5187
        %v5204 = vmul.f32 %v2057, %v5187
        %v5205 = vmul.f32 %v2060, %v5187
        %v5206 = vmul.f32 %v2062, %v5187
        %v5207 = vmul.f32 %v2065, %v5187
        %v5208 = vmul.f32 %v2067, %v5187
        %v5209 = vmul.f32 %v2070, %v5187
        %v5210 = vmul.f32 %v2072, %v5187
        %v5211 = vmul.f32 %v2075, %v5187
        %v5212 = vmul.f32 %v2077, %v5187
        %v5213 = vmul.f32 %v2080, %v5187
        %v5214 = vmul.f32 %v2082, %v5187
        %v5215 = vmul.f32 %v2085, %v5187
        %v5216 = vmul.f32 %v2087, %v5187
        %v5246 = vrot.slane %v5188, 2
        %v5247 = vrot.slane %v5189, 2
        %v5248 = vsel %vm1290, %v5246, %v5247
        %v5249 = vrot.slane %v5190, 2
        %v5250 = vsel %vm1290, %v5247, %v5249
        %v5251 = vrot.slane %v5191, 2
        %v5252 = vsel %vm1290, %v5246, %v5251
        %v5253 = vrot.slane %v5192, 2
        %v5254 = vsel %vm1290, %v5251, %v5253
        %v5255 = vrot.slane %v5193, 2
        %v5256 = vsel %vm1290, %v5246, %v5255
        %v5257 = vrot.slane %v5194, 2
        %v5258 = vsel %vm1290, %v5255, %v5257
        %v5259 = vrot.slane %v5195, 2
        %v5260 = vsel %vm1290, %v5246, %v5259
        %v5261 = vrot.slane %v5196, 2
        %v5262 = vsel %vm1290, %v5259, %v5261
        %v5263 = vrot.slane %v5197, 2
        %v5264 = vsel %vm1290, %v5246, %v5263
        %v5265 = vrot.slane %v5198, 2
        %v5266 = vsel %vm1290, %v5263, %v5265
        %v5267 = vrot.slane %v5199, 2
        %v5268 = vsel %vm1290, %v5246, %v5267
        %v5269 = vrot.slane %v5200, 2
        %v5270 = vsel %vm1290, %v5267, %v5269
        %v5271 = vrot.slane %v5201, 2
        %v5272 = vsel %vm1290, %v5246, %v5271
        %v5273 = vrot.slane %v5202, 2
        %v5274 = vsel %vm1290, %v5271, %v5273
        %v5275 = vrot.slane %v5203, 2
        %v5276 = vsel %vm1290, %v5246, %v5275
        %v5277 = vrot.slane %v5204, 2
        %v5278 = vsel %vm1290, %v5275, %v5277
        %v5279 = vrot.slane %v5205, 2
        %v5280 = vsel %vm1290, %v5246, %v5279
        %v5281 = vrot.slane %v5206, 2
        %v5282 = vsel %vm1290, %v5279, %v5281
        %v5283 = vrot.slane %v5207, 2
        %v5284 = vsel %vm1290, %v5246, %v5283
        %v5285 = vrot.slane %v5208, 2
        %v5286 = vsel %vm1290, %v5283, %v5285
        %v5287 = vrot.slane %v5209, 2
        %v5288 = vsel %vm1290, %v5246, %v5287
        %v5289 = vrot.slane %v5210, 2
        %v5290 = vsel %vm1290, %v5287, %v5289
        %v5291 = vrot.slane %v5211, 2
        %v5292 = vsel %vm1290, %v5246, %v5291
        %v5293 = vrot.slane %v5212, 2
        %v5294 = vsel %vm1290, %v5291, %v5293
        %v5295 = vrot.slane %v5213, 2
        %v5296 = vsel %vm1290, %v5246, %v5295
        %v5297 = vrot.slane %v5214, 2
        %v5298 = vsel %vm1290, %v5295, %v5297
        %v5299 = vrot.slane %v5215, 2
        %v5300 = vsel %vm1290, %v5246, %v5299
        %v5301 = vrot.slane %v5216, 2
        %v5302 = vsel %vm1290, %v5299, %v5301
        %v5303 = vsel %vm1290, %v5246, %v5246
        %v5348 = vadd.f32 %v5135, %v5248
        %v5349 = vadd.f32 %v5136, %v5250
        %v5350 = vadd.f32 %v5137, %v5249
        %v5351 = vadd.f32 %v5138, %v5252
        %v5352 = vadd.f32 %v5139, %v5254
        %v5353 = vadd.f32 %v5140, %v5253
        %v5354 = vadd.f32 %v5141, %v5256
        %v5355 = vadd.f32 %v5142, %v5258
        %v5356 = vadd.f32 %v5143, %v5257
        %v5357 = vadd.f32 %v5144, %v5260
        %v5358 = vadd.f32 %v5145, %v5262
        %v5359 = vadd.f32 %v5146, %v5261
        %v5360 = vadd.f32 %v5147, %v5264
        %v5361 = vadd.f32 %v5148, %v5266
        %v5362 = vadd.f32 %v5149, %v5265
        %v5363 = vadd.f32 %v5150, %v5268
        %v5364 = vadd.f32 %v5151, %v5270
        %v5365 = vadd.f32 %v5152, %v5269
        %v5366 = vadd.f32 %v5153, %v5272
        %v5367 = vadd.f32 %v5154, %v5274
        %v5368 = vadd.f32 %v5155, %v5273
        %v5369 = vadd.f32 %v5156, %v5276
        %v5370 = vadd.f32 %v5157, %v5278
        %v5371 = vadd.f32 %v5158, %v5277
        %v5372 = vadd.f32 %v5159, %v5280
        %v5373 = vadd.f32 %v5160, %v5282
        %v5374 = vadd.f32 %v5161, %v5281
        %v5375 = vadd.f32 %v5162, %v5284
        %v5376 = vadd.f32 %v5163, %v5286
        %v5377 = vadd.f32 %v5164, %v5285
        %v5378 = vadd.f32 %v5165, %v5288
        %v5379 = vadd.f32 %v5166, %v5290
        %v5380 = vadd.f32 %v5167, %v5289
        %v5381 = vadd.f32 %v5168, %v5292
        %v5382 = vadd.f32 %v5169, %v5294
        %v5383 = vadd.f32 %v5170, %v5293
        %v5384 = vadd.f32 %v5171, %v5296
        %v5385 = vadd.f32 %v5172, %v5298
        %v5386 = vadd.f32 %v5173, %v5297
        %v5387 = vadd.f32 %v5174, %v5300
        %v5388 = vadd.f32 %v5175, %v5302
        %v5389 = vadd.f32 %v5176, %v5301
        %v5390 = vadd.f32 %v5177, %v5303
        %v5391 = vadd.f32 %v5178, %v5303
        %v5392 = vadd.f32 %v5179, %v5246
        %v5393 = vadd.f32 %v5180, %v5303
        %v5394 = vadd.f32 %v5181, %v5303
        %v5395 = vadd.f32 %v5182, %v5246
        %v5396 = vld [vmem:[%s3 + $0x2c] sm:$0x1]
        %v5397 = vlaneseq
        %v5398 = vshrl.u32 %v5397, 7
        %v5399 = vsub.s32 0, %v5398
        %v5400 = vrot.slane %v5396, %v5399
        %v5401 = vmul.f32 %v5400, 0.0
        %v5402 = vmul.f32 %v2025, %v5400
        %v5403 = vmul.f32 %v2027, %v5400
        %v5404 = vmul.f32 %v2030, %v5400
        %v5405 = vmul.f32 %v2032, %v5400
        %v5406 = vmul.f32 %v2035, %v5400
        %v5407 = vmul.f32 %v2037, %v5400
        %v5408 = vmul.f32 %v2040, %v5400
        %v5409 = vmul.f32 %v2042, %v5400
        %v5410 = vmul.f32 %v2045, %v5400
        %v5411 = vmul.f32 %v2047, %v5400
        %v5412 = vmul.f32 %v2050, %v5400
        %v5413 = vmul.f32 %v2052, %v5400
        %v5414 = vmul.f32 %v2055, %v5400
        %v5415 = vmul.f32 %v2057, %v5400
        %v5416 = vmul.f32 %v2060, %v5400
        %v5417 = vmul.f32 %v2062, %v5400
        %v5418 = vmul.f32 %v2065, %v5400
        %v5419 = vmul.f32 %v2067, %v5400
        %v5420 = vmul.f32 %v2070, %v5400
        %v5421 = vmul.f32 %v2072, %v5400
        %v5422 = vmul.f32 %v2075, %v5400
        %v5423 = vmul.f32 %v2077, %v5400
        %v5424 = vmul.f32 %v2080, %v5400
        %v5425 = vmul.f32 %v2082, %v5400
        %v5426 = vmul.f32 %v2085, %v5400
        %v5427 = vmul.f32 %v2087, %v5400
        %v5455 = vrot.slane %v5401, 2
        %v5456 = vrot.slane %v5402, 2
        %v5457 = vsel %vm1290, %v5455, %v5456
        %v5458 = vrot.slane %v5403, 2
        %v5459 = vsel %vm1290, %v5456, %v5458
        %v5460 = vrot.slane %v5404, 2
        %v5461 = vsel %vm1290, %v5455, %v5460
        %v5462 = vrot.slane %v5405, 2
        %v5463 = vsel %vm1290, %v5460, %v5462
        %v5464 = vrot.slane %v5406, 2
        %v5465 = vsel %vm1290, %v5455, %v5464
        %v5466 = vrot.slane %v5407, 2
        %v5467 = vsel %vm1290, %v5464, %v5466
        %v5468 = vrot.slane %v5408, 2
        %v5469 = vsel %vm1290, %v5455, %v5468
        %v5470 = vrot.slane %v5409, 2
        %v5471 = vsel %vm1290, %v5468, %v5470
        %v5472 = vrot.slane %v5410, 2
        %v5473 = vsel %vm1290, %v5455, %v5472
        %v5474 = vrot.slane %v5411, 2
        %v5475 = vsel %vm1290, %v5472, %v5474
        %v5476 = vrot.slane %v5412, 2
        %v5477 = vsel %vm1290, %v5455, %v5476
        %v5478 = vrot.slane %v5413, 2
        %v5479 = vsel %vm1290, %v5476, %v5478
        %v5480 = vrot.slane %v5414, 2
        %v5481 = vsel %vm1290, %v5455, %v5480
        %v5482 = vrot.slane %v5415, 2
        %v5483 = vsel %vm1290, %v5480, %v5482
        %v5484 = vrot.slane %v5416, 2
        %v5485 = vsel %vm1290, %v5455, %v5484
        %v5486 = vrot.slane %v5417, 2
        %v5487 = vsel %vm1290, %v5484, %v5486
        %v5488 = vrot.slane %v5418, 2
        %v5489 = vsel %vm1290, %v5455, %v5488
        %v5490 = vrot.slane %v5419, 2
        %v5491 = vsel %vm1290, %v5488, %v5490
        %v5492 = vrot.slane %v5420, 2
        %v5493 = vsel %vm1290, %v5455, %v5492
        %v5494 = vrot.slane %v5421, 2
        %v5495 = vsel %vm1290, %v5492, %v5494
        %v5496 = vrot.slane %v5422, 2
        %v5497 = vsel %vm1290, %v5455, %v5496
        %v5498 = vrot.slane %v5423, 2
        %v5499 = vsel %vm1290, %v5496, %v5498
        %v5500 = vrot.slane %v5424, 2
        %v5501 = vsel %vm1290, %v5455, %v5500
        %v5502 = vrot.slane %v5425, 2
        %v5503 = vsel %vm1290, %v5500, %v5502
        %v5504 = vrot.slane %v5426, 2
        %v5505 = vsel %vm1290, %v5455, %v5504
        %v5506 = vrot.slane %v5427, 2
        %v5507 = vsel %vm1290, %v5504, %v5506
        %v5508 = vsel %vm1290, %v5455, %v5455
        %v5550 = vadd.f32 %v5348, %v5457
        %v5551 = vadd.f32 %v5349, %v5459
        %v5552 = vadd.f32 %v5350, %v5458
        %v5553 = vadd.f32 %v5351, %v5461
        %v5554 = vadd.f32 %v5352, %v5463
        %v5555 = vadd.f32 %v5353, %v5462
        %v5556 = vadd.f32 %v5354, %v5465
        %v5557 = vadd.f32 %v5355, %v5467
        %v5558 = vadd.f32 %v5356, %v5466
        %v5559 = vadd.f32 %v5357, %v5469
        %v5560 = vadd.f32 %v5358, %v5471
        %v5561 = vadd.f32 %v5359, %v5470
        %v5562 = vadd.f32 %v5360, %v5473
        %v5563 = vadd.f32 %v5361, %v5475
        %v5564 = vadd.f32 %v5362, %v5474
        %v5565 = vadd.f32 %v5363, %v5477
        %v5566 = vadd.f32 %v5364, %v5479
        %v5567 = vadd.f32 %v5365, %v5478
        %v5568 = vadd.f32 %v5366, %v5481
        %v5569 = vadd.f32 %v5367, %v5483
        %v5570 = vadd.f32 %v5368, %v5482
        %v5571 = vadd.f32 %v5369, %v5485
        %v5572 = vadd.f32 %v5370, %v5487
        %v5573 = vadd.f32 %v5371, %v5486
        %v5574 = vadd.f32 %v5372, %v5489
        %v5575 = vadd.f32 %v5373, %v5491
        %v5576 = vadd.f32 %v5374, %v5490
        %v5577 = vadd.f32 %v5375, %v5493
        %v5578 = vadd.f32 %v5376, %v5495
        %v5579 = vadd.f32 %v5377, %v5494
        %v5580 = vadd.f32 %v5378, %v5497
        %v5581 = vadd.f32 %v5379, %v5499
        %v5582 = vadd.f32 %v5380, %v5498
        %v5583 = vadd.f32 %v5381, %v5501
        %v5584 = vadd.f32 %v5382, %v5503
        %v5585 = vadd.f32 %v5383, %v5502
        %v5586 = vadd.f32 %v5384, %v5505
        %v5587 = vadd.f32 %v5385, %v5507
        %v5588 = vadd.f32 %v5386, %v5506
        %v5589 = vadd.f32 %v5387, %v5508
        %v5590 = vadd.f32 %v5388, %v5508
        %v5591 = vadd.f32 %v5389, %v5455
        %v5592 = vadd.f32 %v5390, %v5508
        %v5593 = vadd.f32 %v5391, %v5508
        %v5594 = vadd.f32 %v5392, %v5455
        %v5595 = vadd.f32 %v5393, %v5508
        %v5596 = vadd.f32 %v5394, %v5508
        %v5597 = vadd.f32 %v5395, %v5455
        %v5598 = vld [vmem:[%s3 + $0x3] sm:$0x1]
        %v5599 = vlaneseq
        %v5600 = vshrl.u32 %v5599, 7
        %v5601 = vsub.s32 0, %v5600
        %v5602 = vrot.slane %v5598, %v5601
        %v5603 = vmul.f32 %v5602, 0.0
        %v5604 = vmul.f32 %v2010, %v5602
        %v5605 = vmul.f32 %v2012, %v5602
        %v5606 = vmul.f32 %v2015, %v5602
        %v5607 = vmul.f32 %v2017, %v5602
        %v5608 = vmul.f32 %v2020, %v5602
        %v5609 = vmul.f32 %v2022, %v5602
        %v5610 = vmul.f32 %v2025, %v5602
        %v5611 = vmul.f32 %v2027, %v5602
        %v5612 = vmul.f32 %v2030, %v5602
        %v5613 = vmul.f32 %v2032, %v5602
        %v5614 = vmul.f32 %v2035, %v5602
        %v5615 = vmul.f32 %v2037, %v5602
        %v5616 = vmul.f32 %v2040, %v5602
        %v5617 = vmul.f32 %v2042, %v5602
        %v5618 = vmul.f32 %v2045, %v5602
        %v5619 = vmul.f32 %v2047, %v5602
        %v5620 = vmul.f32 %v2050, %v5602
        %v5621 = vmul.f32 %v2052, %v5602
        %v5622 = vmul.f32 %v2055, %v5602
        %v5623 = vmul.f32 %v2057, %v5602
        %v5624 = vmul.f32 %v2060, %v5602
        %v5625 = vmul.f32 %v2062, %v5602
        %v5626 = vmul.f32 %v2065, %v5602
        %v5627 = vmul.f32 %v2067, %v5602
        %v5628 = vmul.f32 %v2070, %v5602
        %v5629 = vmul.f32 %v2072, %v5602
        %vm5657 = vcmask 1044480
        %v5658 = vrot.slane %v5603, 3
        %v5659 = vsel %vm5657, %v5658, %v5658
        %v5660 = vrot.slane %v5604, 3
        %v5661 = vrot.slane %v5605, 3
        %v5662 = vsel %vm5657, %v5660, %v5661
        %v5663 = vrot.slane %v5606, 3
        %v5664 = vrot.slane %v5607, 3
        %v5665 = vsel %vm5657, %v5663, %v5664
        %v5666 = vrot.slane %v5608, 3
        %v5667 = vrot.slane %v5609, 3
        %v5668 = vsel %vm5657, %v5666, %v5667
        %v5669 = vrot.slane %v5610, 3
        %v5670 = vrot.slane %v5611, 3
        %v5671 = vsel %vm5657, %v5669, %v5670
        %v5672 = vrot.slane %v5612, 3
        %v5673 = vrot.slane %v5613, 3
        %v5674 = vsel %vm5657, %v5672, %v5673
        %v5675 = vrot.slane %v5614, 3
        %v5676 = vrot.slane %v5615, 3
        %v5677 = vsel %vm5657, %v5675, %v5676
        %v5678 = vrot.slane %v5616, 3
        %v5679 = vrot.slane %v5617, 3
        %v5680 = vsel %vm5657, %v5678, %v5679
        %v5681 = vrot.slane %v5618, 3
        %v5682 = vrot.slane %v5619, 3
        %v5683 = vsel %vm5657, %v5681, %v5682
        %v5684 = vrot.slane %v5620, 3
        %v5685 = vrot.slane %v5621, 3
        %v5686 = vsel %vm5657, %v5684, %v5685
        %v5687 = vrot.slane %v5622, 3
        %v5688 = vrot.slane %v5623, 3
        %v5689 = vsel %vm5657, %v5687, %v5688
        %v5690 = vrot.slane %v5624, 3
        %v5691 = vrot.slane %v5625, 3
        %v5692 = vsel %vm5657, %v5690, %v5691
        %v5693 = vrot.slane %v5626, 3
        %v5694 = vrot.slane %v5627, 3
        %v5695 = vsel %vm5657, %v5693, %v5694
        %v5696 = vrot.slane %v5628, 3
        %v5697 = vrot.slane %v5629, 3
        %v5698 = vsel %vm5657, %v5696, %v5697
        %v5740 = vadd.f32 %v5550, %v5658
        %v5741 = vadd.f32 %v5551, %v5659
        %v5742 = vadd.f32 %v5552, %v5658
        %v5743 = vadd.f32 %v5553, %v5658
        %v5744 = vadd.f32 %v5554, %v5659
        %v5745 = vadd.f32 %v5555, %v5658
        %v5746 = vadd.f32 %v5556, %v5658
        %v5747 = vadd.f32 %v5557, %v5659
        %v5748 = vadd.f32 %v5558, %v5658
        %v5749 = vadd.f32 %v5559, %v5660
        %v5750 = vadd.f32 %v5560, %v5662
        %v5751 = vadd.f32 %v5561, %v5661
        %v5752 = vadd.f32 %v5562, %v5663
        %v5753 = vadd.f32 %v5563, %v5665
        %v5754 = vadd.f32 %v5564, %v5664
        %v5755 = vadd.f32 %v5565, %v5666
        %v5756 = vadd.f32 %v5566, %v5668
        %v5757 = vadd.f32 %v5567, %v5667
        %v5758 = vadd.f32 %v5568, %v5669
        %v5759 = vadd.f32 %v5569, %v5671
        %v5760 = vadd.f32 %v5570, %v5670
        %v5761 = vadd.f32 %v5571, %v5672
        %v5762 = vadd.f32 %v5572, %v5674
        %v5763 = vadd.f32 %v5573, %v5673
        %v5764 = vadd.f32 %v5574, %v5675
        %v5765 = vadd.f32 %v5575, %v5677
        %v5766 = vadd.f32 %v5576, %v5676
        %v5767 = vadd.f32 %v5577, %v5678
        %v5768 = vadd.f32 %v5578, %v5680
        %v5769 = vadd.f32 %v5579, %v5679
        %v5770 = vadd.f32 %v5580, %v5681
        %v5771 = vadd.f32 %v5581, %v5683
        %v5772 = vadd.f32 %v5582, %v5682
        %v5773 = vadd.f32 %v5583, %v5684
        %v5774 = vadd.f32 %v5584, %v5686
        %v5775 = vadd.f32 %v5585, %v5685
        %v5776 = vadd.f32 %v5586, %v5687
        %v5777 = vadd.f32 %v5587, %v5689
        %v5778 = vadd.f32 %v5588, %v5688
        %v5779 = vadd.f32 %v5589, %v5690
        %v5780 = vadd.f32 %v5590, %v5692
        %v5781 = vadd.f32 %v5591, %v5691
        %v5782 = vadd.f32 %v5592, %v5693
        %v5783 = vadd.f32 %v5593, %v5695
        %v5784 = vadd.f32 %v5594, %v5694
        %v5785 = vadd.f32 %v5595, %v5696
        %v5786 = vadd.f32 %v5596, %v5698
        %v5787 = vadd.f32 %v5597, %v5697
        %v5788 = vld [vmem:[%s3 + $0xa] sm:$0x1]
        %v5789 = vlaneseq
        %v5790 = vshrl.u32 %v5789, 7
        %v5791 = vsub.s32 0, %v5790
        %v5792 = vrot.slane %v5788, %v5791
        %v5793 = vmul.f32 %v5792, 0.0
        %v5794 = vmul.f32 %v2010, %v5792
        %v5795 = vmul.f32 %v2012, %v5792
        %v5796 = vmul.f32 %v2015, %v5792
        %v5797 = vmul.f32 %v2017, %v5792
        %v5798 = vmul.f32 %v2020, %v5792
        %v5799 = vmul.f32 %v2022, %v5792
        %v5800 = vmul.f32 %v2025, %v5792
        %v5801 = vmul.f32 %v2027, %v5792
        %v5802 = vmul.f32 %v2030, %v5792
        %v5803 = vmul.f32 %v2032, %v5792
        %v5804 = vmul.f32 %v2035, %v5792
        %v5805 = vmul.f32 %v2037, %v5792
        %v5806 = vmul.f32 %v2040, %v5792
        %v5807 = vmul.f32 %v2042, %v5792
        %v5808 = vmul.f32 %v2045, %v5792
        %v5809 = vmul.f32 %v2047, %v5792
        %v5810 = vmul.f32 %v2050, %v5792
        %v5811 = vmul.f32 %v2052, %v5792
        %v5812 = vmul.f32 %v2055, %v5792
        %v5813 = vmul.f32 %v2057, %v5792
        %v5814 = vmul.f32 %v2060, %v5792
        %v5815 = vmul.f32 %v2062, %v5792
        %v5816 = vmul.f32 %v2065, %v5792
        %v5817 = vmul.f32 %v2067, %v5792
        %v5818 = vmul.f32 %v2070, %v5792
        %v5819 = vmul.f32 %v2072, %v5792
        %v5820 = vmul.f32 %v2075, %v5792
        %v5821 = vmul.f32 %v2077, %v5792
        %v5851 = vrot.slane %v5793, 3
        %v5852 = vsel %vm5657, %v5851, %v5851
        %v5853 = vrot.slane %v5794, 3
        %v5854 = vrot.slane %v5795, 3
        %v5855 = vsel %vm5657, %v5853, %v5854
        %v5856 = vrot.slane %v5796, 3
        %v5857 = vrot.slane %v5797, 3
        %v5858 = vsel %vm5657, %v5856, %v5857
        %v5859 = vrot.slane %v5798, 3
        %v5860 = vrot.slane %v5799, 3
        %v5861 = vsel %vm5657, %v5859, %v5860
        %v5862 = vrot.slane %v5800, 3
        %v5863 = vrot.slane %v5801, 3
        %v5864 = vsel %vm5657, %v5862, %v5863
        %v5865 = vrot.slane %v5802, 3
        %v5866 = vrot.slane %v5803, 3
        %v5867 = vsel %vm5657, %v5865, %v5866
        %v5868 = vrot.slane %v5804, 3
        %v5869 = vrot.slane %v5805, 3
        %v5870 = vsel %vm5657, %v5868, %v5869
        %v5871 = vrot.slane %v5806, 3
        %v5872 = vrot.slane %v5807, 3
        %v5873 = vsel %vm5657, %v5871, %v5872
        %v5874 = vrot.slane %v5808, 3
        %v5875 = vrot.slane %v5809, 3
        %v5876 = vsel %vm5657, %v5874, %v5875
        %v5877 = vrot.slane %v5810, 3
        %v5878 = vrot.slane %v5811, 3
        %v5879 = vsel %vm5657, %v5877, %v5878
        %v5880 = vrot.slane %v5812, 3
        %v5881 = vrot.slane %v5813, 3
        %v5882 = vsel %vm5657, %v5880, %v5881
        %v5883 = vrot.slane %v5814, 3
        %v5884 = vrot.slane %v5815, 3
        %v5885 = vsel %vm5657, %v5883, %v5884
        %v5886 = vrot.slane %v5816, 3
        %v5887 = vrot.slane %v5817, 3
        %v5888 = vsel %vm5657, %v5886, %v5887
        %v5889 = vrot.slane %v5818, 3
        %v5890 = vrot.slane %v5819, 3
        %v5891 = vsel %vm5657, %v5889, %v5890
        %v5892 = vrot.slane %v5820, 3
        %v5893 = vrot.slane %v5821, 3
        %v5894 = vsel %vm5657, %v5892, %v5893
        %v5939 = vadd.f32 %v5740, %v5851
        %v5940 = vadd.f32 %v5741, %v5852
        %v5941 = vadd.f32 %v5742, %v5851
        %v5942 = vadd.f32 %v5743, %v5851
        %v5943 = vadd.f32 %v5744, %v5852
        %v5944 = vadd.f32 %v5745, %v5851
        %v5945 = vadd.f32 %v5746, %v5853
        %v5946 = vadd.f32 %v5747, %v5855
        %v5947 = vadd.f32 %v5748, %v5854
        %v5948 = vadd.f32 %v5749, %v5856
        %v5949 = vadd.f32 %v5750, %v5858
        %v5950 = vadd.f32 %v5751, %v5857
        %v5951 = vadd.f32 %v5752, %v5859
        %v5952 = vadd.f32 %v5753, %v5861
        %v5953 = vadd.f32 %v5754, %v5860
        %v5954 = vadd.f32 %v5755, %v5862
        %v5955 = vadd.f32 %v5756, %v5864
        %v5956 = vadd.f32 %v5757, %v5863
        %v5957 = vadd.f32 %v5758, %v5865
        %v5958 = vadd.f32 %v5759, %v5867
        %v5959 = vadd.f32 %v5760, %v5866
        %v5960 = vadd.f32 %v5761, %v5868
        %v5961 = vadd.f32 %v5762, %v5870
        %v5962 = vadd.f32 %v5763, %v5869
        %v5963 = vadd.f32 %v5764, %v5871
        %v5964 = vadd.f32 %v5765, %v5873
        %v5965 = vadd.f32 %v5766, %v5872
        %v5966 = vadd.f32 %v5767, %v5874
        %v5967 = vadd.f32 %v5768, %v5876
        %v5968 = vadd.f32 %v5769, %v5875
        %v5969 = vadd.f32 %v5770, %v5877
        %v5970 = vadd.f32 %v5771, %v5879
        %v5971 = vadd.f32 %v5772, %v5878
        %v5972 = vadd.f32 %v5773, %v5880
        %v5973 = vadd.f32 %v5774, %v5882
        %v5974 = vadd.f32 %v5775, %v5881
        %v5975 = vadd.f32 %v5776, %v5883
        %v5976 = vadd.f32 %v5777, %v5885
        %v5977 = vadd.f32 %v5778, %v5884
        %v5978 = vadd.f32 %v5779, %v5886
        %v5979 = vadd.f32 %v5780, %v5888
        %v5980 = vadd.f32 %v5781, %v5887
        %v5981 = vadd.f32 %v5782, %v5889
        %v5982 = vadd.f32 %v5783, %v5891
        %v5983 = vadd.f32 %v5784, %v5890
        %v5984 = vadd.f32 %v5785, %v5892
        %v5985 = vadd.f32 %v5786, %v5894
        %v5986 = vadd.f32 %v5787, %v5893
        %v5987 = vld [vmem:[%s3 + $0x11] sm:$0x1]
        %v5988 = vlaneseq
        %v5989 = vshrl.u32 %v5988, 7
        %v5990 = vsub.s32 0, %v5989
        %v5991 = vrot.slane %v5987, %v5990
        %v5992 = vmul.f32 %v5991, 0.0
        %v5993 = vmul.f32 %v2010, %v5991
        %v5994 = vmul.f32 %v2012, %v5991
        %v5995 = vmul.f32 %v2015, %v5991
        %v5996 = vmul.f32 %v2017, %v5991
        %v5997 = vmul.f32 %v2020, %v5991
        %v5998 = vmul.f32 %v2022, %v5991
        %v5999 = vmul.f32 %v2025, %v5991
        %v6000 = vmul.f32 %v2027, %v5991
        %v6001 = vmul.f32 %v2030, %v5991
        %v6002 = vmul.f32 %v2032, %v5991
        %v6003 = vmul.f32 %v2035, %v5991
        %v6004 = vmul.f32 %v2037, %v5991
        %v6005 = vmul.f32 %v2040, %v5991
        %v6006 = vmul.f32 %v2042, %v5991
        %v6007 = vmul.f32 %v2045, %v5991
        %v6008 = vmul.f32 %v2047, %v5991
        %v6009 = vmul.f32 %v2050, %v5991
        %v6010 = vmul.f32 %v2052, %v5991
        %v6011 = vmul.f32 %v2055, %v5991
        %v6012 = vmul.f32 %v2057, %v5991
        %v6013 = vmul.f32 %v2060, %v5991
        %v6014 = vmul.f32 %v2062, %v5991
        %v6015 = vmul.f32 %v2065, %v5991
        %v6016 = vmul.f32 %v2067, %v5991
        %v6017 = vmul.f32 %v2070, %v5991
        %v6018 = vmul.f32 %v2072, %v5991
        %v6019 = vmul.f32 %v2075, %v5991
        %v6020 = vmul.f32 %v2077, %v5991
        %v6021 = vmul.f32 %v2080, %v5991
        %v6022 = vmul.f32 %v2082, %v5991
        %v6054 = vrot.slane %v5992, 3
        %v6055 = vsel %vm5657, %v6054, %v6054
        %v6056 = vrot.slane %v5993, 3
        %v6057 = vrot.slane %v5994, 3
        %v6058 = vsel %vm5657, %v6056, %v6057
        %v6059 = vrot.slane %v5995, 3
        %v6060 = vrot.slane %v5996, 3
        %v6061 = vsel %vm5657, %v6059, %v6060
        %v6062 = vrot.slane %v5997, 3
        %v6063 = vrot.slane %v5998, 3
        %v6064 = vsel %vm5657, %v6062, %v6063
        %v6065 = vrot.slane %v5999, 3
        %v6066 = vrot.slane %v6000, 3
        %v6067 = vsel %vm5657, %v6065, %v6066
        %v6068 = vrot.slane %v6001, 3
        %v6069 = vrot.slane %v6002, 3
        %v6070 = vsel %vm5657, %v6068, %v6069
        %v6071 = vrot.slane %v6003, 3
        %v6072 = vrot.slane %v6004, 3
        %v6073 = vsel %vm5657, %v6071, %v6072
        %v6074 = vrot.slane %v6005, 3
        %v6075 = vrot.slane %v6006, 3
        %v6076 = vsel %vm5657, %v6074, %v6075
        %v6077 = vrot.slane %v6007, 3
        %v6078 = vrot.slane %v6008, 3
        %v6079 = vsel %vm5657, %v6077, %v6078
        %v6080 = vrot.slane %v6009, 3
        %v6081 = vrot.slane %v6010, 3
        %v6082 = vsel %vm5657, %v6080, %v6081
        %v6083 = vrot.slane %v6011, 3
        %v6084 = vrot.slane %v6012, 3
        %v6085 = vsel %vm5657, %v6083, %v6084
        %v6086 = vrot.slane %v6013, 3
        %v6087 = vrot.slane %v6014, 3
        %v6088 = vsel %vm5657, %v6086, %v6087
        %v6089 = vrot.slane %v6015, 3
        %v6090 = vrot.slane %v6016, 3
        %v6091 = vsel %vm5657, %v6089, %v6090
        %v6092 = vrot.slane %v6017, 3
        %v6093 = vrot.slane %v6018, 3
        %v6094 = vsel %vm5657, %v6092, %v6093
        %v6095 = vrot.slane %v6019, 3
        %v6096 = vrot.slane %v6020, 3
        %v6097 = vsel %vm5657, %v6095, %v6096
        %v6098 = vrot.slane %v6021, 3
        %v6099 = vrot.slane %v6022, 3
        %v6100 = vsel %vm5657, %v6098, %v6099
        %v6148 = vadd.f32 %v5939, %v6054
        %v6149 = vadd.f32 %v5940, %v6055
        %v6150 = vadd.f32 %v5941, %v6054
        %v6151 = vadd.f32 %v5942, %v6056
        %v6152 = vadd.f32 %v5943, %v6058
        %v6153 = vadd.f32 %v5944, %v6057
        %v6154 = vadd.f32 %v5945, %v6059
        %v6155 = vadd.f32 %v5946, %v6061
        %v6156 = vadd.f32 %v5947, %v6060
        %v6157 = vadd.f32 %v5948, %v6062
        %v6158 = vadd.f32 %v5949, %v6064
        %v6159 = vadd.f32 %v5950, %v6063
        %v6160 = vadd.f32 %v5951, %v6065
        %v6161 = vadd.f32 %v5952, %v6067
        %v6162 = vadd.f32 %v5953, %v6066
        %v6163 = vadd.f32 %v5954, %v6068
        %v6164 = vadd.f32 %v5955, %v6070
        %v6165 = vadd.f32 %v5956, %v6069
        %v6166 = vadd.f32 %v5957, %v6071
        %v6167 = vadd.f32 %v5958, %v6073
        %v6168 = vadd.f32 %v5959, %v6072
        %v6169 = vadd.f32 %v5960, %v6074
        %v6170 = vadd.f32 %v5961, %v6076
        %v6171 = vadd.f32 %v5962, %v6075
        %v6172 = vadd.f32 %v5963, %v6077
        %v6173 = vadd.f32 %v5964, %v6079
        %v6174 = vadd.f32 %v5965, %v6078
        %v6175 = vadd.f32 %v5966, %v6080
        %v6176 = vadd.f32 %v5967, %v6082
        %v6177 = vadd.f32 %v5968, %v6081
        %v6178 = vadd.f32 %v5969, %v6083
        %v6179 = vadd.f32 %v5970, %v6085
        %v6180 = vadd.f32 %v5971, %v6084
        %v6181 = vadd.f32 %v5972, %v6086
        %v6182 = vadd.f32 %v5973, %v6088
        %v6183 = vadd.f32 %v5974, %v6087
        %v6184 = vadd.f32 %v5975, %v6089
        %v6185 = vadd.f32 %v5976, %v6091
        %v6186 = vadd.f32 %v5977, %v6090
        %v6187 = vadd.f32 %v5978, %v6092
        %v6188 = vadd.f32 %v5979, %v6094
        %v6189 = vadd.f32 %v5980, %v6093
        %v6190 = vadd.f32 %v5981, %v6095
        %v6191 = vadd.f32 %v5982, %v6097
        %v6192 = vadd.f32 %v5983, %v6096
        %v6193 = vadd.f32 %v5984, %v6098
        %v6194 = vadd.f32 %v5985, %v6100
        %v6195 = vadd.f32 %v5986, %v6099
        %v6196 = vld [vmem:[%s3 + $0x18] sm:$0x1]
        %v6197 = vlaneseq
        %v6198 = vshrl.u32 %v6197, 7
        %v6199 = vsub.s32 0, %v6198
        %v6200 = vrot.slane %v6196, %v6199
        %v6201 = vmul.f32 %v2010, %v6200
        %v6202 = vmul.f32 %v2012, %v6200
        %v6203 = vmul.f32 %v2015, %v6200
        %v6204 = vmul.f32 %v2017, %v6200
        %v6205 = vmul.f32 %v2020, %v6200
        %v6206 = vmul.f32 %v2022, %v6200
        %v6207 = vmul.f32 %v2025, %v6200
        %v6208 = vmul.f32 %v2027, %v6200
        %v6209 = vmul.f32 %v2030, %v6200
        %v6210 = vmul.f32 %v2032, %v6200
        %v6211 = vmul.f32 %v2035, %v6200
        %v6212 = vmul.f32 %v2037, %v6200
        %v6213 = vmul.f32 %v2040, %v6200
        %v6214 = vmul.f32 %v2042, %v6200
        %v6215 = vmul.f32 %v2045, %v6200
        %v6216 = vmul.f32 %v2047, %v6200
        %v6217 = vmul.f32 %v2050, %v6200
        %v6218 = vmul.f32 %v2052, %v6200
        %v6219 = vmul.f32 %v2055, %v6200
        %v6220 = vmul.f32 %v2057, %v6200
        %v6221 = vmul.f32 %v2060, %v6200
        %v6222 = vmul.f32 %v2062, %v6200
        %v6223 = vmul.f32 %v2065, %v6200
        %v6224 = vmul.f32 %v2067, %v6200
        %v6225 = vmul.f32 %v2070, %v6200
        %v6226 = vmul.f32 %v2072, %v6200
        %v6227 = vmul.f32 %v2075, %v6200
        %v6228 = vmul.f32 %v2077, %v6200
        %v6229 = vmul.f32 %v2080, %v6200
        %v6230 = vmul.f32 %v2082, %v6200
        %v6231 = vmul.f32 %v2085, %v6200
        %v6232 = vmul.f32 %v2087, %v6200
        %v6265 = vrot.slane %v6201, 3
        %v6266 = vrot.slane %v6202, 3
        %v6267 = vsel %vm5657, %v6265, %v6266
        %v6268 = vrot.slane %v6203, 3
        %v6269 = vrot.slane %v6204, 3
        %v6270 = vsel %vm5657, %v6268, %v6269
        %v6271 = vrot.slane %v6205, 3
        %v6272 = vrot.slane %v6206, 3
        %v6273 = vsel %vm5657, %v6271, %v6272
        %v6274 = vrot.slane %v6207, 3
        %v6275 = vrot.slane %v6208, 3
        %v6276 = vsel %vm5657, %v6274, %v6275
        %v6277 = vrot.slane %v6209, 3
        %v6278 = vrot.slane %v6210, 3
        %v6279 = vsel %vm5657, %v6277, %v6278
        %v6280 = vrot.slane %v6211, 3
        %v6281 = vrot.slane %v6212, 3
        %v6282 = vsel %vm5657, %v6280, %v6281
        %v6283 = vrot.slane %v6213, 3
        %v6284 = vrot.slane %v6214, 3
        %v6285 = vsel %vm5657, %v6283, %v6284
        %v6286 = vrot.slane %v6215, 3
        %v6287 = vrot.slane %v6216, 3
        %v6288 = vsel %vm5657, %v6286, %v6287
        %v6289 = vrot.slane %v6217, 3
        %v6290 = vrot.slane %v6218, 3
        %v6291 = vsel %vm5657, %v6289, %v6290
        %v6292 = vrot.slane %v6219, 3
        %v6293 = vrot.slane %v6220, 3
        %v6294 = vsel %vm5657, %v6292, %v6293
        %v6295 = vrot.slane %v6221, 3
        %v6296 = vrot.slane %v6222, 3
        %v6297 = vsel %vm5657, %v6295, %v6296
        %v6298 = vrot.slane %v6223, 3
        %v6299 = vrot.slane %v6224, 3
        %v6300 = vsel %vm5657, %v6298, %v6299
        %v6301 = vrot.slane %v6225, 3
        %v6302 = vrot.slane %v6226, 3
        %v6303 = vsel %vm5657, %v6301, %v6302
        %v6304 = vrot.slane %v6227, 3
        %v6305 = vrot.slane %v6228, 3
        %v6306 = vsel %vm5657, %v6304, %v6305
        %v6307 = vrot.slane %v6229, 3
        %v6308 = vrot.slane %v6230, 3
        %v6309 = vsel %vm5657, %v6307, %v6308
        %v6310 = vrot.slane %v6231, 3
        %v6311 = vrot.slane %v6232, 3
        %v6312 = vsel %vm5657, %v6310, %v6311
        %v6361 = vadd.f32 %v6148, %v6265
        %v6362 = vadd.f32 %v6149, %v6267
        %v6363 = vadd.f32 %v6150, %v6266
        %v6364 = vadd.f32 %v6151, %v6268
        %v6365 = vadd.f32 %v6152, %v6270
        %v6366 = vadd.f32 %v6153, %v6269
        %v6367 = vadd.f32 %v6154, %v6271
        %v6368 = vadd.f32 %v6155, %v6273
        %v6369 = vadd.f32 %v6156, %v6272
        %v6370 = vadd.f32 %v6157, %v6274
        %v6371 = vadd.f32 %v6158, %v6276
        %v6372 = vadd.f32 %v6159, %v6275
        %v6373 = vadd.f32 %v6160, %v6277
        %v6374 = vadd.f32 %v6161, %v6279
        %v6375 = vadd.f32 %v6162, %v6278
        %v6376 = vadd.f32 %v6163, %v6280
        %v6377 = vadd.f32 %v6164, %v6282
        %v6378 = vadd.f32 %v6165, %v6281
        %v6379 = vadd.f32 %v6166, %v6283
        %v6380 = vadd.f32 %v6167, %v6285
        %v6381 = vadd.f32 %v6168, %v6284
        %v6382 = vadd.f32 %v6169, %v6286
        %v6383 = vadd.f32 %v6170, %v6288
        %v6384 = vadd.f32 %v6171, %v6287
        %v6385 = vadd.f32 %v6172, %v6289
        %v6386 = vadd.f32 %v6173, %v6291
        %v6387 = vadd.f32 %v6174, %v6290
        %v6388 = vadd.f32 %v6175, %v6292
        %v6389 = vadd.f32 %v6176, %v6294
        %v6390 = vadd.f32 %v6177, %v6293
        %v6391 = vadd.f32 %v6178, %v6295
        %v6392 = vadd.f32 %v6179, %v6297
        %v6393 = vadd.f32 %v6180, %v6296
        %v6394 = vadd.f32 %v6181, %v6298
        %v6395 = vadd.f32 %v6182, %v6300
        %v6396 = vadd.f32 %v6183, %v6299
        %v6397 = vadd.f32 %v6184, %v6301
        %v6398 = vadd.f32 %v6185, %v6303
        %v6399 = vadd.f32 %v6186, %v6302
        %v6400 = vadd.f32 %v6187, %v6304
        %v6401 = vadd.f32 %v6188, %v6306
        %v6402 = vadd.f32 %v6189, %v6305
        %v6403 = vadd.f32 %v6190, %v6307
        %v6404 = vadd.f32 %v6191, %v6309
        %v6405 = vadd.f32 %v6192, %v6308
        %v6406 = vadd.f32 %v6193, %v6310
        %v6407 = vadd.f32 %v6194, %v6312
        %v6408 = vadd.f32 %v6195, %v6311
        %v6409 = vld [vmem:[%s3 + $0x1f] sm:$0x1]
        %v6410 = vlaneseq
        %v6411 = vshrl.u32 %v6410, 7
        %v6412 = vsub.s32 0, %v6411
        %v6413 = vrot.slane %v6409, %v6412
        %v6414 = vmul.f32 %v2015, %v6413
        %v6415 = vmul.f32 %v2017, %v6413
        %v6416 = vmul.f32 %v2020, %v6413
        %v6417 = vmul.f32 %v2022, %v6413
        %v6418 = vmul.f32 %v2025, %v6413
        %v6419 = vmul.f32 %v2027, %v6413
        %v6420 = vmul.f32 %v2030, %v6413
        %v6421 = vmul.f32 %v2032, %v6413
        %v6422 = vmul.f32 %v2035, %v6413
        %v6423 = vmul.f32 %v2037, %v6413
        %v6424 = vmul.f32 %v2040, %v6413
        %v6425 = vmul.f32 %v2042, %v6413
        %v6426 = vmul.f32 %v2045, %v6413
        %v6427 = vmul.f32 %v2047, %v6413
        %v6428 = vmul.f32 %v2050, %v6413
        %v6429 = vmul.f32 %v2052, %v6413
        %v6430 = vmul.f32 %v2055, %v6413
        %v6431 = vmul.f32 %v2057, %v6413
        %v6432 = vmul.f32 %v2060, %v6413
        %v6433 = vmul.f32 %v2062, %v6413
        %v6434 = vmul.f32 %v2065, %v6413
        %v6435 = vmul.f32 %v2067, %v6413
        %v6436 = vmul.f32 %v2070, %v6413
        %v6437 = vmul.f32 %v2072, %v6413
        %v6438 = vmul.f32 %v2075, %v6413
        %v6439 = vmul.f32 %v2077, %v6413
        %v6440 = vmul.f32 %v2080, %v6413
        %v6441 = vmul.f32 %v2082, %v6413
        %v6442 = vmul.f32 %v2085, %v6413
        %v6443 = vmul.f32 %v2087, %v6413
        %v6444 = vmul.f32 %v6413, 0.0
        %v6476 = vrot.slane %v6414, 3
        %v6477 = vrot.slane %v6415, 3
        %v6478 = vsel %vm5657, %v6476, %v6477
        %v6479 = vrot.slane %v6416, 3
        %v6480 = vrot.slane %v6417, 3
        %v6481 = vsel %vm5657, %v6479, %v6480
        %v6482 = vrot.slane %v6418, 3
        %v6483 = vrot.slane %v6419, 3
        %v6484 = vsel %vm5657, %v6482, %v6483
        %v6485 = vrot.slane %v6420, 3
        %v6486 = vrot.slane %v6421, 3
        %v6487 = vsel %vm5657, %v6485, %v6486
        %v6488 = vrot.slane %v6422, 3
        %v6489 = vrot.slane %v6423, 3
        %v6490 = vsel %vm5657, %v6488, %v6489
        %v6491 = vrot.slane %v6424, 3
        %v6492 = vrot.slane %v6425, 3
        %v6493 = vsel %vm5657, %v6491, %v6492
        %v6494 = vrot.slane %v6426, 3
        %v6495 = vrot.slane %v6427, 3
        %v6496 = vsel %vm5657, %v6494, %v6495
        %v6497 = vrot.slane %v6428, 3
        %v6498 = vrot.slane %v6429, 3
        %v6499 = vsel %vm5657, %v6497, %v6498
        %v6500 = vrot.slane %v6430, 3
        %v6501 = vrot.slane %v6431, 3
        %v6502 = vsel %vm5657, %v6500, %v6501
        %v6503 = vrot.slane %v6432, 3
        %v6504 = vrot.slane %v6433, 3
        %v6505 = vsel %vm5657, %v6503, %v6504
        %v6506 = vrot.slane %v6434, 3
        %v6507 = vrot.slane %v6435, 3
        %v6508 = vsel %vm5657, %v6506, %v6507
        %v6509 = vrot.slane %v6436, 3
        %v6510 = vrot.slane %v6437, 3
        %v6511 = vsel %vm5657, %v6509, %v6510
        %v6512 = vrot.slane %v6438, 3
        %v6513 = vrot.slane %v6439, 3
        %v6514 = vsel %vm5657, %v6512, %v6513
        %v6515 = vrot.slane %v6440, 3
        %v6516 = vrot.slane %v6441, 3
        %v6517 = vsel %vm5657, %v6515, %v6516
        %v6518 = vrot.slane %v6442, 3
        %v6519 = vrot.slane %v6443, 3
        %v6520 = vsel %vm5657, %v6518, %v6519
        %v6521 = vrot.slane %v6444, 3
        %v6522 = vsel %vm5657, %v6521, %v6521
        %v6570 = vadd.f32 %v6361, %v6476
        %v6571 = vadd.f32 %v6362, %v6478
        %v6572 = vadd.f32 %v6363, %v6477
        %v6573 = vadd.f32 %v6364, %v6479
        %v6574 = vadd.f32 %v6365, %v6481
        %v6575 = vadd.f32 %v6366, %v6480
        %v6576 = vadd.f32 %v6367, %v6482
        %v6577 = vadd.f32 %v6368, %v6484
        %v6578 = vadd.f32 %v6369, %v6483
        %v6579 = vadd.f32 %v6370, %v6485
        %v6580 = vadd.f32 %v6371, %v6487
        %v6581 = vadd.f32 %v6372, %v6486
        %v6582 = vadd.f32 %v6373, %v6488
        %v6583 = vadd.f32 %v6374, %v6490
        %v6584 = vadd.f32 %v6375, %v6489
        %v6585 = vadd.f32 %v6376, %v6491
        %v6586 = vadd.f32 %v6377, %v6493
        %v6587 = vadd.f32 %v6378, %v6492
        %v6588 = vadd.f32 %v6379, %v6494
        %v6589 = vadd.f32 %v6380, %v6496
        %v6590 = vadd.f32 %v6381, %v6495
        %v6591 = vadd.f32 %v6382, %v6497
        %v6592 = vadd.f32 %v6383, %v6499
        %v6593 = vadd.f32 %v6384, %v6498
        %v6594 = vadd.f32 %v6385, %v6500
        %v6595 = vadd.f32 %v6386, %v6502
        %v6596 = vadd.f32 %v6387, %v6501
        %v6597 = vadd.f32 %v6388, %v6503
        %v6598 = vadd.f32 %v6389, %v6505
        %v6599 = vadd.f32 %v6390, %v6504
        %v6600 = vadd.f32 %v6391, %v6506
        %v6601 = vadd.f32 %v6392, %v6508
        %v6602 = vadd.f32 %v6393, %v6507
        %v6603 = vadd.f32 %v6394, %v6509
        %v6604 = vadd.f32 %v6395, %v6511
        %v6605 = vadd.f32 %v6396, %v6510
        %v6606 = vadd.f32 %v6397, %v6512
        %v6607 = vadd.f32 %v6398, %v6514
        %v6608 = vadd.f32 %v6399, %v6513
        %v6609 = vadd.f32 %v6400, %v6515
        %v6610 = vadd.f32 %v6401, %v6517
        %v6611 = vadd.f32 %v6402, %v6516
        %v6612 = vadd.f32 %v6403, %v6518
        %v6613 = vadd.f32 %v6404, %v6520
        %v6614 = vadd.f32 %v6405, %v6519
        %v6615 = vadd.f32 %v6406, %v6521
        %v6616 = vadd.f32 %v6407, %v6522
        %v6617 = vadd.f32 %v6408, %v6521
        %v6618 = vld [vmem:[%s3 + $0x26] sm:$0x1]
        %v6619 = vlaneseq
        %v6620 = vshrl.u32 %v6619, 7
        %v6621 = vsub.s32 0, %v6620
        %v6622 = vrot.slane %v6618, %v6621
        %v6623 = vmul.f32 %v2020, %v6622
        %v6624 = vmul.f32 %v2022, %v6622
        %v6625 = vmul.f32 %v2025, %v6622
        %v6626 = vmul.f32 %v2027, %v6622
        %v6627 = vmul.f32 %v2030, %v6622
        %v6628 = vmul.f32 %v2032, %v6622
        %v6629 = vmul.f32 %v2035, %v6622
        %v6630 = vmul.f32 %v2037, %v6622
        %v6631 = vmul.f32 %v2040, %v6622
        %v6632 = vmul.f32 %v2042, %v6622
        %v6633 = vmul.f32 %v2045, %v6622
        %v6634 = vmul.f32 %v2047, %v6622
        %v6635 = vmul.f32 %v2050, %v6622
        %v6636 = vmul.f32 %v2052, %v6622
        %v6637 = vmul.f32 %v2055, %v6622
        %v6638 = vmul.f32 %v2057, %v6622
        %v6639 = vmul.f32 %v2060, %v6622
        %v6640 = vmul.f32 %v2062, %v6622
        %v6641 = vmul.f32 %v2065, %v6622
        %v6642 = vmul.f32 %v2067, %v6622
        %v6643 = vmul.f32 %v2070, %v6622
        %v6644 = vmul.f32 %v2072, %v6622
        %v6645 = vmul.f32 %v2075, %v6622
        %v6646 = vmul.f32 %v2077, %v6622
        %v6647 = vmul.f32 %v2080, %v6622
        %v6648 = vmul.f32 %v2082, %v6622
        %v6649 = vmul.f32 %v2085, %v6622
        %v6650 = vmul.f32 %v2087, %v6622
        %v6651 = vmul.f32 %v6622, 0.0
        %v6681 = vrot.slane %v6623, 3
        %v6682 = vrot.slane %v6624, 3
        %v6683 = vsel %vm5657, %v6681, %v6682
        %v6684 = vrot.slane %v6625, 3
        %v6685 = vrot.slane %v6626, 3
        %v6686 = vsel %vm5657, %v6684, %v6685
        %v6687 = vrot.slane %v6627, 3
        %v6688 = vrot.slane %v6628, 3
        %v6689 = vsel %vm5657, %v6687, %v6688
        %v6690 = vrot.slane %v6629, 3
        %v6691 = vrot.slane %v6630, 3
        %v6692 = vsel %vm5657, %v6690, %v6691
        %v6693 = vrot.slane %v6631, 3
        %v6694 = vrot.slane %v6632, 3
        %v6695 = vsel %vm5657, %v6693, %v6694
        %v6696 = vrot.slane %v6633, 3
        %v6697 = vrot.slane %v6634, 3
        %v6698 = vsel %vm5657, %v6696, %v6697
        %v6699 = vrot.slane %v6635, 3
        %v6700 = vrot.slane %v6636, 3
        %v6701 = vsel %vm5657, %v6699, %v6700
        %v6702 = vrot.slane %v6637, 3
        %v6703 = vrot.slane %v6638, 3
        %v6704 = vsel %vm5657, %v6702, %v6703
        %v6705 = vrot.slane %v6639, 3
        %v6706 = vrot.slane %v6640, 3
        %v6707 = vsel %vm5657, %v6705, %v6706
        %v6708 = vrot.slane %v6641, 3
        %v6709 = vrot.slane %v6642, 3
        %v6710 = vsel %vm5657, %v6708, %v6709
        %v6711 = vrot.slane %v6643, 3
        %v6712 = vrot.slane %v6644, 3
        %v6713 = vsel %vm5657, %v6711, %v6712
        %v6714 = vrot.slane %v6645, 3
        %v6715 = vrot.slane %v6646, 3
        %v6716 = vsel %vm5657, %v6714, %v6715
        %v6717 = vrot.slane %v6647, 3
        %v6718 = vrot.slane %v6648, 3
        %v6719 = vsel %vm5657, %v6717, %v6718
        %v6720 = vrot.slane %v6649, 3
        %v6721 = vrot.slane %v6650, 3
        %v6722 = vsel %vm5657, %v6720, %v6721
        %v6723 = vrot.slane %v6651, 3
        %v6724 = vsel %vm5657, %v6723, %v6723
        %v6769 = vadd.f32 %v6570, %v6681
        %v6770 = vadd.f32 %v6571, %v6683
        %v6771 = vadd.f32 %v6572, %v6682
        %v6772 = vadd.f32 %v6573, %v6684
        %v6773 = vadd.f32 %v6574, %v6686
        %v6774 = vadd.f32 %v6575, %v6685
        %v6775 = vadd.f32 %v6576, %v6687
        %v6776 = vadd.f32 %v6577, %v6689
        %v6777 = vadd.f32 %v6578, %v6688
        %v6778 = vadd.f32 %v6579, %v6690
        %v6779 = vadd.f32 %v6580, %v6692
        %v6780 = vadd.f32 %v6581, %v6691
        %v6781 = vadd.f32 %v6582, %v6693
        %v6782 = vadd.f32 %v6583, %v6695
        %v6783 = vadd.f32 %v6584, %v6694
        %v6784 = vadd.f32 %v6585, %v6696
        %v6785 = vadd.f32 %v6586, %v6698
        %v6786 = vadd.f32 %v6587, %v6697
        %v6787 = vadd.f32 %v6588, %v6699
        %v6788 = vadd.f32 %v6589, %v6701
        %v6789 = vadd.f32 %v6590, %v6700
        %v6790 = vadd.f32 %v6591, %v6702
        %v6791 = vadd.f32 %v6592, %v6704
        %v6792 = vadd.f32 %v6593, %v6703
        %v6793 = vadd.f32 %v6594, %v6705
        %v6794 = vadd.f32 %v6595, %v6707
        %v6795 = vadd.f32 %v6596, %v6706
        %v6796 = vadd.f32 %v6597, %v6708
        %v6797 = vadd.f32 %v6598, %v6710
        %v6798 = vadd.f32 %v6599, %v6709
        %v6799 = vadd.f32 %v6600, %v6711
        %v6800 = vadd.f32 %v6601, %v6713
        %v6801 = vadd.f32 %v6602, %v6712
        %v6802 = vadd.f32 %v6603, %v6714
        %v6803 = vadd.f32 %v6604, %v6716
        %v6804 = vadd.f32 %v6605, %v6715
        %v6805 = vadd.f32 %v6606, %v6717
        %v6806 = vadd.f32 %v6607, %v6719
        %v6807 = vadd.f32 %v6608, %v6718
        %v6808 = vadd.f32 %v6609, %v6720
        %v6809 = vadd.f32 %v6610, %v6722
        %v6810 = vadd.f32 %v6611, %v6721
        %v6811 = vadd.f32 %v6612, %v6723
        %v6812 = vadd.f32 %v6613, %v6724
        %v6813 = vadd.f32 %v6614, %v6723
        %v6814 = vadd.f32 %v6615, %v6723
        %v6815 = vadd.f32 %v6616, %v6724
        %v6816 = vadd.f32 %v6617, %v6723
        %v6817 = vld [vmem:[%s3 + $0x2d] sm:$0x1]
        %v6818 = vlaneseq
        %v6819 = vshrl.u32 %v6818, 7
        %v6820 = vsub.s32 0, %v6819
        %v6821 = vrot.slane %v6817, %v6820
        %v6822 = vmul.f32 %v2025, %v6821
        %v6823 = vmul.f32 %v2027, %v6821
        %v6824 = vmul.f32 %v2030, %v6821
        %v6825 = vmul.f32 %v2032, %v6821
        %v6826 = vmul.f32 %v2035, %v6821
        %v6827 = vmul.f32 %v2037, %v6821
        %v6828 = vmul.f32 %v2040, %v6821
        %v6829 = vmul.f32 %v2042, %v6821
        %v6830 = vmul.f32 %v2045, %v6821
        %v6831 = vmul.f32 %v2047, %v6821
        %v6832 = vmul.f32 %v2050, %v6821
        %v6833 = vmul.f32 %v2052, %v6821
        %v6834 = vmul.f32 %v2055, %v6821
        %v6835 = vmul.f32 %v2057, %v6821
        %v6836 = vmul.f32 %v2060, %v6821
        %v6837 = vmul.f32 %v2062, %v6821
        %v6838 = vmul.f32 %v2065, %v6821
        %v6839 = vmul.f32 %v2067, %v6821
        %v6840 = vmul.f32 %v2070, %v6821
        %v6841 = vmul.f32 %v2072, %v6821
        %v6842 = vmul.f32 %v2075, %v6821
        %v6843 = vmul.f32 %v2077, %v6821
        %v6844 = vmul.f32 %v2080, %v6821
        %v6845 = vmul.f32 %v2082, %v6821
        %v6846 = vmul.f32 %v2085, %v6821
        %v6847 = vmul.f32 %v2087, %v6821
        %v6848 = vmul.f32 %v6821, 0.0
        %v6876 = vrot.slane %v6822, 3
        %v6877 = vrot.slane %v6823, 3
        %v6878 = vsel %vm5657, %v6876, %v6877
        %v6879 = vrot.slane %v6824, 3
        %v6880 = vrot.slane %v6825, 3
        %v6881 = vsel %vm5657, %v6879, %v6880
        %v6882 = vrot.slane %v6826, 3
        %v6883 = vrot.slane %v6827, 3
        %v6884 = vsel %vm5657, %v6882, %v6883
        %v6885 = vrot.slane %v6828, 3
        %v6886 = vrot.slane %v6829, 3
        %v6887 = vsel %vm5657, %v6885, %v6886
        %v6888 = vrot.slane %v6830, 3
        %v6889 = vrot.slane %v6831, 3
        %v6890 = vsel %vm5657, %v6888, %v6889
        %v6891 = vrot.slane %v6832, 3
        %v6892 = vrot.slane %v6833, 3
        %v6893 = vsel %vm5657, %v6891, %v6892
        %v6894 = vrot.slane %v6834, 3
        %v6895 = vrot.slane %v6835, 3
        %v6896 = vsel %vm5657, %v6894, %v6895
        %v6897 = vrot.slane %v6836, 3
        %v6898 = vrot.slane %v6837, 3
        %v6899 = vsel %vm5657, %v6897, %v6898
        %v6900 = vrot.slane %v6838, 3
        %v6901 = vrot.slane %v6839, 3
        %v6902 = vsel %vm5657, %v6900, %v6901
        %v6903 = vrot.slane %v6840, 3
        %v6904 = vrot.slane %v6841, 3
        %v6905 = vsel %vm5657, %v6903, %v6904
        %v6906 = vrot.slane %v6842, 3
        %v6907 = vrot.slane %v6843, 3
        %v6908 = vsel %vm5657, %v6906, %v6907
        %v6909 = vrot.slane %v6844, 3
        %v6910 = vrot.slane %v6845, 3
        %v6911 = vsel %vm5657, %v6909, %v6910
        %v6912 = vrot.slane %v6846, 3
        %v6913 = vrot.slane %v6847, 3
        %v6914 = vsel %vm5657, %v6912, %v6913
        %v6915 = vrot.slane %v6848, 3
        %v6916 = vsel %vm5657, %v6915, %v6915
        %v6958 = vadd.f32 %v6769, %v6876
        %v6959 = vadd.f32 %v6770, %v6878
        %v6960 = vadd.f32 %v6771, %v6877
        %v6961 = vadd.f32 %v6772, %v6879
        %v6962 = vadd.f32 %v6773, %v6881
        %v6963 = vadd.f32 %v6774, %v6880
        %v6964 = vadd.f32 %v6775, %v6882
        %v6965 = vadd.f32 %v6776, %v6884
        %v6966 = vadd.f32 %v6777, %v6883
        %v6967 = vadd.f32 %v6778, %v6885
        %v6968 = vadd.f32 %v6779, %v6887
        %v6969 = vadd.f32 %v6780, %v6886
        %v6970 = vadd.f32 %v6781, %v6888
        %v6971 = vadd.f32 %v6782, %v6890
        %v6972 = vadd.f32 %v6783, %v6889
        %v6973 = vadd.f32 %v6784, %v6891
        %v6974 = vadd.f32 %v6785, %v6893
        %v6975 = vadd.f32 %v6786, %v6892
        %v6976 = vadd.f32 %v6787, %v6894
        %v6977 = vadd.f32 %v6788, %v6896
        %v6978 = vadd.f32 %v6789, %v6895
        %v6979 = vadd.f32 %v6790, %v6897
        %v6980 = vadd.f32 %v6791, %v6899
        %v6981 = vadd.f32 %v6792, %v6898
        %v6982 = vadd.f32 %v6793, %v6900
        %v6983 = vadd.f32 %v6794, %v6902
        %v6984 = vadd.f32 %v6795, %v6901
        %v6985 = vadd.f32 %v6796, %v6903
        %v6986 = vadd.f32 %v6797, %v6905
        %v6987 = vadd.f32 %v6798, %v6904
        %v6988 = vadd.f32 %v6799, %v6906
        %v6989 = vadd.f32 %v6800, %v6908
        %v6990 = vadd.f32 %v6801, %v6907
        %v6991 = vadd.f32 %v6802, %v6909
        %v6992 = vadd.f32 %v6803, %v6911
        %v6993 = vadd.f32 %v6804, %v6910
        %v6994 = vadd.f32 %v6805, %v6912
        %v6995 = vadd.f32 %v6806, %v6914
        %v6996 = vadd.f32 %v6807, %v6913
        %v6997 = vadd.f32 %v6808, %v6915
        %v6998 = vadd.f32 %v6809, %v6916
        %v6999 = vadd.f32 %v6810, %v6915
        %v7000 = vadd.f32 %v6811, %v6915
        %v7001 = vadd.f32 %v6812, %v6916
        %v7002 = vadd.f32 %v6813, %v6915
        %v7003 = vadd.f32 %v6814, %v6915
        %v7004 = vadd.f32 %v6815, %v6916
        %v7005 = vadd.f32 %v6816, %v6915
        %v7006 = vld [vmem:[%s3 + $0x4] sm:$0x1]
        %v7007 = vlaneseq
        %v7008 = vshrl.u32 %v7007, 7
        %v7009 = vsub.s32 0, %v7008
        %v7010 = vrot.slane %v7006, %v7009
        %v7011 = vmul.f32 %v7010, 0.0
        %v7012 = vmul.f32 %v2010, %v7010
        %v7013 = vmul.f32 %v2012, %v7010
        %v7014 = vmul.f32 %v2015, %v7010
        %v7015 = vmul.f32 %v2017, %v7010
        %v7016 = vmul.f32 %v2020, %v7010
        %v7017 = vmul.f32 %v2022, %v7010
        %v7018 = vmul.f32 %v2025, %v7010
        %v7019 = vmul.f32 %v2027, %v7010
        %v7020 = vmul.f32 %v2030, %v7010
        %v7021 = vmul.f32 %v2032, %v7010
        %v7022 = vmul.f32 %v2035, %v7010
        %v7023 = vmul.f32 %v2037, %v7010
        %v7024 = vmul.f32 %v2040, %v7010
        %v7025 = vmul.f32 %v2042, %v7010
        %v7026 = vmul.f32 %v2045, %v7010
        %v7027 = vmul.f32 %v2047, %v7010
        %v7028 = vmul.f32 %v2050, %v7010
        %v7029 = vmul.f32 %v2052, %v7010
        %v7030 = vmul.f32 %v2055, %v7010
        %v7031 = vmul.f32 %v2057, %v7010
        %v7032 = vmul.f32 %v2060, %v7010
        %v7033 = vmul.f32 %v2062, %v7010
        %v7034 = vmul.f32 %v2065, %v7010
        %v7035 = vmul.f32 %v2067, %v7010
        %v7036 = vmul.f32 %v2070, %v7010
        %v7037 = vmul.f32 %v2072, %v7010
        %vm7065 = vcmask 1043456
        %v7066 = vrot.slane %v7011, 4
        %v7067 = vsel %vm7065, %v7066, %v7066
        %v7068 = vrot.slane %v7012, 4
        %v7069 = vrot.slane %v7013, 4
        %v7070 = vsel %vm7065, %v7068, %v7069
        %v7071 = vsel %vm7065, %v7069, %v7066
        %v7072 = vrot.slane %v7014, 4
        %v7073 = vrot.slane %v7015, 4
        %v7074 = vsel %vm7065, %v7072, %v7073
        %v7075 = vsel %vm7065, %v7073, %v7066
        %v7076 = vrot.slane %v7016, 4
        %v7077 = vrot.slane %v7017, 4
        %v7078 = vsel %vm7065, %v7076, %v7077
        %v7079 = vsel %vm7065, %v7077, %v7066
        %v7080 = vrot.slane %v7018, 4
        %v7081 = vrot.slane %v7019, 4
        %v7082 = vsel %vm7065, %v7080, %v7081
        %v7083 = vsel %vm7065, %v7081, %v7066
        %v7084 = vrot.slane %v7020, 4
        %v7085 = vrot.slane %v7021, 4
        %v7086 = vsel %vm7065, %v7084, %v7085
        %v7087 = vsel %vm7065, %v7085, %v7066
        %v7088 = vrot.slane %v7022, 4
        %v7089 = vrot.slane %v7023, 4
        %v7090 = vsel %vm7065, %v7088, %v7089
        %v7091 = vsel %vm7065, %v7089, %v7066
        %v7092 = vrot.slane %v7024, 4
        %v7093 = vrot.slane %v7025, 4
        %v7094 = vsel %vm7065, %v7092, %v7093
        %v7095 = vsel %vm7065, %v7093, %v7066
        %v7096 = vrot.slane %v7026, 4
        %v7097 = vrot.slane %v7027, 4
        %v7098 = vsel %vm7065, %v7096, %v7097
        %v7099 = vsel %vm7065, %v7097, %v7066
        %v7100 = vrot.slane %v7028, 4
        %v7101 = vrot.slane %v7029, 4
        %v7102 = vsel %vm7065, %v7100, %v7101
        %v7103 = vsel %vm7065, %v7101, %v7066
        %v7104 = vrot.slane %v7030, 4
        %v7105 = vrot.slane %v7031, 4
        %v7106 = vsel %vm7065, %v7104, %v7105
        %v7107 = vsel %vm7065, %v7105, %v7066
        %v7108 = vrot.slane %v7032, 4
        %v7109 = vrot.slane %v7033, 4
        %v7110 = vsel %vm7065, %v7108, %v7109
        %v7111 = vsel %vm7065, %v7109, %v7066
        %v7112 = vrot.slane %v7034, 4
        %v7113 = vrot.slane %v7035, 4
        %v7114 = vsel %vm7065, %v7112, %v7113
        %v7115 = vsel %vm7065, %v7113, %v7066
        %v7116 = vrot.slane %v7036, 4
        %v7117 = vrot.slane %v7037, 4
        %v7118 = vsel %vm7065, %v7116, %v7117
        %v7119 = vsel %vm7065, %v7117, %v7066
        %v7161 = vadd.f32 %v6958, %v7066
        %v7162 = vadd.f32 %v6959, %v7067
        %v7163 = vadd.f32 %v6960, %v7067
        %v7164 = vadd.f32 %v6961, %v7066
        %v7165 = vadd.f32 %v6962, %v7067
        %v7166 = vadd.f32 %v6963, %v7067
        %v7167 = vadd.f32 %v6964, %v7066
        %v7168 = vadd.f32 %v6965, %v7067
        %v7169 = vadd.f32 %v6966, %v7067
        %v7170 = vadd.f32 %v6967, %v7068
        %v7171 = vadd.f32 %v6968, %v7070
        %v7172 = vadd.f32 %v6969, %v7071
        %v7173 = vadd.f32 %v6970, %v7072
        %v7174 = vadd.f32 %v6971, %v7074
        %v7175 = vadd.f32 %v6972, %v7075
        %v7176 = vadd.f32 %v6973, %v7076
        %v7177 = vadd.f32 %v6974, %v7078
        %v7178 = vadd.f32 %v6975, %v7079
        %v7179 = vadd.f32 %v6976, %v7080
        %v7180 = vadd.f32 %v6977, %v7082
        %v7181 = vadd.f32 %v6978, %v7083
        %v7182 = vadd.f32 %v6979, %v7084
        %v7183 = vadd.f32 %v6980, %v7086
        %v7184 = vadd.f32 %v6981, %v7087
        %v7185 = vadd.f32 %v6982, %v7088
        %v7186 = vadd.f32 %v6983, %v7090
        %v7187 = vadd.f32 %v6984, %v7091
        %v7188 = vadd.f32 %v6985, %v7092
        %v7189 = vadd.f32 %v6986, %v7094
        %v7190 = vadd.f32 %v6987, %v7095
        %v7191 = vadd.f32 %v6988, %v7096
        %v7192 = vadd.f32 %v6989, %v7098
        %v7193 = vadd.f32 %v6990, %v7099
        %v7194 = vadd.f32 %v6991, %v7100
        %v7195 = vadd.f32 %v6992, %v7102
        %v7196 = vadd.f32 %v6993, %v7103
        %v7197 = vadd.f32 %v6994, %v7104
        %v7198 = vadd.f32 %v6995, %v7106
        %v7199 = vadd.f32 %v6996, %v7107
        %v7200 = vadd.f32 %v6997, %v7108
        %v7201 = vadd.f32 %v6998, %v7110
        %v7202 = vadd.f32 %v6999, %v7111
        %v7203 = vadd.f32 %v7000, %v7112
        %v7204 = vadd.f32 %v7001, %v7114
        %v7205 = vadd.f32 %v7002, %v7115
        %v7206 = vadd.f32 %v7003, %v7116
        %v7207 = vadd.f32 %v7004, %v7118
        %v7208 = vadd.f32 %v7005, %v7119
        %v7209 = vld [vmem:[%s3 + $0xb] sm:$0x1]
        %v7210 = vlaneseq
        %v7211 = vshrl.u32 %v7210, 7
        %v7212 = vsub.s32 0, %v7211
        %v7213 = vrot.slane %v7209, %v7212
        %v7214 = vmul.f32 %v7213, 0.0
        %v7215 = vmul.f32 %v2010, %v7213
        %v7216 = vmul.f32 %v2012, %v7213
        %v7217 = vmul.f32 %v2015, %v7213
        %v7218 = vmul.f32 %v2017, %v7213
        %v7219 = vmul.f32 %v2020, %v7213
        %v7220 = vmul.f32 %v2022, %v7213
        %v7221 = vmul.f32 %v2025, %v7213
        %v7222 = vmul.f32 %v2027, %v7213
        %v7223 = vmul.f32 %v2030, %v7213
        %v7224 = vmul.f32 %v2032, %v7213
        %v7225 = vmul.f32 %v2035, %v7213
        %v7226 = vmul.f32 %v2037, %v7213
        %v7227 = vmul.f32 %v2040, %v7213
        %v7228 = vmul.f32 %v2042, %v7213
        %v7229 = vmul.f32 %v2045, %v7213
        %v7230 = vmul.f32 %v2047, %v7213
        %v7231 = vmul.f32 %v2050, %v7213
        %v7232 = vmul.f32 %v2052, %v7213
        %v7233 = vmul.f32 %v2055, %v7213
        %v7234 = vmul.f32 %v2057, %v7213
        %v7235 = vmul.f32 %v2060, %v7213
        %v7236 = vmul.f32 %v2062, %v7213
        %v7237 = vmul.f32 %v2065, %v7213
        %v7238 = vmul.f32 %v2067, %v7213
        %v7239 = vmul.f32 %v2070, %v7213
        %v7240 = vmul.f32 %v2072, %v7213
        %v7241 = vmul.f32 %v2075, %v7213
        %v7242 = vmul.f32 %v2077, %v7213
        %v7272 = vrot.slane %v7214, 4
        %v7273 = vsel %vm7065, %v7272, %v7272
        %v7274 = vrot.slane %v7215, 4
        %v7275 = vrot.slane %v7216, 4
        %v7276 = vsel %vm7065, %v7274, %v7275
        %v7277 = vsel %vm7065, %v7275, %v7272
        %v7278 = vrot.slane %v7217, 4
        %v7279 = vrot.slane %v7218, 4
        %v7280 = vsel %vm7065, %v7278, %v7279
        %v7281 = vsel %vm7065, %v7279, %v7272
        %v7282 = vrot.slane %v7219, 4
        %v7283 = vrot.slane %v7220, 4
        %v7284 = vsel %vm7065, %v7282, %v7283
        %v7285 = vsel %vm7065, %v7283, %v7272
        %v7286 = vrot.slane %v7221, 4
        %v7287 = vrot.slane %v7222, 4
        %v7288 = vsel %vm7065, %v7286, %v7287
        %v7289 = vsel %vm7065, %v7287, %v7272
        %v7290 = vrot.slane %v7223, 4
        %v7291 = vrot.slane %v7224, 4
        %v7292 = vsel %vm7065, %v7290, %v7291
        %v7293 = vsel %vm7065, %v7291, %v7272
        %v7294 = vrot.slane %v7225, 4
        %v7295 = vrot.slane %v7226, 4
        %v7296 = vsel %vm7065, %v7294, %v7295
        %v7297 = vsel %vm7065, %v7295, %v7272
        %v7298 = vrot.slane %v7227, 4
        %v7299 = vrot.slane %v7228, 4
        %v7300 = vsel %vm7065, %v7298, %v7299
        %v7301 = vsel %vm7065, %v7299, %v7272
        %v7302 = vrot.slane %v7229, 4
        %v7303 = vrot.slane %v7230, 4
        %v7304 = vsel %vm7065, %v7302, %v7303
        %v7305 = vsel %vm7065, %v7303, %v7272
        %v7306 = vrot.slane %v7231, 4
        %v7307 = vrot.slane %v7232, 4
        %v7308 = vsel %vm7065, %v7306, %v7307
        %v7309 = vsel %vm7065, %v7307, %v7272
        %v7310 = vrot.slane %v7233, 4
        %v7311 = vrot.slane %v7234, 4
        %v7312 = vsel %vm7065, %v7310, %v7311
        %v7313 = vsel %vm7065, %v7311, %v7272
        %v7314 = vrot.slane %v7235, 4
        %v7315 = vrot.slane %v7236, 4
        %v7316 = vsel %vm7065, %v7314, %v7315
        %v7317 = vsel %vm7065, %v7315, %v7272
        %v7318 = vrot.slane %v7237, 4
        %v7319 = vrot.slane %v7238, 4
        %v7320 = vsel %vm7065, %v7318, %v7319
        %v7321 = vsel %vm7065, %v7319, %v7272
        %v7322 = vrot.slane %v7239, 4
        %v7323 = vrot.slane %v7240, 4
        %v7324 = vsel %vm7065, %v7322, %v7323
        %v7325 = vsel %vm7065, %v7323, %v7272
        %v7326 = vrot.slane %v7241, 4
        %v7327 = vrot.slane %v7242, 4
        %v7328 = vsel %vm7065, %v7326, %v7327
        %v7329 = vsel %vm7065, %v7327, %v7272
        %v7374 = vadd.f32 %v7161, %v7272
        %v7375 = vadd.f32 %v7162, %v7273
        %v7376 = vadd.f32 %v7163, %v7273
        %v7377 = vadd.f32 %v7164, %v7272
        %v7378 = vadd.f32 %v7165, %v7273
        %v7379 = vadd.f32 %v7166, %v7273
        %v7380 = vadd.f32 %v7167, %v7274
        %v7381 = vadd.f32 %v7168, %v7276
        %v7382 = vadd.f32 %v7169, %v7277
        %v7383 = vadd.f32 %v7170, %v7278
        %v7384 = vadd.f32 %v7171, %v7280
        %v7385 = vadd.f32 %v7172, %v7281
        %v7386 = vadd.f32 %v7173, %v7282
        %v7387 = vadd.f32 %v7174, %v7284
        %v7388 = vadd.f32 %v7175, %v7285
        %v7389 = vadd.f32 %v7176, %v7286
        %v7390 = vadd.f32 %v7177, %v7288
        %v7391 = vadd.f32 %v7178, %v7289
        %v7392 = vadd.f32 %v7179, %v7290
        %v7393 = vadd.f32 %v7180, %v7292
        %v7394 = vadd.f32 %v7181, %v7293
        %v7395 = vadd.f32 %v7182, %v7294
        %v7396 = vadd.f32 %v7183, %v7296
        %v7397 = vadd.f32 %v7184, %v7297
        %v7398 = vadd.f32 %v7185, %v7298
        %v7399 = vadd.f32 %v7186, %v7300
        %v7400 = vadd.f32 %v7187, %v7301
        %v7401 = vadd.f32 %v7188, %v7302
        %v7402 = vadd.f32 %v7189, %v7304
        %v7403 = vadd.f32 %v7190, %v7305
        %v7404 = vadd.f32 %v7191, %v7306
        %v7405 = vadd.f32 %v7192, %v7308
        %v7406 = vadd.f32 %v7193, %v7309
        %v7407 = vadd.f32 %v7194, %v7310
        %v7408 = vadd.f32 %v7195, %v7312
        %v7409 = vadd.f32 %v7196, %v7313
        %v7410 = vadd.f32 %v7197, %v7314
        %v7411 = vadd.f32 %v7198, %v7316
        %v7412 = vadd.f32 %v7199, %v7317
        %v7413 = vadd.f32 %v7200, %v7318
        %v7414 = vadd.f32 %v7201, %v7320
        %v7415 = vadd.f32 %v7202, %v7321
        %v7416 = vadd.f32 %v7203, %v7322
        %v7417 = vadd.f32 %v7204, %v7324
        %v7418 = vadd.f32 %v7205, %v7325
        %v7419 = vadd.f32 %v7206, %v7326
        %v7420 = vadd.f32 %v7207, %v7328
        %v7421 = vadd.f32 %v7208, %v7329
        %v7422 = vld [vmem:[%s3 + $0x12] sm:$0x1]
        %v7423 = vlaneseq
        %v7424 = vshrl.u32 %v7423, 7
        %v7425 = vsub.s32 0, %v7424
        %v7426 = vrot.slane %v7422, %v7425
        %v7427 = vmul.f32 %v7426, 0.0
        %v7428 = vmul.f32 %v2010, %v7426
        %v7429 = vmul.f32 %v2012, %v7426
        %v7430 = vmul.f32 %v2015, %v7426
        %v7431 = vmul.f32 %v2017, %v7426
        %v7432 = vmul.f32 %v2020, %v7426
        %v7433 = vmul.f32 %v2022, %v7426
        %v7434 = vmul.f32 %v2025, %v7426
        %v7435 = vmul.f32 %v2027, %v7426
        %v7436 = vmul.f32 %v2030, %v7426
        %v7437 = vmul.f32 %v2032, %v7426
        %v7438 = vmul.f32 %v2035, %v7426
        %v7439 = vmul.f32 %v2037, %v7426
        %v7440 = vmul.f32 %v2040, %v7426
        %v7441 = vmul.f32 %v2042, %v7426
        %v7442 = vmul.f32 %v2045, %v7426
        %v7443 = vmul.f32 %v2047, %v7426
        %v7444 = vmul.f32 %v2050, %v7426
        %v7445 = vmul.f32 %v2052, %v7426
        %v7446 = vmul.f32 %v2055, %v7426
        %v7447 = vmul.f32 %v2057, %v7426
        %v7448 = vmul.f32 %v2060, %v7426
        %v7449 = vmul.f32 %v2062, %v7426
        %v7450 = vmul.f32 %v2065, %v7426
        %v7451 = vmul.f32 %v2067, %v7426
        %v7452 = vmul.f32 %v2070, %v7426
        %v7453 = vmul.f32 %v2072, %v7426
        %v7454 = vmul.f32 %v2075, %v7426
        %v7455 = vmul.f32 %v2077, %v7426
        %v7456 = vmul.f32 %v2080, %v7426
        %v7457 = vmul.f32 %v2082, %v7426
        %v7489 = vrot.slane %v7427, 4
        %v7490 = vsel %vm7065, %v7489, %v7489
        %v7491 = vrot.slane %v7428, 4
        %v7492 = vrot.slane %v7429, 4
        %v7493 = vsel %vm7065, %v7491, %v7492
        %v7494 = vsel %vm7065, %v7492, %v7489
        %v7495 = vrot.slane %v7430, 4
        %v7496 = vrot.slane %v7431, 4
        %v7497 = vsel %vm7065, %v7495, %v7496
        %v7498 = vsel %vm7065, %v7496, %v7489
        %v7499 = vrot.slane %v7432, 4
        %v7500 = vrot.slane %v7433, 4
        %v7501 = vsel %vm7065, %v7499, %v7500
        %v7502 = vsel %vm7065, %v7500, %v7489
        %v7503 = vrot.slane %v7434, 4
        %v7504 = vrot.slane %v7435, 4
        %v7505 = vsel %vm7065, %v7503, %v7504
        %v7506 = vsel %vm7065, %v7504, %v7489
        %v7507 = vrot.slane %v7436, 4
        %v7508 = vrot.slane %v7437, 4
        %v7509 = vsel %vm7065, %v7507, %v7508
        %v7510 = vsel %vm7065, %v7508, %v7489
        %v7511 = vrot.slane %v7438, 4
        %v7512 = vrot.slane %v7439, 4
        %v7513 = vsel %vm7065, %v7511, %v7512
        %v7514 = vsel %vm7065, %v7512, %v7489
        %v7515 = vrot.slane %v7440, 4
        %v7516 = vrot.slane %v7441, 4
        %v7517 = vsel %vm7065, %v7515, %v7516
        %v7518 = vsel %vm7065, %v7516, %v7489
        %v7519 = vrot.slane %v7442, 4
        %v7520 = vrot.slane %v7443, 4
        %v7521 = vsel %vm7065, %v7519, %v7520
        %v7522 = vsel %vm7065, %v7520, %v7489
        %v7523 = vrot.slane %v7444, 4
        %v7524 = vrot.slane %v7445, 4
        %v7525 = vsel %vm7065, %v7523, %v7524
        %v7526 = vsel %vm7065, %v7524, %v7489
        %v7527 = vrot.slane %v7446, 4
        %v7528 = vrot.slane %v7447, 4
        %v7529 = vsel %vm7065, %v7527, %v7528
        %v7530 = vsel %vm7065, %v7528, %v7489
        %v7531 = vrot.slane %v7448, 4
        %v7532 = vrot.slane %v7449, 4
        %v7533 = vsel %vm7065, %v7531, %v7532
        %v7534 = vsel %vm7065, %v7532, %v7489
        %v7535 = vrot.slane %v7450, 4
        %v7536 = vrot.slane %v7451, 4
        %v7537 = vsel %vm7065, %v7535, %v7536
        %v7538 = vsel %vm7065, %v7536, %v7489
        %v7539 = vrot.slane %v7452, 4
        %v7540 = vrot.slane %v7453, 4
        %v7541 = vsel %vm7065, %v7539, %v7540
        %v7542 = vsel %vm7065, %v7540, %v7489
        %v7543 = vrot.slane %v7454, 4
        %v7544 = vrot.slane %v7455, 4
        %v7545 = vsel %vm7065, %v7543, %v7544
        %v7546 = vsel %vm7065, %v7544, %v7489
        %v7547 = vrot.slane %v7456, 4
        %v7548 = vrot.slane %v7457, 4
        %v7549 = vsel %vm7065, %v7547, %v7548
        %v7550 = vsel %vm7065, %v7548, %v7489
        %v7598 = vadd.f32 %v7374, %v7489
        %v7599 = vadd.f32 %v7375, %v7490
        %v7600 = vadd.f32 %v7376, %v7490
        %v7601 = vadd.f32 %v7377, %v7491
        %v7602 = vadd.f32 %v7378, %v7493
        %v7603 = vadd.f32 %v7379, %v7494
        %v7604 = vadd.f32 %v7380, %v7495
        %v7605 = vadd.f32 %v7381, %v7497
        %v7606 = vadd.f32 %v7382, %v7498
        %v7607 = vadd.f32 %v7383, %v7499
        %v7608 = vadd.f32 %v7384, %v7501
        %v7609 = vadd.f32 %v7385, %v7502
        %v7610 = vadd.f32 %v7386, %v7503
        %v7611 = vadd.f32 %v7387, %v7505
        %v7612 = vadd.f32 %v7388, %v7506
        %v7613 = vadd.f32 %v7389, %v7507
        %v7614 = vadd.f32 %v7390, %v7509
        %v7615 = vadd.f32 %v7391, %v7510
        %v7616 = vadd.f32 %v7392, %v7511
        %v7617 = vadd.f32 %v7393, %v7513
        %v7618 = vadd.f32 %v7394, %v7514
        %v7619 = vadd.f32 %v7395, %v7515
        %v7620 = vadd.f32 %v7396, %v7517
        %v7621 = vadd.f32 %v7397, %v7518
        %v7622 = vadd.f32 %v7398, %v7519
        %v7623 = vadd.f32 %v7399, %v7521
        %v7624 = vadd.f32 %v7400, %v7522
        %v7625 = vadd.f32 %v7401, %v7523
        %v7626 = vadd.f32 %v7402, %v7525
        %v7627 = vadd.f32 %v7403, %v7526
        %v7628 = vadd.f32 %v7404, %v7527
        %v7629 = vadd.f32 %v7405, %v7529
        %v7630 = vadd.f32 %v7406, %v7530
        %v7631 = vadd.f32 %v7407, %v7531
        %v7632 = vadd.f32 %v7408, %v7533
        %v7633 = vadd.f32 %v7409, %v7534
        %v7634 = vadd.f32 %v7410, %v7535
        %v7635 = vadd.f32 %v7411, %v7537
        %v7636 = vadd.f32 %v7412, %v7538
        %v7637 = vadd.f32 %v7413, %v7539
        %v7638 = vadd.f32 %v7414, %v7541
        %v7639 = vadd.f32 %v7415, %v7542
        %v7640 = vadd.f32 %v7416, %v7543
        %v7641 = vadd.f32 %v7417, %v7545
        %v7642 = vadd.f32 %v7418, %v7546
        %v7643 = vadd.f32 %v7419, %v7547
        %v7644 = vadd.f32 %v7420, %v7549
        %v7645 = vadd.f32 %v7421, %v7550
        %v7646 = vld [vmem:[%s3 + $0x19] sm:$0x1]
        %v7647 = vlaneseq
        %v7648 = vshrl.u32 %v7647, 7
        %v7649 = vsub.s32 0, %v7648
        %v7650 = vrot.slane %v7646, %v7649
        %v7651 = vmul.f32 %v2010, %v7650
        %v7652 = vmul.f32 %v2012, %v7650
        %v7653 = vmul.f32 %v7650, 0.0
        %v7654 = vmul.f32 %v2015, %v7650
        %v7655 = vmul.f32 %v2017, %v7650
        %v7656 = vmul.f32 %v2020, %v7650
        %v7657 = vmul.f32 %v2022, %v7650
        %v7658 = vmul.f32 %v2025, %v7650
        %v7659 = vmul.f32 %v2027, %v7650
        %v7660 = vmul.f32 %v2030, %v7650
        %v7661 = vmul.f32 %v2032, %v7650
        %v7662 = vmul.f32 %v2035, %v7650
        %v7663 = vmul.f32 %v2037, %v7650
        %v7664 = vmul.f32 %v2040, %v7650
        %v7665 = vmul.f32 %v2042, %v7650
        %v7666 = vmul.f32 %v2045, %v7650
        %v7667 = vmul.f32 %v2047, %v7650
        %v7668 = vmul.f32 %v2050, %v7650
        %v7669 = vmul.f32 %v2052, %v7650
        %v7670 = vmul.f32 %v2055, %v7650
        %v7671 = vmul.f32 %v2057, %v7650
        %v7672 = vmul.f32 %v2060, %v7650
        %v7673 = vmul.f32 %v2062, %v7650
        %v7674 = vmul.f32 %v2065, %v7650
        %v7675 = vmul.f32 %v2067, %v7650
        %v7676 = vmul.f32 %v2070, %v7650
        %v7677 = vmul.f32 %v2072, %v7650
        %v7678 = vmul.f32 %v2075, %v7650
        %v7679 = vmul.f32 %v2077, %v7650
        %v7680 = vmul.f32 %v2080, %v7650
        %v7681 = vmul.f32 %v2082, %v7650
        %v7682 = vmul.f32 %v2085, %v7650
        %v7683 = vmul.f32 %v2087, %v7650
        %v7717 = vrot.slane %v7651, 4
        %v7718 = vrot.slane %v7652, 4
        %v7719 = vsel %vm7065, %v7717, %v7718
        %v7720 = vrot.slane %v7653, 4
        %v7721 = vsel %vm7065, %v7718, %v7720
        %v7722 = vrot.slane %v7654, 4
        %v7723 = vrot.slane %v7655, 4
        %v7724 = vsel %vm7065, %v7722, %v7723
        %v7725 = vsel %vm7065, %v7723, %v7720
        %v7726 = vrot.slane %v7656, 4
        %v7727 = vrot.slane %v7657, 4
        %v7728 = vsel %vm7065, %v7726, %v7727
        %v7729 = vsel %vm7065, %v7727, %v7720
        %v7730 = vrot.slane %v7658, 4
        %v7731 = vrot.slane %v7659, 4
        %v7732 = vsel %vm7065, %v7730, %v7731
        %v7733 = vsel %vm7065, %v7731, %v7720
        %v7734 = vrot.slane %v7660, 4
        %v7735 = vrot.slane %v7661, 4
        %v7736 = vsel %vm7065, %v7734, %v7735
        %v7737 = vsel %vm7065, %v7735, %v7720
        %v7738 = vrot.slane %v7662, 4
        %v7739 = vrot.slane %v7663, 4
        %v7740 = vsel %vm7065, %v7738, %v7739
        %v7741 = vsel %vm7065, %v7739, %v7720
        %v7742 = vrot.slane %v7664, 4
        %v7743 = vrot.slane %v7665, 4
        %v7744 = vsel %vm7065, %v7742, %v7743
        %v7745 = vsel %vm7065, %v7743, %v7720
        %v7746 = vrot.slane %v7666, 4
        %v7747 = vrot.slane %v7667, 4
        %v7748 = vsel %vm7065, %v7746, %v7747
        %v7749 = vsel %vm7065, %v7747, %v7720
        %v7750 = vrot.slane %v7668, 4
        %v7751 = vrot.slane %v7669, 4
        %v7752 = vsel %vm7065, %v7750, %v7751
        %v7753 = vsel %vm7065, %v7751, %v7720
        %v7754 = vrot.slane %v7670, 4
        %v7755 = vrot.slane %v7671, 4
        %v7756 = vsel %vm7065, %v7754, %v7755
        %v7757 = vsel %vm7065, %v7755, %v7720
        %v7758 = vrot.slane %v7672, 4
        %v7759 = vrot.slane %v7673, 4
        %v7760 = vsel %vm7065, %v7758, %v7759
        %v7761 = vsel %vm7065, %v7759, %v7720
        %v7762 = vrot.slane %v7674, 4
        %v7763 = vrot.slane %v7675, 4
        %v7764 = vsel %vm7065, %v7762, %v7763
        %v7765 = vsel %vm7065, %v7763, %v7720
        %v7766 = vrot.slane %v7676, 4
        %v7767 = vrot.slane %v7677, 4
        %v7768 = vsel %vm7065, %v7766, %v7767
        %v7769 = vsel %vm7065, %v7767, %v7720
        %v7770 = vrot.slane %v7678, 4
        %v7771 = vrot.slane %v7679, 4
        %v7772 = vsel %vm7065, %v7770, %v7771
        %v7773 = vsel %vm7065, %v7771, %v7720
        %v7774 = vrot.slane %v7680, 4
        %v7775 = vrot.slane %v7681, 4
        %v7776 = vsel %vm7065, %v7774, %v7775
        %v7777 = vsel %vm7065, %v7775, %v7720
        %v7778 = vrot.slane %v7682, 4
        %v7779 = vrot.slane %v7683, 4
        %v7780 = vsel %vm7065, %v7778, %v7779
        %v7781 = vsel %vm7065, %v7779, %v7720
        %v7830 = vadd.f32 %v7598, %v7717
        %v7831 = vadd.f32 %v7599, %v7719
        %v7832 = vadd.f32 %v7600, %v7721
        %v7833 = vadd.f32 %v7601, %v7722
        %v7834 = vadd.f32 %v7602, %v7724
        %v7835 = vadd.f32 %v7603, %v7725
        %v7836 = vadd.f32 %v7604, %v7726
        %v7837 = vadd.f32 %v7605, %v7728
        %v7838 = vadd.f32 %v7606, %v7729
        %v7839 = vadd.f32 %v7607, %v7730
        %v7840 = vadd.f32 %v7608, %v7732
        %v7841 = vadd.f32 %v7609, %v7733
        %v7842 = vadd.f32 %v7610, %v7734
        %v7843 = vadd.f32 %v7611, %v7736
        %v7844 = vadd.f32 %v7612, %v7737
        %v7845 = vadd.f32 %v7613, %v7738
        %v7846 = vadd.f32 %v7614, %v7740
        %v7847 = vadd.f32 %v7615, %v7741
        %v7848 = vadd.f32 %v7616, %v7742
        %v7849 = vadd.f32 %v7617, %v7744
        %v7850 = vadd.f32 %v7618, %v7745
        %v7851 = vadd.f32 %v7619, %v7746
        %v7852 = vadd.f32 %v7620, %v7748
        %v7853 = vadd.f32 %v7621, %v7749
        %v7854 = vadd.f32 %v7622, %v7750
        %v7855 = vadd.f32 %v7623, %v7752
        %v7856 = vadd.f32 %v7624, %v7753
        %v7857 = vadd.f32 %v7625, %v7754
        %v7858 = vadd.f32 %v7626, %v7756
        %v7859 = vadd.f32 %v7627, %v7757
        %v7860 = vadd.f32 %v7628, %v7758
        %v7861 = vadd.f32 %v7629, %v7760
        %v7862 = vadd.f32 %v7630, %v7761
        %v7863 = vadd.f32 %v7631, %v7762
        %v7864 = vadd.f32 %v7632, %v7764
        %v7865 = vadd.f32 %v7633, %v7765
        %v7866 = vadd.f32 %v7634, %v7766
        %v7867 = vadd.f32 %v7635, %v7768
        %v7868 = vadd.f32 %v7636, %v7769
        %v7869 = vadd.f32 %v7637, %v7770
        %v7870 = vadd.f32 %v7638, %v7772
        %v7871 = vadd.f32 %v7639, %v7773
        %v7872 = vadd.f32 %v7640, %v7774
        %v7873 = vadd.f32 %v7641, %v7776
        %v7874 = vadd.f32 %v7642, %v7777
        %v7875 = vadd.f32 %v7643, %v7778
        %v7876 = vadd.f32 %v7644, %v7780
        %v7877 = vadd.f32 %v7645, %v7781
        %v7878 = vld [vmem:[%s3 + $0x20] sm:$0x1]
        %v7879 = vlaneseq
        %v7880 = vshrl.u32 %v7879, 7
        %v7881 = vsub.s32 0, %v7880
        %v7882 = vrot.slane %v7878, %v7881
        %v7883 = vmul.f32 %v2015, %v7882
        %v7884 = vmul.f32 %v2017, %v7882
        %v7885 = vmul.f32 %v7882, 0.0
        %v7886 = vmul.f32 %v2020, %v7882
        %v7887 = vmul.f32 %v2022, %v7882
        %v7888 = vmul.f32 %v2025, %v7882
        %v7889 = vmul.f32 %v2027, %v7882
        %v7890 = vmul.f32 %v2030, %v7882
        %v7891 = vmul.f32 %v2032, %v7882
        %v7892 = vmul.f32 %v2035, %v7882
        %v7893 = vmul.f32 %v2037, %v7882
        %v7894 = vmul.f32 %v2040, %v7882
        %v7895 = vmul.f32 %v2042, %v7882
        %v7896 = vmul.f32 %v2045, %v7882
        %v7897 = vmul.f32 %v2047, %v7882
        %v7898 = vmul.f32 %v2050, %v7882
        %v7899 = vmul.f32 %v2052, %v7882
        %v7900 = vmul.f32 %v2055, %v7882
        %v7901 = vmul.f32 %v2057, %v7882
        %v7902 = vmul.f32 %v2060, %v7882
        %v7903 = vmul.f32 %v2062, %v7882
        %v7904 = vmul.f32 %v2065, %v7882
        %v7905 = vmul.f32 %v2067, %v7882
        %v7906 = vmul.f32 %v2070, %v7882
        %v7907 = vmul.f32 %v2072, %v7882
        %v7908 = vmul.f32 %v2075, %v7882
        %v7909 = vmul.f32 %v2077, %v7882
        %v7910 = vmul.f32 %v2080, %v7882
        %v7911 = vmul.f32 %v2082, %v7882
        %v7912 = vmul.f32 %v2085, %v7882
        %v7913 = vmul.f32 %v2087, %v7882
        %v7945 = vrot.slane %v7883, 4
        %v7946 = vrot.slane %v7884, 4
        %v7947 = vsel %vm7065, %v7945, %v7946
        %v7948 = vrot.slane %v7885, 4
        %v7949 = vsel %vm7065, %v7946, %v7948
        %v7950 = vrot.slane %v7886, 4
        %v7951 = vrot.slane %v7887, 4
        %v7952 = vsel %vm7065, %v7950, %v7951
        %v7953 = vsel %vm7065, %v7951, %v7948
        %v7954 = vrot.slane %v7888, 4
        %v7955 = vrot.slane %v7889, 4
        %v7956 = vsel %vm7065, %v7954, %v7955
        %v7957 = vsel %vm7065, %v7955, %v7948
        %v7958 = vrot.slane %v7890, 4
        %v7959 = vrot.slane %v7891, 4
        %v7960 = vsel %vm7065, %v7958, %v7959
        %v7961 = vsel %vm7065, %v7959, %v7948
        %v7962 = vrot.slane %v7892, 4
        %v7963 = vrot.slane %v7893, 4
        %v7964 = vsel %vm7065, %v7962, %v7963
        %v7965 = vsel %vm7065, %v7963, %v7948
        %v7966 = vrot.slane %v7894, 4
        %v7967 = vrot.slane %v7895, 4
        %v7968 = vsel %vm7065, %v7966, %v7967
        %v7969 = vsel %vm7065, %v7967, %v7948
        %v7970 = vrot.slane %v7896, 4
        %v7971 = vrot.slane %v7897, 4
        %v7972 = vsel %vm7065, %v7970, %v7971
        %v7973 = vsel %vm7065, %v7971, %v7948
        %v7974 = vrot.slane %v7898, 4
        %v7975 = vrot.slane %v7899, 4
        %v7976 = vsel %vm7065, %v7974, %v7975
        %v7977 = vsel %vm7065, %v7975, %v7948
        %v7978 = vrot.slane %v7900, 4
        %v7979 = vrot.slane %v7901, 4
        %v7980 = vsel %vm7065, %v7978, %v7979
        %v7981 = vsel %vm7065, %v7979, %v7948
        %v7982 = vrot.slane %v7902, 4
        %v7983 = vrot.slane %v7903, 4
        %v7984 = vsel %vm7065, %v7982, %v7983
        %v7985 = vsel %vm7065, %v7983, %v7948
        %v7986 = vrot.slane %v7904, 4
        %v7987 = vrot.slane %v7905, 4
        %v7988 = vsel %vm7065, %v7986, %v7987
        %v7989 = vsel %vm7065, %v7987, %v7948
        %v7990 = vrot.slane %v7906, 4
        %v7991 = vrot.slane %v7907, 4
        %v7992 = vsel %vm7065, %v7990, %v7991
        %v7993 = vsel %vm7065, %v7991, %v7948
        %v7994 = vrot.slane %v7908, 4
        %v7995 = vrot.slane %v7909, 4
        %v7996 = vsel %vm7065, %v7994, %v7995
        %v7997 = vsel %vm7065, %v7995, %v7948
        %v7998 = vrot.slane %v7910, 4
        %v7999 = vrot.slane %v7911, 4
        %v8000 = vsel %vm7065, %v7998, %v7999
        %v8001 = vsel %vm7065, %v7999, %v7948
        %v8002 = vrot.slane %v7912, 4
        %v8003 = vrot.slane %v7913, 4
        %v8004 = vsel %vm7065, %v8002, %v8003
        %v8005 = vsel %vm7065, %v8003, %v7948
        %v8006 = vsel %vm7065, %v7948, %v7948
        %v8054 = vadd.f32 %v7830, %v7945
        %v8055 = vadd.f32 %v7831, %v7947
        %v8056 = vadd.f32 %v7832, %v7949
        %v8057 = vadd.f32 %v7833, %v7950
        %v8058 = vadd.f32 %v7834, %v7952
        %v8059 = vadd.f32 %v7835, %v7953
        %v8060 = vadd.f32 %v7836, %v7954
        %v8061 = vadd.f32 %v7837, %v7956
        %v8062 = vadd.f32 %v7838, %v7957
        %v8063 = vadd.f32 %v7839, %v7958
        %v8064 = vadd.f32 %v7840, %v7960
        %v8065 = vadd.f32 %v7841, %v7961
        %v8066 = vadd.f32 %v7842, %v7962
        %v8067 = vadd.f32 %v7843, %v7964
        %v8068 = vadd.f32 %v7844, %v7965
        %v8069 = vadd.f32 %v7845, %v7966
        %v8070 = vadd.f32 %v7846, %v7968
        %v8071 = vadd.f32 %v7847, %v7969
        %v8072 = vadd.f32 %v7848, %v7970
        %v8073 = vadd.f32 %v7849, %v7972
        %v8074 = vadd.f32 %v7850, %v7973
        %v8075 = vadd.f32 %v7851, %v7974
        %v8076 = vadd.f32 %v7852, %v7976
        %v8077 = vadd.f32 %v7853, %v7977
        %v8078 = vadd.f32 %v7854, %v7978
        %v8079 = vadd.f32 %v7855, %v7980
        %v8080 = vadd.f32 %v7856, %v7981
        %v8081 = vadd.f32 %v7857, %v7982
        %v8082 = vadd.f32 %v7858, %v7984
        %v8083 = vadd.f32 %v7859, %v7985
        %v8084 = vadd.f32 %v7860, %v7986
        %v8085 = vadd.f32 %v7861, %v7988
        %v8086 = vadd.f32 %v7862, %v7989
        %v8087 = vadd.f32 %v7863, %v7990
        %v8088 = vadd.f32 %v7864, %v7992
        %v8089 = vadd.f32 %v7865, %v7993
        %v8090 = vadd.f32 %v7866, %v7994
        %v8091 = vadd.f32 %v7867, %v7996
        %v8092 = vadd.f32 %v7868, %v7997
        %v8093 = vadd.f32 %v7869, %v7998
        %v8094 = vadd.f32 %v7870, %v8000
        %v8095 = vadd.f32 %v7871, %v8001
        %v8096 = vadd.f32 %v7872, %v8002
        %v8097 = vadd.f32 %v7873, %v8004
        %v8098 = vadd.f32 %v7874, %v8005
        %v8099 = vadd.f32 %v7875, %v7948
        %v8100 = vadd.f32 %v7876, %v8006
        %v8101 = vadd.f32 %v7877, %v8006
        %v8102 = vld [vmem:[%s3 + $0x27] sm:$0x1]
        %v8103 = vlaneseq
        %v8104 = vshrl.u32 %v8103, 7
        %v8105 = vsub.s32 0, %v8104
        %v8106 = vrot.slane %v8102, %v8105
        %v8107 = vmul.f32 %v2020, %v8106
        %v8108 = vmul.f32 %v2022, %v8106
        %v8109 = vmul.f32 %v8106, 0.0
        %v8110 = vmul.f32 %v2025, %v8106
        %v8111 = vmul.f32 %v2027, %v8106
        %v8112 = vmul.f32 %v2030, %v8106
        %v8113 = vmul.f32 %v2032, %v8106
        %v8114 = vmul.f32 %v2035, %v8106
        %v8115 = vmul.f32 %v2037, %v8106
        %v8116 = vmul.f32 %v2040, %v8106
        %v8117 = vmul.f32 %v2042, %v8106
        %v8118 = vmul.f32 %v2045, %v8106
        %v8119 = vmul.f32 %v2047, %v8106
        %v8120 = vmul.f32 %v2050, %v8106
        %v8121 = vmul.f32 %v2052, %v8106
        %v8122 = vmul.f32 %v2055, %v8106
        %v8123 = vmul.f32 %v2057, %v8106
        %v8124 = vmul.f32 %v2060, %v8106
        %v8125 = vmul.f32 %v2062, %v8106
        %v8126 = vmul.f32 %v2065, %v8106
        %v8127 = vmul.f32 %v2067, %v8106
        %v8128 = vmul.f32 %v2070, %v8106
        %v8129 = vmul.f32 %v2072, %v8106
        %v8130 = vmul.f32 %v2075, %v8106
        %v8131 = vmul.f32 %v2077, %v8106
        %v8132 = vmul.f32 %v2080, %v8106
        %v8133 = vmul.f32 %v2082, %v8106
        %v8134 = vmul.f32 %v2085, %v8106
        %v8135 = vmul.f32 %v2087, %v8106
        %v8165 = vrot.slane %v8107, 4
        %v8166 = vrot.slane %v8108, 4
        %v8167 = vsel %vm7065, %v8165, %v8166
        %v8168 = vrot.slane %v8109, 4
        %v8169 = vsel %vm7065, %v8166, %v8168
        %v8170 = vrot.slane %v8110, 4
        %v8171 = vrot.slane %v8111, 4
        %v8172 = vsel %vm7065, %v8170, %v8171
        %v8173 = vsel %vm7065, %v8171, %v8168
        %v8174 = vrot.slane %v8112, 4
        %v8175 = vrot.slane %v8113, 4
        %v8176 = vsel %vm7065, %v8174, %v8175
        %v8177 = vsel %vm7065, %v8175, %v8168
        %v8178 = vrot.slane %v8114, 4
        %v8179 = vrot.slane %v8115, 4
        %v8180 = vsel %vm7065, %v8178, %v8179
        %v8181 = vsel %vm7065, %v8179, %v8168
        %v8182 = vrot.slane %v8116, 4
        %v8183 = vrot.slane %v8117, 4
        %v8184 = vsel %vm7065, %v8182, %v8183
        %v8185 = vsel %vm7065, %v8183, %v8168
        %v8186 = vrot.slane %v8118, 4
        %v8187 = vrot.slane %v8119, 4
        %v8188 = vsel %vm7065, %v8186, %v8187
        %v8189 = vsel %vm7065, %v8187, %v8168
        %v8190 = vrot.slane %v8120, 4
        %v8191 = vrot.slane %v8121, 4
        %v8192 = vsel %vm7065, %v8190, %v8191
        %v8193 = vsel %vm7065, %v8191, %v8168
        %v8194 = vrot.slane %v8122, 4
        %v8195 = vrot.slane %v8123, 4
        %v8196 = vsel %vm7065, %v8194, %v8195
        %v8197 = vsel %vm7065, %v8195, %v8168
        %v8198 = vrot.slane %v8124, 4
        %v8199 = vrot.slane %v8125, 4
        %v8200 = vsel %vm7065, %v8198, %v8199
        %v8201 = vsel %vm7065, %v8199, %v8168
        %v8202 = vrot.slane %v8126, 4
        %v8203 = vrot.slane %v8127, 4
        %v8204 = vsel %vm7065, %v8202, %v8203
        %v8205 = vsel %vm7065, %v8203, %v8168
        %v8206 = vrot.slane %v8128, 4
        %v8207 = vrot.slane %v8129, 4
        %v8208 = vsel %vm7065, %v8206, %v8207
        %v8209 = vsel %vm7065, %v8207, %v8168
        %v8210 = vrot.slane %v8130, 4
        %v8211 = vrot.slane %v8131, 4
        %v8212 = vsel %vm7065, %v8210, %v8211
        %v8213 = vsel %vm7065, %v8211, %v8168
        %v8214 = vrot.slane %v8132, 4
        %v8215 = vrot.slane %v8133, 4
        %v8216 = vsel %vm7065, %v8214, %v8215
        %v8217 = vsel %vm7065, %v8215, %v8168
        %v8218 = vrot.slane %v8134, 4
        %v8219 = vrot.slane %v8135, 4
        %v8220 = vsel %vm7065, %v8218, %v8219
        %v8221 = vsel %vm7065, %v8219, %v8168
        %v8222 = vsel %vm7065, %v8168, %v8168
        %v8267 = vadd.f32 %v8054, %v8165
        %v8268 = vadd.f32 %v8055, %v8167
        %v8269 = vadd.f32 %v8056, %v8169
        %v8270 = vadd.f32 %v8057, %v8170
        %v8271 = vadd.f32 %v8058, %v8172
        %v8272 = vadd.f32 %v8059, %v8173
        %v8273 = vadd.f32 %v8060, %v8174
        %v8274 = vadd.f32 %v8061, %v8176
        %v8275 = vadd.f32 %v8062, %v8177
        %v8276 = vadd.f32 %v8063, %v8178
        %v8277 = vadd.f32 %v8064, %v8180
        %v8278 = vadd.f32 %v8065, %v8181
        %v8279 = vadd.f32 %v8066, %v8182
        %v8280 = vadd.f32 %v8067, %v8184
        %v8281 = vadd.f32 %v8068, %v8185
        %v8282 = vadd.f32 %v8069, %v8186
        %v8283 = vadd.f32 %v8070, %v8188
        %v8284 = vadd.f32 %v8071, %v8189
        %v8285 = vadd.f32 %v8072, %v8190
        %v8286 = vadd.f32 %v8073, %v8192
        %v8287 = vadd.f32 %v8074, %v8193
        %v8288 = vadd.f32 %v8075, %v8194
        %v8289 = vadd.f32 %v8076, %v8196
        %v8290 = vadd.f32 %v8077, %v8197
        %v8291 = vadd.f32 %v8078, %v8198
        %v8292 = vadd.f32 %v8079, %v8200
        %v8293 = vadd.f32 %v8080, %v8201
        %v8294 = vadd.f32 %v8081, %v8202
        %v8295 = vadd.f32 %v8082, %v8204
        %v8296 = vadd.f32 %v8083, %v8205
        %v8297 = vadd.f32 %v8084, %v8206
        %v8298 = vadd.f32 %v8085, %v8208
        %v8299 = vadd.f32 %v8086, %v8209
        %v8300 = vadd.f32 %v8087, %v8210
        %v8301 = vadd.f32 %v8088, %v8212
        %v8302 = vadd.f32 %v8089, %v8213
        %v8303 = vadd.f32 %v8090, %v8214
        %v8304 = vadd.f32 %v8091, %v8216
        %v8305 = vadd.f32 %v8092, %v8217
        %v8306 = vadd.f32 %v8093, %v8218
        %v8307 = vadd.f32 %v8094, %v8220
        %v8308 = vadd.f32 %v8095, %v8221
        %v8309 = vadd.f32 %v8096, %v8168
        %v8310 = vadd.f32 %v8097, %v8222
        %v8311 = vadd.f32 %v8098, %v8222
        %v8312 = vadd.f32 %v8099, %v8168
        %v8313 = vadd.f32 %v8100, %v8222
        %v8314 = vadd.f32 %v8101, %v8222
        %v8315 = vld [vmem:[%s3 + $0x2e] sm:$0x1]
        %v8316 = vlaneseq
        %v8317 = vshrl.u32 %v8316, 7
        %v8318 = vsub.s32 0, %v8317
        %v8319 = vrot.slane %v8315, %v8318
        %v8320 = vmul.f32 %v2025, %v8319
        %v8321 = vmul.f32 %v2027, %v8319
        %v8322 = vmul.f32 %v8319, 0.0
        %v8323 = vmul.f32 %v2030, %v8319
        %v8324 = vmul.f32 %v2032, %v8319
        %v8325 = vmul.f32 %v2035, %v8319
        %v8326 = vmul.f32 %v2037, %v8319
        %v8327 = vmul.f32 %v2040, %v8319
        %v8328 = vmul.f32 %v2042, %v8319
        %v8329 = vmul.f32 %v2045, %v8319
        %v8330 = vmul.f32 %v2047, %v8319
        %v8331 = vmul.f32 %v2050, %v8319
        %v8332 = vmul.f32 %v2052, %v8319
        %v8333 = vmul.f32 %v2055, %v8319
        %v8334 = vmul.f32 %v2057, %v8319
        %v8335 = vmul.f32 %v2060, %v8319
        %v8336 = vmul.f32 %v2062, %v8319
        %v8337 = vmul.f32 %v2065, %v8319
        %v8338 = vmul.f32 %v2067, %v8319
        %v8339 = vmul.f32 %v2070, %v8319
        %v8340 = vmul.f32 %v2072, %v8319
        %v8341 = vmul.f32 %v2075, %v8319
        %v8342 = vmul.f32 %v2077, %v8319
        %v8343 = vmul.f32 %v2080, %v8319
        %v8344 = vmul.f32 %v2082, %v8319
        %v8345 = vmul.f32 %v2085, %v8319
        %v8346 = vmul.f32 %v2087, %v8319
        %v8374 = vrot.slane %v8320, 4
        %v8375 = vrot.slane %v8321, 4
        %v8376 = vsel %vm7065, %v8374, %v8375
        %v8377 = vrot.slane %v8322, 4
        %v8378 = vsel %vm7065, %v8375, %v8377
        %v8379 = vrot.slane %v8323, 4
        %v8380 = vrot.slane %v8324, 4
        %v8381 = vsel %vm7065, %v8379, %v8380
        %v8382 = vsel %vm7065, %v8380, %v8377
        %v8383 = vrot.slane %v8325, 4
        %v8384 = vrot.slane %v8326, 4
        %v8385 = vsel %vm7065, %v8383, %v8384
        %v8386 = vsel %vm7065, %v8384, %v8377
        %v8387 = vrot.slane %v8327, 4
        %v8388 = vrot.slane %v8328, 4
        %v8389 = vsel %vm7065, %v8387, %v8388
        %v8390 = vsel %vm7065, %v8388, %v8377
        %v8391 = vrot.slane %v8329, 4
        %v8392 = vrot.slane %v8330, 4
        %v8393 = vsel %vm7065, %v8391, %v8392
        %v8394 = vsel %vm7065, %v8392, %v8377
        %v8395 = vrot.slane %v8331, 4
        %v8396 = vrot.slane %v8332, 4
        %v8397 = vsel %vm7065, %v8395, %v8396
        %v8398 = vsel %vm7065, %v8396, %v8377
        %v8399 = vrot.slane %v8333, 4
        %v8400 = vrot.slane %v8334, 4
        %v8401 = vsel %vm7065, %v8399, %v8400
        %v8402 = vsel %vm7065, %v8400, %v8377
        %v8403 = vrot.slane %v8335, 4
        %v8404 = vrot.slane %v8336, 4
        %v8405 = vsel %vm7065, %v8403, %v8404
        %v8406 = vsel %vm7065, %v8404, %v8377
        %v8407 = vrot.slane %v8337, 4
        %v8408 = vrot.slane %v8338, 4
        %v8409 = vsel %vm7065, %v8407, %v8408
        %v8410 = vsel %vm7065, %v8408, %v8377
        %v8411 = vrot.slane %v8339, 4
        %v8412 = vrot.slane %v8340, 4
        %v8413 = vsel %vm7065, %v8411, %v8412
        %v8414 = vsel %vm7065, %v8412, %v8377
        %v8415 = vrot.slane %v8341, 4
        %v8416 = vrot.slane %v8342, 4
        %v8417 = vsel %vm7065, %v8415, %v8416
        %v8418 = vsel %vm7065, %v8416, %v8377
        %v8419 = vrot.slane %v8343, 4
        %v8420 = vrot.slane %v8344, 4
        %v8421 = vsel %vm7065, %v8419, %v8420
        %v8422 = vsel %vm7065, %v8420, %v8377
        %v8423 = vrot.slane %v8345, 4
        %v8424 = vrot.slane %v8346, 4
        %v8425 = vsel %vm7065, %v8423, %v8424
        %v8426 = vsel %vm7065, %v8424, %v8377
        %v8427 = vsel %vm7065, %v8377, %v8377
        %v8469 = vadd.f32 %v8267, %v8374
        %v8470 = vadd.f32 %v8268, %v8376
        %v8471 = vadd.f32 %v8269, %v8378
        %v8472 = vadd.f32 %v8270, %v8379
        %v8473 = vadd.f32 %v8271, %v8381
        %v8474 = vadd.f32 %v8272, %v8382
        %v8475 = vadd.f32 %v8273, %v8383
        %v8476 = vadd.f32 %v8274, %v8385
        %v8477 = vadd.f32 %v8275, %v8386
        %v8478 = vadd.f32 %v8276, %v8387
        %v8479 = vadd.f32 %v8277, %v8389
        %v8480 = vadd.f32 %v8278, %v8390
        %v8481 = vadd.f32 %v8279, %v8391
        %v8482 = vadd.f32 %v8280, %v8393
        %v8483 = vadd.f32 %v8281, %v8394
        %v8484 = vadd.f32 %v8282, %v8395
        %v8485 = vadd.f32 %v8283, %v8397
        %v8486 = vadd.f32 %v8284, %v8398
        %v8487 = vadd.f32 %v8285, %v8399
        %v8488 = vadd.f32 %v8286, %v8401
        %v8489 = vadd.f32 %v8287, %v8402
        %v8490 = vadd.f32 %v8288, %v8403
        %v8491 = vadd.f32 %v8289, %v8405
        %v8492 = vadd.f32 %v8290, %v8406
        %v8493 = vadd.f32 %v8291, %v8407
        %v8494 = vadd.f32 %v8292, %v8409
        %v8495 = vadd.f32 %v8293, %v8410
        %v8496 = vadd.f32 %v8294, %v8411
        %v8497 = vadd.f32 %v8295, %v8413
        %v8498 = vadd.f32 %v8296, %v8414
        %v8499 = vadd.f32 %v8297, %v8415
        %v8500 = vadd.f32 %v8298, %v8417
        %v8501 = vadd.f32 %v8299, %v8418
        %v8502 = vadd.f32 %v8300, %v8419
        %v8503 = vadd.f32 %v8301, %v8421
        %v8504 = vadd.f32 %v8302, %v8422
        %v8505 = vadd.f32 %v8303, %v8423
        %v8506 = vadd.f32 %v8304, %v8425
        %v8507 = vadd.f32 %v8305, %v8426
        %v8508 = vadd.f32 %v8306, %v8377
        %v8509 = vadd.f32 %v8307, %v8427
        %v8510 = vadd.f32 %v8308, %v8427
        %v8511 = vadd.f32 %v8309, %v8377
        %v8512 = vadd.f32 %v8310, %v8427
        %v8513 = vadd.f32 %v8311, %v8427
        %v8514 = vadd.f32 %v8312, %v8377
        %v8515 = vadd.f32 %v8313, %v8427
        %v8516 = vadd.f32 %v8314, %v8427
        %v8517 = vld [vmem:[%s3 + $0x5] sm:$0x1]
        %v8518 = vlaneseq
        %v8519 = vshrl.u32 %v8518, 7
        %v8520 = vsub.s32 0, %v8519
        %v8521 = vrot.slane %v8517, %v8520
        %v8522 = vmul.f32 %v8521, 0.0
        %v8523 = vmul.f32 %v2010, %v8521
        %v8524 = vmul.f32 %v2012, %v8521
        %v8525 = vmul.f32 %v2015, %v8521
        %v8526 = vmul.f32 %v2017, %v8521
        %v8527 = vmul.f32 %v2020, %v8521
        %v8528 = vmul.f32 %v2022, %v8521
        %v8529 = vmul.f32 %v2025, %v8521
        %v8530 = vmul.f32 %v2027, %v8521
        %v8531 = vmul.f32 %v2030, %v8521
        %v8532 = vmul.f32 %v2032, %v8521
        %v8533 = vmul.f32 %v2035, %v8521
        %v8534 = vmul.f32 %v2037, %v8521
        %v8535 = vmul.f32 %v2040, %v8521
        %v8536 = vmul.f32 %v2042, %v8521
        %v8537 = vmul.f32 %v2045, %v8521
        %v8538 = vmul.f32 %v2047, %v8521
        %v8539 = vmul.f32 %v2050, %v8521
        %v8540 = vmul.f32 %v2052, %v8521
        %v8541 = vmul.f32 %v2055, %v8521
        %v8542 = vmul.f32 %v2057, %v8521
        %v8543 = vmul.f32 %v2060, %v8521
        %v8544 = vmul.f32 %v2062, %v8521
        %v8545 = vmul.f32 %v2065, %v8521
        %v8546 = vmul.f32 %v2067, %v8521
        %v8547 = vmul.f32 %v2070, %v8521
        %v8548 = vmul.f32 %v2072, %v8521
        %vm8576 = vcmask 1042432
        %v8577 = vrot.slane %v8522, 5
        %v8578 = vsel %vm8576, %v8577, %v8577
        %v8579 = vrot.slane %v8523, 5
        %v8580 = vrot.slane %v8524, 5
        %v8581 = vsel %vm8576, %v8579, %v8580
        %v8582 = vsel %vm8576, %v8580, %v8577
        %v8583 = vrot.slane %v8525, 5
        %v8584 = vrot.slane %v8526, 5
        %v8585 = vsel %vm8576, %v8583, %v8584
        %v8586 = vsel %vm8576, %v8584, %v8577
        %v8587 = vrot.slane %v8527, 5
        %v8588 = vrot.slane %v8528, 5
        %v8589 = vsel %vm8576, %v8587, %v8588
        %v8590 = vsel %vm8576, %v8588, %v8577
        %v8591 = vrot.slane %v8529, 5
        %v8592 = vrot.slane %v8530, 5
        %v8593 = vsel %vm8576, %v8591, %v8592
        %v8594 = vsel %vm8576, %v8592, %v8577
        %v8595 = vrot.slane %v8531, 5
        %v8596 = vrot.slane %v8532, 5
        %v8597 = vsel %vm8576, %v8595, %v8596
        %v8598 = vsel %vm8576, %v8596, %v8577
        %v8599 = vrot.slane %v8533, 5
        %v8600 = vrot.slane %v8534, 5
        %v8601 = vsel %vm8576, %v8599, %v8600
        %v8602 = vsel %vm8576, %v8600, %v8577
        %v8603 = vrot.slane %v8535, 5
        %v8604 = vrot.slane %v8536, 5
        %v8605 = vsel %vm8576, %v8603, %v8604
        %v8606 = vsel %vm8576, %v8604, %v8577
        %v8607 = vrot.slane %v8537, 5
        %v8608 = vrot.slane %v8538, 5
        %v8609 = vsel %vm8576, %v8607, %v8608
        %v8610 = vsel %vm8576, %v8608, %v8577
        %v8611 = vrot.slane %v8539, 5
        %v8612 = vrot.slane %v8540, 5
        %v8613 = vsel %vm8576, %v8611, %v8612
        %v8614 = vsel %vm8576, %v8612, %v8577
        %v8615 = vrot.slane %v8541, 5
        %v8616 = vrot.slane %v8542, 5
        %v8617 = vsel %vm8576, %v8615, %v8616
        %v8618 = vsel %vm8576, %v8616, %v8577
        %v8619 = vrot.slane %v8543, 5
        %v8620 = vrot.slane %v8544, 5
        %v8621 = vsel %vm8576, %v8619, %v8620
        %v8622 = vsel %vm8576, %v8620, %v8577
        %v8623 = vrot.slane %v8545, 5
        %v8624 = vrot.slane %v8546, 5
        %v8625 = vsel %vm8576, %v8623, %v8624
        %v8626 = vsel %vm8576, %v8624, %v8577
        %v8627 = vrot.slane %v8547, 5
        %v8628 = vrot.slane %v8548, 5
        %v8629 = vsel %vm8576, %v8627, %v8628
        %v8630 = vsel %vm8576, %v8628, %v8577
        %v8672 = vadd.f32 %v8469, %v8577
        %v8673 = vadd.f32 %v8470, %v8578
        %v8674 = vadd.f32 %v8471, %v8578
        %v8675 = vadd.f32 %v8472, %v8577
        %v8676 = vadd.f32 %v8473, %v8578
        %v8677 = vadd.f32 %v8474, %v8578
        %v8678 = vadd.f32 %v8475, %v8577
        %v8679 = vadd.f32 %v8476, %v8578
        %v8680 = vadd.f32 %v8477, %v8578
        %v8681 = vadd.f32 %v8478, %v8579
        %v8682 = vadd.f32 %v8479, %v8581
        %v8683 = vadd.f32 %v8480, %v8582
        %v8684 = vadd.f32 %v8481, %v8583
        %v8685 = vadd.f32 %v8482, %v8585
        %v8686 = vadd.f32 %v8483, %v8586
        %v8687 = vadd.f32 %v8484, %v8587
        %v8688 = vadd.f32 %v8485, %v8589
        %v8689 = vadd.f32 %v8486, %v8590
        %v8690 = vadd.f32 %v8487, %v8591
        %v8691 = vadd.f32 %v8488, %v8593
        %v8692 = vadd.f32 %v8489, %v8594
        %v8693 = vadd.f32 %v8490, %v8595
        %v8694 = vadd.f32 %v8491, %v8597
        %v8695 = vadd.f32 %v8492, %v8598
        %v8696 = vadd.f32 %v8493, %v8599
        %v8697 = vadd.f32 %v8494, %v8601
        %v8698 = vadd.f32 %v8495, %v8602
        %v8699 = vadd.f32 %v8496, %v8603
        %v8700 = vadd.f32 %v8497, %v8605
        %v8701 = vadd.f32 %v8498, %v8606
        %v8702 = vadd.f32 %v8499, %v8607
        %v8703 = vadd.f32 %v8500, %v8609
        %v8704 = vadd.f32 %v8501, %v8610
        %v8705 = vadd.f32 %v8502, %v8611
        %v8706 = vadd.f32 %v8503, %v8613
        %v8707 = vadd.f32 %v8504, %v8614
        %v8708 = vadd.f32 %v8505, %v8615
        %v8709 = vadd.f32 %v8506, %v8617
        %v8710 = vadd.f32 %v8507, %v8618
        %v8711 = vadd.f32 %v8508, %v8619
        %v8712 = vadd.f32 %v8509, %v8621
        %v8713 = vadd.f32 %v8510, %v8622
        %v8714 = vadd.f32 %v8511, %v8623
        %v8715 = vadd.f32 %v8512, %v8625
        %v8716 = vadd.f32 %v8513, %v8626
        %v8717 = vadd.f32 %v8514, %v8627
        %v8718 = vadd.f32 %v8515, %v8629
        %v8719 = vadd.f32 %v8516, %v8630
        %v8720 = vld [vmem:[%s3 + $0xc] sm:$0x1]
        %v8721 = vlaneseq
        %v8722 = vshrl.u32 %v8721, 7
        %v8723 = vsub.s32 0, %v8722
        %v8724 = vrot.slane %v8720, %v8723
        %v8725 = vmul.f32 %v8724, 0.0
        %v8726 = vmul.f32 %v2010, %v8724
        %v8727 = vmul.f32 %v2012, %v8724
        %v8728 = vmul.f32 %v2015, %v8724
        %v8729 = vmul.f32 %v2017, %v8724
        %v8730 = vmul.f32 %v2020, %v8724
        %v8731 = vmul.f32 %v2022, %v8724
        %v8732 = vmul.f32 %v2025, %v8724
        %v8733 = vmul.f32 %v2027, %v8724
        %v8734 = vmul.f32 %v2030, %v8724
        %v8735 = vmul.f32 %v2032, %v8724
        %v8736 = vmul.f32 %v2035, %v8724
        %v8737 = vmul.f32 %v2037, %v8724
        %v8738 = vmul.f32 %v2040, %v8724
        %v8739 = vmul.f32 %v2042, %v8724
        %v8740 = vmul.f32 %v2045, %v8724
        %v8741 = vmul.f32 %v2047, %v8724
        %v8742 = vmul.f32 %v2050, %v8724
        %v8743 = vmul.f32 %v2052, %v8724
        %v8744 = vmul.f32 %v2055, %v8724
        %v8745 = vmul.f32 %v2057, %v8724
        %v8746 = vmul.f32 %v2060, %v8724
        %v8747 = vmul.f32 %v2062, %v8724
        %v8748 = vmul.f32 %v2065, %v8724
        %v8749 = vmul.f32 %v2067, %v8724
        %v8750 = vmul.f32 %v2070, %v8724
        %v8751 = vmul.f32 %v2072, %v8724
        %v8752 = vmul.f32 %v2075, %v8724
        %v8753 = vmul.f32 %v2077, %v8724
        %v8783 = vrot.slane %v8725, 5
        %v8784 = vsel %vm8576, %v8783, %v8783
        %v8785 = vrot.slane %v8726, 5
        %v8786 = vrot.slane %v8727, 5
        %v8787 = vsel %vm8576, %v8785, %v8786
        %v8788 = vsel %vm8576, %v8786, %v8783
        %v8789 = vrot.slane %v8728, 5
        %v8790 = vrot.slane %v8729, 5
        %v8791 = vsel %vm8576, %v8789, %v8790
        %v8792 = vsel %vm8576, %v8790, %v8783
        %v8793 = vrot.slane %v8730, 5
        %v8794 = vrot.slane %v8731, 5
        %v8795 = vsel %vm8576, %v8793, %v8794
        %v8796 = vsel %vm8576, %v8794, %v8783
        %v8797 = vrot.slane %v8732, 5
        %v8798 = vrot.slane %v8733, 5
        %v8799 = vsel %vm8576, %v8797, %v8798
        %v8800 = vsel %vm8576, %v8798, %v8783
        %v8801 = vrot.slane %v8734, 5
        %v8802 = vrot.slane %v8735, 5
        %v8803 = vsel %vm8576, %v8801, %v8802
        %v8804 = vsel %vm8576, %v8802, %v8783
        %v8805 = vrot.slane %v8736, 5
        %v8806 = vrot.slane %v8737, 5
        %v8807 = vsel %vm8576, %v8805, %v8806
        %v8808 = vsel %vm8576, %v8806, %v8783
        %v8809 = vrot.slane %v8738, 5
        %v8810 = vrot.slane %v8739, 5
        %v8811 = vsel %vm8576, %v8809, %v8810
        %v8812 = vsel %vm8576, %v8810, %v8783
        %v8813 = vrot.slane %v8740, 5
        %v8814 = vrot.slane %v8741, 5
        %v8815 = vsel %vm8576, %v8813, %v8814
        %v8816 = vsel %vm8576, %v8814, %v8783
        %v8817 = vrot.slane %v8742, 5
        %v8818 = vrot.slane %v8743, 5
        %v8819 = vsel %vm8576, %v8817, %v8818
        %v8820 = vsel %vm8576, %v8818, %v8783
        %v8821 = vrot.slane %v8744, 5
        %v8822 = vrot.slane %v8745, 5
        %v8823 = vsel %vm8576, %v8821, %v8822
        %v8824 = vsel %vm8576, %v8822, %v8783
        %v8825 = vrot.slane %v8746, 5
        %v8826 = vrot.slane %v8747, 5
        %v8827 = vsel %vm8576, %v8825, %v8826
        %v8828 = vsel %vm8576, %v8826, %v8783
        %v8829 = vrot.slane %v8748, 5
        %v8830 = vrot.slane %v8749, 5
        %v8831 = vsel %vm8576, %v8829, %v8830
        %v8832 = vsel %vm8576, %v8830, %v8783
        %v8833 = vrot.slane %v8750, 5
        %v8834 = vrot.slane %v8751, 5
        %v8835 = vsel %vm8576, %v8833, %v8834
        %v8836 = vsel %vm8576, %v8834, %v8783
        %v8837 = vrot.slane %v8752, 5
        %v8838 = vrot.slane %v8753, 5
        %v8839 = vsel %vm8576, %v8837, %v8838
        %v8840 = vsel %vm8576, %v8838, %v8783
        %v8885 = vadd.f32 %v8672, %v8783
        %v8886 = vadd.f32 %v8673, %v8784
        %v8887 = vadd.f32 %v8674, %v8784
        %v8888 = vadd.f32 %v8675, %v8783
        %v8889 = vadd.f32 %v8676, %v8784
        %v8890 = vadd.f32 %v8677, %v8784
        %v8891 = vadd.f32 %v8678, %v8785
        %v8892 = vadd.f32 %v8679, %v8787
        %v8893 = vadd.f32 %v8680, %v8788
        %v8894 = vadd.f32 %v8681, %v8789
        %v8895 = vadd.f32 %v8682, %v8791
        %v8896 = vadd.f32 %v8683, %v8792
        %v8897 = vadd.f32 %v8684, %v8793
        %v8898 = vadd.f32 %v8685, %v8795
        %v8899 = vadd.f32 %v8686, %v8796
        %v8900 = vadd.f32 %v8687, %v8797
        %v8901 = vadd.f32 %v8688, %v8799
        %v8902 = vadd.f32 %v8689, %v8800
        %v8903 = vadd.f32 %v8690, %v8801
        %v8904 = vadd.f32 %v8691, %v8803
        %v8905 = vadd.f32 %v8692, %v8804
        %v8906 = vadd.f32 %v8693, %v8805
        %v8907 = vadd.f32 %v8694, %v8807
        %v8908 = vadd.f32 %v8695, %v8808
        %v8909 = vadd.f32 %v8696, %v8809
        %v8910 = vadd.f32 %v8697, %v8811
        %v8911 = vadd.f32 %v8698, %v8812
        %v8912 = vadd.f32 %v8699, %v8813
        %v8913 = vadd.f32 %v8700, %v8815
        %v8914 = vadd.f32 %v8701, %v8816
        %v8915 = vadd.f32 %v8702, %v8817
        %v8916 = vadd.f32 %v8703, %v8819
        %v8917 = vadd.f32 %v8704, %v8820
        %v8918 = vadd.f32 %v8705, %v8821
        %v8919 = vadd.f32 %v8706, %v8823
        %v8920 = vadd.f32 %v8707, %v8824
        %v8921 = vadd.f32 %v8708, %v8825
        %v8922 = vadd.f32 %v8709, %v8827
        %v8923 = vadd.f32 %v8710, %v8828
        %v8924 = vadd.f32 %v8711, %v8829
        %v8925 = vadd.f32 %v8712, %v8831
        %v8926 = vadd.f32 %v8713, %v8832
        %v8927 = vadd.f32 %v8714, %v8833
        %v8928 = vadd.f32 %v8715, %v8835
        %v8929 = vadd.f32 %v8716, %v8836
        %v8930 = vadd.f32 %v8717, %v8837
        %v8931 = vadd.f32 %v8718, %v8839
        %v8932 = vadd.f32 %v8719, %v8840
        %v8933 = vld [vmem:[%s3 + $0x13] sm:$0x1]
        %v8934 = vlaneseq
        %v8935 = vshrl.u32 %v8934, 7
        %v8936 = vsub.s32 0, %v8935
        %v8937 = vrot.slane %v8933, %v8936
        %v8938 = vmul.f32 %v8937, 0.0
        %v8939 = vmul.f32 %v2010, %v8937
        %v8940 = vmul.f32 %v2012, %v8937
        %v8941 = vmul.f32 %v2015, %v8937
        %v8942 = vmul.f32 %v2017, %v8937
        %v8943 = vmul.f32 %v2020, %v8937
        %v8944 = vmul.f32 %v2022, %v8937
        %v8945 = vmul.f32 %v2025, %v8937
        %v8946 = vmul.f32 %v2027, %v8937
        %v8947 = vmul.f32 %v2030, %v8937
        %v8948 = vmul.f32 %v2032, %v8937
        %v8949 = vmul.f32 %v2035, %v8937
        %v8950 = vmul.f32 %v2037, %v8937
        %v8951 = vmul.f32 %v2040, %v8937
        %v8952 = vmul.f32 %v2042, %v8937
        %v8953 = vmul.f32 %v2045, %v8937
        %v8954 = vmul.f32 %v2047, %v8937
        %v8955 = vmul.f32 %v2050, %v8937
        %v8956 = vmul.f32 %v2052, %v8937
        %v8957 = vmul.f32 %v2055, %v8937
        %v8958 = vmul.f32 %v2057, %v8937
        %v8959 = vmul.f32 %v2060, %v8937
        %v8960 = vmul.f32 %v2062, %v8937
        %v8961 = vmul.f32 %v2065, %v8937
        %v8962 = vmul.f32 %v2067, %v8937
        %v8963 = vmul.f32 %v2070, %v8937
        %v8964 = vmul.f32 %v2072, %v8937
        %v8965 = vmul.f32 %v2075, %v8937
        %v8966 = vmul.f32 %v2077, %v8937
        %v8967 = vmul.f32 %v2080, %v8937
        %v8968 = vmul.f32 %v2082, %v8937
        %v9000 = vrot.slane %v8938, 5
        %v9001 = vsel %vm8576, %v9000, %v9000
        %v9002 = vrot.slane %v8939, 5
        %v9003 = vrot.slane %v8940, 5
        %v9004 = vsel %vm8576, %v9002, %v9003
        %v9005 = vsel %vm8576, %v9003, %v9000
        %v9006 = vrot.slane %v8941, 5
        %v9007 = vrot.slane %v8942, 5
        %v9008 = vsel %vm8576, %v9006, %v9007
        %v9009 = vsel %vm8576, %v9007, %v9000
        %v9010 = vrot.slane %v8943, 5
        %v9011 = vrot.slane %v8944, 5
        %v9012 = vsel %vm8576, %v9010, %v9011
        %v9013 = vsel %vm8576, %v9011, %v9000
        %v9014 = vrot.slane %v8945, 5
        %v9015 = vrot.slane %v8946, 5
        %v9016 = vsel %vm8576, %v9014, %v9015
        %v9017 = vsel %vm8576, %v9015, %v9000
        %v9018 = vrot.slane %v8947, 5
        %v9019 = vrot.slane %v8948, 5
        %v9020 = vsel %vm8576, %v9018, %v9019
        %v9021 = vsel %vm8576, %v9019, %v9000
        %v9022 = vrot.slane %v8949, 5
        %v9023 = vrot.slane %v8950, 5
        %v9024 = vsel %vm8576, %v9022, %v9023
        %v9025 = vsel %vm8576, %v9023, %v9000
        %v9026 = vrot.slane %v8951, 5
        %v9027 = vrot.slane %v8952, 5
        %v9028 = vsel %vm8576, %v9026, %v9027
        %v9029 = vsel %vm8576, %v9027, %v9000
        %v9030 = vrot.slane %v8953, 5
        %v9031 = vrot.slane %v8954, 5
        %v9032 = vsel %vm8576, %v9030, %v9031
        %v9033 = vsel %vm8576, %v9031, %v9000
        %v9034 = vrot.slane %v8955, 5
        %v9035 = vrot.slane %v8956, 5
        %v9036 = vsel %vm8576, %v9034, %v9035
        %v9037 = vsel %vm8576, %v9035, %v9000
        %v9038 = vrot.slane %v8957, 5
        %v9039 = vrot.slane %v8958, 5
        %v9040 = vsel %vm8576, %v9038, %v9039
        %v9041 = vsel %vm8576, %v9039, %v9000
        %v9042 = vrot.slane %v8959, 5
        %v9043 = vrot.slane %v8960, 5
        %v9044 = vsel %vm8576, %v9042, %v9043
        %v9045 = vsel %vm8576, %v9043, %v9000
        %v9046 = vrot.slane %v8961, 5
        %v9047 = vrot.slane %v8962, 5
        %v9048 = vsel %vm8576, %v9046, %v9047
        %v9049 = vsel %vm8576, %v9047, %v9000
        %v9050 = vrot.slane %v8963, 5
        %v9051 = vrot.slane %v8964, 5
        %v9052 = vsel %vm8576, %v9050, %v9051
        %v9053 = vsel %vm8576, %v9051, %v9000
        %v9054 = vrot.slane %v8965, 5
        %v9055 = vrot.slane %v8966, 5
        %v9056 = vsel %vm8576, %v9054, %v9055
        %v9057 = vsel %vm8576, %v9055, %v9000
        %v9058 = vrot.slane %v8967, 5
        %v9059 = vrot.slane %v8968, 5
        %v9060 = vsel %vm8576, %v9058, %v9059
        %v9061 = vsel %vm8576, %v9059, %v9000
        %v9109 = vadd.f32 %v8885, %v9000
        %v9110 = vadd.f32 %v8886, %v9001
        %v9111 = vadd.f32 %v8887, %v9001
        %v9112 = vadd.f32 %v8888, %v9002
        %v9113 = vadd.f32 %v8889, %v9004
        %v9114 = vadd.f32 %v8890, %v9005
        %v9115 = vadd.f32 %v8891, %v9006
        %v9116 = vadd.f32 %v8892, %v9008
        %v9117 = vadd.f32 %v8893, %v9009
        %v9118 = vadd.f32 %v8894, %v9010
        %v9119 = vadd.f32 %v8895, %v9012
        %v9120 = vadd.f32 %v8896, %v9013
        %v9121 = vadd.f32 %v8897, %v9014
        %v9122 = vadd.f32 %v8898, %v9016
        %v9123 = vadd.f32 %v8899, %v9017
        %v9124 = vadd.f32 %v8900, %v9018
        %v9125 = vadd.f32 %v8901, %v9020
        %v9126 = vadd.f32 %v8902, %v9021
        %v9127 = vadd.f32 %v8903, %v9022
        %v9128 = vadd.f32 %v8904, %v9024
        %v9129 = vadd.f32 %v8905, %v9025
        %v9130 = vadd.f32 %v8906, %v9026
        %v9131 = vadd.f32 %v8907, %v9028
        %v9132 = vadd.f32 %v8908, %v9029
        %v9133 = vadd.f32 %v8909, %v9030
        %v9134 = vadd.f32 %v8910, %v9032
        %v9135 = vadd.f32 %v8911, %v9033
        %v9136 = vadd.f32 %v8912, %v9034
        %v9137 = vadd.f32 %v8913, %v9036
        %v9138 = vadd.f32 %v8914, %v9037
        %v9139 = vadd.f32 %v8915, %v9038
        %v9140 = vadd.f32 %v8916, %v9040
        %v9141 = vadd.f32 %v8917, %v9041
        %v9142 = vadd.f32 %v8918, %v9042
        %v9143 = vadd.f32 %v8919, %v9044
        %v9144 = vadd.f32 %v8920, %v9045
        %v9145 = vadd.f32 %v8921, %v9046
        %v9146 = vadd.f32 %v8922, %v9048
        %v9147 = vadd.f32 %v8923, %v9049
        %v9148 = vadd.f32 %v8924, %v9050
        %v9149 = vadd.f32 %v8925, %v9052
        %v9150 = vadd.f32 %v8926, %v9053
        %v9151 = vadd.f32 %v8927, %v9054
        %v9152 = vadd.f32 %v8928, %v9056
        %v9153 = vadd.f32 %v8929, %v9057
        %v9154 = vadd.f32 %v8930, %v9058
        %v9155 = vadd.f32 %v8931, %v9060
        %v9156 = vadd.f32 %v8932, %v9061
        %v9157 = vld [vmem:[%s3 + $0x1a] sm:$0x1]
        %v9158 = vlaneseq
        %v9159 = vshrl.u32 %v9158, 7
        %v9160 = vsub.s32 0, %v9159
        %v9161 = vrot.slane %v9157, %v9160
        %v9162 = vmul.f32 %v2010, %v9161
        %v9163 = vmul.f32 %v2012, %v9161
        %v9164 = vmul.f32 %v9161, 0.0
        %v9165 = vmul.f32 %v2015, %v9161
        %v9166 = vmul.f32 %v2017, %v9161
        %v9167 = vmul.f32 %v2020, %v9161
        %v9168 = vmul.f32 %v2022, %v9161
        %v9169 = vmul.f32 %v2025, %v9161
        %v9170 = vmul.f32 %v2027, %v9161
        %v9171 = vmul.f32 %v2030, %v9161
        %v9172 = vmul.f32 %v2032, %v9161
        %v9173 = vmul.f32 %v2035, %v9161
        %v9174 = vmul.f32 %v2037, %v9161
        %v9175 = vmul.f32 %v2040, %v9161
        %v9176 = vmul.f32 %v2042, %v9161
        %v9177 = vmul.f32 %v2045, %v9161
        %v9178 = vmul.f32 %v2047, %v9161
        %v9179 = vmul.f32 %v2050, %v9161
        %v9180 = vmul.f32 %v2052, %v9161
        %v9181 = vmul.f32 %v2055, %v9161
        %v9182 = vmul.f32 %v2057, %v9161
        %v9183 = vmul.f32 %v2060, %v9161
        %v9184 = vmul.f32 %v2062, %v9161
        %v9185 = vmul.f32 %v2065, %v9161
        %v9186 = vmul.f32 %v2067, %v9161
        %v9187 = vmul.f32 %v2070, %v9161
        %v9188 = vmul.f32 %v2072, %v9161
        %v9189 = vmul.f32 %v2075, %v9161
        %v9190 = vmul.f32 %v2077, %v9161
        %v9191 = vmul.f32 %v2080, %v9161
        %v9192 = vmul.f32 %v2082, %v9161
        %v9193 = vmul.f32 %v2085, %v9161
        %v9194 = vmul.f32 %v2087, %v9161
        %v9228 = vrot.slane %v9162, 5
        %v9229 = vrot.slane %v9163, 5
        %v9230 = vsel %vm8576, %v9228, %v9229
        %v9231 = vrot.slane %v9164, 5
        %v9232 = vsel %vm8576, %v9229, %v9231
        %v9233 = vrot.slane %v9165, 5
        %v9234 = vrot.slane %v9166, 5
        %v9235 = vsel %vm8576, %v9233, %v9234
        %v9236 = vsel %vm8576, %v9234, %v9231
        %v9237 = vrot.slane %v9167, 5
        %v9238 = vrot.slane %v9168, 5
        %v9239 = vsel %vm8576, %v9237, %v9238
        %v9240 = vsel %vm8576, %v9238, %v9231
        %v9241 = vrot.slane %v9169, 5
        %v9242 = vrot.slane %v9170, 5
        %v9243 = vsel %vm8576, %v9241, %v9242
        %v9244 = vsel %vm8576, %v9242, %v9231
        %v9245 = vrot.slane %v9171, 5
        %v9246 = vrot.slane %v9172, 5
        %v9247 = vsel %vm8576, %v9245, %v9246
        %v9248 = vsel %vm8576, %v9246, %v9231
        %v9249 = vrot.slane %v9173, 5
        %v9250 = vrot.slane %v9174, 5
        %v9251 = vsel %vm8576, %v9249, %v9250
        %v9252 = vsel %vm8576, %v9250, %v9231
        %v9253 = vrot.slane %v9175, 5
        %v9254 = vrot.slane %v9176, 5
        %v9255 = vsel %vm8576, %v9253, %v9254
        %v9256 = vsel %vm8576, %v9254, %v9231
        %v9257 = vrot.slane %v9177, 5
        %v9258 = vrot.slane %v9178, 5
        %v9259 = vsel %vm8576, %v9257, %v9258
        %v9260 = vsel %vm8576, %v9258, %v9231
        %v9261 = vrot.slane %v9179, 5
        %v9262 = vrot.slane %v9180, 5
        %v9263 = vsel %vm8576, %v9261, %v9262
        %v9264 = vsel %vm8576, %v9262, %v9231
        %v9265 = vrot.slane %v9181, 5
        %v9266 = vrot.slane %v9182, 5
        %v9267 = vsel %vm8576, %v9265, %v9266
        %v9268 = vsel %vm8576, %v9266, %v9231
        %v9269 = vrot.slane %v9183, 5
        %v9270 = vrot.slane %v9184, 5
        %v9271 = vsel %vm8576, %v9269, %v9270
        %v9272 = vsel %vm8576, %v9270, %v9231
        %v9273 = vrot.slane %v9185, 5
        %v9274 = vrot.slane %v9186, 5
        %v9275 = vsel %vm8576, %v9273, %v9274
        %v9276 = vsel %vm8576, %v9274, %v9231
        %v9277 = vrot.slane %v9187, 5
        %v9278 = vrot.slane %v9188, 5
        %v9279 = vsel %vm8576, %v9277, %v9278
        %v9280 = vsel %vm8576, %v9278, %v9231
        %v9281 = vrot.slane %v9189, 5
        %v9282 = vrot.slane %v9190, 5
        %v9283 = vsel %vm8576, %v9281, %v9282
        %v9284 = vsel %vm8576, %v9282, %v9231
        %v9285 = vrot.slane %v9191, 5
        %v9286 = vrot.slane %v9192, 5
        %v9287 = vsel %vm8576, %v9285, %v9286
        %v9288 = vsel %vm8576, %v9286, %v9231
        %v9289 = vrot.slane %v9193, 5
        %v9290 = vrot.slane %v9194, 5
        %v9291 = vsel %vm8576, %v9289, %v9290
        %v9292 = vsel %vm8576, %v9290, %v9231
        %v9341 = vadd.f32 %v9109, %v9228
        %v9342 = vadd.f32 %v9110, %v9230
        %v9343 = vadd.f32 %v9111, %v9232
        %v9344 = vadd.f32 %v9112, %v9233
        %v9345 = vadd.f32 %v9113, %v9235
        %v9346 = vadd.f32 %v9114, %v9236
        %v9347 = vadd.f32 %v9115, %v9237
        %v9348 = vadd.f32 %v9116, %v9239
        %v9349 = vadd.f32 %v9117, %v9240
        %v9350 = vadd.f32 %v9118, %v9241
        %v9351 = vadd.f32 %v9119, %v9243
        %v9352 = vadd.f32 %v9120, %v9244
        %v9353 = vadd.f32 %v9121, %v9245
        %v9354 = vadd.f32 %v9122, %v9247
        %v9355 = vadd.f32 %v9123, %v9248
        %v9356 = vadd.f32 %v9124, %v9249
        %v9357 = vadd.f32 %v9125, %v9251
        %v9358 = vadd.f32 %v9126, %v9252
        %v9359 = vadd.f32 %v9127, %v9253
        %v9360 = vadd.f32 %v9128, %v9255
        %v9361 = vadd.f32 %v9129, %v9256
        %v9362 = vadd.f32 %v9130, %v9257
        %v9363 = vadd.f32 %v9131, %v9259
        %v9364 = vadd.f32 %v9132, %v9260
        %v9365 = vadd.f32 %v9133, %v9261
        %v9366 = vadd.f32 %v9134, %v9263
        %v9367 = vadd.f32 %v9135, %v9264
        %v9368 = vadd.f32 %v9136, %v9265
        %v9369 = vadd.f32 %v9137, %v9267
        %v9370 = vadd.f32 %v9138, %v9268
        %v9371 = vadd.f32 %v9139, %v9269
        %v9372 = vadd.f32 %v9140, %v9271
        %v9373 = vadd.f32 %v9141, %v9272
        %v9374 = vadd.f32 %v9142, %v9273
        %v9375 = vadd.f32 %v9143, %v9275
        %v9376 = vadd.f32 %v9144, %v9276
        %v9377 = vadd.f32 %v9145, %v9277
        %v9378 = vadd.f32 %v9146, %v9279
        %v9379 = vadd.f32 %v9147, %v9280
        %v9380 = vadd.f32 %v9148, %v9281
        %v9381 = vadd.f32 %v9149, %v9283
        %v9382 = vadd.f32 %v9150, %v9284
        %v9383 = vadd.f32 %v9151, %v9285
        %v9384 = vadd.f32 %v9152, %v9287
        %v9385 = vadd.f32 %v9153, %v9288
        %v9386 = vadd.f32 %v9154, %v9289
        %v9387 = vadd.f32 %v9155, %v9291
        %v9388 = vadd.f32 %v9156, %v9292
        %v9389 = vld [vmem:[%s3 + $0x21] sm:$0x1]
        %v9390 = vlaneseq
        %v9391 = vshrl.u32 %v9390, 7
        %v9392 = vsub.s32 0, %v9391
        %v9393 = vrot.slane %v9389, %v9392
        %v9394 = vmul.f32 %v2015, %v9393
        %v9395 = vmul.f32 %v2017, %v9393
        %v9396 = vmul.f32 %v9393, 0.0
        %v9397 = vmul.f32 %v2020, %v9393
        %v9398 = vmul.f32 %v2022, %v9393
        %v9399 = vmul.f32 %v2025, %v9393
        %v9400 = vmul.f32 %v2027, %v9393
        %v9401 = vmul.f32 %v2030, %v9393
        %v9402 = vmul.f32 %v2032, %v9393
        %v9403 = vmul.f32 %v2035, %v9393
        %v9404 = vmul.f32 %v2037, %v9393
        %v9405 = vmul.f32 %v2040, %v9393
        %v9406 = vmul.f32 %v2042, %v9393
        %v9407 = vmul.f32 %v2045, %v9393
        %v9408 = vmul.f32 %v2047, %v9393
        %v9409 = vmul.f32 %v2050, %v9393
        %v9410 = vmul.f32 %v2052, %v9393
        %v9411 = vmul.f32 %v2055, %v9393
        %v9412 = vmul.f32 %v2057, %v9393
        %v9413 = vmul.f32 %v2060, %v9393
        %v9414 = vmul.f32 %v2062, %v9393
        %v9415 = vmul.f32 %v2065, %v9393
        %v9416 = vmul.f32 %v2067, %v9393
        %v9417 = vmul.f32 %v2070, %v9393
        %v9418 = vmul.f32 %v2072, %v9393
        %v9419 = vmul.f32 %v2075, %v9393
        %v9420 = vmul.f32 %v2077, %v9393
        %v9421 = vmul.f32 %v2080, %v9393
        %v9422 = vmul.f32 %v2082, %v9393
        %v9423 = vmul.f32 %v2085, %v9393
        %v9424 = vmul.f32 %v2087, %v9393
        %v9456 = vrot.slane %v9394, 5
        %v9457 = vrot.slane %v9395, 5
        %v9458 = vsel %vm8576, %v9456, %v9457
        %v9459 = vrot.slane %v9396, 5
        %v9460 = vsel %vm8576, %v9457, %v9459
        %v9461 = vrot.slane %v9397, 5
        %v9462 = vrot.slane %v9398, 5
        %v9463 = vsel %vm8576, %v9461, %v9462
        %v9464 = vsel %vm8576, %v9462, %v9459
        %v9465 = vrot.slane %v9399, 5
        %v9466 = vrot.slane %v9400, 5
        %v9467 = vsel %vm8576, %v9465, %v9466
        %v9468 = vsel %vm8576, %v9466, %v9459
        %v9469 = vrot.slane %v9401, 5
        %v9470 = vrot.slane %v9402, 5
        %v9471 = vsel %vm8576, %v9469, %v9470
        %v9472 = vsel %vm8576, %v9470, %v9459
        %v9473 = vrot.slane %v9403, 5
        %v9474 = vrot.slane %v9404, 5
        %v9475 = vsel %vm8576, %v9473, %v9474
        %v9476 = vsel %vm8576, %v9474, %v9459
        %v9477 = vrot.slane %v9405, 5
        %v9478 = vrot.slane %v9406, 5
        %v9479 = vsel %vm8576, %v9477, %v9478
        %v9480 = vsel %vm8576, %v9478, %v9459
        %v9481 = vrot.slane %v9407, 5
        %v9482 = vrot.slane %v9408, 5
        %v9483 = vsel %vm8576, %v9481, %v9482
        %v9484 = vsel %vm8576, %v9482, %v9459
        %v9485 = vrot.slane %v9409, 5
        %v9486 = vrot.slane %v9410, 5
        %v9487 = vsel %vm8576, %v9485, %v9486
        %v9488 = vsel %vm8576, %v9486, %v9459
        %v9489 = vrot.slane %v9411, 5
        %v9490 = vrot.slane %v9412, 5
        %v9491 = vsel %vm8576, %v9489, %v9490
        %v9492 = vsel %vm8576, %v9490, %v9459
        %v9493 = vrot.slane %v9413, 5
        %v9494 = vrot.slane %v9414, 5
        %v9495 = vsel %vm8576, %v9493, %v9494
        %v9496 = vsel %vm8576, %v9494, %v9459
        %v9497 = vrot.slane %v9415, 5
        %v9498 = vrot.slane %v9416, 5
        %v9499 = vsel %vm8576, %v9497, %v9498
        %v9500 = vsel %vm8576, %v9498, %v9459
        %v9501 = vrot.slane %v9417, 5
        %v9502 = vrot.slane %v9418, 5
        %v9503 = vsel %vm8576, %v9501, %v9502
        %v9504 = vsel %vm8576, %v9502, %v9459
        %v9505 = vrot.slane %v9419, 5
        %v9506 = vrot.slane %v9420, 5
        %v9507 = vsel %vm8576, %v9505, %v9506
        %v9508 = vsel %vm8576, %v9506, %v9459
        %v9509 = vrot.slane %v9421, 5
        %v9510 = vrot.slane %v9422, 5
        %v9511 = vsel %vm8576, %v9509, %v9510
        %v9512 = vsel %vm8576, %v9510, %v9459
        %v9513 = vrot.slane %v9423, 5
        %v9514 = vrot.slane %v9424, 5
        %v9515 = vsel %vm8576, %v9513, %v9514
        %v9516 = vsel %vm8576, %v9514, %v9459
        %v9517 = vsel %vm8576, %v9459, %v9459
        %v9565 = vadd.f32 %v9341, %v9456
        %v9566 = vadd.f32 %v9342, %v9458
        %v9567 = vadd.f32 %v9343, %v9460
        %v9568 = vadd.f32 %v9344, %v9461
        %v9569 = vadd.f32 %v9345, %v9463
        %v9570 = vadd.f32 %v9346, %v9464
        %v9571 = vadd.f32 %v9347, %v9465
        %v9572 = vadd.f32 %v9348, %v9467
        %v9573 = vadd.f32 %v9349, %v9468
        %v9574 = vadd.f32 %v9350, %v9469
        %v9575 = vadd.f32 %v9351, %v9471
        %v9576 = vadd.f32 %v9352, %v9472
        %v9577 = vadd.f32 %v9353, %v9473
        %v9578 = vadd.f32 %v9354, %v9475
        %v9579 = vadd.f32 %v9355, %v9476
        %v9580 = vadd.f32 %v9356, %v9477
        %v9581 = vadd.f32 %v9357, %v9479
        %v9582 = vadd.f32 %v9358, %v9480
        %v9583 = vadd.f32 %v9359, %v9481
        %v9584 = vadd.f32 %v9360, %v9483
        %v9585 = vadd.f32 %v9361, %v9484
        %v9586 = vadd.f32 %v9362, %v9485
        %v9587 = vadd.f32 %v9363, %v9487
        %v9588 = vadd.f32 %v9364, %v9488
        %v9589 = vadd.f32 %v9365, %v9489
        %v9590 = vadd.f32 %v9366, %v9491
        %v9591 = vadd.f32 %v9367, %v9492
        %v9592 = vadd.f32 %v9368, %v9493
        %v9593 = vadd.f32 %v9369, %v9495
        %v9594 = vadd.f32 %v9370, %v9496
        %v9595 = vadd.f32 %v9371, %v9497
        %v9596 = vadd.f32 %v9372, %v9499
        %v9597 = vadd.f32 %v9373, %v9500
        %v9598 = vadd.f32 %v9374, %v9501
        %v9599 = vadd.f32 %v9375, %v9503
        %v9600 = vadd.f32 %v9376, %v9504
        %v9601 = vadd.f32 %v9377, %v9505
        %v9602 = vadd.f32 %v9378, %v9507
        %v9603 = vadd.f32 %v9379, %v9508
        %v9604 = vadd.f32 %v9380, %v9509
        %v9605 = vadd.f32 %v9381, %v9511
        %v9606 = vadd.f32 %v9382, %v9512
        %v9607 = vadd.f32 %v9383, %v9513
        %v9608 = vadd.f32 %v9384, %v9515
        %v9609 = vadd.f32 %v9385, %v9516
        %v9610 = vadd.f32 %v9386, %v9459
        %v9611 = vadd.f32 %v9387, %v9517
        %v9612 = vadd.f32 %v9388, %v9517
        %v9613 = vld [vmem:[%s3 + $0x28] sm:$0x1]
        %v9614 = vlaneseq
        %v9615 = vshrl.u32 %v9614, 7
        %v9616 = vsub.s32 0, %v9615
        %v9617 = vrot.slane %v9613, %v9616
        %v9618 = vmul.f32 %v2020, %v9617
        %v9619 = vmul.f32 %v2022, %v9617
        %v9620 = vmul.f32 %v9617, 0.0
        %v9621 = vmul.f32 %v2025, %v9617
        %v9622 = vmul.f32 %v2027, %v9617
        %v9623 = vmul.f32 %v2030, %v9617
        %v9624 = vmul.f32 %v2032, %v9617
        %v9625 = vmul.f32 %v2035, %v9617
        %v9626 = vmul.f32 %v2037, %v9617
        %v9627 = vmul.f32 %v2040, %v9617
        %v9628 = vmul.f32 %v2042, %v9617
        %v9629 = vmul.f32 %v2045, %v9617
        %v9630 = vmul.f32 %v2047, %v9617
        %v9631 = vmul.f32 %v2050, %v9617
        %v9632 = vmul.f32 %v2052, %v9617
        %v9633 = vmul.f32 %v2055, %v9617
        %v9634 = vmul.f32 %v2057, %v9617
        %v9635 = vmul.f32 %v2060, %v9617
        %v9636 = vmul.f32 %v2062, %v9617
        %v9637 = vmul.f32 %v2065, %v9617
        %v9638 = vmul.f32 %v2067, %v9617
        %v9639 = vmul.f32 %v2070, %v9617
        %v9640 = vmul.f32 %v2072, %v9617
        %v9641 = vmul.f32 %v2075, %v9617
        %v9642 = vmul.f32 %v2077, %v9617
        %v9643 = vmul.f32 %v2080, %v9617
        %v9644 = vmul.f32 %v2082, %v9617
        %v9645 = vmul.f32 %v2085, %v9617
        %v9646 = vmul.f32 %v2087, %v9617
        %v9676 = vrot.slane %v9618, 5
        %v9677 = vrot.slane %v9619, 5
        %v9678 = vsel %vm8576, %v9676, %v9677
        %v9679 = vrot.slane %v9620, 5
        %v9680 = vsel %vm8576, %v9677, %v9679
        %v9681 = vrot.slane %v9621, 5
        %v9682 = vrot.slane %v9622, 5
        %v9683 = vsel %vm8576, %v9681, %v9682
        %v9684 = vsel %vm8576, %v9682, %v9679
        %v9685 = vrot.slane %v9623, 5
        %v9686 = vrot.slane %v9624, 5
        %v9687 = vsel %vm8576, %v9685, %v9686
        %v9688 = vsel %vm8576, %v9686, %v9679
        %v9689 = vrot.slane %v9625, 5
        %v9690 = vrot.slane %v9626, 5
        %v9691 = vsel %vm8576, %v9689, %v9690
        %v9692 = vsel %vm8576, %v9690, %v9679
        %v9693 = vrot.slane %v9627, 5
        %v9694 = vrot.slane %v9628, 5
        %v9695 = vsel %vm8576, %v9693, %v9694
        %v9696 = vsel %vm8576, %v9694, %v9679
        %v9697 = vrot.slane %v9629, 5
        %v9698 = vrot.slane %v9630, 5
        %v9699 = vsel %vm8576, %v9697, %v9698
        %v9700 = vsel %vm8576, %v9698, %v9679
        %v9701 = vrot.slane %v9631, 5
        %v9702 = vrot.slane %v9632, 5
        %v9703 = vsel %vm8576, %v9701, %v9702
        %v9704 = vsel %vm8576, %v9702, %v9679
        %v9705 = vrot.slane %v9633, 5
        %v9706 = vrot.slane %v9634, 5
        %v9707 = vsel %vm8576, %v9705, %v9706
        %v9708 = vsel %vm8576, %v9706, %v9679
        %v9709 = vrot.slane %v9635, 5
        %v9710 = vrot.slane %v9636, 5
        %v9711 = vsel %vm8576, %v9709, %v9710
        %v9712 = vsel %vm8576, %v9710, %v9679
        %v9713 = vrot.slane %v9637, 5
        %v9714 = vrot.slane %v9638, 5
        %v9715 = vsel %vm8576, %v9713, %v9714
        %v9716 = vsel %vm8576, %v9714, %v9679
        %v9717 = vrot.slane %v9639, 5
        %v9718 = vrot.slane %v9640, 5
        %v9719 = vsel %vm8576, %v9717, %v9718
        %v9720 = vsel %vm8576, %v9718, %v9679
        %v9721 = vrot.slane %v9641, 5
        %v9722 = vrot.slane %v9642, 5
        %v9723 = vsel %vm8576, %v9721, %v9722
        %v9724 = vsel %vm8576, %v9722, %v9679
        %v9725 = vrot.slane %v9643, 5
        %v9726 = vrot.slane %v9644, 5
        %v9727 = vsel %vm8576, %v9725, %v9726
        %v9728 = vsel %vm8576, %v9726, %v9679
        %v9729 = vrot.slane %v9645, 5
        %v9730 = vrot.slane %v9646, 5
        %v9731 = vsel %vm8576, %v9729, %v9730
        %v9732 = vsel %vm8576, %v9730, %v9679
        %v9733 = vsel %vm8576, %v9679, %v9679
        %v9778 = vadd.f32 %v9565, %v9676
        %v9779 = vadd.f32 %v9566, %v9678
        %v9780 = vadd.f32 %v9567, %v9680
        %v9781 = vadd.f32 %v9568, %v9681
        %v9782 = vadd.f32 %v9569, %v9683
        %v9783 = vadd.f32 %v9570, %v9684
        %v9784 = vadd.f32 %v9571, %v9685
        %v9785 = vadd.f32 %v9572, %v9687
        %v9786 = vadd.f32 %v9573, %v9688
        %v9787 = vadd.f32 %v9574, %v9689
        %v9788 = vadd.f32 %v9575, %v9691
        %v9789 = vadd.f32 %v9576, %v9692
        %v9790 = vadd.f32 %v9577, %v9693
        %v9791 = vadd.f32 %v9578, %v9695
        %v9792 = vadd.f32 %v9579, %v9696
        %v9793 = vadd.f32 %v9580, %v9697
        %v9794 = vadd.f32 %v9581, %v9699
        %v9795 = vadd.f32 %v9582, %v9700
        %v9796 = vadd.f32 %v9583, %v9701
        %v9797 = vadd.f32 %v9584, %v9703
        %v9798 = vadd.f32 %v9585, %v9704
        %v9799 = vadd.f32 %v9586, %v9705
        %v9800 = vadd.f32 %v9587, %v9707
        %v9801 = vadd.f32 %v9588, %v9708
        %v9802 = vadd.f32 %v9589, %v9709
        %v9803 = vadd.f32 %v9590, %v9711
        %v9804 = vadd.f32 %v9591, %v9712
        %v9805 = vadd.f32 %v9592, %v9713
        %v9806 = vadd.f32 %v9593, %v9715
        %v9807 = vadd.f32 %v9594, %v9716
        %v9808 = vadd.f32 %v9595, %v9717
        %v9809 = vadd.f32 %v9596, %v9719
        %v9810 = vadd.f32 %v9597, %v9720
        %v9811 = vadd.f32 %v9598, %v9721
        %v9812 = vadd.f32 %v9599, %v9723
        %v9813 = vadd.f32 %v9600, %v9724
        %v9814 = vadd.f32 %v9601, %v9725
        %v9815 = vadd.f32 %v9602, %v9727
        %v9816 = vadd.f32 %v9603, %v9728
        %v9817 = vadd.f32 %v9604, %v9729
        %v9818 = vadd.f32 %v9605, %v9731
        %v9819 = vadd.f32 %v9606, %v9732
        %v9820 = vadd.f32 %v9607, %v9679
        %v9821 = vadd.f32 %v9608, %v9733
        %v9822 = vadd.f32 %v9609, %v9733
        %v9823 = vadd.f32 %v9610, %v9679
        %v9824 = vadd.f32 %v9611, %v9733
        %v9825 = vadd.f32 %v9612, %v9733
        %v9826 = vld [vmem:[%s3 + $0x2f] sm:$0x1]
        %v9827 = vlaneseq
        %v9828 = vshrl.u32 %v9827, 7
        %v9829 = vsub.s32 0, %v9828
        %v9830 = vrot.slane %v9826, %v9829
        %v9831 = vmul.f32 %v2025, %v9830
        %v9832 = vmul.f32 %v2027, %v9830
        %v9833 = vmul.f32 %v9830, 0.0
        %v9834 = vmul.f32 %v2030, %v9830
        %v9835 = vmul.f32 %v2032, %v9830
        %v9836 = vmul.f32 %v2035, %v9830
        %v9837 = vmul.f32 %v2037, %v9830
        %v9838 = vmul.f32 %v2040, %v9830
        %v9839 = vmul.f32 %v2042, %v9830
        %v9840 = vmul.f32 %v2045, %v9830
        %v9841 = vmul.f32 %v2047, %v9830
        %v9842 = vmul.f32 %v2050, %v9830
        %v9843 = vmul.f32 %v2052, %v9830
        %v9844 = vmul.f32 %v2055, %v9830
        %v9845 = vmul.f32 %v2057, %v9830
        %v9846 = vmul.f32 %v2060, %v9830
        %v9847 = vmul.f32 %v2062, %v9830
        %v9848 = vmul.f32 %v2065, %v9830
        %v9849 = vmul.f32 %v2067, %v9830
        %v9850 = vmul.f32 %v2070, %v9830
        %v9851 = vmul.f32 %v2072, %v9830
        %v9852 = vmul.f32 %v2075, %v9830
        %v9853 = vmul.f32 %v2077, %v9830
        %v9854 = vmul.f32 %v2080, %v9830
        %v9855 = vmul.f32 %v2082, %v9830
        %v9856 = vmul.f32 %v2085, %v9830
        %v9857 = vmul.f32 %v2087, %v9830
        %v9885 = vrot.slane %v9831, 5
        %v9886 = vrot.slane %v9832, 5
        %v9887 = vsel %vm8576, %v9885, %v9886
        %v9888 = vrot.slane %v9833, 5
        %v9889 = vsel %vm8576, %v9886, %v9888
        %v9890 = vrot.slane %v9834, 5
        %v9891 = vrot.slane %v9835, 5
        %v9892 = vsel %vm8576, %v9890, %v9891
        %v9893 = vsel %vm8576, %v9891, %v9888
        %v9894 = vrot.slane %v9836, 5
        %v9895 = vrot.slane %v9837, 5
        %v9896 = vsel %vm8576, %v9894, %v9895
        %v9897 = vsel %vm8576, %v9895, %v9888
        %v9898 = vrot.slane %v9838, 5
        %v9899 = vrot.slane %v9839, 5
        %v9900 = vsel %vm8576, %v9898, %v9899
        %v9901 = vsel %vm8576, %v9899, %v9888
        %v9902 = vrot.slane %v9840, 5
        %v9903 = vrot.slane %v9841, 5
        %v9904 = vsel %vm8576, %v9902, %v9903
        %v9905 = vsel %vm8576, %v9903, %v9888
        %v9906 = vrot.slane %v9842, 5
        %v9907 = vrot.slane %v9843, 5
        %v9908 = vsel %vm8576, %v9906, %v9907
        %v9909 = vsel %vm8576, %v9907, %v9888
        %v9910 = vrot.slane %v9844, 5
        %v9911 = vrot.slane %v9845, 5
        %v9912 = vsel %vm8576, %v9910, %v9911
        %v9913 = vsel %vm8576, %v9911, %v9888
        %v9914 = vrot.slane %v9846, 5
        %v9915 = vrot.slane %v9847, 5
        %v9916 = vsel %vm8576, %v9914, %v9915
        %v9917 = vsel %vm8576, %v9915, %v9888
        %v9918 = vrot.slane %v9848, 5
        %v9919 = vrot.slane %v9849, 5
        %v9920 = vsel %vm8576, %v9918, %v9919
        %v9921 = vsel %vm8576, %v9919, %v9888
        %v9922 = vrot.slane %v9850, 5
        %v9923 = vrot.slane %v9851, 5
        %v9924 = vsel %vm8576, %v9922, %v9923
        %v9925 = vsel %vm8576, %v9923, %v9888
        %v9926 = vrot.slane %v9852, 5
        %v9927 = vrot.slane %v9853, 5
        %v9928 = vsel %vm8576, %v9926, %v9927
        %v9929 = vsel %vm8576, %v9927, %v9888
        %v9930 = vrot.slane %v9854, 5
        %v9931 = vrot.slane %v9855, 5
        %v9932 = vsel %vm8576, %v9930, %v9931
        %v9933 = vsel %vm8576, %v9931, %v9888
        %v9934 = vrot.slane %v9856, 5
        %v9935 = vrot.slane %v9857, 5
        %v9936 = vsel %vm8576, %v9934, %v9935
        %v9937 = vsel %vm8576, %v9935, %v9888
        %v9938 = vsel %vm8576, %v9888, %v9888
        %v9980 = vadd.f32 %v9778, %v9885
        %v9981 = vadd.f32 %v9779, %v9887
        %v9982 = vadd.f32 %v9780, %v9889
        %v9983 = vadd.f32 %v9781, %v9890
        %v9984 = vadd.f32 %v9782, %v9892
        %v9985 = vadd.f32 %v9783, %v9893
        %v9986 = vadd.f32 %v9784, %v9894
        %v9987 = vadd.f32 %v9785, %v9896
        %v9988 = vadd.f32 %v9786, %v9897
        %v9989 = vadd.f32 %v9787, %v9898
        %v9990 = vadd.f32 %v9788, %v9900
        %v9991 = vadd.f32 %v9789, %v9901
        %v9992 = vadd.f32 %v9790, %v9902
        %v9993 = vadd.f32 %v9791, %v9904
        %v9994 = vadd.f32 %v9792, %v9905
        %v9995 = vadd.f32 %v9793, %v9906
        %v9996 = vadd.f32 %v9794, %v9908
        %v9997 = vadd.f32 %v9795, %v9909
        %v9998 = vadd.f32 %v9796, %v9910
        %v9999 = vadd.f32 %v9797, %v9912
        %v10000 = vadd.f32 %v9798, %v9913
        %v10001 = vadd.f32 %v9799, %v9914
        %v10002 = vadd.f32 %v9800, %v9916
        %v10003 = vadd.f32 %v9801, %v9917
        %v10004 = vadd.f32 %v9802, %v9918
        %v10005 = vadd.f32 %v9803, %v9920
        %v10006 = vadd.f32 %v9804, %v9921
        %v10007 = vadd.f32 %v9805, %v9922
        %v10008 = vadd.f32 %v9806, %v9924
        %v10009 = vadd.f32 %v9807, %v9925
        %v10010 = vadd.f32 %v9808, %v9926
        %v10011 = vadd.f32 %v9809, %v9928
        %v10012 = vadd.f32 %v9810, %v9929
        %v10013 = vadd.f32 %v9811, %v9930
        %v10014 = vadd.f32 %v9812, %v9932
        %v10015 = vadd.f32 %v9813, %v9933
        %v10016 = vadd.f32 %v9814, %v9934
        %v10017 = vadd.f32 %v9815, %v9936
        %v10018 = vadd.f32 %v9816, %v9937
        %v10019 = vadd.f32 %v9817, %v9888
        %v10020 = vadd.f32 %v9818, %v9938
        %v10021 = vadd.f32 %v9819, %v9938
        %v10022 = vadd.f32 %v9820, %v9888
        %v10023 = vadd.f32 %v9821, %v9938
        %v10024 = vadd.f32 %v9822, %v9938
        %v10025 = vadd.f32 %v9823, %v9888
        %v10026 = vadd.f32 %v9824, %v9938
        %v10027 = vadd.f32 %v9825, %v9938
        %v10028 = vld [vmem:[%s3 + $0x6] sm:$0x1]
        %v10029 = vlaneseq
        %v10030 = vshrl.u32 %v10029, 7
        %v10031 = vsub.s32 0, %v10030
        %v10032 = vrot.slane %v10028, %v10031
        %v10033 = vmul.f32 %v10032, 0.0
        %v10034 = vmul.f32 %v2010, %v10032
        %v10035 = vmul.f32 %v2012, %v10032
        %v10036 = vmul.f32 %v2015, %v10032
        %v10037 = vmul.f32 %v2017, %v10032
        %v10038 = vmul.f32 %v2020, %v10032
        %v10039 = vmul.f32 %v2022, %v10032
        %v10040 = vmul.f32 %v2025, %v10032
        %v10041 = vmul.f32 %v2027, %v10032
        %v10042 = vmul.f32 %v2030, %v10032
        %v10043 = vmul.f32 %v2032, %v10032
        %v10044 = vmul.f32 %v2035, %v10032
        %v10045 = vmul.f32 %v2037, %v10032
        %v10046 = vmul.f32 %v2040, %v10032
        %v10047 = vmul.f32 %v2042, %v10032
        %v10048 = vmul.f32 %v2045, %v10032
        %v10049 = vmul.f32 %v2047, %v10032
        %v10050 = vmul.f32 %v2050, %v10032
        %v10051 = vmul.f32 %v2052, %v10032
        %v10052 = vmul.f32 %v2055, %v10032
        %v10053 = vmul.f32 %v2057, %v10032
        %v10054 = vmul.f32 %v2060, %v10032
        %v10055 = vmul.f32 %v2062, %v10032
        %v10056 = vmul.f32 %v2065, %v10032
        %v10057 = vmul.f32 %v2067, %v10032
        %v10058 = vmul.f32 %v2070, %v10032
        %v10059 = vmul.f32 %v2072, %v10032
        %vm10087 = vcmask 1041408
        %v10088 = vrot.slane %v10033, 6
        %v10089 = vsel %vm10087, %v10088, %v10088
        %v10090 = vrot.slane %v10034, 6
        %v10091 = vrot.slane %v10035, 6
        %v10092 = vsel %vm10087, %v10090, %v10091
        %v10093 = vsel %vm10087, %v10091, %v10088
        %v10094 = vrot.slane %v10036, 6
        %v10095 = vrot.slane %v10037, 6
        %v10096 = vsel %vm10087, %v10094, %v10095
        %v10097 = vsel %vm10087, %v10095, %v10088
        %v10098 = vrot.slane %v10038, 6
        %v10099 = vrot.slane %v10039, 6
        %v10100 = vsel %vm10087, %v10098, %v10099
        %v10101 = vsel %vm10087, %v10099, %v10088
        %v10102 = vrot.slane %v10040, 6
        %v10103 = vrot.slane %v10041, 6
        %v10104 = vsel %vm10087, %v10102, %v10103
        %v10105 = vsel %vm10087, %v10103, %v10088
        %v10106 = vrot.slane %v10042, 6
        %v10107 = vrot.slane %v10043, 6
        %v10108 = vsel %vm10087, %v10106, %v10107
        %v10109 = vsel %vm10087, %v10107, %v10088
        %v10110 = vrot.slane %v10044, 6
        %v10111 = vrot.slane %v10045, 6
        %v10112 = vsel %vm10087, %v10110, %v10111
        %v10113 = vsel %vm10087, %v10111, %v10088
        %v10114 = vrot.slane %v10046, 6
        %v10115 = vrot.slane %v10047, 6
        %v10116 = vsel %vm10087, %v10114, %v10115
        %v10117 = vsel %vm10087, %v10115, %v10088
        %v10118 = vrot.slane %v10048, 6
        %v10119 = vrot.slane %v10049, 6
        %v10120 = vsel %vm10087, %v10118, %v10119
        %v10121 = vsel %vm10087, %v10119, %v10088
        %v10122 = vrot.slane %v10050, 6
        %v10123 = vrot.slane %v10051, 6
        %v10124 = vsel %vm10087, %v10122, %v10123
        %v10125 = vsel %vm10087, %v10123, %v10088
        %v10126 = vrot.slane %v10052, 6
        %v10127 = vrot.slane %v10053, 6
        %v10128 = vsel %vm10087, %v10126, %v10127
        %v10129 = vsel %vm10087, %v10127, %v10088
        %v10130 = vrot.slane %v10054, 6
        %v10131 = vrot.slane %v10055, 6
        %v10132 = vsel %vm10087, %v10130, %v10131
        %v10133 = vsel %vm10087, %v10131, %v10088
        %v10134 = vrot.slane %v10056, 6
        %v10135 = vrot.slane %v10057, 6
        %v10136 = vsel %vm10087, %v10134, %v10135
        %v10137 = vsel %vm10087, %v10135, %v10088
        %v10138 = vrot.slane %v10058, 6
        %v10139 = vrot.slane %v10059, 6
        %v10140 = vsel %vm10087, %v10138, %v10139
        %v10141 = vsel %vm10087, %v10139, %v10088
        %v10183 = vadd.f32 %v9980, %v10088
        %v10184 = vadd.f32 %v9981, %v10089
        %v10185 = vadd.f32 %v9982, %v10089
        %v10186 = vadd.f32 %v9983, %v10088
        %v10187 = vadd.f32 %v9984, %v10089
        %v10188 = vadd.f32 %v9985, %v10089
        %v10189 = vadd.f32 %v9986, %v10088
        %v10190 = vadd.f32 %v9987, %v10089
        %v10191 = vadd.f32 %v9988, %v10089
        %v10192 = vadd.f32 %v9989, %v10090
        %v10193 = vadd.f32 %v9990, %v10092
        %v10194 = vadd.f32 %v9991, %v10093
        %v10195 = vadd.f32 %v9992, %v10094
        %v10196 = vadd.f32 %v9993, %v10096
        %v10197 = vadd.f32 %v9994, %v10097
        %v10198 = vadd.f32 %v9995, %v10098
        %v10199 = vadd.f32 %v9996, %v10100
        %v10200 = vadd.f32 %v9997, %v10101
        %v10201 = vadd.f32 %v9998, %v10102
        %v10202 = vadd.f32 %v9999, %v10104
        %v10203 = vadd.f32 %v10000, %v10105
        %v10204 = vadd.f32 %v10001, %v10106
        %v10205 = vadd.f32 %v10002, %v10108
        %v10206 = vadd.f32 %v10003, %v10109
        %v10207 = vadd.f32 %v10004, %v10110
        %v10208 = vadd.f32 %v10005, %v10112
        %v10209 = vadd.f32 %v10006, %v10113
        %v10210 = vadd.f32 %v10007, %v10114
        %v10211 = vadd.f32 %v10008, %v10116
        %v10212 = vadd.f32 %v10009, %v10117
        %v10213 = vadd.f32 %v10010, %v10118
        %v10214 = vadd.f32 %v10011, %v10120
        %v10215 = vadd.f32 %v10012, %v10121
        %v10216 = vadd.f32 %v10013, %v10122
        %v10217 = vadd.f32 %v10014, %v10124
        %v10218 = vadd.f32 %v10015, %v10125
        %v10219 = vadd.f32 %v10016, %v10126
        %v10220 = vadd.f32 %v10017, %v10128
        %v10221 = vadd.f32 %v10018, %v10129
        %v10222 = vadd.f32 %v10019, %v10130
        %v10223 = vadd.f32 %v10020, %v10132
        %v10224 = vadd.f32 %v10021, %v10133
        %v10225 = vadd.f32 %v10022, %v10134
        %v10226 = vadd.f32 %v10023, %v10136
        %v10227 = vadd.f32 %v10024, %v10137
        %v10228 = vadd.f32 %v10025, %v10138
        %v10229 = vadd.f32 %v10026, %v10140
        %v10230 = vadd.f32 %v10027, %v10141
        %v10231 = vld [vmem:[%s3 + $0xd] sm:$0x1]
        %v10232 = vlaneseq
        %v10233 = vshrl.u32 %v10232, 7
        %v10234 = vsub.s32 0, %v10233
        %v10235 = vrot.slane %v10231, %v10234
        %v10236 = vmul.f32 %v10235, 0.0
        %v10237 = vmul.f32 %v2010, %v10235
        %v10238 = vmul.f32 %v2012, %v10235
        %v10239 = vmul.f32 %v2015, %v10235
        %v10240 = vmul.f32 %v2017, %v10235
        %v10241 = vmul.f32 %v2020, %v10235
        %v10242 = vmul.f32 %v2022, %v10235
        %v10243 = vmul.f32 %v2025, %v10235
        %v10244 = vmul.f32 %v2027, %v10235
        %v10245 = vmul.f32 %v2030, %v10235
        %v10246 = vmul.f32 %v2032, %v10235
        %v10247 = vmul.f32 %v2035, %v10235
        %v10248 = vmul.f32 %v2037, %v10235
        %v10249 = vmul.f32 %v2040, %v10235
        %v10250 = vmul.f32 %v2042, %v10235
        %v10251 = vmul.f32 %v2045, %v10235
        %v10252 = vmul.f32 %v2047, %v10235
        %v10253 = vmul.f32 %v2050, %v10235
        %v10254 = vmul.f32 %v2052, %v10235
        %v10255 = vmul.f32 %v2055, %v10235
        %v10256 = vmul.f32 %v2057, %v10235
        %v10257 = vmul.f32 %v2060, %v10235
        %v10258 = vmul.f32 %v2062, %v10235
        %v10259 = vmul.f32 %v2065, %v10235
        %v10260 = vmul.f32 %v2067, %v10235
        %v10261 = vmul.f32 %v2070, %v10235
        %v10262 = vmul.f32 %v2072, %v10235
        %v10263 = vmul.f32 %v2075, %v10235
        %v10264 = vmul.f32 %v2077, %v10235
        %v10294 = vrot.slane %v10236, 6
        %v10295 = vsel %vm10087, %v10294, %v10294
        %v10296 = vrot.slane %v10237, 6
        %v10297 = vrot.slane %v10238, 6
        %v10298 = vsel %vm10087, %v10296, %v10297
        %v10299 = vsel %vm10087, %v10297, %v10294
        %v10300 = vrot.slane %v10239, 6
        %v10301 = vrot.slane %v10240, 6
        %v10302 = vsel %vm10087, %v10300, %v10301
        %v10303 = vsel %vm10087, %v10301, %v10294
        %v10304 = vrot.slane %v10241, 6
        %v10305 = vrot.slane %v10242, 6
        %v10306 = vsel %vm10087, %v10304, %v10305
        %v10307 = vsel %vm10087, %v10305, %v10294
        %v10308 = vrot.slane %v10243, 6
        %v10309 = vrot.slane %v10244, 6
        %v10310 = vsel %vm10087, %v10308, %v10309
        %v10311 = vsel %vm10087, %v10309, %v10294
        %v10312 = vrot.slane %v10245, 6
        %v10313 = vrot.slane %v10246, 6
        %v10314 = vsel %vm10087, %v10312, %v10313
        %v10315 = vsel %vm10087, %v10313, %v10294
        %v10316 = vrot.slane %v10247, 6
        %v10317 = vrot.slane %v10248, 6
        %v10318 = vsel %vm10087, %v10316, %v10317
        %v10319 = vsel %vm10087, %v10317, %v10294
        %v10320 = vrot.slane %v10249, 6
        %v10321 = vrot.slane %v10250, 6
        %v10322 = vsel %vm10087, %v10320, %v10321
        %v10323 = vsel %vm10087, %v10321, %v10294
        %v10324 = vrot.slane %v10251, 6
        %v10325 = vrot.slane %v10252, 6
        %v10326 = vsel %vm10087, %v10324, %v10325
        %v10327 = vsel %vm10087, %v10325, %v10294
        %v10328 = vrot.slane %v10253, 6
        %v10329 = vrot.slane %v10254, 6
        %v10330 = vsel %vm10087, %v10328, %v10329
        %v10331 = vsel %vm10087, %v10329, %v10294
        %v10332 = vrot.slane %v10255, 6
        %v10333 = vrot.slane %v10256, 6
        %v10334 = vsel %vm10087, %v10332, %v10333
        %v10335 = vsel %vm10087, %v10333, %v10294
        %v10336 = vrot.slane %v10257, 6
        %v10337 = vrot.slane %v10258, 6
        %v10338 = vsel %vm10087, %v10336, %v10337
        %v10339 = vsel %vm10087, %v10337, %v10294
        %v10340 = vrot.slane %v10259, 6
        %v10341 = vrot.slane %v10260, 6
        %v10342 = vsel %vm10087, %v10340, %v10341
        %v10343 = vsel %vm10087, %v10341, %v10294
        %v10344 = vrot.slane %v10261, 6
        %v10345 = vrot.slane %v10262, 6
        %v10346 = vsel %vm10087, %v10344, %v10345
        %v10347 = vsel %vm10087, %v10345, %v10294
        %v10348 = vrot.slane %v10263, 6
        %v10349 = vrot.slane %v10264, 6
        %v10350 = vsel %vm10087, %v10348, %v10349
        %v10351 = vsel %vm10087, %v10349, %v10294
        %v10396 = vadd.f32 %v10183, %v10294
        %v10397 = vadd.f32 %v10184, %v10295
        %v10398 = vadd.f32 %v10185, %v10295
        %v10399 = vadd.f32 %v10186, %v10294
        %v10400 = vadd.f32 %v10187, %v10295
        %v10401 = vadd.f32 %v10188, %v10295
        %v10402 = vadd.f32 %v10189, %v10296
        %v10403 = vadd.f32 %v10190, %v10298
        %v10404 = vadd.f32 %v10191, %v10299
        %v10405 = vadd.f32 %v10192, %v10300
        %v10406 = vadd.f32 %v10193, %v10302
        %v10407 = vadd.f32 %v10194, %v10303
        %v10408 = vadd.f32 %v10195, %v10304
        %v10409 = vadd.f32 %v10196, %v10306
        %v10410 = vadd.f32 %v10197, %v10307
        %v10411 = vadd.f32 %v10198, %v10308
        %v10412 = vadd.f32 %v10199, %v10310
        %v10413 = vadd.f32 %v10200, %v10311
        %v10414 = vadd.f32 %v10201, %v10312
        %v10415 = vadd.f32 %v10202, %v10314
        %v10416 = vadd.f32 %v10203, %v10315
        %v10417 = vadd.f32 %v10204, %v10316
        %v10418 = vadd.f32 %v10205, %v10318
        %v10419 = vadd.f32 %v10206, %v10319
        %v10420 = vadd.f32 %v10207, %v10320
        %v10421 = vadd.f32 %v10208, %v10322
        %v10422 = vadd.f32 %v10209, %v10323
        %v10423 = vadd.f32 %v10210, %v10324
        %v10424 = vadd.f32 %v10211, %v10326
        %v10425 = vadd.f32 %v10212, %v10327
        %v10426 = vadd.f32 %v10213, %v10328
        %v10427 = vadd.f32 %v10214, %v10330
        %v10428 = vadd.f32 %v10215, %v10331
        %v10429 = vadd.f32 %v10216, %v10332
        %v10430 = vadd.f32 %v10217, %v10334
        %v10431 = vadd.f32 %v10218, %v10335
        %v10432 = vadd.f32 %v10219, %v10336
        %v10433 = vadd.f32 %v10220, %v10338
        %v10434 = vadd.f32 %v10221, %v10339
        %v10435 = vadd.f32 %v10222, %v10340
        %v10436 = vadd.f32 %v10223, %v10342
        %v10437 = vadd.f32 %v10224, %v10343
        %v10438 = vadd.f32 %v10225, %v10344
        %v10439 = vadd.f32 %v10226, %v10346
        %v10440 = vadd.f32 %v10227, %v10347
        %v10441 = vadd.f32 %v10228, %v10348
        %v10442 = vadd.f32 %v10229, %v10350
        %v10443 = vadd.f32 %v10230, %v10351
        %v10444 = vld [vmem:[%s3 + $0x14] sm:$0x1]
        %v10445 = vlaneseq
        %v10446 = vshrl.u32 %v10445, 7
        %v10447 = vsub.s32 0, %v10446
        %v10448 = vrot.slane %v10444, %v10447
        %v10449 = vmul.f32 %v10448, 0.0
        %v10450 = vmul.f32 %v2010, %v10448
        %v10451 = vmul.f32 %v2012, %v10448
        %v10452 = vmul.f32 %v2015, %v10448
        %v10453 = vmul.f32 %v2017, %v10448
        %v10454 = vmul.f32 %v2020, %v10448
        %v10455 = vmul.f32 %v2022, %v10448
        %v10456 = vmul.f32 %v2025, %v10448
        %v10457 = vmul.f32 %v2027, %v10448
        %v10458 = vmul.f32 %v2030, %v10448
        %v10459 = vmul.f32 %v2032, %v10448
        %v10460 = vmul.f32 %v2035, %v10448
        %v10461 = vmul.f32 %v2037, %v10448
        %v10462 = vmul.f32 %v2040, %v10448
        %v10463 = vmul.f32 %v2042, %v10448
        %v10464 = vmul.f32 %v2045, %v10448
        %v10465 = vmul.f32 %v2047, %v10448
        %v10466 = vmul.f32 %v2050, %v10448
        %v10467 = vmul.f32 %v2052, %v10448
        %v10468 = vmul.f32 %v2055, %v10448
        %v10469 = vmul.f32 %v2057, %v10448
        %v10470 = vmul.f32 %v2060, %v10448
        %v10471 = vmul.f32 %v2062, %v10448
        %v10472 = vmul.f32 %v2065, %v10448
        %v10473 = vmul.f32 %v2067, %v10448
        %v10474 = vmul.f32 %v2070, %v10448
        %v10475 = vmul.f32 %v2072, %v10448
        %v10476 = vmul.f32 %v2075, %v10448
        %v10477 = vmul.f32 %v2077, %v10448
        %v10478 = vmul.f32 %v2080, %v10448
        %v10479 = vmul.f32 %v2082, %v10448
        %v10511 = vrot.slane %v10449, 6
        %v10512 = vsel %vm10087, %v10511, %v10511
        %v10513 = vrot.slane %v10450, 6
        %v10514 = vrot.slane %v10451, 6
        %v10515 = vsel %vm10087, %v10513, %v10514
        %v10516 = vsel %vm10087, %v10514, %v10511
        %v10517 = vrot.slane %v10452, 6
        %v10518 = vrot.slane %v10453, 6
        %v10519 = vsel %vm10087, %v10517, %v10518
        %v10520 = vsel %vm10087, %v10518, %v10511
        %v10521 = vrot.slane %v10454, 6
        %v10522 = vrot.slane %v10455, 6
        %v10523 = vsel %vm10087, %v10521, %v10522
        %v10524 = vsel %vm10087, %v10522, %v10511
        %v10525 = vrot.slane %v10456, 6
        %v10526 = vrot.slane %v10457, 6
        %v10527 = vsel %vm10087, %v10525, %v10526
        %v10528 = vsel %vm10087, %v10526, %v10511
        %v10529 = vrot.slane %v10458, 6
        %v10530 = vrot.slane %v10459, 6
        %v10531 = vsel %vm10087, %v10529, %v10530
        %v10532 = vsel %vm10087, %v10530, %v10511
        %v10533 = vrot.slane %v10460, 6
        %v10534 = vrot.slane %v10461, 6
        %v10535 = vsel %vm10087, %v10533, %v10534
        %v10536 = vsel %vm10087, %v10534, %v10511
        %v10537 = vrot.slane %v10462, 6
        %v10538 = vrot.slane %v10463, 6
        %v10539 = vsel %vm10087, %v10537, %v10538
        %v10540 = vsel %vm10087, %v10538, %v10511
        %v10541 = vrot.slane %v10464, 6
        %v10542 = vrot.slane %v10465, 6
        %v10543 = vsel %vm10087, %v10541, %v10542
        %v10544 = vsel %vm10087, %v10542, %v10511
        %v10545 = vrot.slane %v10466, 6
        %v10546 = vrot.slane %v10467, 6
        %v10547 = vsel %vm10087, %v10545, %v10546
        %v10548 = vsel %vm10087, %v10546, %v10511
        %v10549 = vrot.slane %v10468, 6
        %v10550 = vrot.slane %v10469, 6
        %v10551 = vsel %vm10087, %v10549, %v10550
        %v10552 = vsel %vm10087, %v10550, %v10511
        %v10553 = vrot.slane %v10470, 6
        %v10554 = vrot.slane %v10471, 6
        %v10555 = vsel %vm10087, %v10553, %v10554
        %v10556 = vsel %vm10087, %v10554, %v10511
        %v10557 = vrot.slane %v10472, 6
        %v10558 = vrot.slane %v10473, 6
        %v10559 = vsel %vm10087, %v10557, %v10558
        %v10560 = vsel %vm10087, %v10558, %v10511
        %v10561 = vrot.slane %v10474, 6
        %v10562 = vrot.slane %v10475, 6
        %v10563 = vsel %vm10087, %v10561, %v10562
        %v10564 = vsel %vm10087, %v10562, %v10511
        %v10565 = vrot.slane %v10476, 6
        %v10566 = vrot.slane %v10477, 6
        %v10567 = vsel %vm10087, %v10565, %v10566
        %v10568 = vsel %vm10087, %v10566, %v10511
        %v10569 = vrot.slane %v10478, 6
        %v10570 = vrot.slane %v10479, 6
        %v10571 = vsel %vm10087, %v10569, %v10570
        %v10572 = vsel %vm10087, %v10570, %v10511
        %v10620 = vadd.f32 %v10396, %v10511
        %v10621 = vadd.f32 %v10397, %v10512
        %v10622 = vadd.f32 %v10398, %v10512
        %v10623 = vadd.f32 %v10399, %v10513
        %v10624 = vadd.f32 %v10400, %v10515
        %v10625 = vadd.f32 %v10401, %v10516
        %v10626 = vadd.f32 %v10402, %v10517
        %v10627 = vadd.f32 %v10403, %v10519
        %v10628 = vadd.f32 %v10404, %v10520
        %v10629 = vadd.f32 %v10405, %v10521
        %v10630 = vadd.f32 %v10406, %v10523
        %v10631 = vadd.f32 %v10407, %v10524
        %v10632 = vadd.f32 %v10408, %v10525
        %v10633 = vadd.f32 %v10409, %v10527
        %v10634 = vadd.f32 %v10410, %v10528
        %v10635 = vadd.f32 %v10411, %v10529
        %v10636 = vadd.f32 %v10412, %v10531
        %v10637 = vadd.f32 %v10413, %v10532
        %v10638 = vadd.f32 %v10414, %v10533
        %v10639 = vadd.f32 %v10415, %v10535
        %v10640 = vadd.f32 %v10416, %v10536
        %v10641 = vadd.f32 %v10417, %v10537
        %v10642 = vadd.f32 %v10418, %v10539
        %v10643 = vadd.f32 %v10419, %v10540
        %v10644 = vadd.f32 %v10420, %v10541
        %v10645 = vadd.f32 %v10421, %v10543
        %v10646 = vadd.f32 %v10422, %v10544
        %v10647 = vadd.f32 %v10423, %v10545
        %v10648 = vadd.f32 %v10424, %v10547
        %v10649 = vadd.f32 %v10425, %v10548
        %v10650 = vadd.f32 %v10426, %v10549
        %v10651 = vadd.f32 %v10427, %v10551
        %v10652 = vadd.f32 %v10428, %v10552
        %v10653 = vadd.f32 %v10429, %v10553
        %v10654 = vadd.f32 %v10430, %v10555
        %v10655 = vadd.f32 %v10431, %v10556
        %v10656 = vadd.f32 %v10432, %v10557
        %v10657 = vadd.f32 %v10433, %v10559
        %v10658 = vadd.f32 %v10434, %v10560
        %v10659 = vadd.f32 %v10435, %v10561
        %v10660 = vadd.f32 %v10436, %v10563
        %v10661 = vadd.f32 %v10437, %v10564
        %v10662 = vadd.f32 %v10438, %v10565
        %v10663 = vadd.f32 %v10439, %v10567
        %v10664 = vadd.f32 %v10440, %v10568
        %v10665 = vadd.f32 %v10441, %v10569
        %v10666 = vadd.f32 %v10442, %v10571
        %v10667 = vadd.f32 %v10443, %v10572
        %v10668 = vld [vmem:[%s3 + $0x1b] sm:$0x1]
        %v10669 = vlaneseq
        %v10670 = vshrl.u32 %v10669, 7
        %v10671 = vsub.s32 0, %v10670
        %v10672 = vrot.slane %v10668, %v10671
        %v10673 = vmul.f32 %v2010, %v10672
        %v10674 = vmul.f32 %v2012, %v10672
        %v10675 = vmul.f32 %v10672, 0.0
        %v10676 = vmul.f32 %v2015, %v10672
        %v10677 = vmul.f32 %v2017, %v10672
        %v10678 = vmul.f32 %v2020, %v10672
        %v10679 = vmul.f32 %v2022, %v10672
        %v10680 = vmul.f32 %v2025, %v10672
        %v10681 = vmul.f32 %v2027, %v10672
        %v10682 = vmul.f32 %v2030, %v10672
        %v10683 = vmul.f32 %v2032, %v10672
        %v10684 = vmul.f32 %v2035, %v10672
        %v10685 = vmul.f32 %v2037, %v10672
        %v10686 = vmul.f32 %v2040, %v10672
        %v10687 = vmul.f32 %v2042, %v10672
        %v10688 = vmul.f32 %v2045, %v10672
        %v10689 = vmul.f32 %v2047, %v10672
        %v10690 = vmul.f32 %v2050, %v10672
        %v10691 = vmul.f32 %v2052, %v10672
        %v10692 = vmul.f32 %v2055, %v10672
        %v10693 = vmul.f32 %v2057, %v10672
        %v10694 = vmul.f32 %v2060, %v10672
        %v10695 = vmul.f32 %v2062, %v10672
        %v10696 = vmul.f32 %v2065, %v10672
        %v10697 = vmul.f32 %v2067, %v10672
        %v10698 = vmul.f32 %v2070, %v10672
        %v10699 = vmul.f32 %v2072, %v10672
        %v10700 = vmul.f32 %v2075, %v10672
        %v10701 = vmul.f32 %v2077, %v10672
        %v10702 = vmul.f32 %v2080, %v10672
        %v10703 = vmul.f32 %v2082, %v10672
        %v10704 = vmul.f32 %v2085, %v10672
        %v10705 = vmul.f32 %v2087, %v10672
        %v10739 = vrot.slane %v10673, 6
        %v10740 = vrot.slane %v10674, 6
        %v10741 = vsel %vm10087, %v10739, %v10740
        %v10742 = vrot.slane %v10675, 6
        %v10743 = vsel %vm10087, %v10740, %v10742
        %v10744 = vrot.slane %v10676, 6
        %v10745 = vrot.slane %v10677, 6
        %v10746 = vsel %vm10087, %v10744, %v10745
        %v10747 = vsel %vm10087, %v10745, %v10742
        %v10748 = vrot.slane %v10678, 6
        %v10749 = vrot.slane %v10679, 6
        %v10750 = vsel %vm10087, %v10748, %v10749
        %v10751 = vsel %vm10087, %v10749, %v10742
        %v10752 = vrot.slane %v10680, 6
        %v10753 = vrot.slane %v10681, 6
        %v10754 = vsel %vm10087, %v10752, %v10753
        %v10755 = vsel %vm10087, %v10753, %v10742
        %v10756 = vrot.slane %v10682, 6
        %v10757 = vrot.slane %v10683, 6
        %v10758 = vsel %vm10087, %v10756, %v10757
        %v10759 = vsel %vm10087, %v10757, %v10742
        %v10760 = vrot.slane %v10684, 6
        %v10761 = vrot.slane %v10685, 6
        %v10762 = vsel %vm10087, %v10760, %v10761
        %v10763 = vsel %vm10087, %v10761, %v10742
        %v10764 = vrot.slane %v10686, 6
        %v10765 = vrot.slane %v10687, 6
        %v10766 = vsel %vm10087, %v10764, %v10765
        %v10767 = vsel %vm10087, %v10765, %v10742
        %v10768 = vrot.slane %v10688, 6
        %v10769 = vrot.slane %v10689, 6
        %v10770 = vsel %vm10087, %v10768, %v10769
        %v10771 = vsel %vm10087, %v10769, %v10742
        %v10772 = vrot.slane %v10690, 6
        %v10773 = vrot.slane %v10691, 6
        %v10774 = vsel %vm10087, %v10772, %v10773
        %v10775 = vsel %vm10087, %v10773, %v10742
        %v10776 = vrot.slane %v10692, 6
        %v10777 = vrot.slane %v10693, 6
        %v10778 = vsel %vm10087, %v10776, %v10777
        %v10779 = vsel %vm10087, %v10777, %v10742
        %v10780 = vrot.slane %v10694, 6
        %v10781 = vrot.slane %v10695, 6
        %v10782 = vsel %vm10087, %v10780, %v10781
        %v10783 = vsel %vm10087, %v10781, %v10742
        %v10784 = vrot.slane %v10696, 6
        %v10785 = vrot.slane %v10697, 6
        %v10786 = vsel %vm10087, %v10784, %v10785
        %v10787 = vsel %vm10087, %v10785, %v10742
        %v10788 = vrot.slane %v10698, 6
        %v10789 = vrot.slane %v10699, 6
        %v10790 = vsel %vm10087, %v10788, %v10789
        %v10791 = vsel %vm10087, %v10789, %v10742
        %v10792 = vrot.slane %v10700, 6
        %v10793 = vrot.slane %v10701, 6
        %v10794 = vsel %vm10087, %v10792, %v10793
        %v10795 = vsel %vm10087, %v10793, %v10742
        %v10796 = vrot.slane %v10702, 6
        %v10797 = vrot.slane %v10703, 6
        %v10798 = vsel %vm10087, %v10796, %v10797
        %v10799 = vsel %vm10087, %v10797, %v10742
        %v10800 = vrot.slane %v10704, 6
        %v10801 = vrot.slane %v10705, 6
        %v10802 = vsel %vm10087, %v10800, %v10801
        %v10803 = vsel %vm10087, %v10801, %v10742
        %v10852 = vadd.f32 %v10620, %v10739
        %v10853 = vadd.f32 %v10621, %v10741
        %v10854 = vadd.f32 %v10622, %v10743
        %v10855 = vadd.f32 %v10623, %v10744
        %v10856 = vadd.f32 %v10624, %v10746
        %v10857 = vadd.f32 %v10625, %v10747
        %v10858 = vadd.f32 %v10626, %v10748
        %v10859 = vadd.f32 %v10627, %v10750
        %v10860 = vadd.f32 %v10628, %v10751
        %v10861 = vadd.f32 %v10629, %v10752
        %v10862 = vadd.f32 %v10630, %v10754
        %v10863 = vadd.f32 %v10631, %v10755
        %v10864 = vadd.f32 %v10632, %v10756
        %v10865 = vadd.f32 %v10633, %v10758
        %v10866 = vadd.f32 %v10634, %v10759
        %v10867 = vadd.f32 %v10635, %v10760
        %v10868 = vadd.f32 %v10636, %v10762
        %v10869 = vadd.f32 %v10637, %v10763
        %v10870 = vadd.f32 %v10638, %v10764
        %v10871 = vadd.f32 %v10639, %v10766
        %v10872 = vadd.f32 %v10640, %v10767
        %v10873 = vadd.f32 %v10641, %v10768
        %v10874 = vadd.f32 %v10642, %v10770
        %v10875 = vadd.f32 %v10643, %v10771
        %v10876 = vadd.f32 %v10644, %v10772
        %v10877 = vadd.f32 %v10645, %v10774
        %v10878 = vadd.f32 %v10646, %v10775
        %v10879 = vadd.f32 %v10647, %v10776
        %v10880 = vadd.f32 %v10648, %v10778
        %v10881 = vadd.f32 %v10649, %v10779
        %v10882 = vadd.f32 %v10650, %v10780
        %v10883 = vadd.f32 %v10651, %v10782
        %v10884 = vadd.f32 %v10652, %v10783
        %v10885 = vadd.f32 %v10653, %v10784
        %v10886 = vadd.f32 %v10654, %v10786
        %v10887 = vadd.f32 %v10655, %v10787
        %v10888 = vadd.f32 %v10656, %v10788
        %v10889 = vadd.f32 %v10657, %v10790
        %v10890 = vadd.f32 %v10658, %v10791
        %v10891 = vadd.f32 %v10659, %v10792
        %v10892 = vadd.f32 %v10660, %v10794
        %v10893 = vadd.f32 %v10661, %v10795
        %v10894 = vadd.f32 %v10662, %v10796
        %v10895 = vadd.f32 %v10663, %v10798
        %v10896 = vadd.f32 %v10664, %v10799
        %v10897 = vadd.f32 %v10665, %v10800
        %v10898 = vadd.f32 %v10666, %v10802
        %v10899 = vadd.f32 %v10667, %v10803
        %v10900 = vld [vmem:[%s3 + $0x22] sm:$0x1]
        %v10901 = vlaneseq
        %v10902 = vshrl.u32 %v10901, 7
        %v10903 = vsub.s32 0, %v10902
        %v10904 = vrot.slane %v10900, %v10903
        %v10905 = vmul.f32 %v2015, %v10904
        %v10906 = vmul.f32 %v2017, %v10904
        %v10907 = vmul.f32 %v10904, 0.0
        %v10908 = vmul.f32 %v2020, %v10904
        %v10909 = vmul.f32 %v2022, %v10904
        %v10910 = vmul.f32 %v2025, %v10904
        %v10911 = vmul.f32 %v2027, %v10904
        %v10912 = vmul.f32 %v2030, %v10904
        %v10913 = vmul.f32 %v2032, %v10904
        %v10914 = vmul.f32 %v2035, %v10904
        %v10915 = vmul.f32 %v2037, %v10904
        %v10916 = vmul.f32 %v2040, %v10904
        %v10917 = vmul.f32 %v2042, %v10904
        %v10918 = vmul.f32 %v2045, %v10904
        %v10919 = vmul.f32 %v2047, %v10904
        %v10920 = vmul.f32 %v2050, %v10904
        %v10921 = vmul.f32 %v2052, %v10904
        %v10922 = vmul.f32 %v2055, %v10904
        %v10923 = vmul.f32 %v2057, %v10904
        %v10924 = vmul.f32 %v2060, %v10904
        %v10925 = vmul.f32 %v2062, %v10904
        %v10926 = vmul.f32 %v2065, %v10904
        %v10927 = vmul.f32 %v2067, %v10904
        %v10928 = vmul.f32 %v2070, %v10904
        %v10929 = vmul.f32 %v2072, %v10904
        %v10930 = vmul.f32 %v2075, %v10904
        %v10931 = vmul.f32 %v2077, %v10904
        %v10932 = vmul.f32 %v2080, %v10904
        %v10933 = vmul.f32 %v2082, %v10904
        %v10934 = vmul.f32 %v2085, %v10904
        %v10935 = vmul.f32 %v2087, %v10904
        %v10967 = vrot.slane %v10905, 6
        %v10968 = vrot.slane %v10906, 6
        %v10969 = vsel %vm10087, %v10967, %v10968
        %v10970 = vrot.slane %v10907, 6
        %v10971 = vsel %vm10087, %v10968, %v10970
        %v10972 = vrot.slane %v10908, 6
        %v10973 = vrot.slane %v10909, 6
        %v10974 = vsel %vm10087, %v10972, %v10973
        %v10975 = vsel %vm10087, %v10973, %v10970
        %v10976 = vrot.slane %v10910, 6
        %v10977 = vrot.slane %v10911, 6
        %v10978 = vsel %vm10087, %v10976, %v10977
        %v10979 = vsel %vm10087, %v10977, %v10970
        %v10980 = vrot.slane %v10912, 6
        %v10981 = vrot.slane %v10913, 6
        %v10982 = vsel %vm10087, %v10980, %v10981
        %v10983 = vsel %vm10087, %v10981, %v10970
        %v10984 = vrot.slane %v10914, 6
        %v10985 = vrot.slane %v10915, 6
        %v10986 = vsel %vm10087, %v10984, %v10985
        %v10987 = vsel %vm10087, %v10985, %v10970
        %v10988 = vrot.slane %v10916, 6
        %v10989 = vrot.slane %v10917, 6
        %v10990 = vsel %vm10087, %v10988, %v10989
        %v10991 = vsel %vm10087, %v10989, %v10970
        %v10992 = vrot.slane %v10918, 6
        %v10993 = vrot.slane %v10919, 6
        %v10994 = vsel %vm10087, %v10992, %v10993
        %v10995 = vsel %vm10087, %v10993, %v10970
        %v10996 = vrot.slane %v10920, 6
        %v10997 = vrot.slane %v10921, 6
        %v10998 = vsel %vm10087, %v10996, %v10997
        %v10999 = vsel %vm10087, %v10997, %v10970
        %v11000 = vrot.slane %v10922, 6
        %v11001 = vrot.slane %v10923, 6
        %v11002 = vsel %vm10087, %v11000, %v11001
        %v11003 = vsel %vm10087, %v11001, %v10970
        %v11004 = vrot.slane %v10924, 6
        %v11005 = vrot.slane %v10925, 6
        %v11006 = vsel %vm10087, %v11004, %v11005
        %v11007 = vsel %vm10087, %v11005, %v10970
        %v11008 = vrot.slane %v10926, 6
        %v11009 = vrot.slane %v10927, 6
        %v11010 = vsel %vm10087, %v11008, %v11009
        %v11011 = vsel %vm10087, %v11009, %v10970
        %v11012 = vrot.slane %v10928, 6
        %v11013 = vrot.slane %v10929, 6
        %v11014 = vsel %vm10087, %v11012, %v11013
        %v11015 = vsel %vm10087, %v11013, %v10970
        %v11016 = vrot.slane %v10930, 6
        %v11017 = vrot.slane %v10931, 6
        %v11018 = vsel %vm10087, %v11016, %v11017
        %v11019 = vsel %vm10087, %v11017, %v10970
        %v11020 = vrot.slane %v10932, 6
        %v11021 = vrot.slane %v10933, 6
        %v11022 = vsel %vm10087, %v11020, %v11021
        %v11023 = vsel %vm10087, %v11021, %v10970
        %v11024 = vrot.slane %v10934, 6
        %v11025 = vrot.slane %v10935, 6
        %v11026 = vsel %vm10087, %v11024, %v11025
        %v11027 = vsel %vm10087, %v11025, %v10970
        %v11028 = vsel %vm10087, %v10970, %v10970
        %v11076 = vadd.f32 %v10852, %v10967
        %v11077 = vadd.f32 %v10853, %v10969
        %v11078 = vadd.f32 %v10854, %v10971
        %v11079 = vadd.f32 %v10855, %v10972
        %v11080 = vadd.f32 %v10856, %v10974
        %v11081 = vadd.f32 %v10857, %v10975
        %v11082 = vadd.f32 %v10858, %v10976
        %v11083 = vadd.f32 %v10859, %v10978
        %v11084 = vadd.f32 %v10860, %v10979
        %v11085 = vadd.f32 %v10861, %v10980
        %v11086 = vadd.f32 %v10862, %v10982
        %v11087 = vadd.f32 %v10863, %v10983
        %v11088 = vadd.f32 %v10864, %v10984
        %v11089 = vadd.f32 %v10865, %v10986
        %v11090 = vadd.f32 %v10866, %v10987
        %v11091 = vadd.f32 %v10867, %v10988
        %v11092 = vadd.f32 %v10868, %v10990
        %v11093 = vadd.f32 %v10869, %v10991
        %v11094 = vadd.f32 %v10870, %v10992
        %v11095 = vadd.f32 %v10871, %v10994
        %v11096 = vadd.f32 %v10872, %v10995
        %v11097 = vadd.f32 %v10873, %v10996
        %v11098 = vadd.f32 %v10874, %v10998
        %v11099 = vadd.f32 %v10875, %v10999
        %v11100 = vadd.f32 %v10876, %v11000
        %v11101 = vadd.f32 %v10877, %v11002
        %v11102 = vadd.f32 %v10878, %v11003
        %v11103 = vadd.f32 %v10879, %v11004
        %v11104 = vadd.f32 %v10880, %v11006
        %v11105 = vadd.f32 %v10881, %v11007
        %v11106 = vadd.f32 %v10882, %v11008
        %v11107 = vadd.f32 %v10883, %v11010
        %v11108 = vadd.f32 %v10884, %v11011
        %v11109 = vadd.f32 %v10885, %v11012
        %v11110 = vadd.f32 %v10886, %v11014
        %v11111 = vadd.f32 %v10887, %v11015
        %v11112 = vadd.f32 %v10888, %v11016
        %v11113 = vadd.f32 %v10889, %v11018
        %v11114 = vadd.f32 %v10890, %v11019
        %v11115 = vadd.f32 %v10891, %v11020
        %v11116 = vadd.f32 %v10892, %v11022
        %v11117 = vadd.f32 %v10893, %v11023
        %v11118 = vadd.f32 %v10894, %v11024
        %v11119 = vadd.f32 %v10895, %v11026
        %v11120 = vadd.f32 %v10896, %v11027
        %v11121 = vadd.f32 %v10897, %v10970
        %v11122 = vadd.f32 %v10898, %v11028
        %v11123 = vadd.f32 %v10899, %v11028
        %v11124 = vld [vmem:[%s3 + $0x29] sm:$0x1]
        %v11125 = vlaneseq
        %v11126 = vshrl.u32 %v11125, 7
        %v11127 = vsub.s32 0, %v11126
        %v11128 = vrot.slane %v11124, %v11127
        %v11129 = vmul.f32 %v2020, %v11128
        %v11130 = vmul.f32 %v2022, %v11128
        %v11131 = vmul.f32 %v11128, 0.0
        %v11132 = vmul.f32 %v2025, %v11128
        %v11133 = vmul.f32 %v2027, %v11128
        %v11134 = vmul.f32 %v2030, %v11128
        %v11135 = vmul.f32 %v2032, %v11128
        %v11136 = vmul.f32 %v2035, %v11128
        %v11137 = vmul.f32 %v2037, %v11128
        %v11138 = vmul.f32 %v2040, %v11128
        %v11139 = vmul.f32 %v2042, %v11128
        %v11140 = vmul.f32 %v2045, %v11128
        %v11141 = vmul.f32 %v2047, %v11128
        %v11142 = vmul.f32 %v2050, %v11128
        %v11143 = vmul.f32 %v2052, %v11128
        %v11144 = vmul.f32 %v2055, %v11128
        %v11145 = vmul.f32 %v2057, %v11128
        %v11146 = vmul.f32 %v2060, %v11128
        %v11147 = vmul.f32 %v2062, %v11128
        %v11148 = vmul.f32 %v2065, %v11128
        %v11149 = vmul.f32 %v2067, %v11128
        %v11150 = vmul.f32 %v2070, %v11128
        %v11151 = vmul.f32 %v2072, %v11128
        %v11152 = vmul.f32 %v2075, %v11128
        %v11153 = vmul.f32 %v2077, %v11128
        %v11154 = vmul.f32 %v2080, %v11128
        %v11155 = vmul.f32 %v2082, %v11128
        %v11156 = vmul.f32 %v2085, %v11128
        %v11157 = vmul.f32 %v2087, %v11128
        %v11187 = vrot.slane %v11129, 6
        %v11188 = vrot.slane %v11130, 6
        %v11189 = vsel %vm10087, %v11187, %v11188
        %v11190 = vrot.slane %v11131, 6
        %v11191 = vsel %vm10087, %v11188, %v11190
        %v11192 = vrot.slane %v11132, 6
        %v11193 = vrot.slane %v11133, 6
        %v11194 = vsel %vm10087, %v11192, %v11193
        %v11195 = vsel %vm10087, %v11193, %v11190
        %v11196 = vrot.slane %v11134, 6
        %v11197 = vrot.slane %v11135, 6
        %v11198 = vsel %vm10087, %v11196, %v11197
        %v11199 = vsel %vm10087, %v11197, %v11190
        %v11200 = vrot.slane %v11136, 6
        %v11201 = vrot.slane %v11137, 6
        %v11202 = vsel %vm10087, %v11200, %v11201
        %v11203 = vsel %vm10087, %v11201, %v11190
        %v11204 = vrot.slane %v11138, 6
        %v11205 = vrot.slane %v11139, 6
        %v11206 = vsel %vm10087, %v11204, %v11205
        %v11207 = vsel %vm10087, %v11205, %v11190
        %v11208 = vrot.slane %v11140, 6
        %v11209 = vrot.slane %v11141, 6
        %v11210 = vsel %vm10087, %v11208, %v11209
        %v11211 = vsel %vm10087, %v11209, %v11190
        %v11212 = vrot.slane %v11142, 6
        %v11213 = vrot.slane %v11143, 6
        %v11214 = vsel %vm10087, %v11212, %v11213
        %v11215 = vsel %vm10087, %v11213, %v11190
        %v11216 = vrot.slane %v11144, 6
        %v11217 = vrot.slane %v11145, 6
        %v11218 = vsel %vm10087, %v11216, %v11217
        %v11219 = vsel %vm10087, %v11217, %v11190
        %v11220 = vrot.slane %v11146, 6
        %v11221 = vrot.slane %v11147, 6
        %v11222 = vsel %vm10087, %v11220, %v11221
        %v11223 = vsel %vm10087, %v11221, %v11190
        %v11224 = vrot.slane %v11148, 6
        %v11225 = vrot.slane %v11149, 6
        %v11226 = vsel %vm10087, %v11224, %v11225
        %v11227 = vsel %vm10087, %v11225, %v11190
        %v11228 = vrot.slane %v11150, 6
        %v11229 = vrot.slane %v11151, 6
        %v11230 = vsel %vm10087, %v11228, %v11229
        %v11231 = vsel %vm10087, %v11229, %v11190
        %v11232 = vrot.slane %v11152, 6
        %v11233 = vrot.slane %v11153, 6
        %v11234 = vsel %vm10087, %v11232, %v11233
        %v11235 = vsel %vm10087, %v11233, %v11190
        %v11236 = vrot.slane %v11154, 6
        %v11237 = vrot.slane %v11155, 6
        %v11238 = vsel %vm10087, %v11236, %v11237
        %v11239 = vsel %vm10087, %v11237, %v11190
        %v11240 = vrot.slane %v11156, 6
        %v11241 = vrot.slane %v11157, 6
        %v11242 = vsel %vm10087, %v11240, %v11241
        %v11243 = vsel %vm10087, %v11241, %v11190
        %v11244 = vsel %vm10087, %v11190, %v11190
        %v11289 = vadd.f32 %v11076, %v11187
        %v11290 = vadd.f32 %v11077, %v11189
        %v11291 = vadd.f32 %v11078, %v11191
        %v11292 = vadd.f32 %v11079, %v11192
        %v11293 = vadd.f32 %v11080, %v11194
        %v11294 = vadd.f32 %v11081, %v11195
        %v11295 = vadd.f32 %v11082, %v11196
        %v11296 = vadd.f32 %v11083, %v11198
        %v11297 = vadd.f32 %v11084, %v11199
        %v11298 = vadd.f32 %v11085, %v11200
        %v11299 = vadd.f32 %v11086, %v11202
        %v11300 = vadd.f32 %v11087, %v11203
        %v11301 = vadd.f32 %v11088, %v11204
        %v11302 = vadd.f32 %v11089, %v11206
        %v11303 = vadd.f32 %v11090, %v11207
        %v11304 = vadd.f32 %v11091, %v11208
        %v11305 = vadd.f32 %v11092, %v11210
        %v11306 = vadd.f32 %v11093, %v11211
        %v11307 = vadd.f32 %v11094, %v11212
        %v11308 = vadd.f32 %v11095, %v11214
        %v11309 = vadd.f32 %v11096, %v11215
        %v11310 = vadd.f32 %v11097, %v11216
        %v11311 = vadd.f32 %v11098, %v11218
        %v11312 = vadd.f32 %v11099, %v11219
        %v11313 = vadd.f32 %v11100, %v11220
        %v11314 = vadd.f32 %v11101, %v11222
        %v11315 = vadd.f32 %v11102, %v11223
        %v11316 = vadd.f32 %v11103, %v11224
        %v11317 = vadd.f32 %v11104, %v11226
        %v11318 = vadd.f32 %v11105, %v11227
        %v11319 = vadd.f32 %v11106, %v11228
        %v11320 = vadd.f32 %v11107, %v11230
        %v11321 = vadd.f32 %v11108, %v11231
        %v11322 = vadd.f32 %v11109, %v11232
        %v11323 = vadd.f32 %v11110, %v11234
        %v11324 = vadd.f32 %v11111, %v11235
        %v11325 = vadd.f32 %v11112, %v11236
        %v11326 = vadd.f32 %v11113, %v11238
        %v11327 = vadd.f32 %v11114, %v11239
        %v11328 = vadd.f32 %v11115, %v11240
        %v11329 = vadd.f32 %v11116, %v11242
        %v11330 = vadd.f32 %v11117, %v11243
        %v11331 = vadd.f32 %v11118, %v11190
        %v11332 = vadd.f32 %v11119, %v11244
        %v11333 = vadd.f32 %v11120, %v11244
        %v11334 = vadd.f32 %v11121, %v11190
        %v11335 = vadd.f32 %v11122, %v11244
        %v11336 = vadd.f32 %v11123, %v11244
        %v11337 = vld [vmem:[%s3 + $0x30] sm:$0x1]
        %v11338 = vlaneseq
        %v11339 = vshrl.u32 %v11338, 7
        %v11340 = vsub.s32 0, %v11339
        %v11341 = vrot.slane %v11337, %v11340
        %v11342 = vmul.f32 %v2025, %v11341
        %v11343 = vmul.f32 %v2027, %v11341
        %v11344 = vmul.f32 %v11341, 0.0
        %v11345 = vmul.f32 %v2030, %v11341
        %v11346 = vmul.f32 %v2032, %v11341
        %v11347 = vmul.f32 %v2035, %v11341
        %v11348 = vmul.f32 %v2037, %v11341
        %v11349 = vmul.f32 %v2040, %v11341
        %v11350 = vmul.f32 %v2042, %v11341
        %v11351 = vmul.f32 %v2045, %v11341
        %v11352 = vmul.f32 %v2047, %v11341
        %v11353 = vmul.f32 %v2050, %v11341
        %v11354 = vmul.f32 %v2052, %v11341
        %v11355 = vmul.f32 %v2055, %v11341
        %v11356 = vmul.f32 %v2057, %v11341
        %v11357 = vmul.f32 %v2060, %v11341
        %v11358 = vmul.f32 %v2062, %v11341
        %v11359 = vmul.f32 %v2065, %v11341
        %v11360 = vmul.f32 %v2067, %v11341
        %v11361 = vmul.f32 %v2070, %v11341
        %v11362 = vmul.f32 %v2072, %v11341
        %v11363 = vmul.f32 %v2075, %v11341
        %v11364 = vmul.f32 %v2077, %v11341
        %v11365 = vmul.f32 %v2080, %v11341
        %v11366 = vmul.f32 %v2082, %v11341
        %v11367 = vmul.f32 %v2085, %v11341
        %v11368 = vmul.f32 %v2087, %v11341
        %v11396 = vrot.slane %v11342, 6
        %v11397 = vrot.slane %v11343, 6
        %v11398 = vsel %vm10087, %v11396, %v11397
        %v11399 = vrot.slane %v11344, 6
        %v11400 = vsel %vm10087, %v11397, %v11399
        %v11401 = vrot.slane %v11345, 6
        %v11402 = vrot.slane %v11346, 6
        %v11403 = vsel %vm10087, %v11401, %v11402
        %v11404 = vsel %vm10087, %v11402, %v11399
        %v11405 = vrot.slane %v11347, 6
        %v11406 = vrot.slane %v11348, 6
        %v11407 = vsel %vm10087, %v11405, %v11406
        %v11408 = vsel %vm10087, %v11406, %v11399
        %v11409 = vrot.slane %v11349, 6
        %v11410 = vrot.slane %v11350, 6
        %v11411 = vsel %vm10087, %v11409, %v11410
        %v11412 = vsel %vm10087, %v11410, %v11399
        %v11413 = vrot.slane %v11351, 6
        %v11414 = vrot.slane %v11352, 6
        %v11415 = vsel %vm10087, %v11413, %v11414
        %v11416 = vsel %vm10087, %v11414, %v11399
        %v11417 = vrot.slane %v11353, 6
        %v11418 = vrot.slane %v11354, 6
        %v11419 = vsel %vm10087, %v11417, %v11418
        %v11420 = vsel %vm10087, %v11418, %v11399
        %v11421 = vrot.slane %v11355, 6
        %v11422 = vrot.slane %v11356, 6
        %v11423 = vsel %vm10087, %v11421, %v11422
        %v11424 = vsel %vm10087, %v11422, %v11399
        %v11425 = vrot.slane %v11357, 6
        %v11426 = vrot.slane %v11358, 6
        %v11427 = vsel %vm10087, %v11425, %v11426
        %v11428 = vsel %vm10087, %v11426, %v11399
        %v11429 = vrot.slane %v11359, 6
        %v11430 = vrot.slane %v11360, 6
        %v11431 = vsel %vm10087, %v11429, %v11430
        %v11432 = vsel %vm10087, %v11430, %v11399
        %v11433 = vrot.slane %v11361, 6
        %v11434 = vrot.slane %v11362, 6
        %v11435 = vsel %vm10087, %v11433, %v11434
        %v11436 = vsel %vm10087, %v11434, %v11399
        %v11437 = vrot.slane %v11363, 6
        %v11438 = vrot.slane %v11364, 6
        %v11439 = vsel %vm10087, %v11437, %v11438
        %v11440 = vsel %vm10087, %v11438, %v11399
        %v11441 = vrot.slane %v11365, 6
        %v11442 = vrot.slane %v11366, 6
        %v11443 = vsel %vm10087, %v11441, %v11442
        %v11444 = vsel %vm10087, %v11442, %v11399
        %v11445 = vrot.slane %v11367, 6
        %v11446 = vrot.slane %v11368, 6
        %v11447 = vsel %vm10087, %v11445, %v11446
        %v11448 = vsel %vm10087, %v11446, %v11399
        %v11449 = vsel %vm10087, %v11399, %v11399
        %v11491 = vadd.f32 %v11289, %v11396
        %v11492 = vadd.f32 %v11290, %v11398
        %v11493 = vadd.f32 %v11291, %v11400
        %v11494 = vadd.f32 %v11292, %v11401
        %v11495 = vadd.f32 %v11293, %v11403
        %v11496 = vadd.f32 %v11294, %v11404
        %v11497 = vadd.f32 %v11295, %v11405
        %v11498 = vadd.f32 %v11296, %v11407
        %v11499 = vadd.f32 %v11297, %v11408
        %v11500 = vadd.f32 %v11298, %v11409
        %v11501 = vadd.f32 %v11299, %v11411
        %v11502 = vadd.f32 %v11300, %v11412
        %v11503 = vadd.f32 %v11301, %v11413
        %v11504 = vadd.f32 %v11302, %v11415
        %v11505 = vadd.f32 %v11303, %v11416
        %v11506 = vadd.f32 %v11304, %v11417
        %v11507 = vadd.f32 %v11305, %v11419
        %v11508 = vadd.f32 %v11306, %v11420
        %v11509 = vadd.f32 %v11307, %v11421
        %v11510 = vadd.f32 %v11308, %v11423
        %v11511 = vadd.f32 %v11309, %v11424
        %v11512 = vadd.f32 %v11310, %v11425
        %v11513 = vadd.f32 %v11311, %v11427
        %v11514 = vadd.f32 %v11312, %v11428
        %v11515 = vadd.f32 %v11313, %v11429
        %v11516 = vadd.f32 %v11314, %v11431
        %v11517 = vadd.f32 %v11315, %v11432
        %v11518 = vadd.f32 %v11316, %v11433
        %v11519 = vadd.f32 %v11317, %v11435
        %v11520 = vadd.f32 %v11318, %v11436
        %v11521 = vadd.f32 %v11319, %v11437
        %v11522 = vadd.f32 %v11320, %v11439
        %v11523 = vadd.f32 %v11321, %v11440
        %v11524 = vadd.f32 %v11322, %v11441
        %v11525 = vadd.f32 %v11323, %v11443
        %v11526 = vadd.f32 %v11324, %v11444
        %v11527 = vadd.f32 %v11325, %v11445
        %v11528 = vadd.f32 %v11326, %v11447
        %v11529 = vadd.f32 %v11327, %v11448
        %v11530 = vadd.f32 %v11328, %v11399
        %v11531 = vadd.f32 %v11329, %v11449
        %v11532 = vadd.f32 %v11330, %v11449
        %v11533 = vadd.f32 %v11331, %v11399
        %v11534 = vadd.f32 %v11332, %v11449
        %v11535 = vadd.f32 %v11333, %v11449
        %v11536 = vadd.f32 %v11334, %v11399
        %v11537 = vadd.f32 %v11335, %v11449
        %v11538 = vadd.f32 %v11336, %v11449
        %v11539 = vld [vmem:[%s4] sm:$0x1]
        %v11541 = vlaneseq
        %v11542 = vshrl.u32 %v11541, 7
        %v11543 = vsub.s32 0, %v11542
        %v11544 = vrot.slane %v11539, %v11543
        %v11546 = vadd.f32 %v11491, %v11544
        %v11547 = vadd.f32 %v11492, %v11544
        %v11548 = vadd.f32 %v11493, %v11544
        %v11549 = vadd.f32 %v11494, %v11544
        %v11550 = vadd.f32 %v11495, %v11544
        %v11551 = vadd.f32 %v11496, %v11544
        %v11552 = vadd.f32 %v11497, %v11544
        %v11553 = vadd.f32 %v11498, %v11544
        %v11554 = vadd.f32 %v11499, %v11544
        %v11555 = vadd.f32 %v11500, %v11544
        %v11556 = vadd.f32 %v11501, %v11544
        %v11557 = vadd.f32 %v11502, %v11544
        %v11558 = vadd.f32 %v11503, %v11544
        %v11559 = vadd.f32 %v11504, %v11544
        %v11560 = vadd.f32 %v11505, %v11544
        %v11561 = vadd.f32 %v11506, %v11544
        %v11562 = vadd.f32 %v11507, %v11544
        %v11563 = vadd.f32 %v11508, %v11544
        %v11564 = vadd.f32 %v11509, %v11544
        %v11565 = vadd.f32 %v11510, %v11544
        %v11566 = vadd.f32 %v11511, %v11544
        %v11567 = vadd.f32 %v11512, %v11544
        %v11568 = vadd.f32 %v11513, %v11544
        %v11569 = vadd.f32 %v11514, %v11544
        %v11570 = vadd.f32 %v11515, %v11544
        %v11571 = vadd.f32 %v11516, %v11544
        %v11572 = vadd.f32 %v11517, %v11544
        %v11573 = vadd.f32 %v11518, %v11544
        %v11574 = vadd.f32 %v11519, %v11544
        %v11575 = vadd.f32 %v11520, %v11544
        %v11576 = vadd.f32 %v11521, %v11544
        %v11577 = vadd.f32 %v11522, %v11544
        %v11578 = vadd.f32 %v11523, %v11544
        %v11579 = vadd.f32 %v11524, %v11544
        %v11580 = vadd.f32 %v11525, %v11544
        %v11581 = vadd.f32 %v11526, %v11544
        %v11582 = vadd.f32 %v11527, %v11544
        %v11583 = vadd.f32 %v11528, %v11544
        %v11584 = vadd.f32 %v11529, %v11544
        %v11585 = vadd.f32 %v11530, %v11544
        %v11586 = vadd.f32 %v11531, %v11544
        %v11587 = vadd.f32 %v11532, %v11544
        %v11588 = vadd.f32 %v11533, %v11544
        %v11589 = vadd.f32 %v11534, %v11544
        %v11590 = vadd.f32 %v11535, %v11544
        %v11591 = vadd.f32 %v11536, %v11544
        %v11592 = vadd.f32 %v11537, %v11544
        %v11593 = vadd.f32 %v11538, %v11544
        %v11642 = vrot.slane %v11546, 5
        %v11643 = vrot.slane %v11547, 5
        %v11644 = vsel %vm8576, %v11642, %v11643
        %v11645 = vrot.slane %v11548, 5
        %v11646 = vsel %vm8576, %v11643, %v11645
        %v11647 = vrot.slane %v11549, 5
        %v11648 = vrot.slane %v11550, 5
        %v11649 = vsel %vm8576, %v11647, %v11648
        %v11650 = vrot.slane %v11551, 5
        %v11651 = vsel %vm8576, %v11648, %v11650
        %v11652 = vrot.slane %v11552, 5
        %v11653 = vrot.slane %v11553, 5
        %v11654 = vsel %vm8576, %v11652, %v11653
        %v11655 = vrot.slane %v11554, 5
        %v11656 = vsel %vm8576, %v11653, %v11655
        %v11657 = vrot.slane %v11555, 5
        %v11658 = vrot.slane %v11556, 5
        %v11659 = vsel %vm8576, %v11657, %v11658
        %v11660 = vrot.slane %v11557, 5
        %v11661 = vsel %vm8576, %v11658, %v11660
        %v11662 = vrot.slane %v11558, 5
        %v11663 = vrot.slane %v11559, 5
        %v11664 = vsel %vm8576, %v11662, %v11663
        %v11665 = vrot.slane %v11560, 5
        %v11666 = vsel %vm8576, %v11663, %v11665
        %v11667 = vrot.slane %v11561, 5
        %v11668 = vrot.slane %v11562, 5
        %v11669 = vsel %vm8576, %v11667, %v11668
        %v11670 = vrot.slane %v11563, 5
        %v11671 = vsel %vm8576, %v11668, %v11670
        %v11672 = vrot.slane %v11564, 5
        %v11673 = vrot.slane %v11565, 5
        %v11674 = vsel %vm8576, %v11672, %v11673
        %v11675 = vrot.slane %v11566, 5
        %v11676 = vsel %vm8576, %v11673, %v11675
        %v11677 = vrot.slane %v11567, 5
        %v11678 = vrot.slane %v11568, 5
        %v11679 = vsel %vm8576, %v11677, %v11678
        %v11680 = vrot.slane %v11569, 5
        %v11681 = vsel %vm8576, %v11678, %v11680
        %v11682 = vrot.slane %v11570, 5
        %v11683 = vrot.slane %v11571, 5
        %v11684 = vsel %vm8576, %v11682, %v11683
        %v11685 = vrot.slane %v11572, 5
        %v11686 = vsel %vm8576, %v11683, %v11685
        %v11687 = vrot.slane %v11573, 5
        %v11688 = vrot.slane %v11574, 5
        %v11689 = vsel %vm8576, %v11687, %v11688
        %v11690 = vrot.slane %v11575, 5
        %v11691 = vsel %vm8576, %v11688, %v11690
        %v11692 = vrot.slane %v11576, 5
        %v11693 = vrot.slane %v11577, 5
        %v11694 = vsel %vm8576, %v11692, %v11693
        %v11695 = vrot.slane %v11578, 5
        %v11696 = vsel %vm8576, %v11693, %v11695
        %v11697 = vrot.slane %v11579, 5
        %v11698 = vrot.slane %v11580, 5
        %v11699 = vsel %vm8576, %v11697, %v11698
        %v11700 = vrot.slane %v11581, 5
        %v11701 = vsel %vm8576, %v11698, %v11700
        %v11702 = vrot.slane %v11582, 5
        %v11703 = vrot.slane %v11583, 5
        %v11704 = vsel %vm8576, %v11702, %v11703
        %v11705 = vrot.slane %v11584, 5
        %v11706 = vsel %vm8576, %v11703, %v11705
        %v11707 = vrot.slane %v11585, 5
        %v11708 = vrot.slane %v11586, 5
        %v11709 = vsel %vm8576, %v11707, %v11708
        %v11710 = vrot.slane %v11587, 5
        %v11711 = vsel %vm8576, %v11708, %v11710
        %v11712 = vrot.slane %v11588, 5
        %v11713 = vrot.slane %v11589, 5
        %v11714 = vsel %vm8576, %v11712, %v11713
        %v11715 = vrot.slane %v11590, 5
        %v11716 = vsel %vm8576, %v11713, %v11715
        %v11717 = vrot.slane %v11591, 5
        %v11718 = vrot.slane %v11592, 5
        %v11719 = vsel %vm8576, %v11717, %v11718
        %v11720 = vrot.slane %v11593, 5
        %v11721 = vsel %vm8576, %v11718, %v11720
        %v11754 = vpack.c.bf16 %v11646, %v11644
        %v11755 = vpack.c.bf16 %v11651, %v11649
        %v11756 = vpack.c.bf16 %v11656, %v11654
        %v11757 = vpack.c.bf16 %v11661, %v11659
        %v11758 = vpack.c.bf16 %v11666, %v11664
        %v11759 = vpack.c.bf16 %v11671, %v11669
        %v11760 = vpack.c.bf16 %v11676, %v11674
        %v11761 = vpack.c.bf16 %v11681, %v11679
        %v11762 = vpack.c.bf16 %v11686, %v11684
        %v11763 = vpack.c.bf16 %v11691, %v11689
        %v11764 = vpack.c.bf16 %v11696, %v11694
        %v11765 = vpack.c.bf16 %v11701, %v11699
        %v11766 = vpack.c.bf16 %v11706, %v11704
        %v11767 = vpack.c.bf16 %v11711, %v11709
        %v11768 = vpack.c.bf16 %v11716, %v11714
        %v11769 = vpack.c.bf16 %v11721, %v11719
        %v11770 = vld [vmem:[%s5] sm:$0xff]
        %v11771 = vld [vmem:[%s5 + $0x8] sm:$0xff]
        %v11772 = vld [vmem:[%s5 + $0x10] sm:$0xff]
        %v11773 = vld [vmem:[%s5 + $0x18] sm:$0xff]
        %v11774 = vld [vmem:[%s5 + $0x20] sm:$0xff]
        %v11775 = vld [vmem:[%s5 + $0x28] sm:$0xff]
        %v11776 = vld [vmem:[%s5 + $0x30] sm:$0xff]
        %v11777 = vld [vmem:[%s5 + $0x38] sm:$0xff]
        %v11778 = vld [vmem:[%s6] sm:$0x3]
        %v11780 = vlaneseq
        %v11781 = vshrl.u32 %v11780, 7
        %v11782 = vsub.s32 0, %v11781
        %v11783 = vrot.slane %v11778, %v11782
        %v11784 = vlaneseq
        %v11785 = vshrl.u32 %v11784, 7
        %v11786 = vsub.s32 1, %v11785
        %v11787 = vrot.slane %v11778, %v11786
        %v11798 = vunpack.c.l.b16 %v11770
        %v11799 = vunpack.c.h.b16 %v11770
        %v11800 = vunpack.c.l.b16 %v11771
        %v11801 = vunpack.c.h.b16 %v11771
        %v11802 = vunpack.c.l.b16 %v11772
        %v11803 = vunpack.c.h.b16 %v11772
        %v11804 = vunpack.c.l.b16 %v11773
        %v11805 = vunpack.c.h.b16 %v11773
        %v11806 = vunpack.c.l.b16 %v11774
        %v11807 = vunpack.c.h.b16 %v11774
        %v11808 = vunpack.c.l.b16 %v11775
        %v11809 = vunpack.c.h.b16 %v11775
        %v11810 = vunpack.c.l.b16 %v11776
        %v11811 = vunpack.c.h.b16 %v11776
        %v11812 = vunpack.c.l.b16 %v11777
        %v11813 = vunpack.c.h.b16 %v11777
        %v11814 = vpack.c.b16 %v11800, %v11798
        %v11815 = vpack.c.b16 %v11801, %v11799
        %v11816 = vpack.c.b16 %v11804, %v11802
        %v11817 = vpack.c.b16 %v11805, %v11803
        %v11818 = vpack.c.b16 %v11808, %v11806
        %v11819 = vpack.c.b16 %v11809, %v11807
        %v11820 = vpack.c.b16 %v11812, %v11810
        %v11821 = vpack.c.b16 %v11813, %v11811
        %vm11830 = vcmask 523264
        %v11832 = vsel %vm11830, %v11754, 0
        %v11835 = vsel %vm11830, %v11755, 0
        %v11838 = vsel %vm11830, %v11756, 0
        %v11841 = vsel %vm11830, %v11757, 0
        %v11844 = vsel %vm11830, %v11758, 0
        %v11847 = vsel %vm11830, %v11759, 0
        %v11850 = vsel %vm11830, %v11760, 0
        %v11853 = vsel %vm11830, %v11761, 0
        %v11856 = vsel %vm11830, %v11762, 0
        %v11859 = vsel %vm11830, %v11763, 0
        %v11862 = vsel %vm11830, %v11764, 0
        %v11865 = vsel %vm11830, %v11765, 0
        %v11868 = vsel %vm11830, %v11766, 0
        %v11871 = vsel %vm11830, %v11767, 0
        %v11874 = vsel %vm11830, %v11768, 0
        %v11877 = vsel %vm11830, %v11769, 0
        %11879 = vmatprep.subr.bf16.mxu0 %v11815
        %11880 = vmatpush1.bf16.msra.mxu0 %v11814
        %11881 = vmatprep.subr.bf16.mxu0 %v11817
        %11882 = vmatpush1.bf16.msra.mxu0 %v11816
        %11883 = vmatprep.subr.bf16.mxu0 %v11819
        %11884 = vmatpush1.bf16.msra.mxu0 %v11818
        %11885 = vmatprep.subr.bf16.mxu0 %v11821
        %11886 = vmatpush1.bf16.msra.mxu0 %v11820
        %11887 = vmatprep.subr.bf16.mxu0 0
        %11888 = vmatpush1.bf16.msra.mxu0 0
        %11889 = vmatprep.subr.bf16.mxu0 0
        %11890 = vmatpush1.bf16.msra.mxu0 0
        %11891 = vmatprep.subr.bf16.mxu0 0
        %11892 = vmatpush1.bf16.msra.mxu0 0
        %11893 = vmatprep.subr.bf16.mxu0 0
        %11894 = vmatpush1.bf16.msra.mxu0 0
        %11895 = vmatprep.subr.bf16.mxu0 0
        %11896 = vmatpush1.bf16.msra.mxu0 0
        %11897 = vmatprep.subr.bf16.mxu0 0
        %11898 = vmatpush1.bf16.msra.mxu0 0
        %11899 = vmatprep.subr.bf16.mxu0 0
        %11900 = vmatpush1.bf16.msra.mxu0 0
        %11901 = vmatprep.subr.bf16.mxu0 0
        %11902 = vmatpush1.bf16.msra.mxu0 0
        %11903 = vmatprep.subr.bf16.mxu0 0
        %11904 = vmatpush1.bf16.msra.mxu0 0
        %11905 = vmatprep.subr.bf16.mxu0 0
        %11906 = vmatpush1.bf16.msra.mxu0 0
        %11907 = vmatprep.subr.bf16.mxu0 0
        %11908 = vmatpush1.bf16.msra.mxu0 0
        %11909 = vmatprep.subr.bf16.mxu0 0
        %11910 = vmatpush1.bf16.msra.mxu0 0
        %11911 = vmatprep.mubr.bf16.mxu0 0
        %11912 = vmatmul.mubr.bf16.gmra.mrb[0].mxu0 %v11832
        %v11913 = vpop.f32.mrb[0].mxu0
        %v11914 = vadd.f32 %v11783, %v11913
        %v11915 = vpop.f32.mrb[0].mxu0
        %v11916 = vadd.f32 %v11787, %v11915
        %v11917 = vpop.f32.mrb[0].mxu0
        %v11918 = vadd.f32 %v11783, %v11917
        %v11919 = vpop.f32.mrb[0].mxu0
        %v11920 = vadd.f32 %v11787, %v11919
        %11921 = vmatprep.mubr.bf16.mxu0 0
        %11922 = vmatmul.mubr.bf16.gmra.mrb[0].mxu0 %v11835
        %v11923 = vpop.f32.mrb[0].mxu0
        %v11924 = vadd.f32 %v11783, %v11923
        %v11925 = vpop.f32.mrb[0].mxu0
        %v11926 = vadd.f32 %v11787, %v11925
        %v11927 = vpop.f32.mrb[0].mxu0
        %v11928 = vadd.f32 %v11783, %v11927
        %v11929 = vpop.f32.mrb[0].mxu0
        %v11930 = vadd.f32 %v11787, %v11929
        %11931 = vmatprep.mubr.bf16.mxu0 0
        %11932 = vmatmul.mubr.bf16.gmra.mrb[0].mxu0 %v11838
        %v11933 = vpop.f32.mrb[0].mxu0
        %v11934 = vadd.f32 %v11783, %v11933
        %v11935 = vpop.f32.mrb[0].mxu0
        %v11936 = vadd.f32 %v11787, %v11935
        %v11937 = vpop.f32.mrb[0].mxu0
        %v11938 = vadd.f32 %v11783, %v11937
        %v11939 = vpop.f32.mrb[0].mxu0
        %v11940 = vadd.f32 %v11787, %v11939
        %11941 = vmatprep.mubr.bf16.mxu0 0
        %11942 = vmatmul.mubr.bf16.gmra.mrb[0].mxu0 %v11841
        %v11943 = vpop.f32.mrb[0].mxu0
        %v11944 = vadd.f32 %v11783, %v11943
        %v11945 = vpop.f32.mrb[0].mxu0
        %v11946 = vadd.f32 %v11787, %v11945
        %v11947 = vpop.f32.mrb[0].mxu0
        %v11948 = vadd.f32 %v11783, %v11947
        %v11949 = vpop.f32.mrb[0].mxu0
        %v11950 = vadd.f32 %v11787, %v11949
        %11951 = vmatprep.mubr.bf16.mxu0 0
        %11952 = vmatmul.mubr.bf16.gmra.mrb[0].mxu0 %v11844
        %v11953 = vpop.f32.mrb[0].mxu0
        %v11954 = vadd.f32 %v11783, %v11953
        %v11955 = vpop.f32.mrb[0].mxu0
        %v11956 = vadd.f32 %v11787, %v11955
        %v11957 = vpop.f32.mrb[0].mxu0
        %v11958 = vadd.f32 %v11783, %v11957
        %v11959 = vpop.f32.mrb[0].mxu0
        %v11960 = vadd.f32 %v11787, %v11959
        %11961 = vmatprep.mubr.bf16.mxu0 0
        %11962 = vmatmul.mubr.bf16.gmra.mrb[0].mxu0 %v11847
        %v11963 = vpop.f32.mrb[0].mxu0
        %v11964 = vadd.f32 %v11783, %v11963
        %v11965 = vpop.f32.mrb[0].mxu0
        %v11966 = vadd.f32 %v11787, %v11965
        %v11967 = vpop.f32.mrb[0].mxu0
        %v11968 = vadd.f32 %v11783, %v11967
        %v11969 = vpop.f32.mrb[0].mxu0
        %v11970 = vadd.f32 %v11787, %v11969
        %11971 = vmatprep.mubr.bf16.mxu0 0
        %11972 = vmatmul.mubr.bf16.gmra.mrb[0].mxu0 %v11850
        %v11973 = vpop.f32.mrb[0].mxu0
        %v11974 = vadd.f32 %v11783, %v11973
        %v11975 = vpop.f32.mrb[0].mxu0
        %v11976 = vadd.f32 %v11787, %v11975
        %v11977 = vpop.f32.mrb[0].mxu0
        %v11978 = vadd.f32 %v11783, %v11977
        %v11979 = vpop.f32.mrb[0].mxu0
        %v11980 = vadd.f32 %v11787, %v11979
        %11981 = vmatprep.mubr.bf16.mxu0 0
        %11982 = vmatmul.mubr.bf16.gmra.mrb[0].mxu0 %v11853
        %v11983 = vpop.f32.mrb[0].mxu0
        %v11984 = vadd.f32 %v11783, %v11983
        %v11985 = vpop.f32.mrb[0].mxu0
        %v11986 = vadd.f32 %v11787, %v11985
        %v11987 = vpop.f32.mrb[0].mxu0
        %v11988 = vadd.f32 %v11783, %v11987
        %v11989 = vpop.f32.mrb[0].mxu0
        %v11990 = vadd.f32 %v11787, %v11989
        %11991 = vmatprep.mubr.bf16.mxu0 0
        %11992 = vmatmul.mubr.bf16.gmra.mrb[0].mxu0 %v11856
        %v11993 = vpop.f32.mrb[0].mxu0
        %v11994 = vadd.f32 %v11783, %v11993
        %v11995 = vpop.f32.mrb[0].mxu0
        %v11996 = vadd.f32 %v11787, %v11995
        %v11997 = vpop.f32.mrb[0].mxu0
        %v11998 = vadd.f32 %v11783, %v11997
        %v11999 = vpop.f32.mrb[0].mxu0
        %v12000 = vadd.f32 %v11787, %v11999
        %12001 = vmatprep.mubr.bf16.mxu0 0
        %12002 = vmatmul.mubr.bf16.gmra.mrb[0].mxu0 %v11859
        %v12003 = vpop.f32.mrb[0].mxu0
        %v12004 = vadd.f32 %v11783, %v12003
        %v12005 = vpop.f32.mrb[0].mxu0
        %v12006 = vadd.f32 %v11787, %v12005
        %v12007 = vpop.f32.mrb[0].mxu0
        %v12008 = vadd.f32 %v11783, %v12007
        %v12009 = vpop.f32.mrb[0].mxu0
        %v12010 = vadd.f32 %v11787, %v12009
        %12011 = vmatprep.mubr.bf16.mxu0 0
        %12012 = vmatmul.mubr.bf16.gmra.mrb[0].mxu0 %v11862
        %v12013 = vpop.f32.mrb[0].mxu0
        %v12014 = vadd.f32 %v11783, %v12013
        %v12015 = vpop.f32.mrb[0].mxu0
        %v12016 = vadd.f32 %v11787, %v12015
        %v12017 = vpop.f32.mrb[0].mxu0
        %v12018 = vadd.f32 %v11783, %v12017
        %v12019 = vpop.f32.mrb[0].mxu0
        %v12020 = vadd.f32 %v11787, %v12019
        %12021 = vmatprep.mubr.bf16.mxu0 0
        %12022 = vmatmul.mubr.bf16.gmra.mrb[0].mxu0 %v11865
        %v12023 = vpop.f32.mrb[0].mxu0
        %v12024 = vadd.f32 %v11783, %v12023
        %v12025 = vpop.f32.mrb[0].mxu0
        %v12026 = vadd.f32 %v11787, %v12025
        %v12027 = vpop.f32.mrb[0].mxu0
        %v12028 = vadd.f32 %v11783, %v12027
        %v12029 = vpop.f32.mrb[0].mxu0
        %v12030 = vadd.f32 %v11787, %v12029
        %12031 = vmatprep.mubr.bf16.mxu0 0
        %12032 = vmatmul.mubr.bf16.gmra.mrb[0].mxu0 %v11868
        %v12033 = vpop.f32.mrb[0].mxu0
        %v12034 = vadd.f32 %v11783, %v12033
        %v12035 = vpop.f32.mrb[0].mxu0
        %v12036 = vadd.f32 %v11787, %v12035
        %v12037 = vpop.f32.mrb[0].mxu0
        %v12038 = vadd.f32 %v11783, %v12037
        %v12039 = vpop.f32.mrb[0].mxu0
        %v12040 = vadd.f32 %v11787, %v12039
        %12041 = vmatprep.mubr.bf16.mxu0 0
        %12042 = vmatmul.mubr.bf16.gmra.mrb[0].mxu0 %v11871
        %v12043 = vpop.f32.mrb[0].mxu0
        %v12044 = vadd.f32 %v11783, %v12043
        %v12045 = vpop.f32.mrb[0].mxu0
        %v12046 = vadd.f32 %v11787, %v12045
        %v12047 = vpop.f32.mrb[0].mxu0
        %v12048 = vadd.f32 %v11783, %v12047
        %v12049 = vpop.f32.mrb[0].mxu0
        %v12050 = vadd.f32 %v11787, %v12049
        %12051 = vmatprep.mubr.bf16.mxu0 0
        %12052 = vmatmul.mubr.bf16.gmra.mrb[0].mxu0 %v11874
        %v12053 = vpop.f32.mrb[0].mxu0
        %v12054 = vadd.f32 %v11783, %v12053
        %v12055 = vpop.f32.mrb[0].mxu0
        %v12056 = vadd.f32 %v11787, %v12055
        %v12057 = vpop.f32.mrb[0].mxu0
        %v12058 = vadd.f32 %v11783, %v12057
        %v12059 = vpop.f32.mrb[0].mxu0
        %v12060 = vadd.f32 %v11787, %v12059
        %12061 = vmatprep.mubr.bf16.mxu0 0
        %12062 = vmatmul.mubr.bf16.gmra.mrb[0].mxu0 %v11877
        %v12063 = vpop.f32.mrb[0].mxu0
        %v12064 = vadd.f32 %v11783, %v12063
        %v12065 = vpop.f32.mrb[0].mxu0
        %v12066 = vadd.f32 %v11787, %v12065
        %v12067 = vpop.f32.mrb[0].mxu0
        %v12068 = vadd.f32 %v11783, %v12067
        %v12069 = vpop.f32.mrb[0].mxu0
        %v12070 = vadd.f32 %v11787, %v12069
        %12071 = vdwg.mxu0
        %v12072 = vmul.f32 %v11914, 0.5
        %v12073 = vmul.f32 %v11916, 0.5
        %v12074 = vmul.f32 %v11918, 0.5
        %v12075 = vmul.f32 %v11920, 0.5
        %v12076 = vmul.f32 %v11924, 0.5
        %v12077 = vmul.f32 %v11926, 0.5
        %v12078 = vmul.f32 %v11928, 0.5
        %v12079 = vmul.f32 %v11930, 0.5
        %v12080 = vmul.f32 %v11934, 0.5
        %v12081 = vmul.f32 %v11936, 0.5
        %v12082 = vmul.f32 %v11938, 0.5
        %v12083 = vmul.f32 %v11940, 0.5
        %v12084 = vmul.f32 %v11944, 0.5
        %v12085 = vmul.f32 %v11946, 0.5
        %v12086 = vmul.f32 %v11948, 0.5
        %v12087 = vmul.f32 %v11950, 0.5
        %v12088 = vmul.f32 %v11954, 0.5
        %v12089 = vmul.f32 %v11956, 0.5
        %v12090 = vmul.f32 %v11958, 0.5
        %v12091 = vmul.f32 %v11960, 0.5
        %v12092 = vmul.f32 %v11964, 0.5
        %v12093 = vmul.f32 %v11966, 0.5
        %v12094 = vmul.f32 %v11968, 0.5
        %v12095 = vmul.f32 %v11970, 0.5
        %v12096 = vmul.f32 %v11974, 0.5
        %v12097 = vmul.f32 %v11976, 0.5
        %v12098 = vmul.f32 %v11978, 0.5
        %v12099 = vmul.f32 %v11980, 0.5
        %v12100 = vmul.f32 %v11984, 0.5
        %v12101 = vmul.f32 %v11986, 0.5
        %v12102 = vmul.f32 %v11988, 0.5
        %v12103 = vmul.f32 %v11990, 0.5
        %v12104 = vmul.f32 %v11994, 0.5
        %v12105 = vmul.f32 %v11996, 0.5
        %v12106 = vmul.f32 %v11998, 0.5
        %v12107 = vmul.f32 %v12000, 0.5
        %v12108 = vmul.f32 %v12004, 0.5
        %v12109 = vmul.f32 %v12006, 0.5
        %v12110 = vmul.f32 %v12008, 0.5
        %v12111 = vmul.f32 %v12010, 0.5
        %v12112 = vmul.f32 %v12014, 0.5
        %v12113 = vmul.f32 %v12016, 0.5
        %v12114 = vmul.f32 %v12018, 0.5
        %v12115 = vmul.f32 %v12020, 0.5
        %v12116 = vmul.f32 %v12024, 0.5
        %v12117 = vmul.f32 %v12026, 0.5
        %v12118 = vmul.f32 %v12028, 0.5
        %v12119 = vmul.f32 %v12030, 0.5
        %v12120 = vmul.f32 %v12034, 0.5
        %v12121 = vmul.f32 %v12036, 0.5
        %v12122 = vmul.f32 %v12038, 0.5
        %v12123 = vmul.f32 %v12040, 0.5
        %v12124 = vmul.f32 %v12044, 0.5
        %v12125 = vmul.f32 %v12046, 0.5
        %v12126 = vmul.f32 %v12048, 0.5
        %v12127 = vmul.f32 %v12050, 0.5
        %v12128 = vmul.f32 %v12054, 0.5
        %v12129 = vmul.f32 %v12056, 0.5
        %v12130 = vmul.f32 %v12058, 0.5
        %v12131 = vmul.f32 %v12060, 0.5
        %v12132 = vmul.f32 %v12064, 0.5
        %v12133 = vmul.f32 %v12066, 0.5
        %v12134 = vmul.f32 %v12068, 0.5
        %v12135 = vmul.f32 %v12070, 0.5
        %v12136 = vmul.f32 %v11914, 0.70710677
        %v12137 = vmul.f32 %v11916, 0.70710677
        %v12138 = vmul.f32 %v11918, 0.70710677
        %v12139 = vmul.f32 %v11920, 0.70710677
        %v12140 = vmul.f32 %v11924, 0.70710677
        %v12141 = vmul.f32 %v11926, 0.70710677
        %v12142 = vmul.f32 %v11928, 0.70710677
        %v12143 = vmul.f32 %v11930, 0.70710677
        %v12144 = vmul.f32 %v11934, 0.70710677
        %v12145 = vmul.f32 %v11936, 0.70710677
        %v12146 = vmul.f32 %v11938, 0.70710677
        %v12147 = vmul.f32 %v11940, 0.70710677
        %v12148 = vmul.f32 %v11944, 0.70710677
        %v12149 = vmul.f32 %v11946, 0.70710677
        %v12150 = vmul.f32 %v11948, 0.70710677
        %v12151 = vmul.f32 %v11950, 0.70710677
        %v12152 = vmul.f32 %v11954, 0.70710677
        %v12153 = vmul.f32 %v11956, 0.70710677
        %v12154 = vmul.f32 %v11958, 0.70710677
        %v12155 = vmul.f32 %v11960, 0.70710677
        %v12156 = vmul.f32 %v11964, 0.70710677
        %v12157 = vmul.f32 %v11966, 0.70710677
        %v12158 = vmul.f32 %v11968, 0.70710677
        %v12159 = vmul.f32 %v11970, 0.70710677
        %v12160 = vmul.f32 %v11974, 0.70710677
        %v12161 = vmul.f32 %v11976, 0.70710677
        %v12162 = vmul.f32 %v11978, 0.70710677
        %v12163 = vmul.f32 %v11980, 0.70710677
        %v12164 = vmul.f32 %v11984, 0.70710677
        %v12165 = vmul.f32 %v11986, 0.70710677
        %v12166 = vmul.f32 %v11988, 0.70710677
        %v12167 = vmul.f32 %v11990, 0.70710677
        %v12168 = vmul.f32 %v11994, 0.70710677
        %v12169 = vmul.f32 %v11996, 0.70710677
        %v12170 = vmul.f32 %v11998, 0.70710677
        %v12171 = vmul.f32 %v12000, 0.70710677
        %v12172 = vmul.f32 %v12004, 0.70710677
        %v12173 = vmul.f32 %v12006, 0.70710677
        %v12174 = vmul.f32 %v12008, 0.70710677
        %v12175 = vmul.f32 %v12010, 0.70710677
        %v12176 = vmul.f32 %v12014, 0.70710677
        %v12177 = vmul.f32 %v12016, 0.70710677
        %v12178 = vmul.f32 %v12018, 0.70710677
        %v12179 = vmul.f32 %v12020, 0.70710677
        %v12180 = vmul.f32 %v12024, 0.70710677
        %v12181 = vmul.f32 %v12026, 0.70710677
        %v12182 = vmul.f32 %v12028, 0.70710677
        %v12183 = vmul.f32 %v12030, 0.70710677
        %v12184 = vmul.f32 %v12034, 0.70710677
        %v12185 = vmul.f32 %v12036, 0.70710677
        %v12186 = vmul.f32 %v12038, 0.70710677
        %v12187 = vmul.f32 %v12040, 0.70710677
        %v12188 = vmul.f32 %v12044, 0.70710677
        %v12189 = vmul.f32 %v12046, 0.70710677
        %v12190 = vmul.f32 %v12048, 0.70710677
        %v12191 = vmul.f32 %v12050, 0.70710677
        %v12192 = vmul.f32 %v12054, 0.70710677
        %v12193 = vmul.f32 %v12056, 0.70710677
        %v12194 = vmul.f32 %v12058, 0.70710677
        %v12195 = vmul.f32 %v12060, 0.70710677
        %v12196 = vmul.f32 %v12064, 0.70710677
        %v12197 = vmul.f32 %v12066, 0.70710677
        %v12198 = vmul.f32 %v12068, 0.70710677
        %v12199 = vmul.f32 %v12070, 0.70710677
        %v12200 = verf.f32.pop %v12136
        %v12201 = verf.f32.pop %v12137
        %v12202 = verf.f32.pop %v12138
        %v12203 = verf.f32.pop %v12139
        %v12204 = verf.f32.pop %v12140
        %v12205 = verf.f32.pop %v12141
        %v12206 = verf.f32.pop %v12142
        %v12207 = verf.f32.pop %v12143
        %v12208 = verf.f32.pop %v12144
        %v12209 = verf.f32.pop %v12145
        %v12210 = verf.f32.pop %v12146
        %v12211 = verf.f32.pop %v12147
        %v12212 = verf.f32.pop %v12148
        %v12213 = verf.f32.pop %v12149
        %v12214 = verf.f32.pop %v12150
        %v12215 = verf.f32.pop %v12151
        %v12216 = verf.f32.pop %v12152
        %v12217 = verf.f32.pop %v12153
        %v12218 = verf.f32.pop %v12154
        %v12219 = verf.f32.pop %v12155
        %v12220 = verf.f32.pop %v12156
        %v12221 = verf.f32.pop %v12157
        %v12222 = verf.f32.pop %v12158
        %v12223 = verf.f32.pop %v12159
        %v12224 = verf.f32.pop %v12160
        %v12225 = verf.f32.pop %v12161
        %v12226 = verf.f32.pop %v12162
        %v12227 = verf.f32.pop %v12163
        %v12228 = verf.f32.pop %v12164
        %v12229 = verf.f32.pop %v12165
        %v12230 = verf.f32.pop %v12166
        %v12231 = verf.f32.pop %v12167
        %v12232 = verf.f32.pop %v12168
        %v12233 = verf.f32.pop %v12169
        %v12234 = verf.f32.pop %v12170
        %v12235 = verf.f32.pop %v12171
        %v12236 = verf.f32.pop %v12172
        %v12237 = verf.f32.pop %v12173
        %v12238 = verf.f32.pop %v12174
        %v12239 = verf.f32.pop %v12175
        %v12240 = verf.f32.pop %v12176
        %v12241 = verf.f32.pop %v12177
        %v12242 = verf.f32.pop %v12178
        %v12243 = verf.f32.pop %v12179
        %v12244 = verf.f32.pop %v12180
        %v12245 = verf.f32.pop %v12181
        %v12246 = verf.f32.pop %v12182
        %v12247 = verf.f32.pop %v12183
        %v12248 = verf.f32.pop %v12184
        %v12249 = verf.f32.pop %v12185
        %v12250 = verf.f32.pop %v12186
        %v12251 = verf.f32.pop %v12187
        %v12252 = verf.f32.pop %v12188
        %v12253 = verf.f32.pop %v12189
        %v12254 = verf.f32.pop %v12190
        %v12255 = verf.f32.pop %v12191
        %v12256 = verf.f32.pop %v12192
        %v12257 = verf.f32.pop %v12193
        %v12258 = verf.f32.pop %v12194
        %v12259 = verf.f32.pop %v12195
        %v12260 = verf.f32.pop %v12196
        %v12261 = verf.f32.pop %v12197
        %v12262 = verf.f32.pop %v12198
        %v12263 = verf.f32.pop %v12199
        %v12264 = vadd.f32 %v12200, 1.0
        %v12265 = vadd.f32 %v12201, 1.0
        %v12266 = vadd.f32 %v12202, 1.0
        %v12267 = vadd.f32 %v12203, 1.0
        %v12268 = vadd.f32 %v12204, 1.0
        %v12269 = vadd.f32 %v12205, 1.0
        %v12270 = vadd.f32 %v12206, 1.0
        %v12271 = vadd.f32 %v12207, 1.0
        %v12272 = vadd.f32 %v12208, 1.0
        %v12273 = vadd.f32 %v12209, 1.0
        %v12274 = vadd.f32 %v12210, 1.0
        %v12275 = vadd.f32 %v12211, 1.0
        %v12276 = vadd.f32 %v12212, 1.0
        %v12277 = vadd.f32 %v12213, 1.0
        %v12278 = vadd.f32 %v12214, 1.0
        %v12279 = vadd.f32 %v12215, 1.0
        %v12280 = vadd.f32 %v12216, 1.0
        %v12281 = vadd.f32 %v12217, 1.0
        %v12282 = vadd.f32 %v12218, 1.0
        %v12283 = vadd.f32 %v12219, 1.0
        %v12284 = vadd.f32 %v12220, 1.0
        %v12285 = vadd.f32 %v12221, 1.0
        %v12286 = vadd.f32 %v12222, 1.0
        %v12287 = vadd.f32 %v12223, 1.0
        %v12288 = vadd.f32 %v12224, 1.0
        %v12289 = vadd.f32 %v12225, 1.0
        %v12290 = vadd.f32 %v12226, 1.0
        %v12291 = vadd.f32 %v12227, 1.0
        %v12292 = vadd.f32 %v12228, 1.0
        %v12293 = vadd.f32 %v12229, 1.0
        %v12294 = vadd.f32 %v12230, 1.0
        %v12295 = vadd.f32 %v12231, 1.0
        %v12296 = vadd.f32 %v12232, 1.0
        %v12297 = vadd.f32 %v12233, 1.0
        %v12298 = vadd.f32 %v12234, 1.0
        %v12299 = vadd.f32 %v12235, 1.0
        %v12300 = vadd.f32 %v12236, 1.0
        %v12301 = vadd.f32 %v12237, 1.0
        %v12302 = vadd.f32 %v12238, 1.0
        %v12303 = vadd.f32 %v12239, 1.0
        %v12304 = vadd.f32 %v12240, 1.0
        %v12305 = vadd.f32 %v12241, 1.0
        %v12306 = vadd.f32 %v12242, 1.0
        %v12307 = vadd.f32 %v12243, 1.0
        %v12308 = vadd.f32 %v12244, 1.0
        %v12309 = vadd.f32 %v12245, 1.0
        %v12310 = vadd.f32 %v12246, 1.0
        %v12311 = vadd.f32 %v12247, 1.0
        %v12312 = vadd.f32 %v12248, 1.0
        %v12313 = vadd.f32 %v12249, 1.0
        %v12314 = vadd.f32 %v12250, 1.0
        %v12315 = vadd.f32 %v12251, 1.0
        %v12316 = vadd.f32 %v12252, 1.0
        %v12317 = vadd.f32 %v12253, 1.0
        %v12318 = vadd.f32 %v12254, 1.0
        %v12319 = vadd.f32 %v12255, 1.0
        %v12320 = vadd.f32 %v12256, 1.0
        %v12321 = vadd.f32 %v12257, 1.0
        %v12322 = vadd.f32 %v12258, 1.0
        %v12323 = vadd.f32 %v12259, 1.0
        %v12324 = vadd.f32 %v12260, 1.0
        %v12325 = vadd.f32 %v12261, 1.0
        %v12326 = vadd.f32 %v12262, 1.0
        %v12327 = vadd.f32 %v12263, 1.0
        %v12328 = vmul.f32 %v12072, %v12264
        %v12329 = vmul.f32 %v12073, %v12265
        %v12330 = vmul.f32 %v12074, %v12266
        %v12331 = vmul.f32 %v12075, %v12267
        %v12332 = vmul.f32 %v12076, %v12268
        %v12333 = vmul.f32 %v12077, %v12269
        %v12334 = vmul.f32 %v12078, %v12270
        %v12335 = vmul.f32 %v12079, %v12271
        %v12336 = vmul.f32 %v12080, %v12272
        %v12337 = vmul.f32 %v12081, %v12273
        %v12338 = vmul.f32 %v12082, %v12274
        %v12339 = vmul.f32 %v12083, %v12275
        %v12340 = vmul.f32 %v12084, %v12276
        %v12341 = vmul.f32 %v12085, %v12277
        %v12342 = vmul.f32 %v12086, %v12278
        %v12343 = vmul.f32 %v12087, %v12279
        %v12344 = vmul.f32 %v12088, %v12280
        %v12345 = vmul.f32 %v12089, %v12281
        %v12346 = vmul.f32 %v12090, %v12282
        %v12347 = vmul.f32 %v12091, %v12283
        %v12348 = vmul.f32 %v12092, %v12284
        %v12349 = vmul.f32 %v12093, %v12285
        %v12350 = vmul.f32 %v12094, %v12286
        %v12351 = vmul.f32 %v12095, %v12287
        %v12352 = vmul.f32 %v12096, %v12288
        %v12353 = vmul.f32 %v12097, %v12289
        %v12354 = vmul.f32 %v12098, %v12290
        %v12355 = vmul.f32 %v12099, %v12291
        %v12356 = vmul.f32 %v12100, %v12292
        %v12357 = vmul.f32 %v12101, %v12293
        %v12358 = vmul.f32 %v12102, %v12294
        %v12359 = vmul.f32 %v12103, %v12295
        %v12360 = vmul.f32 %v12104, %v12296
        %v12361 = vmul.f32 %v12105, %v12297
        %v12362 = vmul.f32 %v12106, %v12298
        %v12363 = vmul.f32 %v12107, %v12299
        %v12364 = vmul.f32 %v12108, %v12300
        %v12365 = vmul.f32 %v12109, %v12301
        %v12366 = vmul.f32 %v12110, %v12302
        %v12367 = vmul.f32 %v12111, %v12303
        %v12368 = vmul.f32 %v12112, %v12304
        %v12369 = vmul.f32 %v12113, %v12305
        %v12370 = vmul.f32 %v12114, %v12306
        %v12371 = vmul.f32 %v12115, %v12307
        %v12372 = vmul.f32 %v12116, %v12308
        %v12373 = vmul.f32 %v12117, %v12309
        %v12374 = vmul.f32 %v12118, %v12310
        %v12375 = vmul.f32 %v12119, %v12311
        %v12376 = vmul.f32 %v12120, %v12312
        %v12377 = vmul.f32 %v12121, %v12313
        %v12378 = vmul.f32 %v12122, %v12314
        %v12379 = vmul.f32 %v12123, %v12315
        %v12380 = vmul.f32 %v12124, %v12316
        %v12381 = vmul.f32 %v12125, %v12317
        %v12382 = vmul.f32 %v12126, %v12318
        %v12383 = vmul.f32 %v12127, %v12319
        %v12384 = vmul.f32 %v12128, %v12320
        %v12385 = vmul.f32 %v12129, %v12321
        %v12386 = vmul.f32 %v12130, %v12322
        %v12387 = vmul.f32 %v12131, %v12323
        %v12388 = vmul.f32 %v12132, %v12324
        %v12389 = vmul.f32 %v12133, %v12325
        %v12390 = vmul.f32 %v12134, %v12326
        %v12391 = vmul.f32 %v12135, %v12327
        %v12392 = vpack.c.bf16 %v12330, %v12328
        %v12393 = vpack.c.bf16 %v12331, %v12329
        %v12394 = vpack.c.bf16 %v12334, %v12332
        %v12395 = vpack.c.bf16 %v12335, %v12333
        %v12396 = vpack.c.bf16 %v12338, %v12336
        %v12397 = vpack.c.bf16 %v12339, %v12337
        %v12398 = vpack.c.bf16 %v12342, %v12340
        %v12399 = vpack.c.bf16 %v12343, %v12341
        %v12400 = vpack.c.bf16 %v12346, %v12344
        %v12401 = vpack.c.bf16 %v12347, %v12345
        %v12402 = vpack.c.bf16 %v12350, %v12348
        %v12403 = vpack.c.bf16 %v12351, %v12349
        %v12404 = vpack.c.bf16 %v12354, %v12352
        %v12405 = vpack.c.bf16 %v12355, %v12353
        %v12406 = vpack.c.bf16 %v12358, %v12356
        %v12407 = vpack.c.bf16 %v12359, %v12357
        %v12408 = vpack.c.bf16 %v12362, %v12360
        %v12409 = vpack.c.bf16 %v12363, %v12361
        %v12410 = vpack.c.bf16 %v12366, %v12364
        %v12411 = vpack.c.bf16 %v12367, %v12365
        %v12412 = vpack.c.bf16 %v12370, %v12368
        %v12413 = vpack.c.bf16 %v12371, %v12369
        %v12414 = vpack.c.bf16 %v12374, %v12372
        %v12415 = vpack.c.bf16 %v12375, %v12373
        %v12416 = vpack.c.bf16 %v12378, %v12376
        %v12417 = vpack.c.bf16 %v12379, %v12377
        %v12418 = vpack.c.bf16 %v12382, %v12380
        %v12419 = vpack.c.bf16 %v12383, %v12381
        %v12420 = vpack.c.bf16 %v12386, %v12384
        %v12421 = vpack.c.bf16 %v12387, %v12385
        %v12422 = vpack.c.bf16 %v12390, %v12388
        %v12423 = vpack.c.bf16 %v12391, %v12389
        %v12424 = vld [vmem:[%s7] sm:$0xf]
        %v12425 = vld [vmem:[%s7 + $0x4] sm:$0xf]
        %v12426 = vld [vmem:[%s7 + $0x8] sm:$0xf]
        %v12427 = vld [vmem:[%s7 + $0xc] sm:$0xf]
        %v12428 = vld [vmem:[%s7 + $0x10] sm:$0xf]
        %v12429 = vld [vmem:[%s7 + $0x14] sm:$0xf]
        %v12430 = vld [vmem:[%s7 + $0x18] sm:$0xf]
        %v12431 = vld [vmem:[%s7 + $0x1c] sm:$0xf]
        %v12432 = vld [vmem:[%s7 + $0x20] sm:$0xf]
        %v12433 = vld [vmem:[%s7 + $0x24] sm:$0xf]
        %v12434 = vld [vmem:[%s7 + $0x28] sm:$0xf]
        %v12435 = vld [vmem:[%s7 + $0x2c] sm:$0xf]
        %v12436 = vld [vmem:[%s7 + $0x30] sm:$0xf]
        %v12437 = vld [vmem:[%s7 + $0x34] sm:$0xf]
        %v12438 = vld [vmem:[%s7 + $0x38] sm:$0xf]
        %v12439 = vld [vmem:[%s7 + $0x3c] sm:$0xf]
        %v12440 = vld [vmem:[%s7 + $0x40] sm:$0xf]
        %v12441 = vld [vmem:[%s7 + $0x44] sm:$0xf]
        %v12442 = vld [vmem:[%s7 + $0x48] sm:$0xf]
        %v12443 = vld [vmem:[%s7 + $0x4c] sm:$0xf]
        %v12444 = vld [vmem:[%s7 + $0x50] sm:$0xf]
        %v12445 = vld [vmem:[%s7 + $0x54] sm:$0xf]
        %v12446 = vld [vmem:[%s7 + $0x58] sm:$0xf]
        %v12447 = vld [vmem:[%s7 + $0x5c] sm:$0xf]
        %v12448 = vld [vmem:[%s7 + $0x60] sm:$0xf]
        %v12449 = vld [vmem:[%s7 + $0x64] sm:$0xf]
        %v12450 = vld [vmem:[%s7 + $0x68] sm:$0xf]
        %v12451 = vld [vmem:[%s7 + $0x6c] sm:$0xf]
        %v12452 = vld [vmem:[%s7 + $0x70] sm:$0xf]
        %v12453 = vld [vmem:[%s7 + $0x74] sm:$0xf]
        %v12454 = vld [vmem:[%s7 + $0x78] sm:$0xf]
        %v12455 = vld [vmem:[%s7 + $0x7c] sm:$0xf]
        %v12456 = vld [vmem:[%s8] sm:$0x1]
        %v12458 = vlaneseq
        %v12459 = vshrl.u32 %v12458, 7
        %v12460 = vsub.s32 0, %v12459
        %v12461 = vrot.slane %v12456, %v12460
        %v12495 = vunpack.c.l.b16 %v12424
        %v12496 = vunpack.c.l.b16 %v12425
        %v12497 = vunpack.c.l.b16 %v12426
        %v12498 = vunpack.c.l.b16 %v12427
        %v12499 = vunpack.c.l.b16 %v12428
        %v12500 = vunpack.c.l.b16 %v12429
        %v12501 = vunpack.c.l.b16 %v12430
        %v12502 = vunpack.c.l.b16 %v12431
        %v12503 = vunpack.c.l.b16 %v12432
        %v12504 = vunpack.c.l.b16 %v12433
        %v12505 = vunpack.c.l.b16 %v12434
        %v12506 = vunpack.c.l.b16 %v12435
        %v12507 = vunpack.c.l.b16 %v12436
        %v12508 = vunpack.c.l.b16 %v12437
        %v12509 = vunpack.c.l.b16 %v12438
        %v12510 = vunpack.c.l.b16 %v12439
        %v12511 = vunpack.c.l.b16 %v12440
        %v12512 = vunpack.c.l.b16 %v12441
        %v12513 = vunpack.c.l.b16 %v12442
        %v12514 = vunpack.c.l.b16 %v12443
        %v12515 = vunpack.c.l.b16 %v12444
        %v12516 = vunpack.c.l.b16 %v12445
        %v12517 = vunpack.c.l.b16 %v12446
        %v12518 = vunpack.c.l.b16 %v12447
        %v12519 = vunpack.c.l.b16 %v12448
        %v12520 = vunpack.c.l.b16 %v12449
        %v12521 = vunpack.c.l.b16 %v12450
        %v12522 = vunpack.c.l.b16 %v12451
        %v12523 = vunpack.c.l.b16 %v12452
        %v12524 = vunpack.c.l.b16 %v12453
        %v12525 = vunpack.c.l.b16 %v12454
        %v12526 = vunpack.c.l.b16 %v12455
        %v12527 = vpack.c.b16 %v12496, %v12495
        %v12528 = vpack.c.b16 %v12498, %v12497
        %v12529 = vpack.c.b16 %v12500, %v12499
        %v12530 = vpack.c.b16 %v12502, %v12501
        %v12531 = vpack.c.b16 %v12504, %v12503
        %v12532 = vpack.c.b16 %v12506, %v12505
        %v12533 = vpack.c.b16 %v12508, %v12507
        %v12534 = vpack.c.b16 %v12510, %v12509
        %v12535 = vpack.c.b16 %v12512, %v12511
        %v12536 = vpack.c.b16 %v12514, %v12513
        %v12537 = vpack.c.b16 %v12516, %v12515
        %v12538 = vpack.c.b16 %v12518, %v12517
        %v12539 = vpack.c.b16 %v12520, %v12519
        %v12540 = vpack.c.b16 %v12522, %v12521
        %v12541 = vpack.c.b16 %v12524, %v12523
        %v12542 = vpack.c.b16 %v12526, %v12525
        %12559 = vmatprep.subr.bf16.mxu0 0
        %12560 = vmatpush1.bf16.msra.mxu0 %v12527
        %12561 = vmatprep.subr.bf16.mxu0 0
        %12562 = vmatpush1.bf16.msra.mxu0 %v12528
        %12563 = vmatprep.subr.bf16.mxu0 0
        %12564 = vmatpush1.bf16.msra.mxu0 %v12529
        %12565 = vmatprep.subr.bf16.mxu0 0
        %12566 = vmatpush1.bf16.msra.mxu0 %v12530
        %12567 = vmatprep.subr.bf16.mxu0 0
        %12568 = vmatpush1.bf16.msra.mxu0 %v12531
        %12569 = vmatprep.subr.bf16.mxu0 0
        %12570 = vmatpush1.bf16.msra.mxu0 %v12532
        %12571 = vmatprep.subr.bf16.mxu0 0
        %12572 = vmatpush1.bf16.msra.mxu0 %v12533
        %12573 = vmatprep.subr.bf16.mxu0 0
        %12574 = vmatpush1.bf16.msra.mxu0 %v12534
        %12575 = vmatprep.subr.bf16.mxu0 0
        %12576 = vmatpush1.bf16.msra.mxu0 %v12535
        %12577 = vmatprep.subr.bf16.mxu0 0
        %12578 = vmatpush1.bf16.msra.mxu0 %v12536
        %12579 = vmatprep.subr.bf16.mxu0 0
        %12580 = vmatpush1.bf16.msra.mxu0 %v12537
        %12581 = vmatprep.subr.bf16.mxu0 0
        %12582 = vmatpush1.bf16.msra.mxu0 %v12538
        %12583 = vmatprep.subr.bf16.mxu0 0
        %12584 = vmatpush1.bf16.msra.mxu0 %v12539
        %12585 = vmatprep.subr.bf16.mxu0 0
        %12586 = vmatpush1.bf16.msra.mxu0 %v12540
        %12587 = vmatprep.subr.bf16.mxu0 0
        %12588 = vmatpush1.bf16.msra.mxu0 %v12541
        %12589 = vmatprep.subr.bf16.mxu0 0
        %12590 = vmatpush1.bf16.msra.mxu0 %v12542
        %12591 = vmatprep.mubr.bf16.mxu0 %v12393
        %12592 = vmatmul.mubr.bf16.gmra.mrb[0].mxu0 %v12392
        %v12593 = vpop.f32.mrb[0].mxu0
        %v12594 = vadd.f32 %v12461, %v12593
        %v12595 = vpop.f32.mrb[0].mxu0
        %v12596 = vpop.f32.mrb[0].mxu0
        %v12597 = vadd.f32 %v12461, %v12596
        %v12598 = vpop.f32.mrb[0].mxu0
        %12599 = vmatprep.mubr.bf16.mxu0 %v12395
        %12600 = vmatmul.mubr.bf16.gmra.mrb[0].mxu0 %v12394
        %v12601 = vpop.f32.mrb[0].mxu0
        %v12602 = vadd.f32 %v12461, %v12601
        %v12603 = vpop.f32.mrb[0].mxu0
        %v12604 = vpop.f32.mrb[0].mxu0
        %v12605 = vadd.f32 %v12461, %v12604
        %v12606 = vpop.f32.mrb[0].mxu0
        %12607 = vmatprep.mubr.bf16.mxu0 %v12397
        %12608 = vmatmul.mubr.bf16.gmra.mrb[0].mxu0 %v12396
        %v12609 = vpop.f32.mrb[0].mxu0
        %v12610 = vadd.f32 %v12461, %v12609
        %v12611 = vpop.f32.mrb[0].mxu0
        %v12612 = vpop.f32.mrb[0].mxu0
        %v12613 = vadd.f32 %v12461, %v12612
        %v12614 = vpop.f32.mrb[0].mxu0
        %12615 = vmatprep.mubr.bf16.mxu0 %v12399
        %12616 = vmatmul.mubr.bf16.gmra.mrb[0].mxu0 %v12398
        %v12617 = vpop.f32.mrb[0].mxu0
        %v12618 = vadd.f32 %v12461, %v12617
        %v12619 = vpop.f32.mrb[0].mxu0
        %v12620 = vpop.f32.mrb[0].mxu0
        %v12621 = vadd.f32 %v12461, %v12620
        %v12622 = vpop.f32.mrb[0].mxu0
        %12623 = vmatprep.mubr.bf16.mxu0 %v12401
        %12624 = vmatmul.mubr.bf16.gmra.mrb[0].mxu0 %v12400
        %v12625 = vpop.f32.mrb[0].mxu0
        %v12626 = vadd.f32 %v12461, %v12625
        %v12627 = vpop.f32.mrb[0].mxu0
        %v12628 = vpop.f32.mrb[0].mxu0
        %v12629 = vadd.f32 %v12461, %v12628
        %v12630 = vpop.f32.mrb[0].mxu0
        %12631 = vmatprep.mubr.bf16.mxu0 %v12403
        %12632 = vmatmul.mubr.bf16.gmra.mrb[0].mxu0 %v12402
        %v12633 = vpop.f32.mrb[0].mxu0
        %v12634 = vadd.f32 %v12461, %v12633
        %v12635 = vpop.f32.mrb[0].mxu0
        %v12636 = vpop.f32.mrb[0].mxu0
        %v12637 = vadd.f32 %v12461, %v12636
        %v12638 = vpop.f32.mrb[0].mxu0
        %12639 = vmatprep.mubr.bf16.mxu0 %v12405
        %12640 = vmatmul.mubr.bf16.gmra.mrb[0].mxu0 %v12404
        %v12641 = vpop.f32.mrb[0].mxu0
        %v12642 = vadd.f32 %v12461, %v12641
        %v12643 = vpop.f32.mrb[0].mxu0
        %v12644 = vpop.f32.mrb[0].mxu0
        %v12645 = vadd.f32 %v12461, %v12644
        %v12646 = vpop.f32.mrb[0].mxu0
        %12647 = vmatprep.mubr.bf16.mxu0 %v12407
        %12648 = vmatmul.mubr.bf16.gmra.mrb[0].mxu0 %v12406
        %v12649 = vpop.f32.mrb[0].mxu0
        %v12650 = vadd.f32 %v12461, %v12649
        %v12651 = vpop.f32.mrb[0].mxu0
        %v12652 = vpop.f32.mrb[0].mxu0
        %v12653 = vadd.f32 %v12461, %v12652
        %v12654 = vpop.f32.mrb[0].mxu0
        %12655 = vmatprep.mubr.bf16.mxu0 %v12409
        %12656 = vmatmul.mubr.bf16.gmra.mrb[0].mxu0 %v12408
        %v12657 = vpop.f32.mrb[0].mxu0
        %v12658 = vadd.f32 %v12461, %v12657
        %v12659 = vpop.f32.mrb[0].mxu0
        %v12660 = vpop.f32.mrb[0].mxu0
        %v12661 = vadd.f32 %v12461, %v12660
        %v12662 = vpop.f32.mrb[0].mxu0
        %12663 = vmatprep.mubr.bf16.mxu0 %v12411
        %12664 = vmatmul.mubr.bf16.gmra.mrb[0].mxu0 %v12410
        %v12665 = vpop.f32.mrb[0].mxu0
        %v12666 = vadd.f32 %v12461, %v12665
        %v12667 = vpop.f32.mrb[0].mxu0
        %v12668 = vpop.f32.mrb[0].mxu0
        %v12669 = vadd.f32 %v12461, %v12668
        %v12670 = vpop.f32.mrb[0].mxu0
        %12671 = vmatprep.mubr.bf16.mxu0 %v12413
        %12672 = vmatmul.mubr.bf16.gmra.mrb[0].mxu0 %v12412
        %v12673 = vpop.f32.mrb[0].mxu0
        %v12674 = vadd.f32 %v12461, %v12673
        %v12675 = vpop.f32.mrb[0].mxu0
        %v12676 = vpop.f32.mrb[0].mxu0
        %v12677 = vadd.f32 %v12461, %v12676
        %v12678 = vpop.f32.mrb[0].mxu0
        %12679 = vmatprep.mubr.bf16.mxu0 %v12415
        %12680 = vmatmul.mubr.bf16.gmra.mrb[0].mxu0 %v12414
        %v12681 = vpop.f32.mrb[0].mxu0
        %v12682 = vadd.f32 %v12461, %v12681
        %v12683 = vpop.f32.mrb[0].mxu0
        %v12684 = vpop.f32.mrb[0].mxu0
        %v12685 = vadd.f32 %v12461, %v12684
        %v12686 = vpop.f32.mrb[0].mxu0
        %12687 = vmatprep.mubr.bf16.mxu0 %v12417
        %12688 = vmatmul.mubr.bf16.gmra.mrb[0].mxu0 %v12416
        %v12689 = vpop.f32.mrb[0].mxu0
        %v12690 = vadd.f32 %v12461, %v12689
        %v12691 = vpop.f32.mrb[0].mxu0
        %v12692 = vpop.f32.mrb[0].mxu0
        %v12693 = vadd.f32 %v12461, %v12692
        %v12694 = vpop.f32.mrb[0].mxu0
        %12695 = vmatprep.mubr.bf16.mxu0 %v12419
        %12696 = vmatmul.mubr.bf16.gmra.mrb[0].mxu0 %v12418
        %v12697 = vpop.f32.mrb[0].mxu0
        %v12698 = vadd.f32 %v12461, %v12697
        %v12699 = vpop.f32.mrb[0].mxu0
        %v12700 = vpop.f32.mrb[0].mxu0
        %v12701 = vadd.f32 %v12461, %v12700
        %v12702 = vpop.f32.mrb[0].mxu0
        %12703 = vmatprep.mubr.bf16.mxu0 %v12421
        %12704 = vmatmul.mubr.bf16.gmra.mrb[0].mxu0 %v12420
        %v12705 = vpop.f32.mrb[0].mxu0
        %v12706 = vadd.f32 %v12461, %v12705
        %v12707 = vpop.f32.mrb[0].mxu0
        %v12708 = vpop.f32.mrb[0].mxu0
        %v12709 = vadd.f32 %v12461, %v12708
        %v12710 = vpop.f32.mrb[0].mxu0
        %12711 = vmatprep.mubr.bf16.mxu0 %v12423
        %12712 = vmatmul.mubr.bf16.gmra.mrb[0].mxu0 %v12422
        %v12713 = vpop.f32.mrb[0].mxu0
        %v12714 = vadd.f32 %v12461, %v12713
        %v12715 = vpop.f32.mrb[0].mxu0
        %v12716 = vpop.f32.mrb[0].mxu0
        %v12717 = vadd.f32 %v12461, %v12716
        %v12718 = vpop.f32.mrb[0].mxu0
        %12719 = vdwg.mxu0
        %v12752 = vrot.slane %v12594, 1
        %v12753 = vrot.slane %v12597, 1
        %v12754 = vsel %vm658, %v12752, %v12753
        %v12755 = vrot.slane %v12602, 1
        %v12756 = vrot.slane %v12605, 1
        %v12757 = vsel %vm658, %v12755, %v12756
        %v12758 = vrot.slane %v12610, 1
        %v12759 = vrot.slane %v12613, 1
        %v12760 = vsel %vm658, %v12758, %v12759
        %v12761 = vrot.slane %v12618, 1
        %v12762 = vrot.slane %v12621, 1
        %v12763 = vsel %vm658, %v12761, %v12762
        %v12764 = vrot.slane %v12626, 1
        %v12765 = vrot.slane %v12629, 1
        %v12766 = vsel %vm658, %v12764, %v12765
        %v12767 = vrot.slane %v12634, 1
        %v12768 = vrot.slane %v12637, 1
        %v12769 = vsel %vm658, %v12767, %v12768
        %v12770 = vrot.slane %v12642, 1
        %v12771 = vrot.slane %v12645, 1
        %v12772 = vsel %vm658, %v12770, %v12771
        %v12773 = vrot.slane %v12650, 1
        %v12774 = vrot.slane %v12653, 1
        %v12775 = vsel %vm658, %v12773, %v12774
        %v12776 = vrot.slane %v12658, 1
        %v12777 = vrot.slane %v12661, 1
        %v12778 = vsel %vm658, %v12776, %v12777
        %v12779 = vrot.slane %v12666, 1
        %v12780 = vrot.slane %v12669, 1
        %v12781 = vsel %vm658, %v12779, %v12780
        %v12782 = vrot.slane %v12674, 1
        %v12783 = vrot.slane %v12677, 1
        %v12784 = vsel %vm658, %v12782, %v12783
        %v12785 = vrot.slane %v12682, 1
        %v12786 = vrot.slane %v12685, 1
        %v12787 = vsel %vm658, %v12785, %v12786
        %v12788 = vrot.slane %v12690, 1
        %v12789 = vrot.slane %v12693, 1
        %v12790 = vsel %vm658, %v12788, %v12789
        %v12791 = vrot.slane %v12698, 1
        %v12792 = vrot.slane %v12701, 1
        %v12793 = vsel %vm658, %v12791, %v12792
        %v12794 = vrot.slane %v12706, 1
        %v12795 = vrot.slane %v12709, 1
        %v12796 = vsel %vm658, %v12794, %v12795
        %v12797 = vrot.slane %v12714, 1
        %v12798 = vrot.slane %v12717, 1
        %v12799 = vsel %vm658, %v12797, %v12798
        %v12848 = vadd.f32 %v1911, %v12752
        %v12849 = vadd.f32 %v1912, %v12754
        %v12850 = vadd.f32 %v1913, %v12753
        %v12851 = vadd.f32 %v1914, %v12755
        %v12852 = vadd.f32 %v1915, %v12757
        %v12853 = vadd.f32 %v1916, %v12756
        %v12854 = vadd.f32 %v1917, %v12758
        %v12855 = vadd.f32 %v1918, %v12760
        %v12856 = vadd.f32 %v1919, %v12759
        %v12857 = vadd.f32 %v1920, %v12761
        %v12858 = vadd.f32 %v1921, %v12763
        %v12859 = vadd.f32 %v1922, %v12762
        %v12860 = vadd.f32 %v1923, %v12764
        %v12861 = vadd.f32 %v1924, %v12766
        %v12862 = vadd.f32 %v1925, %v12765
        %v12863 = vadd.f32 %v1926, %v12767
        %v12864 = vadd.f32 %v1927, %v12769
        %v12865 = vadd.f32 %v1928, %v12768
        %v12866 = vadd.f32 %v1929, %v12770
        %v12867 = vadd.f32 %v1930, %v12772
        %v12868 = vadd.f32 %v1931, %v12771
        %v12869 = vadd.f32 %v1932, %v12773
        %v12870 = vadd.f32 %v1933, %v12775
        %v12871 = vadd.f32 %v1934, %v12774
        %v12872 = vadd.f32 %v1935, %v12776
        %v12873 = vadd.f32 %v1936, %v12778
        %v12874 = vadd.f32 %v1937, %v12777
        %v12875 = vadd.f32 %v1938, %v12779
        %v12876 = vadd.f32 %v1939, %v12781
        %v12877 = vadd.f32 %v1940, %v12780
        %v12878 = vadd.f32 %v1941, %v12782
        %v12879 = vadd.f32 %v1942, %v12784
        %v12880 = vadd.f32 %v1943, %v12783
        %v12881 = vadd.f32 %v1944, %v12785
        %v12882 = vadd.f32 %v1945, %v12787
        %v12883 = vadd.f32 %v1946, %v12786
        %v12884 = vadd.f32 %v1947, %v12788
        %v12885 = vadd.f32 %v1948, %v12790
        %v12886 = vadd.f32 %v1949, %v12789
        %v12887 = vadd.f32 %v1950, %v12791
        %v12888 = vadd.f32 %v1951, %v12793
        %v12889 = vadd.f32 %v1952, %v12792
        %v12890 = vadd.f32 %v1953, %v12794
        %v12891 = vadd.f32 %v1954, %v12796
        %v12892 = vadd.f32 %v1955, %v12795
        %v12893 = vadd.f32 %v1956, %v12797
        %v12894 = vadd.f32 %v1957, %v12799
        %v12895 = vadd.f32 %v1958, %v12798
        %vm12896 = vcmask 523271
        %12897 = vst.msk [vmem:[%s350 - $0x7] sm:$0x80] %vm12896, %v12848
        %12898 = vst.msk [vmem:[%s350 + $0x1] sm:$0xff] %vm11830, %v12849
        %vm12899 = vcmask 522240
        %12900 = vst.msk [vmem:[%s350 + $0x9] sm:$0x7f] %vm12899, %v12850
        %12901 = vst.msk [vmem:[%s350 + $0x9] sm:$0x80] %vm12896, %v12851
        %12902 = vst.msk [vmem:[%s350 + $0x11] sm:$0xff] %vm11830, %v12852
        %12903 = vst.msk [vmem:[%s350 + $0x19] sm:$0x7f] %vm12899, %v12853
        %12904 = vst.msk [vmem:[%s350 + $0x19] sm:$0x80] %vm12896, %v12854
        %12905 = vst.msk [vmem:[%s350 + $0x21] sm:$0xff] %vm11830, %v12855
        %12906 = vst.msk [vmem:[%s350 + $0x29] sm:$0x7f] %vm12899, %v12856
        %12907 = vst.msk [vmem:[%s350 + $0x29] sm:$0x80] %vm12896, %v12857
        %12908 = vst.msk [vmem:[%s350 + $0x31] sm:$0xff] %vm11830, %v12858
        %12909 = vst.msk [vmem:[%s350 + $0x39] sm:$0x7f] %vm12899, %v12859
        %12910 = vst.msk [vmem:[%s350 + $0x39] sm:$0x80] %vm12896, %v12860
        %12911 = vst.msk [vmem:[%s350 + $0x41] sm:$0xff] %vm11830, %v12861
        %12912 = vst.msk [vmem:[%s350 + $0x49] sm:$0x7f] %vm12899, %v12862
        %12913 = vst.msk [vmem:[%s350 + $0x49] sm:$0x80] %vm12896, %v12863
        %12914 = vst.msk [vmem:[%s350 + $0x51] sm:$0xff] %vm11830, %v12864
        %12915 = vst.msk [vmem:[%s350 + $0x59] sm:$0x7f] %vm12899, %v12865
        %12916 = vst.msk [vmem:[%s350 + $0x59] sm:$0x80] %vm12896, %v12866
        %12917 = vst.msk [vmem:[%s350 + $0x61] sm:$0xff] %vm11830, %v12867
        %12918 = vst.msk [vmem:[%s350 + $0x69] sm:$0x7f] %vm12899, %v12868
        %12919 = vst.msk [vmem:[%s350 + $0x69] sm:$0x80] %vm12896, %v12869
        %12920 = vst.msk [vmem:[%s350 + $0x71] sm:$0xff] %vm11830, %v12870
        %12921 = vst.msk [vmem:[%s350 + $0x79] sm:$0x7f] %vm12899, %v12871
        %12922 = vst.msk [vmem:[%s350 + $0x79] sm:$0x80] %vm12896, %v12872
        %12923 = vst.msk [vmem:[%s350 + $0x81] sm:$0xff] %vm11830, %v12873
        %12924 = vst.msk [vmem:[%s350 + $0x89] sm:$0x7f] %vm12899, %v12874
        %12925 = vst.msk [vmem:[%s350 + $0x89] sm:$0x80] %vm12896, %v12875
        %12926 = vst.msk [vmem:[%s350 + $0x91] sm:$0xff] %vm11830, %v12876
        %12927 = vst.msk [vmem:[%s350 + $0x99] sm:$0x7f] %vm12899, %v12877
        %12928 = vst.msk [vmem:[%s350 + $0x99] sm:$0x80] %vm12896, %v12878
        %12929 = vst.msk [vmem:[%s350 + $0xa1] sm:$0xff] %vm11830, %v12879
        %12930 = vst.msk [vmem:[%s350 + $0xa9] sm:$0x7f] %vm12899, %v12880
        %12931 = vst.msk [vmem:[%s350 + $0xa9] sm:$0x80] %vm12896, %v12881
        %12932 = vst.msk [vmem:[%s350 + $0xb1] sm:$0xff] %vm11830, %v12882
        %12933 = vst.msk [vmem:[%s350 + $0xb9] sm:$0x7f] %vm12899, %v12883
        %12934 = vst.msk [vmem:[%s350 + $0xb9] sm:$0x80] %vm12896, %v12884
        %12935 = vst.msk [vmem:[%s350 + $0xc1] sm:$0xff] %vm11830, %v12885
        %12936 = vst.msk [vmem:[%s350 + $0xc9] sm:$0x7f] %vm12899, %v12886
        %12937 = vst.msk [vmem:[%s350 + $0xc9] sm:$0x80] %vm12896, %v12887
        %12938 = vst.msk [vmem:[%s350 + $0xd1] sm:$0xff] %vm11830, %v12888
        %12939 = vst.msk [vmem:[%s350 + $0xd9] sm:$0x7f] %vm12899, %v12889
        %12940 = vst.msk [vmem:[%s350 + $0xd9] sm:$0x80] %vm12896, %v12890
        %12941 = vst.msk [vmem:[%s350 + $0xe1] sm:$0xff] %vm11830, %v12891
        %12942 = vst.msk [vmem:[%s350 + $0xe9] sm:$0x7f] %vm12899, %v12892
        %12943 = vst.msk [vmem:[%s350 + $0xe9] sm:$0x80] %vm12896, %v12893
        %12944 = vst.msk [vmem:[%s350 + $0xf1] sm:$0xff] %vm11830, %v12894
        %12945 = vst.msk [vmem:[%s350 + $0xf9] sm:$0x7f] %vm12899, %v12895
        %s12946 = sand.u32 %s228, 1
        %s12947 = scalar_lea.sflag [#allocation4], %s12946
        %s12948 = sand.u32 %s228, 1
        %s12949 = smul.addr %s12948, 256
        %s12950 = scalar_lea.vmem [#allocation5], %s12949
        // Predicated region
        $region61: #{tpu_custom_call.1} parent=55 // pred_check
          %p12951 = pneg %p238
        $region62: #{tpu_custom_call.1} parent=55 // pred_check_branch
          %12953 = sbr.rel (%p12951) target = $region64
        $region63: #{tpu_custom_call.1} parent=55 // pred_region
          %s12955 = ssub.s32 4096, 4096
          %12956 = vsyncadd %s12947, %s12955
          %s12957 = smul.addr %s26, 32
          %s12958 = smul.addr %s12957, 128
          %s12959 = scalar_lea.hbm %s9, %s12958
          %s12960 = sshll.u32 %s12950, 4
          %s12961 = int_to_ptr.vmem [resolvable:$true] %s12960
          %12966 = dma.vmem_to_hbm [thread:$0]  %s12961, 4096, %s12959, %s12947, 128, 128, 8
        $region64: #{tpu_custom_call.1} parent=55 // pred_fallthru
          _
      $region56: #{tpu_custom_call.1} parent=5 // pred_fallthru
        _
      %p12967 = scmp.le.s32.totalorder 2, %s21
      // Predicated region
      $region65: #{tpu_custom_call.1} parent=5 // pred_check
        %p12968 = pneg %p12967
      $region66: #{tpu_custom_call.1} parent=5 // pred_check_branch
        %12970 = sbr.rel (%p12968) target = $region68
      $region67: #{tpu_custom_call.1} parent=5 // pred_region
        %s12971 = ssub.s32 %s21, 2
        // Predicated region
        $region69: #{tpu_custom_call.1} parent=67 // pred_check
          %p12972 = pneg %p244
        $region70: #{tpu_custom_call.1} parent=67 // pred_check_branch
          %12974 = sbr.rel (%p12972) target = $region72
        $region71: #{tpu_custom_call.1} parent=67 // pred_region
          %s12975 = sand.u32 %s229, 1
          %s12976 = scalar_lea.sflag [#allocation4], %s12975
          %s12977 = sand.u32 %s229, 1
          %s12978 = smul.addr %s12977, 256
          %s12979 = scalar_lea.vmem [#allocation5], %s12978
          %12980 = dma.done %s12976, 4096
        $region72: #{tpu_custom_call.1} parent=67 // pred_fallthru
          _
      $region68: #{tpu_custom_call.1} parent=5 // pred_fallthru
        _
    $region6: #{tpu_custom_call.1} parent=1 // loop_footer
      %s25 = sadd.s32 1, %s21
    $region7: #{tpu_custom_call.1} parent=1 // loop_footer_branch
      %20 = sbr.rel target = $region3
    $region8: #{tpu_custom_call.1} parent=1 // loop_exit
      _
    %12981 = vsyncpa [#allocation3], 1
    %s12982 = scalar_lea.sflag [#allocation3], 1
    %12983 = vsyncpa %s12982, 1
    %12984 = vsyncpa [#allocation4], 1
    %s12985 = scalar_lea.sflag [#allocation4], 1
    %12986 = vsyncpa %s12985, 1

</llo_original>
